<compile_context>
chip_gen: v5e
topology: v5e:2x2
jax: 0.10.0
libtpu: 0.0.40
codegen_flags: <defaults>
</compile_context>

<pallas_src>
import functools
import math

import numpy as np
import jax
import jax.numpy as jnp
from jax.experimental import pallas as pl


# ------------------------- ConvT(4,2,1) phase tables -------------------------
# Output pixel (oh, ow) = (2*j + rh, 2*i + rw) of ConvTranspose2d(k=4,s=2,p=1)
# receives contributions from exactly 4 of the 16 kernel taps:
#   kh in {1,3} if rh == 0 else {0,2}   (and the same for kw / rw),
# taken from input pixel (ih, iw) = (j + (rh+1-kh)//2, i + (rw+1-kw)//2).

_PHASES = ((0, 0), (0, 1), (1, 0), (1, 1))


def _phase_taps(rh, rw):
    khs = (1, 3) if rh == 0 else (0, 2)
    kws = (1, 3) if rw == 0 else (0, 2)
    return tuple((kh, kw) for kh in khs for kw in kws)


_TAP_IDS = tuple(tuple(kh * 4 + kw for (kh, kw) in _phase_taps(rh, rw))
                 for (rh, rw) in _PHASES)


def _round_up(n, m):
    return ((n + m - 1) // m) * m


# ------------------------------ fused kernel --------------------------------

def _decoder_kernel(*refs, n_conv):
    """Whole decoder, single invocation, everything resident in VMEM.

    refs = [x, fc1_w, fc1_b, fc2_w, fc2_b, (Wcat_l, bias_l, P_l) * n_conv, out]
    Activation layout: rows = flattened (batch, spatial) positions in the
    phase-major order encoded in the scatter tables; lanes = channels padded
    to a multiple of 128 (so every slice below is vreg-aligned).
    """
    x_ref, fc1w_ref, fc1b_ref, fc2w_ref, fc2b_ref = refs[:5]
    conv_refs = refs[5:5 + 3 * n_conv]
    o_ref = refs[5 + 3 * n_conv]

    def mm(a, b):  # bf16 x bf16 on the MXU, f32 accumulation
        return jnp.dot(a.astype(jnp.bfloat16), b,
                       preferred_element_type=jnp.float32)

    # fc1 + ReLU, fc2 + ReLU   (rows = batch)
    h = jnp.maximum(mm(x_ref[...], fc1w_ref[...]) + fc1b_ref[...], 0.0)
    a = jnp.maximum(mm(h, fc2w_ref[...]) + fc2b_ref[...], 0.0)

    for l in range(n_conv):
        w_ref = conv_refs[3 * l]        # (Cin_pad, 16*Cout_pad)   bf16
        b_ref = conv_refs[3 * l + 1]    # (1, Cout_pad)            f32
        p_ref = conv_refs[3 * l + 2]    # (4, M, 4*M)              bf16
        cp = b_ref.shape[1]             # padded Cout (multiple of 128)

        # All 16 tap contributions in one MXU matmul (no structural zeros).
        aw = mm(a, w_ref[...])          # (M, 16*Cout_pad) f32
        taps = [aw[:, t * cp:(t + 1) * cp] for t in range(16)]

        phase_out = []
        for p in range(4):
            # Stack the 4 taps this output phase needs, then scatter-sum them
            # into the phase's output rows with a precomputed 0/1 table.
            vp = jnp.concatenate([taps[t] for t in _TAP_IDS[p]], axis=0)
            phase_out.append(
                jnp.dot(p_ref[p], vp.astype(jnp.bfloat16),
                        preferred_element_type=jnp.float32))   # (M, Cout_pad)

        a = jnp.concatenate(phase_out, axis=0) + b_ref[...]     # (4*M, Cout_pad)
        if l != n_conv - 1:
            a = jnp.maximum(a, 0.0)

    o_ref[...] = a.astype(o_ref.dtype)


# ------------------------------ parameters ----------------------------------

def init_params(key, resolution, nc, latents):
    rlog2 = int(math.log2(resolution))
    ch_idx = int(math.floor((rlog2 - 1) / 2.0 + 5))
    out_ch = 2 ** ch_idx

    n_keys = 4 + 2 * rlog2
    keys = list(jax.random.split(key, n_keys))
    ki = iter(keys)

    def xavier(k, shape, fan_in, fan_out):
        bound = math.sqrt(6.0 / (fan_in + fan_out))
        return jax.random.uniform(k, shape, jnp.float32, -bound, bound)

    params = {}
    # Linear weights stored as (in, out) so forward is x @ W + b
    params['fc1_w'] = xavier(next(ki), (latents, 512), latents, 512)
    params['fc1_b'] = jax.random.uniform(next(ki), (512,), jnp.float32,
                                         -1.0 / math.sqrt(latents),
                                         1.0 / math.sqrt(latents))
    params['fc2_w'] = xavier(next(ki), (512, out_ch), 512, out_ch)
    params['fc2_b'] = jax.random.uniform(next(ki), (out_ch,), jnp.float32,
                                         -1.0 / math.sqrt(512),
                                         1.0 / math.sqrt(512))
    convs = []
    for i in range(rlog2):
        ch_idx = int(math.floor((rlog2 - 2 - i) / 2.0 + 5))
        in_ch = out_ch
        out_ch = nc if i == rlog2 - 1 else 2 ** ch_idx
        fan_in = out_ch * 16   # PyTorch fan-in convention for ConvTranspose2d
        fan_out = in_ch * 16
        w = xavier(next(ki), (in_ch, out_ch, 4, 4), fan_in, fan_out)
        bb = jax.random.uniform(next(ki), (out_ch,), jnp.float32,
                                -1.0 / math.sqrt(fan_in),
                                1.0 / math.sqrt(fan_in))
        convs.append((w, bb))
    params['convs'] = convs
    return params


# ------------------------- one-time operand preparation ---------------------

def _pad2d(arr, rows, cols):
    out = np.zeros((rows, cols), np.float32)
    out[:arr.shape[0], :arr.shape[1]] = arr
    return out


def prepare_params(params, batch):
    """One-time re-layout of the parameters into fused-kernel operands:
    bf16 matmul weights (taps flattened onto lanes, channels padded to 128),
    f32 (1, C) biases, per-layer/per-phase 0/1 scatter tables (bf16), and the
    final raster-order permutation.  Scatter tables depend on the batch size.
    """
    fc1_w = np.asarray(params['fc1_w'], np.float32)
    fc1_b = np.asarray(params['fc1_b'], np.float32).reshape(1, -1)
    fc2_w = np.asarray(params['fc2_w'], np.float32)
    fc2_b = np.asarray(params['fc2_b'], np.float32).reshape(1, -1)

    c0 = fc2_w.shape[1]
    acc_w = _round_up(c0, 128)          # lane-padded channel width of `a`
    prep = {
        'fc1_w': jnp.asarray(fc1_w, jnp.bfloat16),
        'fc1_b': jnp.asarray(fc1_b),
        'fc2_w': jnp.asarray(_pad2d(fc2_w, fc2_w.shape[0], acc_w), jnp.bfloat16),
        'fc2_b': jnp.asarray(_pad2d(fc2_b, 1, acc_w)),
    }

    convs = []
    order = [(b, 0, 0) for b in range(batch)]   # activation row -> (b, h, w)
    H = W = 1
    for (w_pt, bias) in params['convs']:
        w_np = np.asarray(w_pt, np.float32)     # (Cin, Cout, 4, 4) PyTorch layout
        cin, cout = w_np.shape[0], w_np.shape[1]
        cp = _round_up(cout, 128)

        # Wcat[ci, t*cp + co] = W[ci, co, kh, kw],  t = kh*4 + kw
        wcat = np.zeros((acc_w, 16 * cp), np.float32)
        for kh in range(4):
            for kw in range(4):
                t = kh * 4 + kw
                wcat[:cin, t * cp:t * cp + cout] = w_np[:, :, kh, kw]

        m_in = len(order)
        row_of = {pos: r for r, pos in enumerate(order)}
        ptab = np.zeros((4, m_in, 4 * m_in), np.float32)
        new_order = []
        for p, (rh, rw) in enumerate(_PHASES):
            taps = _phase_taps(rh, rw)
            for r, (b, j, i) in enumerate(order):
                new_order.append((b, 2 * j + rh, 2 * i + rw))
                for q, (kh, kw) in enumerate(taps):
                    ih = j + (rh + 1 - kh) // 2
                    iw = i + (rw + 1 - kw) // 2
                    if 0 <= ih < H and 0 <= iw < W:
                        ptab[p, r, q * m_in + row_of[(b, ih, iw)]] = 1.0

        convs.append({
            'w': jnp.asarray(wcat, jnp.bfloat16),
            'b': jnp.asarray(_pad2d(np.asarray(bias, np.float32).reshape(1, -1), 1, cp)),
            'p': jnp.asarray(ptab, jnp.bfloat16),
        })
        order, H, W, acc_w = new_order, 2 * H, 2 * W, cp

    prep['convs'] = convs

    # kernel-output row order -> raster (b, oh, ow): build inverse permutation
    row_of = {pos: r for r, pos in enumerate(order)}
    perm = np.empty((batch * H * W,), np.int32)
    for b in range(batch):
        for oh in range(H):
            for ow in range(W):
                perm[(b * H + oh) * W + ow] = row_of[(b, oh, ow)]
    prep['perm'] = jnp.asarray(perm)
    return prep


# -------------------------------- forward -----------------------------------

def make_decoder_forward(prep, batch, resolution, nc):
    n_conv = len(prep['convs'])
    out_rows = int(prep['perm'].shape[0])
    out_width = int(prep['convs'][-1]['b'].shape[1])
    assert out_rows == batch * resolution * resolution

    kernel = functools.partial(_decoder_kernel, n_conv=n_conv)

    # Advisory cost estimate so XLA schedules the custom call sensibly.
    flops = 2 * batch * int(prep['fc1_w'].shape[0]) * int(prep['fc1_w'].shape[1])
    flops += 2 * batch * int(prep['fc2_w'].shape[0]) * int(prep['fc2_w'].shape[1])
    bytes_accessed = out_rows * out_width * 4
    for leaf in jax.tree_util.tree_leaves(prep):
        bytes_accessed += int(leaf.size) * leaf.dtype.itemsize
    for c in prep['convs']:
        m_in = int(c['p'].shape[1])
        kin, kwide = (int(s) for s in c['w'].shape)
        cp = int(c['b'].shape[1])
        flops += 2 * m_in * kin * kwide          # tap matmul
        flops += 2 * 4 * m_in * 4 * m_in * cp    # phase scatter matmuls
    cost = pl.CostEstimate(flops=int(flops), transcendentals=0,
                           bytes_accessed=int(bytes_accessed))

    def forward(x, p):
        ops = [x, p['fc1_w'], p['fc1_b'], p['fc2_w'], p['fc2_b']]
        for c in p['convs']:
            ops.extend([c['w'], c['b'], c['p']])
        flat = pl.pallas_call(
            kernel,
            out_shape=jax.ShapeDtypeStruct((out_rows, out_width), jnp.float32),
            cost_estimate=cost,
        )(*ops)
        # TODO(synk): the final NCHW re-ordering (6 KB useful data: row
        # permutation + transpose) is done in the jitted wrapper, not in-kernel.
        y = jnp.take(flat[:, :nc], p['perm'], axis=0)
        return y.reshape(batch, resolution, resolution, nc).transpose(0, 3, 1, 2)

    return jax.jit(forward)


# --------------------------- numpy reference ---------------------------------

def reference_forward(x, params):
    x = np.asarray(x, np.float64)
    h = np.maximum(x @ np.asarray(params['fc1_w']) + np.asarray(params['fc1_b']), 0.0)
    h = np.maximum(h @ np.asarray(params['fc2_w']) + np.asarray(params['fc2_b']), 0.0)
    B = x.shape[0]
    h = h.reshape(B, -1, 1, 1)  # NCHW
    n_conv = len(params['convs'])
    for li, (w, bb) in enumerate(params['convs']):
        w = np.asarray(w, np.float64)
        bb = np.asarray(bb, np.float64)
        Cout = w.shape[1]
        H = h.shape[2]
        out = np.zeros((B, Cout, 2 * H, 2 * H), np.float64)
        for ih in range(H):
            for iw in range(H):
                contrib = np.einsum('bi,iokl->bokl', h[:, :, ih, iw], w)
                for kh in range(4):
                    oh = 2 * ih - 1 + kh
                    if not (0 <= oh < 2 * H):
                        continue
                    for kw in range(4):
                        ow = 2 * iw - 1 + kw
                        if 0 <= ow < 2 * H:
                            out[:, :, oh, ow] += contrib[:, :, kh, kw]
        out += bb[None, :, None, None]
        if li != n_conv - 1:
            out = np.maximum(out, 0.0)
        h = out
    return h


# ---------------------------------- main -------------------------------------

if __name__ == "__main__":
    RESOLUTION, NC, LATENTS, BATCH = 16, 3, 8, 2

    key = jax.random.PRNGKey(0)
    k_param, k_x = jax.random.split(key)
    params = init_params(k_param, RESOLUTION, NC, LATENTS)
    x = jax.random.normal(k_x, (BATCH, LATENTS), jnp.float32)

    prep = prepare_params(params, BATCH)
    forward = make_decoder_forward(prep, BATCH, RESOLUTION, NC)

    y = forward(x, prep)
    y = jax.block_until_ready(y)
    assert y.shape == (BATCH, NC, RESOLUTION, RESOLUTION), y.shape

    y_ref = reference_forward(x, params)
    scale = 1.0 + np.max(np.abs(y_ref))
    max_err = np.max(np.abs(np.asarray(y, np.float64) - y_ref))
    assert max_err < 2e-2 * scale, f"max_err={max_err}, scale={scale}"

    print("KERNEL_OK")
</pallas_src>

<mosaic_0001>
module attributes {stable_mosaic.version = 11 : i64} {
  func.func @_decoder_kernel(%arg0: memref<2x8xf32, #tpu.memory_space<vmem>>, %arg1: memref<8x512xbf16, #tpu.memory_space<vmem>>, %arg2: memref<1x512xf32, #tpu.memory_space<vmem>>, %arg3: memref<512x128xbf16, #tpu.memory_space<vmem>>, %arg4: memref<1x128xf32, #tpu.memory_space<vmem>>, %arg5: memref<128x2048xbf16, #tpu.memory_space<vmem>>, %arg6: memref<1x128xf32, #tpu.memory_space<vmem>>, %arg7: memref<4x2x8xbf16, #tpu.memory_space<vmem>>, %arg8: memref<128x2048xbf16, #tpu.memory_space<vmem>>, %arg9: memref<1x128xf32, #tpu.memory_space<vmem>>, %arg10: memref<4x8x32xbf16, #tpu.memory_space<vmem>>, %arg11: memref<128x2048xbf16, #tpu.memory_space<vmem>>, %arg12: memref<1x128xf32, #tpu.memory_space<vmem>>, %arg13: memref<4x32x128xbf16, #tpu.memory_space<vmem>>, %arg14: memref<128x2048xbf16, #tpu.memory_space<vmem>>, %arg15: memref<1x128xf32, #tpu.memory_space<vmem>>, %arg16: memref<4x128x512xbf16, #tpu.memory_space<vmem>>, %arg17: memref<512x128xf32, #tpu.memory_space<vmem>>) attributes {dimension_semantics = [], scalar_prefetch = 0 : i64, scratch_operands = 0 : i64, tpu.core_type = #tpu.core_type<tc>} {
    %c0 = arith.constant 0 : index
    %c0_0 = arith.constant 0 : index
    %0 = vector.load %arg0[%c0, %c0_0] : memref<2x8xf32, #tpu.memory_space<vmem>>, vector<2x8xf32>
    %c0_1 = arith.constant 0 : index
    %c0_2 = arith.constant 0 : index
    %1 = vector.load %arg1[%c0_1, %c0_2] : memref<8x512xbf16, #tpu.memory_space<vmem>>, vector<8x512xbf16>
    %2 = arith.truncf %0 : vector<2x8xf32> to vector<2x8xbf16>
    %cst = arith.constant dense<0.000000e+00> : vector<2x512xf32>
    %3 = tpu.matmul %2, %1, %cst {dimension_numbers = #tpu.dot_dimension_numbers<[1], [0], [0], [1], [0, 0, 1, 1], [], []>} : vector<2x8xbf16>, vector<8x512xbf16>, vector<2x512xf32> -> vector<2x512xf32>
    %c0_3 = arith.constant 0 : index
    %c0_4 = arith.constant 0 : index
    %4 = vector.load %arg2[%c0_3, %c0_4] : memref<1x512xf32, #tpu.memory_space<vmem>>, vector<1x512xf32>
    %5 = vector.broadcast %4 : vector<1x512xf32> to vector<2x512xf32>
    %6 = arith.addf %3, %5 : vector<2x512xf32>
    %cst_5 = arith.constant 0.000000e+00 : f32
    %7 = vector.broadcast %cst_5 : f32 to vector<2x512xf32>
    %8 = arith.maximumf %6, %7 : vector<2x512xf32>
    %c0_6 = arith.constant 0 : index
    %c0_7 = arith.constant 0 : index
    %9 = vector.load %arg3[%c0_6, %c0_7] : memref<512x128xbf16, #tpu.memory_space<vmem>>, vector<512x128xbf16>
    %10 = arith.truncf %8 : vector<2x512xf32> to vector<2x512xbf16>
    %cst_8 = arith.constant dense<0.000000e+00> : vector<2x128xf32>
    %11 = tpu.matmul %10, %9, %cst_8 {dimension_numbers = #tpu.dot_dimension_numbers<[1], [0], [0], [1], [0, 0, 1, 1], [], []>} : vector<2x512xbf16>, vector<512x128xbf16>, vector<2x128xf32> -> vector<2x128xf32>
    %c0_9 = arith.constant 0 : index
    %c0_10 = arith.constant 0 : index
    %12 = vector.load %arg4[%c0_9, %c0_10] : memref<1x128xf32, #tpu.memory_space<vmem>>, vector<1x128xf32>
    %13 = vector.broadcast %12 : vector<1x128xf32> to vector<2x128xf32>
    %14 = arith.addf %11, %13 : vector<2x128xf32>
    %cst_11 = arith.constant 0.000000e+00 : f32
    %15 = vector.broadcast %cst_11 : f32 to vector<2x128xf32>
    %16 = arith.maximumf %14, %15 : vector<2x128xf32>
    %c0_12 = arith.constant 0 : index
    %c0_13 = arith.constant 0 : index
    %17 = vector.load %arg5[%c0_12, %c0_13] : memref<128x2048xbf16, #tpu.memory_space<vmem>>, vector<128x2048xbf16>
    %18 = arith.truncf %16 : vector<2x128xf32> to vector<2x128xbf16>
    %cst_14 = arith.constant dense<0.000000e+00> : vector<2x2048xf32>
    %19 = tpu.matmul %18, %17, %cst_14 {dimension_numbers = #tpu.dot_dimension_numbers<[1], [0], [0], [1], [0, 0, 1, 1], [], []>} : vector<2x128xbf16>, vector<128x2048xbf16>, vector<2x2048xf32> -> vector<2x2048xf32>
    %20 = vector.extract_strided_slice %19 {offsets = [0, 0], sizes = [2, 128], strides = [1, 1]} : vector<2x2048xf32> to vector<2x128xf32>
    %21 = vector.extract_strided_slice %19 {offsets = [0, 128], sizes = [2, 128], strides = [1, 1]} : vector<2x2048xf32> to vector<2x128xf32>
    %22 = vector.extract_strided_slice %19 {offsets = [0, 256], sizes = [2, 128], strides = [1, 1]} : vector<2x2048xf32> to vector<2x128xf32>
    %23 = vector.extract_strided_slice %19 {offsets = [0, 384], sizes = [2, 128], strides = [1, 1]} : vector<2x2048xf32> to vector<2x128xf32>
    %24 = vector.extract_strided_slice %19 {offsets = [0, 512], sizes = [2, 128], strides = [1, 1]} : vector<2x2048xf32> to vector<2x128xf32>
    %25 = vector.extract_strided_slice %19 {offsets = [0, 640], sizes = [2, 128], strides = [1, 1]} : vector<2x2048xf32> to vector<2x128xf32>
    %26 = vector.extract_strided_slice %19 {offsets = [0, 768], sizes = [2, 128], strides = [1, 1]} : vector<2x2048xf32> to vector<2x128xf32>
    %27 = vector.extract_strided_slice %19 {offsets = [0, 896], sizes = [2, 128], strides = [1, 1]} : vector<2x2048xf32> to vector<2x128xf32>
    %28 = vector.extract_strided_slice %19 {offsets = [0, 1024], sizes = [2, 128], strides = [1, 1]} : vector<2x2048xf32> to vector<2x128xf32>
    %29 = vector.extract_strided_slice %19 {offsets = [0, 1152], sizes = [2, 128], strides = [1, 1]} : vector<2x2048xf32> to vector<2x128xf32>
    %30 = vector.extract_strided_slice %19 {offsets = [0, 1280], sizes = [2, 128], strides = [1, 1]} : vector<2x2048xf32> to vector<2x128xf32>
    %31 = vector.extract_strided_slice %19 {offsets = [0, 1408], sizes = [2, 128], strides = [1, 1]} : vector<2x2048xf32> to vector<2x128xf32>
    %32 = vector.extract_strided_slice %19 {offsets = [0, 1536], sizes = [2, 128], strides = [1, 1]} : vector<2x2048xf32> to vector<2x128xf32>
    %33 = vector.extract_strided_slice %19 {offsets = [0, 1664], sizes = [2, 128], strides = [1, 1]} : vector<2x2048xf32> to vector<2x128xf32>
    %34 = vector.extract_strided_slice %19 {offsets = [0, 1792], sizes = [2, 128], strides = [1, 1]} : vector<2x2048xf32> to vector<2x128xf32>
    %35 = vector.extract_strided_slice %19 {offsets = [0, 1920], sizes = [2, 128], strides = [1, 1]} : vector<2x2048xf32> to vector<2x128xf32>
    %36 = tpu.concatenate %25, %27, %33, %35 in 0 : vector<2x128xf32>, vector<2x128xf32>, vector<2x128xf32>, vector<2x128xf32> -> vector<8x128xf32>
    %c0_15 = arith.constant 0 : index
    %c0_16 = arith.constant 0 : index
    %c0_17 = arith.constant 0 : index
    %37 = vector.load %arg7[%c0_15, %c0_16, %c0_17] : memref<4x2x8xbf16, #tpu.memory_space<vmem>>, vector<1x2x8xbf16>
    %38 = vector.shape_cast %37 : vector<1x2x8xbf16> to vector<2x8xbf16>
    %39 = arith.truncf %36 : vector<8x128xf32> to vector<8x128xbf16>
    %cst_18 = arith.constant dense<0.000000e+00> : vector<2x128xf32>
    %40 = tpu.matmul %38, %39, %cst_18 {dimension_numbers = #tpu.dot_dimension_numbers<[1], [0], [0], [1], [0, 0, 1, 1], [], []>} : vector<2x8xbf16>, vector<8x128xbf16>, vector<2x128xf32> -> vector<2x128xf32>
    %41 = tpu.concatenate %24, %26, %32, %34 in 0 : vector<2x128xf32>, vector<2x128xf32>, vector<2x128xf32>, vector<2x128xf32> -> vector<8x128xf32>
    %c1 = arith.constant 1 : index
    %c0_19 = arith.constant 0 : index
    %c0_20 = arith.constant 0 : index
    %42 = vector.load %arg7[%c1, %c0_19, %c0_20] : memref<4x2x8xbf16, #tpu.memory_space<vmem>>, vector<1x2x8xbf16>
    %43 = vector.shape_cast %42 : vector<1x2x8xbf16> to vector<2x8xbf16>
    %44 = arith.truncf %41 : vector<8x128xf32> to vector<8x128xbf16>
    %cst_21 = arith.constant dense<0.000000e+00> : vector<2x128xf32>
    %45 = tpu.matmul %43, %44, %cst_21 {dimension_numbers = #tpu.dot_dimension_numbers<[1], [0], [0], [1], [0, 0, 1, 1], [], []>} : vector<2x8xbf16>, vector<8x128xbf16>, vector<2x128xf32> -> vector<2x128xf32>
    %46 = tpu.concatenate %21, %23, %29, %31 in 0 : vector<2x128xf32>, vector<2x128xf32>, vector<2x128xf32>, vector<2x128xf32> -> vector<8x128xf32>
    %c2 = arith.constant 2 : index
    %c0_22 = arith.constant 0 : index
    %c0_23 = arith.constant 0 : index
    %47 = vector.load %arg7[%c2, %c0_22, %c0_23] : memref<4x2x8xbf16, #tpu.memory_space<vmem>>, vector<1x2x8xbf16>
    %48 = vector.shape_cast %47 : vector<1x2x8xbf16> to vector<2x8xbf16>
    %49 = arith.truncf %46 : vector<8x128xf32> to vector<8x128xbf16>
    %cst_24 = arith.constant dense<0.000000e+00> : vector<2x128xf32>
    %50 = tpu.matmul %48, %49, %cst_24 {dimension_numbers = #tpu.dot_dimension_numbers<[1], [0], [0], [1], [0, 0, 1, 1], [], []>} : vector<2x8xbf16>, vector<8x128xbf16>, vector<2x128xf32> -> vector<2x128xf32>
    %51 = tpu.concatenate %20, %22, %28, %30 in 0 : vector<2x128xf32>, vector<2x128xf32>, vector<2x128xf32>, vector<2x128xf32> -> vector<8x128xf32>
    %c3 = arith.constant 3 : index
    %c0_25 = arith.constant 0 : index
    %c0_26 = arith.constant 0 : index
    %52 = vector.load %arg7[%c3, %c0_25, %c0_26] : memref<4x2x8xbf16, #tpu.memory_space<vmem>>, vector<1x2x8xbf16>
    %53 = vector.shape_cast %52 : vector<1x2x8xbf16> to vector<2x8xbf16>
    %54 = arith.truncf %51 : vector<8x128xf32> to vector<8x128xbf16>
    %cst_27 = arith.constant dense<0.000000e+00> : vector<2x128xf32>
    %55 = tpu.matmul %53, %54, %cst_27 {dimension_numbers = #tpu.dot_dimension_numbers<[1], [0], [0], [1], [0, 0, 1, 1], [], []>} : vector<2x8xbf16>, vector<8x128xbf16>, vector<2x128xf32> -> vector<2x128xf32>
    %56 = tpu.concatenate %40, %45, %50, %55 in 0 : vector<2x128xf32>, vector<2x128xf32>, vector<2x128xf32>, vector<2x128xf32> -> vector<8x128xf32>
    %c0_28 = arith.constant 0 : index
    %c0_29 = arith.constant 0 : index
    %57 = vector.load %arg6[%c0_28, %c0_29] : memref<1x128xf32, #tpu.memory_space<vmem>>, vector<1x128xf32>
    %58 = vector.broadcast %57 : vector<1x128xf32> to vector<8x128xf32>
    %59 = arith.addf %56, %58 : vector<8x128xf32>
    %cst_30 = arith.constant 0.000000e+00 : f32
    %60 = vector.broadcast %cst_30 : f32 to vector<8x128xf32>
    %61 = arith.maximumf %59, %60 : vector<8x128xf32>
    %c0_31 = arith.constant 0 : index
    %c0_32 = arith.constant 0 : index
    %62 = vector.load %arg8[%c0_31, %c0_32] : memref<128x2048xbf16, #tpu.memory_space<vmem>>, vector<128x2048xbf16>
    %63 = arith.truncf %61 : vector<8x128xf32> to vector<8x128xbf16>
    %cst_33 = arith.constant dense<0.000000e+00> : vector<8x2048xf32>
    %64 = tpu.matmul %63, %62, %cst_33 {dimension_numbers = #tpu.dot_dimension_numbers<[1], [0], [0], [1], [0, 0, 1, 1], [], []>} : vector<8x128xbf16>, vector<128x2048xbf16>, vector<8x2048xf32> -> vector<8x2048xf32>
    %65 = vector.extract_strided_slice %64 {offsets = [0, 0], sizes = [8, 128], strides = [1, 1]} : vector<8x2048xf32> to vector<8x128xf32>
    %66 = vector.extract_strided_slice %64 {offsets = [0, 128], sizes = [8, 128], strides = [1, 1]} : vector<8x2048xf32> to vector<8x128xf32>
    %67 = vector.extract_strided_slice %64 {offsets = [0, 256], sizes = [8, 128], strides = [1, 1]} : vector<8x2048xf32> to vector<8x128xf32>
    %68 = vector.extract_strided_slice %64 {offsets = [0, 384], sizes = [8, 128], strides = [1, 1]} : vector<8x2048xf32> to vector<8x128xf32>
    %69 = vector.extract_strided_slice %64 {offsets = [0, 512], sizes = [8, 128], strides = [1, 1]} : vector<8x2048xf32> to vector<8x128xf32>
    %70 = vector.extract_strided_slice %64 {offsets = [0, 640], sizes = [8, 128], strides = [1, 1]} : vector<8x2048xf32> to vector<8x128xf32>
    %71 = vector.extract_strided_slice %64 {offsets = [0, 768], sizes = [8, 128], strides = [1, 1]} : vector<8x2048xf32> to vector<8x128xf32>
    %72 = vector.extract_strided_slice %64 {offsets = [0, 896], sizes = [8, 128], strides = [1, 1]} : vector<8x2048xf32> to vector<8x128xf32>
    %73 = vector.extract_strided_slice %64 {offsets = [0, 1024], sizes = [8, 128], strides = [1, 1]} : vector<8x2048xf32> to vector<8x128xf32>
    %74 = vector.extract_strided_slice %64 {offsets = [0, 1152], sizes = [8, 128], strides = [1, 1]} : vector<8x2048xf32> to vector<8x128xf32>
    %75 = vector.extract_strided_slice %64 {offsets = [0, 1280], sizes = [8, 128], strides = [1, 1]} : vector<8x2048xf32> to vector<8x128xf32>
    %76 = vector.extract_strided_slice %64 {offsets = [0, 1408], sizes = [8, 128], strides = [1, 1]} : vector<8x2048xf32> to vector<8x128xf32>
    %77 = vector.extract_strided_slice %64 {offsets = [0, 1536], sizes = [8, 128], strides = [1, 1]} : vector<8x2048xf32> to vector<8x128xf32>
    %78 = vector.extract_strided_slice %64 {offsets = [0, 1664], sizes = [8, 128], strides = [1, 1]} : vector<8x2048xf32> to vector<8x128xf32>
    %79 = vector.extract_strided_slice %64 {offsets = [0, 1792], sizes = [8, 128], strides = [1, 1]} : vector<8x2048xf32> to vector<8x128xf32>
    %80 = vector.extract_strided_slice %64 {offsets = [0, 1920], sizes = [8, 128], strides = [1, 1]} : vector<8x2048xf32> to vector<8x128xf32>
    %81 = tpu.concatenate %70, %72, %78, %80 in 0 : vector<8x128xf32>, vector<8x128xf32>, vector<8x128xf32>, vector<8x128xf32> -> vector<32x128xf32>
    %c0_34 = arith.constant 0 : index
    %c0_35 = arith.constant 0 : index
    %c0_36 = arith.constant 0 : index
    %82 = vector.load %arg10[%c0_34, %c0_35, %c0_36] : memref<4x8x32xbf16, #tpu.memory_space<vmem>>, vector<1x8x32xbf16>
    %83 = vector.shape_cast %82 : vector<1x8x32xbf16> to vector<8x32xbf16>
    %84 = arith.truncf %81 : vector<32x128xf32> to vector<32x128xbf16>
    %cst_37 = arith.constant dense<0.000000e+00> : vector<8x128xf32>
    %85 = tpu.matmul %83, %84, %cst_37 {dimension_numbers = #tpu.dot_dimension_numbers<[1], [0], [0], [1], [0, 0, 1, 1], [], []>} : vector<8x32xbf16>, vector<32x128xbf16>, vector<8x128xf32> -> vector<8x128xf32>
    %86 = tpu.concatenate %69, %71, %77, %79 in 0 : vector<8x128xf32>, vector<8x128xf32>, vector<8x128xf32>, vector<8x128xf32> -> vector<32x128xf32>
    %c1_38 = arith.constant 1 : index
    %c0_39 = arith.constant 0 : index
    %c0_40 = arith.constant 0 : index
    %87 = vector.load %arg10[%c1_38, %c0_39, %c0_40] : memref<4x8x32xbf16, #tpu.memory_space<vmem>>, vector<1x8x32xbf16>
    %88 = vector.shape_cast %87 : vector<1x8x32xbf16> to vector<8x32xbf16>
    %89 = arith.truncf %86 : vector<32x128xf32> to vector<32x128xbf16>
    %cst_41 = arith.constant dense<0.000000e+00> : vector<8x128xf32>
    %90 = tpu.matmul %88, %89, %cst_41 {dimension_numbers = #tpu.dot_dimension_numbers<[1], [0], [0], [1], [0, 0, 1, 1], [], []>} : vector<8x32xbf16>, vector<32x128xbf16>, vector<8x128xf32> -> vector<8x128xf32>
    %91 = tpu.concatenate %66, %68, %74, %76 in 0 : vector<8x128xf32>, vector<8x128xf32>, vector<8x128xf32>, vector<8x128xf32> -> vector<32x128xf32>
    %c2_42 = arith.constant 2 : index
    %c0_43 = arith.constant 0 : index
    %c0_44 = arith.constant 0 : index
    %92 = vector.load %arg10[%c2_42, %c0_43, %c0_44] : memref<4x8x32xbf16, #tpu.memory_space<vmem>>, vector<1x8x32xbf16>
    %93 = vector.shape_cast %92 : vector<1x8x32xbf16> to vector<8x32xbf16>
    %94 = arith.truncf %91 : vector<32x128xf32> to vector<32x128xbf16>
    %cst_45 = arith.constant dense<0.000000e+00> : vector<8x128xf32>
    %95 = tpu.matmul %93, %94, %cst_45 {dimension_numbers = #tpu.dot_dimension_numbers<[1], [0], [0], [1], [0, 0, 1, 1], [], []>} : vector<8x32xbf16>, vector<32x128xbf16>, vector<8x128xf32> -> vector<8x128xf32>
    %96 = tpu.concatenate %65, %67, %73, %75 in 0 : vector<8x128xf32>, vector<8x128xf32>, vector<8x128xf32>, vector<8x128xf32> -> vector<32x128xf32>
    %c3_46 = arith.constant 3 : index
    %c0_47 = arith.constant 0 : index
    %c0_48 = arith.constant 0 : index
    %97 = vector.load %arg10[%c3_46, %c0_47, %c0_48] : memref<4x8x32xbf16, #tpu.memory_space<vmem>>, vector<1x8x32xbf16>
    %98 = vector.shape_cast %97 : vector<1x8x32xbf16> to vector<8x32xbf16>
    %99 = arith.truncf %96 : vector<32x128xf32> to vector<32x128xbf16>
    %cst_49 = arith.constant dense<0.000000e+00> : vector<8x128xf32>
    %100 = tpu.matmul %98, %99, %cst_49 {dimension_numbers = #tpu.dot_dimension_numbers<[1], [0], [0], [1], [0, 0, 1, 1], [], []>} : vector<8x32xbf16>, vector<32x128xbf16>, vector<8x128xf32> -> vector<8x128xf32>
    %101 = tpu.concatenate %85, %90, %95, %100 in 0 : vector<8x128xf32>, vector<8x128xf32>, vector<8x128xf32>, vector<8x128xf32> -> vector<32x128xf32>
    %c0_50 = arith.constant 0 : index
    %c0_51 = arith.constant 0 : index
    %102 = vector.load %arg9[%c0_50, %c0_51] : memref<1x128xf32, #tpu.memory_space<vmem>>, vector<1x128xf32>
    %103 = vector.broadcast %102 : vector<1x128xf32> to vector<32x128xf32>
    %104 = arith.addf %101, %103 : vector<32x128xf32>
    %cst_52 = arith.constant 0.000000e+00 : f32
    %105 = vector.broadcast %cst_52 : f32 to vector<32x128xf32>
    %106 = arith.maximumf %104, %105 : vector<32x128xf32>
    %c0_53 = arith.constant 0 : index
    %c0_54 = arith.constant 0 : index
    %107 = vector.load %arg11[%c0_53, %c0_54] : memref<128x2048xbf16, #tpu.memory_space<vmem>>, vector<128x2048xbf16>
    %108 = arith.truncf %106 : vector<32x128xf32> to vector<32x128xbf16>
    %cst_55 = arith.constant dense<0.000000e+00> : vector<32x2048xf32>
    %109 = tpu.matmul %108, %107, %cst_55 {dimension_numbers = #tpu.dot_dimension_numbers<[1], [0], [0], [1], [0, 0, 1, 1], [], []>} : vector<32x128xbf16>, vector<128x2048xbf16>, vector<32x2048xf32> -> vector<32x2048xf32>
    %110 = vector.extract_strided_slice %109 {offsets = [0, 0], sizes = [32, 128], strides = [1, 1]} : vector<32x2048xf32> to vector<32x128xf32>
    %111 = vector.extract_strided_slice %109 {offsets = [0, 128], sizes = [32, 128], strides = [1, 1]} : vector<32x2048xf32> to vector<32x128xf32>
    %112 = vector.extract_strided_slice %109 {offsets = [0, 256], sizes = [32, 128], strides = [1, 1]} : vector<32x2048xf32> to vector<32x128xf32>
    %113 = vector.extract_strided_slice %109 {offsets = [0, 384], sizes = [32, 128], strides = [1, 1]} : vector<32x2048xf32> to vector<32x128xf32>
    %114 = vector.extract_strided_slice %109 {offsets = [0, 512], sizes = [32, 128], strides = [1, 1]} : vector<32x2048xf32> to vector<32x128xf32>
    %115 = vector.extract_strided_slice %109 {offsets = [0, 640], sizes = [32, 128], strides = [1, 1]} : vector<32x2048xf32> to vector<32x128xf32>
    %116 = vector.extract_strided_slice %109 {offsets = [0, 768], sizes = [32, 128], strides = [1, 1]} : vector<32x2048xf32> to vector<32x128xf32>
    %117 = vector.extract_strided_slice %109 {offsets = [0, 896], sizes = [32, 128], strides = [1, 1]} : vector<32x2048xf32> to vector<32x128xf32>
    %118 = vector.extract_strided_slice %109 {offsets = [0, 1024], sizes = [32, 128], strides = [1, 1]} : vector<32x2048xf32> to vector<32x128xf32>
    %119 = vector.extract_strided_slice %109 {offsets = [0, 1152], sizes = [32, 128], strides = [1, 1]} : vector<32x2048xf32> to vector<32x128xf32>
    %120 = vector.extract_strided_slice %109 {offsets = [0, 1280], sizes = [32, 128], strides = [1, 1]} : vector<32x2048xf32> to vector<32x128xf32>
    %121 = vector.extract_strided_slice %109 {offsets = [0, 1408], sizes = [32, 128], strides = [1, 1]} : vector<32x2048xf32> to vector<32x128xf32>
    %122 = vector.extract_strided_slice %109 {offsets = [0, 1536], sizes = [32, 128], strides = [1, 1]} : vector<32x2048xf32> to vector<32x128xf32>
    %123 = vector.extract_strided_slice %109 {offsets = [0, 1664], sizes = [32, 128], strides = [1, 1]} : vector<32x2048xf32> to vector<32x128xf32>
    %124 = vector.extract_strided_slice %109 {offsets = [0, 1792], sizes = [32, 128], strides = [1, 1]} : vector<32x2048xf32> to vector<32x128xf32>
    %125 = vector.extract_strided_slice %109 {offsets = [0, 1920], sizes = [32, 128], strides = [1, 1]} : vector<32x2048xf32> to vector<32x128xf32>
    %126 = tpu.concatenate %115, %117, %123, %125 in 0 : vector<32x128xf32>, vector<32x128xf32>, vector<32x128xf32>, vector<32x128xf32> -> vector<128x128xf32>
    %c0_56 = arith.constant 0 : index
    %c0_57 = arith.constant 0 : index
    %c0_58 = arith.constant 0 : index
    %127 = vector.load %arg13[%c0_56, %c0_57, %c0_58] : memref<4x32x128xbf16, #tpu.memory_space<vmem>>, vector<1x32x128xbf16>
    %128 = vector.shape_cast %127 : vector<1x32x128xbf16> to vector<32x128xbf16>
    %129 = arith.truncf %126 : vector<128x128xf32> to vector<128x128xbf16>
    %cst_59 = arith.constant dense<0.000000e+00> : vector<32x128xf32>
    %130 = tpu.matmul %128, %129, %cst_59 {dimension_numbers = #tpu.dot_dimension_numbers<[1], [0], [0], [1], [0, 0, 1, 1], [], []>} : vector<32x128xbf16>, vector<128x128xbf16>, vector<32x128xf32> -> vector<32x128xf32>
    %131 = tpu.concatenate %114, %116, %122, %124 in 0 : vector<32x128xf32>, vector<32x128xf32>, vector<32x128xf32>, vector<32x128xf32> -> vector<128x128xf32>
    %c1_60 = arith.constant 1 : index
    %c0_61 = arith.constant 0 : index
    %c0_62 = arith.constant 0 : index
    %132 = vector.load %arg13[%c1_60, %c0_61, %c0_62] : memref<4x32x128xbf16, #tpu.memory_space<vmem>>, vector<1x32x128xbf16>
    %133 = vector.shape_cast %132 : vector<1x32x128xbf16> to vector<32x128xbf16>
    %134 = arith.truncf %131 : vector<128x128xf32> to vector<128x128xbf16>
    %cst_63 = arith.constant dense<0.000000e+00> : vector<32x128xf32>
    %135 = tpu.matmul %133, %134, %cst_63 {dimension_numbers = #tpu.dot_dimension_numbers<[1], [0], [0], [1], [0, 0, 1, 1], [], []>} : vector<32x128xbf16>, vector<128x128xbf16>, vector<32x128xf32> -> vector<32x128xf32>
    %136 = tpu.concatenate %111, %113, %119, %121 in 0 : vector<32x128xf32>, vector<32x128xf32>, vector<32x128xf32>, vector<32x128xf32> -> vector<128x128xf32>
    %c2_64 = arith.constant 2 : index
    %c0_65 = arith.constant 0 : index
    %c0_66 = arith.constant 0 : index
    %137 = vector.load %arg13[%c2_64, %c0_65, %c0_66] : memref<4x32x128xbf16, #tpu.memory_space<vmem>>, vector<1x32x128xbf16>
    %138 = vector.shape_cast %137 : vector<1x32x128xbf16> to vector<32x128xbf16>
    %139 = arith.truncf %136 : vector<128x128xf32> to vector<128x128xbf16>
    %cst_67 = arith.constant dense<0.000000e+00> : vector<32x128xf32>
    %140 = tpu.matmul %138, %139, %cst_67 {dimension_numbers = #tpu.dot_dimension_numbers<[1], [0], [0], [1], [0, 0, 1, 1], [], []>} : vector<32x128xbf16>, vector<128x128xbf16>, vector<32x128xf32> -> vector<32x128xf32>
    %141 = tpu.concatenate %110, %112, %118, %120 in 0 : vector<32x128xf32>, vector<32x128xf32>, vector<32x128xf32>, vector<32x128xf32> -> vector<128x128xf32>
    %c3_68 = arith.constant 3 : index
    %c0_69 = arith.constant 0 : index
    %c0_70 = arith.constant 0 : index
    %142 = vector.load %arg13[%c3_68, %c0_69, %c0_70] : memref<4x32x128xbf16, #tpu.memory_space<vmem>>, vector<1x32x128xbf16>
    %143 = vector.shape_cast %142 : vector<1x32x128xbf16> to vector<32x128xbf16>
    %144 = arith.truncf %141 : vector<128x128xf32> to vector<128x128xbf16>
    %cst_71 = arith.constant dense<0.000000e+00> : vector<32x128xf32>
    %145 = tpu.matmul %143, %144, %cst_71 {dimension_numbers = #tpu.dot_dimension_numbers<[1], [0], [0], [1], [0, 0, 1, 1], [], []>} : vector<32x128xbf16>, vector<128x128xbf16>, vector<32x128xf32> -> vector<32x128xf32>
    %146 = tpu.concatenate %130, %135, %140, %145 in 0 : vector<32x128xf32>, vector<32x128xf32>, vector<32x128xf32>, vector<32x128xf32> -> vector<128x128xf32>
    %c0_72 = arith.constant 0 : index
    %c0_73 = arith.constant 0 : index
    %147 = vector.load %arg12[%c0_72, %c0_73] : memref<1x128xf32, #tpu.memory_space<vmem>>, vector<1x128xf32>
    %148 = vector.broadcast %147 : vector<1x128xf32> to vector<128x128xf32>
    %149 = arith.addf %146, %148 : vector<128x128xf32>
    %cst_74 = arith.constant 0.000000e+00 : f32
    %150 = vector.broadcast %cst_74 : f32 to vector<128x128xf32>
    %151 = arith.maximumf %149, %150 : vector<128x128xf32>
    %c0_75 = arith.constant 0 : index
    %c0_76 = arith.constant 0 : index
    %152 = vector.load %arg14[%c0_75, %c0_76] : memref<128x2048xbf16, #tpu.memory_space<vmem>>, vector<128x2048xbf16>
    %153 = arith.truncf %151 : vector<128x128xf32> to vector<128x128xbf16>
    %cst_77 = arith.constant dense<0.000000e+00> : vector<128x2048xf32>
    %154 = tpu.matmul %153, %152, %cst_77 {dimension_numbers = #tpu.dot_dimension_numbers<[1], [0], [0], [1], [0, 0, 1, 1], [], []>} : vector<128x128xbf16>, vector<128x2048xbf16>, vector<128x2048xf32> -> vector<128x2048xf32>
    %155 = vector.extract_strided_slice %154 {offsets = [0, 0], sizes = [128, 128], strides = [1, 1]} : vector<128x2048xf32> to vector<128x128xf32>
    %156 = vector.extract_strided_slice %154 {offsets = [0, 128], sizes = [128, 128], strides = [1, 1]} : vector<128x2048xf32> to vector<128x128xf32>
    %157 = vector.extract_strided_slice %154 {offsets = [0, 256], sizes = [128, 128], strides = [1, 1]} : vector<128x2048xf32> to vector<128x128xf32>
    %158 = vector.extract_strided_slice %154 {offsets = [0, 384], sizes = [128, 128], strides = [1, 1]} : vector<128x2048xf32> to vector<128x128xf32>
    %159 = vector.extract_strided_slice %154 {offsets = [0, 512], sizes = [128, 128], strides = [1, 1]} : vector<128x2048xf32> to vector<128x128xf32>
    %160 = vector.extract_strided_slice %154 {offsets = [0, 640], sizes = [128, 128], strides = [1, 1]} : vector<128x2048xf32> to vector<128x128xf32>
    %161 = vector.extract_strided_slice %154 {offsets = [0, 768], sizes = [128, 128], strides = [1, 1]} : vector<128x2048xf32> to vector<128x128xf32>
    %162 = vector.extract_strided_slice %154 {offsets = [0, 896], sizes = [128, 128], strides = [1, 1]} : vector<128x2048xf32> to vector<128x128xf32>
    %163 = vector.extract_strided_slice %154 {offsets = [0, 1024], sizes = [128, 128], strides = [1, 1]} : vector<128x2048xf32> to vector<128x128xf32>
    %164 = vector.extract_strided_slice %154 {offsets = [0, 1152], sizes = [128, 128], strides = [1, 1]} : vector<128x2048xf32> to vector<128x128xf32>
    %165 = vector.extract_strided_slice %154 {offsets = [0, 1280], sizes = [128, 128], strides = [1, 1]} : vector<128x2048xf32> to vector<128x128xf32>
    %166 = vector.extract_strided_slice %154 {offsets = [0, 1408], sizes = [128, 128], strides = [1, 1]} : vector<128x2048xf32> to vector<128x128xf32>
    %167 = vector.extract_strided_slice %154 {offsets = [0, 1536], sizes = [128, 128], strides = [1, 1]} : vector<128x2048xf32> to vector<128x128xf32>
    %168 = vector.extract_strided_slice %154 {offsets = [0, 1664], sizes = [128, 128], strides = [1, 1]} : vector<128x2048xf32> to vector<128x128xf32>
    %169 = vector.extract_strided_slice %154 {offsets = [0, 1792], sizes = [128, 128], strides = [1, 1]} : vector<128x2048xf32> to vector<128x128xf32>
    %170 = vector.extract_strided_slice %154 {offsets = [0, 1920], sizes = [128, 128], strides = [1, 1]} : vector<128x2048xf32> to vector<128x128xf32>
    %171 = tpu.concatenate %160, %162, %168, %170 in 0 : vector<128x128xf32>, vector<128x128xf32>, vector<128x128xf32>, vector<128x128xf32> -> vector<512x128xf32>
    %c0_78 = arith.constant 0 : index
    %c0_79 = arith.constant 0 : index
    %c0_80 = arith.constant 0 : index
    %172 = vector.load %arg16[%c0_78, %c0_79, %c0_80] : memref<4x128x512xbf16, #tpu.memory_space<vmem>>, vector<1x128x512xbf16>
    %173 = vector.shape_cast %172 : vector<1x128x512xbf16> to vector<128x512xbf16>
    %174 = arith.truncf %171 : vector<512x128xf32> to vector<512x128xbf16>
    %cst_81 = arith.constant dense<0.000000e+00> : vector<128x128xf32>
    %175 = tpu.matmul %173, %174, %cst_81 {dimension_numbers = #tpu.dot_dimension_numbers<[1], [0], [0], [1], [0, 0, 1, 1], [], []>} : vector<128x512xbf16>, vector<512x128xbf16>, vector<128x128xf32> -> vector<128x128xf32>
    %176 = tpu.concatenate %159, %161, %167, %169 in 0 : vector<128x128xf32>, vector<128x128xf32>, vector<128x128xf32>, vector<128x128xf32> -> vector<512x128xf32>
    %c1_82 = arith.constant 1 : index
    %c0_83 = arith.constant 0 : index
    %c0_84 = arith.constant 0 : index
    %177 = vector.load %arg16[%c1_82, %c0_83, %c0_84] : memref<4x128x512xbf16, #tpu.memory_space<vmem>>, vector<1x128x512xbf16>
    %178 = vector.shape_cast %177 : vector<1x128x512xbf16> to vector<128x512xbf16>
    %179 = arith.truncf %176 : vector<512x128xf32> to vector<512x128xbf16>
    %cst_85 = arith.constant dense<0.000000e+00> : vector<128x128xf32>
    %180 = tpu.matmul %178, %179, %cst_85 {dimension_numbers = #tpu.dot_dimension_numbers<[1], [0], [0], [1], [0, 0, 1, 1], [], []>} : vector<128x512xbf16>, vector<512x128xbf16>, vector<128x128xf32> -> vector<128x128xf32>
    %181 = tpu.concatenate %156, %158, %164, %166 in 0 : vector<128x128xf32>, vector<128x128xf32>, vector<128x128xf32>, vector<128x128xf32> -> vector<512x128xf32>
    %c2_86 = arith.constant 2 : index
    %c0_87 = arith.constant 0 : index
    %c0_88 = arith.constant 0 : index
    %182 = vector.load %arg16[%c2_86, %c0_87, %c0_88] : memref<4x128x512xbf16, #tpu.memory_space<vmem>>, vector<1x128x512xbf16>
    %183 = vector.shape_cast %182 : vector<1x128x512xbf16> to vector<128x512xbf16>
    %184 = arith.truncf %181 : vector<512x128xf32> to vector<512x128xbf16>
    %cst_89 = arith.constant dense<0.000000e+00> : vector<128x128xf32>
    %185 = tpu.matmul %183, %184, %cst_89 {dimension_numbers = #tpu.dot_dimension_numbers<[1], [0], [0], [1], [0, 0, 1, 1], [], []>} : vector<128x512xbf16>, vector<512x128xbf16>, vector<128x128xf32> -> vector<128x128xf32>
    %186 = tpu.concatenate %155, %157, %163, %165 in 0 : vector<128x128xf32>, vector<128x128xf32>, vector<128x128xf32>, vector<128x128xf32> -> vector<512x128xf32>
    %c3_90 = arith.constant 3 : index
    %c0_91 = arith.constant 0 : index
    %c0_92 = arith.constant 0 : index
    %187 = vector.load %arg16[%c3_90, %c0_91, %c0_92] : memref<4x128x512xbf16, #tpu.memory_space<vmem>>, vector<1x128x512xbf16>
    %188 = vector.shape_cast %187 : vector<1x128x512xbf16> to vector<128x512xbf16>
    %189 = arith.truncf %186 : vector<512x128xf32> to vector<512x128xbf16>
    %cst_93 = arith.constant dense<0.000000e+00> : vector<128x128xf32>
    %190 = tpu.matmul %188, %189, %cst_93 {dimension_numbers = #tpu.dot_dimension_numbers<[1], [0], [0], [1], [0, 0, 1, 1], [], []>} : vector<128x512xbf16>, vector<512x128xbf16>, vector<128x128xf32> -> vector<128x128xf32>
    %191 = tpu.concatenate %175, %180, %185, %190 in 0 : vector<128x128xf32>, vector<128x128xf32>, vector<128x128xf32>, vector<128x128xf32> -> vector<512x128xf32>
    %c0_94 = arith.constant 0 : index
    %c0_95 = arith.constant 0 : index
    %192 = vector.load %arg15[%c0_94, %c0_95] : memref<1x128xf32, #tpu.memory_space<vmem>>, vector<1x128xf32>
    %193 = vector.broadcast %192 : vector<1x128xf32> to vector<512x128xf32>
    %194 = arith.addf %191, %193 : vector<512x128xf32>
    %c0_96 = arith.constant 0 : index
    %c0_97 = arith.constant 0 : index
    %195 = vector.load %arg17[%c0_96, %c0_97] : memref<512x128xf32, #tpu.memory_space<vmem>>, vector<512x128xf32>
    tpu.vector_store %arg17[%c0_96, %c0_97], %194 {strides = array<i32>} : memref<512x128xf32, #tpu.memory_space<vmem>>, vector<512x128xf32>,
    return
  }
}

</mosaic_0001>

<llo_original>
// kernel: forward.1
$region0: #{forward.1}
  #allocation0 [shape = 'u32[]', space=smem, size = 0x4, offset = 0x4, fixed_abs, tag = 'smem constant byte address 0x4 - core index']
  #allocation1 [shape = 'u32[72,128]{1,0:T(1,128)}', space=vmem, size = 0x9000, scoped, tag = 'internal scratch']
  %s0 = inlined_call_operand.hbm [shape: f32[2,8], index: 0, kind: input, shape index: {}]
  %s1 = inlined_call_operand.hbm [shape: bf16[8,512], index: 1, kind: input, shape index: {}]
  %s2 = inlined_call_operand.vmem [shape: f32[1,512], index: 2, kind: input, shape index: {}]
  %s3 = inlined_call_operand.hbm [shape: bf16[512,128], index: 3, kind: input, shape index: {}]
  %s4 = inlined_call_operand.hbm [shape: f32[1,128], index: 4, kind: input, shape index: {}]
  %s5 = inlined_call_operand.hbm [shape: bf16[128,2048], index: 5, kind: input, shape index: {}]
  %s6 = inlined_call_operand.vmem [shape: f32[1,128], index: 6, kind: input, shape index: {}]
  %s7 = inlined_call_operand.vmem [shape: bf16[4,2,8], index: 7, kind: input, shape index: {}]
  %s8 = inlined_call_operand.hbm [shape: bf16[128,2048], index: 8, kind: input, shape index: {}]
  %s9 = inlined_call_operand.vmem [shape: f32[1,128], index: 9, kind: input, shape index: {}]
  %s10 = inlined_call_operand.hbm [shape: bf16[4,8,32], index: 10, kind: input, shape index: {}]
  %s11 = inlined_call_operand.hbm [shape: bf16[128,2048], index: 11, kind: input, shape index: {}]
  %s12 = inlined_call_operand.hbm [shape: f32[1,128], index: 12, kind: input, shape index: {}]
  %s13 = inlined_call_operand.hbm [shape: bf16[4,32,128], index: 13, kind: input, shape index: {}]
  %s14 = inlined_call_operand.hbm [shape: bf16[128,2048], index: 14, kind: input, shape index: {}]
  %s15 = inlined_call_operand.hbm [shape: f32[1,128], index: 15, kind: input, shape index: {}]
  %s16 = inlined_call_operand.hbm [shape: bf16[4,128,512], index: 16, kind: input, shape index: {}]
  %s17 = inlined_call_operand.vmem [shape: f32[512,128], index: 17, kind: output, shape index: {}]
  %s18 = sld [smem:[#allocation0]]
  $region130: #{forward.1} parent=0
    _
  %s20 = ssub.s32 1, %s18
  %s21 = scalar_select 0, %s20, %s18
  $region1: #{forward.1} parent=0
    #allocation2 [shape = 'u8[1024]{0}', space=vmem, size = 0x400, scoped, tag = 'input window, operand 0, single buffered']
    #allocation3 [shape = 's32[1]{0}', space=sflag, size = 0x4, scoped, tag = 'scoped memory for forward.1']
    #allocation4 [shape = 'u8[8192]{0}', space=vmem, size = 0x2000, scoped, tag = 'input window, operand 1, single buffered']
    #allocation5 [shape = 's32[1]{0}', space=sflag, size = 0x4, scoped, tag = 'scoped memory for forward.1']
    #allocation6 [shape = 'u8[131072]{0}', space=vmem, size = 0x20000, scoped, tag = 'input window, operand 3, single buffered']
    #allocation7 [shape = 'u8[512]{0}', space=vmem, size = 0x400, scoped, tag = 'input window, operand 4, single buffered']
    #allocation8 [shape = 's32[1]{0}', space=sflag, size = 0x4, scoped, tag = 'scoped memory for forward.1']
    #allocation9 [shape = 'u8[524288]{0}', space=vmem, size = 0x80000, scoped, tag = 'input window, operand 5, single buffered']
    #allocation10 [shape = 'u8[524288]{0}', space=vmem, size = 0x80000, scoped, tag = 'input window, operand 8, single buffered']
    #allocation11 [shape = 's32[1]{0}', space=sflag, size = 0x4, scoped, tag = 'scoped memory for forward.1']
    #allocation12 [shape = 'u8[8192]{0}', space=vmem, size = 0x2000, scoped, tag = 'input window, operand 10, single buffered']
    #allocation13 [shape = 'u8[524288]{0}', space=vmem, size = 0x80000, scoped, tag = 'input window, operand 11, single buffered']
    #allocation14 [shape = 's32[1]{0}', space=sflag, size = 0x4, scoped, tag = 'scoped memory for forward.1']
    #allocation15 [shape = 'u8[512]{0}', space=vmem, size = 0x400, scoped, tag = 'input window, operand 12, single buffered']
    #allocation16 [shape = 'u8[32768]{0}', space=vmem, size = 0x8000, scoped, tag = 'input window, operand 13, single buffered']
    #allocation17 [shape = 's32[1]{0}', space=sflag, size = 0x4, scoped, tag = 'scoped memory for forward.1']
    #allocation18 [shape = 'u8[524288]{0}', space=vmem, size = 0x80000, scoped, tag = 'input window, operand 14, single buffered']
    #allocation19 [shape = 'u8[512]{0}', space=vmem, size = 0x400, scoped, tag = 'input window, operand 15, single buffered']
    #allocation20 [shape = 's32[1]{0}', space=sflag, size = 0x4, scoped, tag = 'scoped memory for forward.1']
    #allocation21 [shape = 'u8[524288]{0}', space=vmem, size = 0x80000, scoped, tag = 'input window, operand 16, single buffered']
    %22 = vsyncpa [#allocation3], 0
    %23 = vsyncpa [#allocation5], 0
    %24 = vsyncpa [#allocation8], 0
    %25 = vsyncpa [#allocation11], 0
    %26 = vsyncpa [#allocation14], 0
    %27 = vsyncpa [#allocation17], 0
    %28 = vsyncpa [#allocation20], 0
    // Predicated region
    $region2: #{forward.1} parent=1 // pred_check
      _
    $region3: #{forward.1} parent=1 // pred_check_branch
      %30 = sbr.rel (0) target = $region5
    $region4: #{forward.1} parent=1 // pred_region
      %32 = vsyncadd [#allocation3], 0
      %s34 = sshll.u32 %s0, 4
      %s35 = int_to_ptr.hbm [resolvable:$true] %s34
      %s36 = sshll.u32 [#allocation2], 4
      %s37 = int_to_ptr.vmem [resolvable:$true] %s36
      %39 = dma.hbm_to_vmem [thread:$0]  %s35, 32, %s37, [#allocation3]
    $region5: #{forward.1} parent=1 // pred_fallthru
      _
    // Predicated region
    $region6: #{forward.1} parent=1 // pred_check
      _
    $region7: #{forward.1} parent=1 // pred_check_branch
      %41 = sbr.rel (0) target = $region9
    $region8: #{forward.1} parent=1 // pred_region
      %43 = vsyncadd [#allocation5], 0
      %s45 = sshll.u32 %s1, 4
      %s46 = int_to_ptr.hbm [resolvable:$true] %s45
      %s47 = sshll.u32 [#allocation4], 4
      %s48 = int_to_ptr.vmem [resolvable:$true] %s47
      %50 = dma.hbm_to_vmem [thread:$0]  %s46, 256, %s48, [#allocation5]
    $region9: #{forward.1} parent=1 // pred_fallthru
      _
    // Predicated region
    $region10: #{forward.1} parent=1 // pred_check
      _
    $region11: #{forward.1} parent=1 // pred_check_branch
      %52 = sbr.rel (0) target = $region13
    $region12: #{forward.1} parent=1 // pred_region
      _
    $region13: #{forward.1} parent=1 // pred_fallthru
      _
    // Predicated region
    $region14: #{forward.1} parent=1 // pred_check
      _
    $region15: #{forward.1} parent=1 // pred_check_branch
      %54 = sbr.rel (0) target = $region17
    $region16: #{forward.1} parent=1 // pred_region
      %56 = vsyncadd [#allocation5], 0
      %s57 = sshll.u32 %s3, 4
      %s58 = int_to_ptr.hbm [resolvable:$true] %s57
      %s59 = sshll.u32 [#allocation6], 4
      %s60 = int_to_ptr.vmem [resolvable:$true] %s59
      %65 = dma.hbm_to_vmem [thread:$0]  %s58, 4096, %s60, [#allocation5], 64, 64, 4
    $region17: #{forward.1} parent=1 // pred_fallthru
      _
    // Predicated region
    $region18: #{forward.1} parent=1 // pred_check
      _
    $region19: #{forward.1} parent=1 // pred_check_branch
      %67 = sbr.rel (0) target = $region21
    $region20: #{forward.1} parent=1 // pred_region
      %69 = vsyncadd [#allocation8], 0
      %s71 = sshll.u32 %s4, 4
      %s72 = int_to_ptr.hbm [resolvable:$true] %s71
      %s73 = sshll.u32 [#allocation7], 4
      %s74 = int_to_ptr.vmem [resolvable:$true] %s73
      %76 = dma.hbm_to_vmem [thread:$0]  %s72, 16, %s74, [#allocation8]
    $region21: #{forward.1} parent=1 // pred_fallthru
      _
    // Predicated region
    $region22: #{forward.1} parent=1 // pred_check
      _
    $region23: #{forward.1} parent=1 // pred_check_branch
      %78 = sbr.rel (0) target = $region25
    $region24: #{forward.1} parent=1 // pred_region
      %80 = vsyncadd [#allocation8], 0
      %s81 = sshll.u32 %s5, 4
      %s82 = int_to_ptr.hbm [resolvable:$true] %s81
      %s83 = sshll.u32 [#allocation9], 4
      %s84 = int_to_ptr.vmem [resolvable:$true] %s83
      %89 = dma.hbm_to_vmem [thread:$0]  %s82, 16384, %s84, [#allocation8], 1024, 1024, 64
    $region25: #{forward.1} parent=1 // pred_fallthru
      _
    // Predicated region
    $region26: #{forward.1} parent=1 // pred_check
      _
    $region27: #{forward.1} parent=1 // pred_check_branch
      %91 = sbr.rel (0) target = $region29
    $region28: #{forward.1} parent=1 // pred_region
      _
    $region29: #{forward.1} parent=1 // pred_fallthru
      _
    // Predicated region
    $region30: #{forward.1} parent=1 // pred_check
      _
    $region31: #{forward.1} parent=1 // pred_check_branch
      %93 = sbr.rel (0) target = $region33
    $region32: #{forward.1} parent=1 // pred_region
      _
    $region33: #{forward.1} parent=1 // pred_fallthru
      _
    // Predicated region
    $region34: #{forward.1} parent=1 // pred_check
      _
    $region35: #{forward.1} parent=1 // pred_check_branch
      %95 = sbr.rel (0) target = $region37
    $region36: #{forward.1} parent=1 // pred_region
      %97 = vsyncadd [#allocation11], 0
      %s98 = sshll.u32 %s8, 4
      %s99 = int_to_ptr.hbm [resolvable:$true] %s98
      %s100 = sshll.u32 [#allocation10], 4
      %s101 = int_to_ptr.vmem [resolvable:$true] %s100
      %106 = dma.hbm_to_vmem [thread:$0]  %s99, 16384, %s101, [#allocation11], 1024, 1024, 64
    $region37: #{forward.1} parent=1 // pred_fallthru
      _
    // Predicated region
    $region38: #{forward.1} parent=1 // pred_check
      _
    $region39: #{forward.1} parent=1 // pred_check_branch
      %108 = sbr.rel (0) target = $region41
    $region40: #{forward.1} parent=1 // pred_region
      _
    $region41: #{forward.1} parent=1 // pred_fallthru
      _
    // Predicated region
    $region42: #{forward.1} parent=1 // pred_check
      _
    $region43: #{forward.1} parent=1 // pred_check_branch
      %110 = sbr.rel (0) target = $region45
    $region44: #{forward.1} parent=1 // pred_region
      %112 = vsyncadd [#allocation11], 0
      %s113 = sshll.u32 %s10, 4
      %s114 = int_to_ptr.hbm [resolvable:$true] %s113
      %s115 = sshll.u32 [#allocation12], 4
      %s116 = int_to_ptr.vmem [resolvable:$true] %s115
      %121 = dma.hbm_to_vmem [thread:$0]  %s114, 256, %s116, [#allocation11], 64, 64, 4
    $region45: #{forward.1} parent=1 // pred_fallthru
      _
    // Predicated region
    $region46: #{forward.1} parent=1 // pred_check
      _
    $region47: #{forward.1} parent=1 // pred_check_branch
      %123 = sbr.rel (0) target = $region49
    $region48: #{forward.1} parent=1 // pred_region
      %125 = vsyncadd [#allocation14], 0
      %s126 = sshll.u32 %s11, 4
      %s127 = int_to_ptr.hbm [resolvable:$true] %s126
      %s128 = sshll.u32 [#allocation13], 4
      %s129 = int_to_ptr.vmem [resolvable:$true] %s128
      %134 = dma.hbm_to_vmem [thread:$0]  %s127, 16384, %s129, [#allocation14], 1024, 1024, 64
    $region49: #{forward.1} parent=1 // pred_fallthru
      _
    // Predicated region
    $region50: #{forward.1} parent=1 // pred_check
      _
    $region51: #{forward.1} parent=1 // pred_check_branch
      %136 = sbr.rel (0) target = $region53
    $region52: #{forward.1} parent=1 // pred_region
      %138 = vsyncadd [#allocation14], 0
      %s140 = sshll.u32 %s12, 4
      %s141 = int_to_ptr.hbm [resolvable:$true] %s140
      %s142 = sshll.u32 [#allocation15], 4
      %s143 = int_to_ptr.vmem [resolvable:$true] %s142
      %145 = dma.hbm_to_vmem [thread:$0]  %s141, 16, %s143, [#allocation14]
    $region53: #{forward.1} parent=1 // pred_fallthru
      _
    // Predicated region
    $region54: #{forward.1} parent=1 // pred_check
      _
    $region55: #{forward.1} parent=1 // pred_check_branch
      %147 = sbr.rel (0) target = $region57
    $region56: #{forward.1} parent=1 // pred_region
      %149 = vsyncadd [#allocation17], 0
      %s150 = sshll.u32 %s13, 4
      %s151 = int_to_ptr.hbm [resolvable:$true] %s150
      %s152 = sshll.u32 [#allocation16], 4
      %s153 = int_to_ptr.vmem [resolvable:$true] %s152
      %158 = dma.hbm_to_vmem [thread:$0]  %s151, 1024, %s153, [#allocation17], 64, 64, 4
    $region57: #{forward.1} parent=1 // pred_fallthru
      _
    // Predicated region
    $region58: #{forward.1} parent=1 // pred_check
      _
    $region59: #{forward.1} parent=1 // pred_check_branch
      %160 = sbr.rel (0) target = $region61
    $region60: #{forward.1} parent=1 // pred_region
      %162 = vsyncadd [#allocation17], 0
      %s163 = sshll.u32 %s14, 4
      %s164 = int_to_ptr.hbm [resolvable:$true] %s163
      %s165 = sshll.u32 [#allocation18], 4
      %s166 = int_to_ptr.vmem [resolvable:$true] %s165
      %171 = dma.hbm_to_vmem [thread:$0]  %s164, 16384, %s166, [#allocation17], 1024, 1024, 64
    $region61: #{forward.1} parent=1 // pred_fallthru
      _
    // Predicated region
    $region62: #{forward.1} parent=1 // pred_check
      _
    $region63: #{forward.1} parent=1 // pred_check_branch
      %173 = sbr.rel (0) target = $region65
    $region64: #{forward.1} parent=1 // pred_region
      %175 = vsyncadd [#allocation20], 0
      %s177 = sshll.u32 %s15, 4
      %s178 = int_to_ptr.hbm [resolvable:$true] %s177
      %s179 = sshll.u32 [#allocation19], 4
      %s180 = int_to_ptr.vmem [resolvable:$true] %s179
      %182 = dma.hbm_to_vmem [thread:$0]  %s178, 16, %s180, [#allocation20]
    $region65: #{forward.1} parent=1 // pred_fallthru
      _
    // Predicated region
    $region66: #{forward.1} parent=1 // pred_check
      _
    $region67: #{forward.1} parent=1 // pred_check_branch
      %184 = sbr.rel (0) target = $region69
    $region68: #{forward.1} parent=1 // pred_region
      %186 = vsyncadd [#allocation20], 0
      %s187 = sshll.u32 %s16, 4
      %s188 = int_to_ptr.hbm [resolvable:$true] %s187
      %s189 = sshll.u32 [#allocation21], 4
      %s190 = int_to_ptr.vmem [resolvable:$true] %s189
      %195 = dma.hbm_to_vmem [thread:$0]  %s188, 16384, %s190, [#allocation20], 256, 256, 16
    $region69: #{forward.1} parent=1 // pred_fallthru
      _
    // Predicated region
    $region70: #{forward.1} parent=1 // pred_check
      _
    $region71: #{forward.1} parent=1 // pred_check_branch
      %197 = sbr.rel (0) target = $region73
    $region72: #{forward.1} parent=1 // pred_region
      %199 = dma.done [#allocation3], 32
    $region73: #{forward.1} parent=1 // pred_fallthru
      _
    // Predicated region
    $region74: #{forward.1} parent=1 // pred_check
      _
    $region75: #{forward.1} parent=1 // pred_check_branch
      %201 = sbr.rel (0) target = $region77
    $region76: #{forward.1} parent=1 // pred_region
      %203 = dma.done [#allocation5], 256
    $region77: #{forward.1} parent=1 // pred_fallthru
      _
    // Predicated region
    $region78: #{forward.1} parent=1 // pred_check
      _
    $region79: #{forward.1} parent=1 // pred_check_branch
      %205 = sbr.rel (0) target = $region81
    $region80: #{forward.1} parent=1 // pred_region
      %207 = dma.done [#allocation5], 4096
    $region81: #{forward.1} parent=1 // pred_fallthru
      _
    // Predicated region
    $region82: #{forward.1} parent=1 // pred_check
      _
    $region83: #{forward.1} parent=1 // pred_check_branch
      %209 = sbr.rel (0) target = $region85
    $region84: #{forward.1} parent=1 // pred_region
      %211 = dma.done [#allocation8], 16
    $region85: #{forward.1} parent=1 // pred_fallthru
      _
    // Predicated region
    $region86: #{forward.1} parent=1 // pred_check
      _
    $region87: #{forward.1} parent=1 // pred_check_branch
      %213 = sbr.rel (0) target = $region89
    $region88: #{forward.1} parent=1 // pred_region
      %215 = dma.done [#allocation8], 16384
    $region89: #{forward.1} parent=1 // pred_fallthru
      _
    // Predicated region
    $region90: #{forward.1} parent=1 // pred_check
      _
    $region91: #{forward.1} parent=1 // pred_check_branch
      %217 = sbr.rel (0) target = $region93
    $region92: #{forward.1} parent=1 // pred_region
      %219 = dma.done [#allocation11], 16384
    $region93: #{forward.1} parent=1 // pred_fallthru
      _
    // Predicated region
    $region94: #{forward.1} parent=1 // pred_check
      _
    $region95: #{forward.1} parent=1 // pred_check_branch
      %221 = sbr.rel (0) target = $region97
    $region96: #{forward.1} parent=1 // pred_region
      %223 = dma.done [#allocation11], 256
    $region97: #{forward.1} parent=1 // pred_fallthru
      _
    // Predicated region
    $region98: #{forward.1} parent=1 // pred_check
      _
    $region99: #{forward.1} parent=1 // pred_check_branch
      %225 = sbr.rel (0) target = $region101
    $region100: #{forward.1} parent=1 // pred_region
      %227 = dma.done [#allocation14], 16384
    $region101: #{forward.1} parent=1 // pred_fallthru
      _
    // Predicated region
    $region102: #{forward.1} parent=1 // pred_check
      _
    $region103: #{forward.1} parent=1 // pred_check_branch
      %229 = sbr.rel (0) target = $region105
    $region104: #{forward.1} parent=1 // pred_region
      %231 = dma.done [#allocation14], 16
    $region105: #{forward.1} parent=1 // pred_fallthru
      _
    // Predicated region
    $region106: #{forward.1} parent=1 // pred_check
      _
    $region107: #{forward.1} parent=1 // pred_check_branch
      %233 = sbr.rel (0) target = $region109
    $region108: #{forward.1} parent=1 // pred_region
      %235 = dma.done [#allocation17], 1024
    $region109: #{forward.1} parent=1 // pred_fallthru
      _
    // Predicated region
    $region110: #{forward.1} parent=1 // pred_check
      _
    $region111: #{forward.1} parent=1 // pred_check_branch
      %237 = sbr.rel (0) target = $region113
    $region112: #{forward.1} parent=1 // pred_region
      %239 = dma.done [#allocation17], 16384
    $region113: #{forward.1} parent=1 // pred_fallthru
      _
    // Predicated region
    $region114: #{forward.1} parent=1 // pred_check
      _
    $region115: #{forward.1} parent=1 // pred_check_branch
      %241 = sbr.rel (0) target = $region117
    $region116: #{forward.1} parent=1 // pred_region
      %243 = dma.done [#allocation20], 16
    $region117: #{forward.1} parent=1 // pred_fallthru
      _
    // Predicated region
    $region118: #{forward.1} parent=1 // pred_check
      _
    $region119: #{forward.1} parent=1 // pred_check_branch
      %245 = sbr.rel (0) target = $region121
    $region120: #{forward.1} parent=1 // pred_region
      %247 = dma.done [#allocation20], 16384
    $region121: #{forward.1} parent=1 // pred_fallthru
      _
    %v249 = vld [vmem:[#allocation2] sm:$0x3]
    %v250 = vld [vmem:[#allocation4] sm:$0xff]
    %v251 = vld [vmem:[#allocation4 + $0x8] sm:$0xff]
    %v252 = vpack.c.bf16 %v249, %v249
    %v253 = vld [vmem:[%s2] sm:$0xf]
    %v255 = vperm.slane %v253, 0
    %v256 = vperm.slane %v253, 1
    %v257 = vperm.slane %v253, 2
    %v258 = vperm.slane %v253, 3
    %v265 = vunpack.c.l.b16 %v250
    %v266 = vunpack.c.h.b16 %v250
    %v267 = vunpack.c.l.b16 %v251
    %v268 = vunpack.c.h.b16 %v251
    %v269 = vpack.c.b16 %v265, %v265
    %v270 = vpack.c.b16 %v266, %v266
    %v271 = vpack.c.b16 %v267, %v267
    %v272 = vpack.c.b16 %v268, %v268
    %vm273 = vcmask 64512
    %v275 = vsel %vm273, %v252, 0
    %vm277 = vcmask 1043456
    %v279 = vsel %vm277, %v269, 0
    %v282 = vsel %vm277, %v270, 0
    %v285 = vsel %vm277, %v271, 0
    %v288 = vsel %vm277, %v272, 0
    %290 = vmatpush.bf16.msra.mxu0 0
    %291 = vmatpush.bf16.msra.mxu0 0
    %292 = vmatpush.bf16.msra.mxu0 0
    %293 = vmatpush.bf16.msra.mxu0 0
    %294 = vmatpush.bf16.msra.mxu0 0
    %295 = vmatpush.bf16.msra.mxu0 0
    %296 = vmatpush.bf16.msra.mxu0 0
    %297 = vmatpush.bf16.msra.mxu0 %v279
    %298 = vmatmul.bf16.gmra.mxu0 %v275
    %v299 = vpop.f32.mrf.mxu0
    %v300 = vadd.f32 %v255, %v299
    %v301 = vpop.f32.mrf.mxu0
    %302 = vdwg.mxu0
    %303 = vmatpush.bf16.msra.mxu0 0
    %304 = vmatpush.bf16.msra.mxu0 0
    %305 = vmatpush.bf16.msra.mxu0 0
    %306 = vmatpush.bf16.msra.mxu0 0
    %307 = vmatpush.bf16.msra.mxu0 0
    %308 = vmatpush.bf16.msra.mxu0 0
    %309 = vmatpush.bf16.msra.mxu0 0
    %310 = vmatpush.bf16.msra.mxu0 %v282
    %311 = vmatmul.bf16.gmra.mxu0 %v275
    %v312 = vpop.f32.mrf.mxu0
    %v313 = vadd.f32 %v256, %v312
    %v314 = vpop.f32.mrf.mxu0
    %315 = vdwg.mxu0
    %316 = vmatpush.bf16.msra.mxu0 0
    %317 = vmatpush.bf16.msra.mxu0 0
    %318 = vmatpush.bf16.msra.mxu0 0
    %319 = vmatpush.bf16.msra.mxu0 0
    %320 = vmatpush.bf16.msra.mxu0 0
    %321 = vmatpush.bf16.msra.mxu0 0
    %322 = vmatpush.bf16.msra.mxu0 0
    %323 = vmatpush.bf16.msra.mxu0 %v285
    %324 = vmatmul.bf16.gmra.mxu0 %v275
    %v325 = vpop.f32.mrf.mxu0
    %v326 = vadd.f32 %v257, %v325
    %v327 = vpop.f32.mrf.mxu0
    %328 = vdwg.mxu0
    %329 = vmatpush.bf16.msra.mxu0 0
    %330 = vmatpush.bf16.msra.mxu0 0
    %331 = vmatpush.bf16.msra.mxu0 0
    %332 = vmatpush.bf16.msra.mxu0 0
    %333 = vmatpush.bf16.msra.mxu0 0
    %334 = vmatpush.bf16.msra.mxu0 0
    %335 = vmatpush.bf16.msra.mxu0 0
    %336 = vmatpush.bf16.msra.mxu0 %v288
    %337 = vmatmul.bf16.gmra.mxu0 %v275
    %v338 = vpop.f32.mrf.mxu0
    %v339 = vadd.f32 %v258, %v338
    %v340 = vpop.f32.mrf.mxu0
    %341 = vdwg.mxu0
    %v342 = vmax.f32 %v300, 0.0
    %v343 = vmax.f32 %v313, 0.0
    %v344 = vmax.f32 %v326, 0.0
    %v345 = vmax.f32 %v339, 0.0
    %v346 = vld [vmem:[#allocation6] sm:$0xf]
    %v347 = vld [vmem:[#allocation6 + $0x4] sm:$0xf]
    %v348 = vld [vmem:[#allocation6 + $0x8] sm:$0xf]
    %v349 = vld [vmem:[#allocation6 + $0xc] sm:$0xf]
    %v350 = vld [vmem:[#allocation6 + $0x10] sm:$0xf]
    %v351 = vld [vmem:[#allocation6 + $0x14] sm:$0xf]
    %v352 = vld [vmem:[#allocation6 + $0x18] sm:$0xf]
    %v353 = vld [vmem:[#allocation6 + $0x1c] sm:$0xf]
    %v354 = vld [vmem:[#allocation6 + $0x20] sm:$0xf]
    %v355 = vld [vmem:[#allocation6 + $0x24] sm:$0xf]
    %v356 = vld [vmem:[#allocation6 + $0x28] sm:$0xf]
    %v357 = vld [vmem:[#allocation6 + $0x2c] sm:$0xf]
    %v358 = vld [vmem:[#allocation6 + $0x30] sm:$0xf]
    %v359 = vld [vmem:[#allocation6 + $0x34] sm:$0xf]
    %v360 = vld [vmem:[#allocation6 + $0x38] sm:$0xf]
    %v361 = vld [vmem:[#allocation6 + $0x3c] sm:$0xf]
    %v362 = vld [vmem:[#allocation6 + $0x40] sm:$0xf]
    %v363 = vld [vmem:[#allocation6 + $0x44] sm:$0xf]
    %v364 = vld [vmem:[#allocation6 + $0x48] sm:$0xf]
    %v365 = vld [vmem:[#allocation6 + $0x4c] sm:$0xf]
    %v366 = vld [vmem:[#allocation6 + $0x50] sm:$0xf]
    %v367 = vld [vmem:[#allocation6 + $0x54] sm:$0xf]
    %v368 = vld [vmem:[#allocation6 + $0x58] sm:$0xf]
    %v369 = vld [vmem:[#allocation6 + $0x5c] sm:$0xf]
    %v370 = vld [vmem:[#allocation6 + $0x60] sm:$0xf]
    %v371 = vld [vmem:[#allocation6 + $0x64] sm:$0xf]
    %v372 = vld [vmem:[#allocation6 + $0x68] sm:$0xf]
    %v373 = vld [vmem:[#allocation6 + $0x6c] sm:$0xf]
    %v374 = vld [vmem:[#allocation6 + $0x70] sm:$0xf]
    %v375 = vld [vmem:[#allocation6 + $0x74] sm:$0xf]
    %v376 = vld [vmem:[#allocation6 + $0x78] sm:$0xf]
    %v377 = vld [vmem:[#allocation6 + $0x7c] sm:$0xf]
    %v378 = vld [vmem:[#allocation6 + $0x80] sm:$0xf]
    %v379 = vld [vmem:[#allocation6 + $0x84] sm:$0xf]
    %v380 = vld [vmem:[#allocation6 + $0x88] sm:$0xf]
    %v381 = vld [vmem:[#allocation6 + $0x8c] sm:$0xf]
    %v382 = vld [vmem:[#allocation6 + $0x90] sm:$0xf]
    %v383 = vld [vmem:[#allocation6 + $0x94] sm:$0xf]
    %v384 = vld [vmem:[#allocation6 + $0x98] sm:$0xf]
    %v385 = vld [vmem:[#allocation6 + $0x9c] sm:$0xf]
    %v386 = vld [vmem:[#allocation6 + $0xa0] sm:$0xf]
    %v387 = vld [vmem:[#allocation6 + $0xa4] sm:$0xf]
    %v388 = vld [vmem:[#allocation6 + $0xa8] sm:$0xf]
    %v389 = vld [vmem:[#allocation6 + $0xac] sm:$0xf]
    %v390 = vld [vmem:[#allocation6 + $0xb0] sm:$0xf]
    %v391 = vld [vmem:[#allocation6 + $0xb4] sm:$0xf]
    %v392 = vld [vmem:[#allocation6 + $0xb8] sm:$0xf]
    %v393 = vld [vmem:[#allocation6 + $0xbc] sm:$0xf]
    %v394 = vld [vmem:[#allocation6 + $0xc0] sm:$0xf]
    %v395 = vld [vmem:[#allocation6 + $0xc4] sm:$0xf]
    %v396 = vld [vmem:[#allocation6 + $0xc8] sm:$0xf]
    %v397 = vld [vmem:[#allocation6 + $0xcc] sm:$0xf]
    %v398 = vld [vmem:[#allocation6 + $0xd0] sm:$0xf]
    %v399 = vld [vmem:[#allocation6 + $0xd4] sm:$0xf]
    %v400 = vld [vmem:[#allocation6 + $0xd8] sm:$0xf]
    %v401 = vld [vmem:[#allocation6 + $0xdc] sm:$0xf]
    %v402 = vld [vmem:[#allocation6 + $0xe0] sm:$0xf]
    %v403 = vld [vmem:[#allocation6 + $0xe4] sm:$0xf]
    %v404 = vld [vmem:[#allocation6 + $0xe8] sm:$0xf]
    %v405 = vld [vmem:[#allocation6 + $0xec] sm:$0xf]
    %v406 = vld [vmem:[#allocation6 + $0xf0] sm:$0xf]
    %v407 = vld [vmem:[#allocation6 + $0xf4] sm:$0xf]
    %v408 = vld [vmem:[#allocation6 + $0xf8] sm:$0xf]
    %v409 = vld [vmem:[#allocation6 + $0xfc] sm:$0xf]
    %v410 = vpack.c.bf16 %v342, %v342
    %v411 = vpack.c.bf16 %v343, %v343
    %v412 = vpack.c.bf16 %v344, %v344
    %v413 = vpack.c.bf16 %v345, %v345
    %v414 = vld [vmem:[#allocation7] sm:$0x1]
    %v416 = vperm.slane %v414, 0
    %v482 = vunpack.c.l.b16 %v346
    %v483 = vunpack.c.l.b16 %v347
    %v484 = vunpack.c.l.b16 %v348
    %v485 = vunpack.c.l.b16 %v349
    %v486 = vunpack.c.l.b16 %v350
    %v487 = vunpack.c.l.b16 %v351
    %v488 = vunpack.c.l.b16 %v352
    %v489 = vunpack.c.l.b16 %v353
    %v490 = vunpack.c.l.b16 %v354
    %v491 = vunpack.c.l.b16 %v355
    %v492 = vunpack.c.l.b16 %v356
    %v493 = vunpack.c.l.b16 %v357
    %v494 = vunpack.c.l.b16 %v358
    %v495 = vunpack.c.l.b16 %v359
    %v496 = vunpack.c.l.b16 %v360
    %v497 = vunpack.c.l.b16 %v361
    %v498 = vunpack.c.l.b16 %v362
    %v499 = vunpack.c.l.b16 %v363
    %v500 = vunpack.c.l.b16 %v364
    %v501 = vunpack.c.l.b16 %v365
    %v502 = vunpack.c.l.b16 %v366
    %v503 = vunpack.c.l.b16 %v367
    %v504 = vunpack.c.l.b16 %v368
    %v505 = vunpack.c.l.b16 %v369
    %v506 = vunpack.c.l.b16 %v370
    %v507 = vunpack.c.l.b16 %v371
    %v508 = vunpack.c.l.b16 %v372
    %v509 = vunpack.c.l.b16 %v373
    %v510 = vunpack.c.l.b16 %v374
    %v511 = vunpack.c.l.b16 %v375
    %v512 = vunpack.c.l.b16 %v376
    %v513 = vunpack.c.l.b16 %v377
    %v514 = vunpack.c.l.b16 %v378
    %v515 = vunpack.c.l.b16 %v379
    %v516 = vunpack.c.l.b16 %v380
    %v517 = vunpack.c.l.b16 %v381
    %v518 = vunpack.c.l.b16 %v382
    %v519 = vunpack.c.l.b16 %v383
    %v520 = vunpack.c.l.b16 %v384
    %v521 = vunpack.c.l.b16 %v385
    %v522 = vunpack.c.l.b16 %v386
    %v523 = vunpack.c.l.b16 %v387
    %v524 = vunpack.c.l.b16 %v388
    %v525 = vunpack.c.l.b16 %v389
    %v526 = vunpack.c.l.b16 %v390
    %v527 = vunpack.c.l.b16 %v391
    %v528 = vunpack.c.l.b16 %v392
    %v529 = vunpack.c.l.b16 %v393
    %v530 = vunpack.c.l.b16 %v394
    %v531 = vunpack.c.l.b16 %v395
    %v532 = vunpack.c.l.b16 %v396
    %v533 = vunpack.c.l.b16 %v397
    %v534 = vunpack.c.l.b16 %v398
    %v535 = vunpack.c.l.b16 %v399
    %v536 = vunpack.c.l.b16 %v400
    %v537 = vunpack.c.l.b16 %v401
    %v538 = vunpack.c.l.b16 %v402
    %v539 = vunpack.c.l.b16 %v403
    %v540 = vunpack.c.l.b16 %v404
    %v541 = vunpack.c.l.b16 %v405
    %v542 = vunpack.c.l.b16 %v406
    %v543 = vunpack.c.l.b16 %v407
    %v544 = vunpack.c.l.b16 %v408
    %v545 = vunpack.c.l.b16 %v409
    %v546 = vpack.c.b16 %v483, %v482
    %v547 = vpack.c.b16 %v485, %v484
    %v548 = vpack.c.b16 %v487, %v486
    %v549 = vpack.c.b16 %v489, %v488
    %v550 = vpack.c.b16 %v491, %v490
    %v551 = vpack.c.b16 %v493, %v492
    %v552 = vpack.c.b16 %v495, %v494
    %v553 = vpack.c.b16 %v497, %v496
    %v554 = vpack.c.b16 %v499, %v498
    %v555 = vpack.c.b16 %v501, %v500
    %v556 = vpack.c.b16 %v503, %v502
    %v557 = vpack.c.b16 %v505, %v504
    %v558 = vpack.c.b16 %v507, %v506
    %v559 = vpack.c.b16 %v509, %v508
    %v560 = vpack.c.b16 %v511, %v510
    %v561 = vpack.c.b16 %v513, %v512
    %v562 = vpack.c.b16 %v515, %v514
    %v563 = vpack.c.b16 %v517, %v516
    %v564 = vpack.c.b16 %v519, %v518
    %v565 = vpack.c.b16 %v521, %v520
    %v566 = vpack.c.b16 %v523, %v522
    %v567 = vpack.c.b16 %v525, %v524
    %v568 = vpack.c.b16 %v527, %v526
    %v569 = vpack.c.b16 %v529, %v528
    %v570 = vpack.c.b16 %v531, %v530
    %v571 = vpack.c.b16 %v533, %v532
    %v572 = vpack.c.b16 %v535, %v534
    %v573 = vpack.c.b16 %v537, %v536
    %v574 = vpack.c.b16 %v539, %v538
    %v575 = vpack.c.b16 %v541, %v540
    %v576 = vpack.c.b16 %v543, %v542
    %v577 = vpack.c.b16 %v545, %v544
    %610 = vmatpush.bf16.msra.mxu0 %v553
    %611 = vmatpush.bf16.msra.mxu0 %v552
    %612 = vmatpush.bf16.msra.mxu0 %v551
    %613 = vmatpush.bf16.msra.mxu0 %v550
    %614 = vmatpush.bf16.msra.mxu0 %v549
    %615 = vmatpush.bf16.msra.mxu0 %v548
    %616 = vmatpush.bf16.msra.mxu0 %v547
    %617 = vmatpush.bf16.msra.mxu0 %v546
    %618 = vmatmul.bf16.gmra.mxu0 %v410
    %v619 = vpop.f32.mrf.mxu0
    %v620 = vadd.f32 %v416, %v619
    %v621 = vpop.f32.mrf.mxu0
    %622 = vdwg.mxu0
    %623 = vmatpush.bf16.msra.mxu0 %v561
    %624 = vmatpush.bf16.msra.mxu0 %v560
    %625 = vmatpush.bf16.msra.mxu0 %v559
    %626 = vmatpush.bf16.msra.mxu0 %v558
    %627 = vmatpush.bf16.msra.mxu0 %v557
    %628 = vmatpush.bf16.msra.mxu0 %v556
    %629 = vmatpush.bf16.msra.mxu0 %v555
    %630 = vmatpush.bf16.msra.mxu0 %v554
    %631 = vmatmul.bf16.gmra.mxu0 %v411
    %v632 = vpop.f32.mrf.mxu0
    %v633 = vadd.f32 %v620, %v632
    %v634 = vpop.f32.mrf.mxu0
    %635 = vdwg.mxu0
    %636 = vmatpush.bf16.msra.mxu0 %v569
    %637 = vmatpush.bf16.msra.mxu0 %v568
    %638 = vmatpush.bf16.msra.mxu0 %v567
    %639 = vmatpush.bf16.msra.mxu0 %v566
    %640 = vmatpush.bf16.msra.mxu0 %v565
    %641 = vmatpush.bf16.msra.mxu0 %v564
    %642 = vmatpush.bf16.msra.mxu0 %v563
    %643 = vmatpush.bf16.msra.mxu0 %v562
    %644 = vmatmul.bf16.gmra.mxu0 %v412
    %v645 = vpop.f32.mrf.mxu0
    %v646 = vadd.f32 %v633, %v645
    %v647 = vpop.f32.mrf.mxu0
    %648 = vdwg.mxu0
    %649 = vmatpush.bf16.msra.mxu0 %v577
    %650 = vmatpush.bf16.msra.mxu0 %v576
    %651 = vmatpush.bf16.msra.mxu0 %v575
    %652 = vmatpush.bf16.msra.mxu0 %v574
    %653 = vmatpush.bf16.msra.mxu0 %v573
    %654 = vmatpush.bf16.msra.mxu0 %v572
    %655 = vmatpush.bf16.msra.mxu0 %v571
    %656 = vmatpush.bf16.msra.mxu0 %v570
    %657 = vmatmul.bf16.gmra.mxu0 %v413
    %v658 = vpop.f32.mrf.mxu0
    %v659 = vadd.f32 %v646, %v658
    %v660 = vpop.f32.mrf.mxu0
    %661 = vdwg.mxu0
    %v662 = vmax.f32 %v659, 0.0
    %v663 = vld [vmem:[#allocation9] sm:$0xff]
    %v664 = vld [vmem:[#allocation9 + $0x8] sm:$0xff]
    %v665 = vld [vmem:[#allocation9 + $0x10] sm:$0xff]
    %v666 = vld [vmem:[#allocation9 + $0x18] sm:$0xff]
    %v667 = vld [vmem:[#allocation9 + $0x20] sm:$0xff]
    %v668 = vld [vmem:[#allocation9 + $0x28] sm:$0xff]
    %v669 = vld [vmem:[#allocation9 + $0x30] sm:$0xff]
    %v670 = vld [vmem:[#allocation9 + $0x38] sm:$0xff]
    %v671 = vld [vmem:[#allocation9 + $0x40] sm:$0xff]
    %v672 = vld [vmem:[#allocation9 + $0x48] sm:$0xff]
    %v673 = vld [vmem:[#allocation9 + $0x50] sm:$0xff]
    %v674 = vld [vmem:[#allocation9 + $0x58] sm:$0xff]
    %v675 = vld [vmem:[#allocation9 + $0x60] sm:$0xff]
    %v676 = vld [vmem:[#allocation9 + $0x68] sm:$0xff]
    %v677 = vld [vmem:[#allocation9 + $0x70] sm:$0xff]
    %v678 = vld [vmem:[#allocation9 + $0x78] sm:$0xff]
    %v679 = vld [vmem:[#allocation9 + $0x80] sm:$0xff]
    %v680 = vld [vmem:[#allocation9 + $0x88] sm:$0xff]
    %v681 = vld [vmem:[#allocation9 + $0x90] sm:$0xff]
    %v682 = vld [vmem:[#allocation9 + $0x98] sm:$0xff]
    %v683 = vld [vmem:[#allocation9 + $0xa0] sm:$0xff]
    %v684 = vld [vmem:[#allocation9 + $0xa8] sm:$0xff]
    %v685 = vld [vmem:[#allocation9 + $0xb0] sm:$0xff]
    %v686 = vld [vmem:[#allocation9 + $0xb8] sm:$0xff]
    %v687 = vld [vmem:[#allocation9 + $0xc0] sm:$0xff]
    %v688 = vld [vmem:[#allocation9 + $0xc8] sm:$0xff]
    %v689 = vld [vmem:[#allocation9 + $0xd0] sm:$0xff]
    %v690 = vld [vmem:[#allocation9 + $0xd8] sm:$0xff]
    %v691 = vld [vmem:[#allocation9 + $0xe0] sm:$0xff]
    %v692 = vld [vmem:[#allocation9 + $0xe8] sm:$0xff]
    %v693 = vld [vmem:[#allocation9 + $0xf0] sm:$0xff]
    %v694 = vld [vmem:[#allocation9 + $0xf8] sm:$0xff]
    %v695 = vld [vmem:[#allocation9 + $0x100] sm:$0xff]
    %v696 = vld [vmem:[#allocation9 + $0x108] sm:$0xff]
    %v697 = vld [vmem:[#allocation9 + $0x110] sm:$0xff]
    %v698 = vld [vmem:[#allocation9 + $0x118] sm:$0xff]
    %v699 = vld [vmem:[#allocation9 + $0x120] sm:$0xff]
    %v700 = vld [vmem:[#allocation9 + $0x128] sm:$0xff]
    %v701 = vld [vmem:[#allocation9 + $0x130] sm:$0xff]
    %v702 = vld [vmem:[#allocation9 + $0x138] sm:$0xff]
    %v703 = vld [vmem:[#allocation9 + $0x140] sm:$0xff]
    %v704 = vld [vmem:[#allocation9 + $0x148] sm:$0xff]
    %v705 = vld [vmem:[#allocation9 + $0x150] sm:$0xff]
    %v706 = vld [vmem:[#allocation9 + $0x158] sm:$0xff]
    %v707 = vld [vmem:[#allocation9 + $0x160] sm:$0xff]
    %v708 = vld [vmem:[#allocation9 + $0x168] sm:$0xff]
    %v709 = vld [vmem:[#allocation9 + $0x170] sm:$0xff]
    %v710 = vld [vmem:[#allocation9 + $0x178] sm:$0xff]
    %v711 = vld [vmem:[#allocation9 + $0x180] sm:$0xff]
    %v712 = vld [vmem:[#allocation9 + $0x188] sm:$0xff]
    %v713 = vld [vmem:[#allocation9 + $0x190] sm:$0xff]
    %v714 = vld [vmem:[#allocation9 + $0x198] sm:$0xff]
    %v715 = vld [vmem:[#allocation9 + $0x1a0] sm:$0xff]
    %v716 = vld [vmem:[#allocation9 + $0x1a8] sm:$0xff]
    %v717 = vld [vmem:[#allocation9 + $0x1b0] sm:$0xff]
    %v718 = vld [vmem:[#allocation9 + $0x1b8] sm:$0xff]
    %v719 = vld [vmem:[#allocation9 + $0x1c0] sm:$0xff]
    %v720 = vld [vmem:[#allocation9 + $0x1c8] sm:$0xff]
    %v721 = vld [vmem:[#allocation9 + $0x1d0] sm:$0xff]
    %v722 = vld [vmem:[#allocation9 + $0x1d8] sm:$0xff]
    %v723 = vld [vmem:[#allocation9 + $0x1e0] sm:$0xff]
    %v724 = vld [vmem:[#allocation9 + $0x1e8] sm:$0xff]
    %v725 = vld [vmem:[#allocation9 + $0x1f0] sm:$0xff]
    %v726 = vld [vmem:[#allocation9 + $0x1f8] sm:$0xff]
    %v727 = vld [vmem:[#allocation9 + $0x200] sm:$0xff]
    %v728 = vld [vmem:[#allocation9 + $0x208] sm:$0xff]
    %v729 = vld [vmem:[#allocation9 + $0x210] sm:$0xff]
    %v730 = vld [vmem:[#allocation9 + $0x218] sm:$0xff]
    %v731 = vld [vmem:[#allocation9 + $0x220] sm:$0xff]
    %v732 = vld [vmem:[#allocation9 + $0x228] sm:$0xff]
    %v733 = vld [vmem:[#allocation9 + $0x230] sm:$0xff]
    %v734 = vld [vmem:[#allocation9 + $0x238] sm:$0xff]
    %v735 = vld [vmem:[#allocation9 + $0x240] sm:$0xff]
    %v736 = vld [vmem:[#allocation9 + $0x248] sm:$0xff]
    %v737 = vld [vmem:[#allocation9 + $0x250] sm:$0xff]
    %v738 = vld [vmem:[#allocation9 + $0x258] sm:$0xff]
    %v739 = vld [vmem:[#allocation9 + $0x260] sm:$0xff]
    %v740 = vld [vmem:[#allocation9 + $0x268] sm:$0xff]
    %v741 = vld [vmem:[#allocation9 + $0x270] sm:$0xff]
    %v742 = vld [vmem:[#allocation9 + $0x278] sm:$0xff]
    %v743 = vld [vmem:[#allocation9 + $0x280] sm:$0xff]
    %v744 = vld [vmem:[#allocation9 + $0x288] sm:$0xff]
    %v745 = vld [vmem:[#allocation9 + $0x290] sm:$0xff]
    %v746 = vld [vmem:[#allocation9 + $0x298] sm:$0xff]
    %v747 = vld [vmem:[#allocation9 + $0x2a0] sm:$0xff]
    %v748 = vld [vmem:[#allocation9 + $0x2a8] sm:$0xff]
    %v749 = vld [vmem:[#allocation9 + $0x2b0] sm:$0xff]
    %v750 = vld [vmem:[#allocation9 + $0x2b8] sm:$0xff]
    %v751 = vld [vmem:[#allocation9 + $0x2c0] sm:$0xff]
    %v752 = vld [vmem:[#allocation9 + $0x2c8] sm:$0xff]
    %v753 = vld [vmem:[#allocation9 + $0x2d0] sm:$0xff]
    %v754 = vld [vmem:[#allocation9 + $0x2d8] sm:$0xff]
    %v755 = vld [vmem:[#allocation9 + $0x2e0] sm:$0xff]
    %v756 = vld [vmem:[#allocation9 + $0x2e8] sm:$0xff]
    %v757 = vld [vmem:[#allocation9 + $0x2f0] sm:$0xff]
    %v758 = vld [vmem:[#allocation9 + $0x2f8] sm:$0xff]
    %v759 = vld [vmem:[#allocation9 + $0x300] sm:$0xff]
    %v760 = vld [vmem:[#allocation9 + $0x308] sm:$0xff]
    %v761 = vld [vmem:[#allocation9 + $0x310] sm:$0xff]
    %v762 = vld [vmem:[#allocation9 + $0x318] sm:$0xff]
    %v763 = vld [vmem:[#allocation9 + $0x320] sm:$0xff]
    %v764 = vld [vmem:[#allocation9 + $0x328] sm:$0xff]
    %v765 = vld [vmem:[#allocation9 + $0x330] sm:$0xff]
    %v766 = vld [vmem:[#allocation9 + $0x338] sm:$0xff]
    %v767 = vld [vmem:[#allocation9 + $0x340] sm:$0xff]
    %v768 = vld [vmem:[#allocation9 + $0x348] sm:$0xff]
    %v769 = vld [vmem:[#allocation9 + $0x350] sm:$0xff]
    %v770 = vld [vmem:[#allocation9 + $0x358] sm:$0xff]
    %v771 = vld [vmem:[#allocation9 + $0x360] sm:$0xff]
    %v772 = vld [vmem:[#allocation9 + $0x368] sm:$0xff]
    %v773 = vld [vmem:[#allocation9 + $0x370] sm:$0xff]
    %v774 = vld [vmem:[#allocation9 + $0x378] sm:$0xff]
    %v775 = vld [vmem:[#allocation9 + $0x380] sm:$0xff]
    %v776 = vld [vmem:[#allocation9 + $0x388] sm:$0xff]
    %v777 = vld [vmem:[#allocation9 + $0x390] sm:$0xff]
    %v778 = vld [vmem:[#allocation9 + $0x398] sm:$0xff]
    %v779 = vld [vmem:[#allocation9 + $0x3a0] sm:$0xff]
    %v780 = vld [vmem:[#allocation9 + $0x3a8] sm:$0xff]
    %v781 = vld [vmem:[#allocation9 + $0x3b0] sm:$0xff]
    %v782 = vld [vmem:[#allocation9 + $0x3b8] sm:$0xff]
    %v783 = vld [vmem:[#allocation9 + $0x3c0] sm:$0xff]
    %v784 = vld [vmem:[#allocation9 + $0x3c8] sm:$0xff]
    %v785 = vld [vmem:[#allocation9 + $0x3d0] sm:$0xff]
    %v786 = vld [vmem:[#allocation9 + $0x3d8] sm:$0xff]
    %v787 = vld [vmem:[#allocation9 + $0x3e0] sm:$0xff]
    %v788 = vld [vmem:[#allocation9 + $0x3e8] sm:$0xff]
    %v789 = vld [vmem:[#allocation9 + $0x3f0] sm:$0xff]
    %v790 = vld [vmem:[#allocation9 + $0x3f8] sm:$0xff]
    %v791 = vpack.c.bf16 %v662, %v662
    %v920 = vunpack.c.l.b16 %v663
    %v921 = vunpack.c.h.b16 %v663
    %v922 = vunpack.c.l.b16 %v664
    %v923 = vunpack.c.h.b16 %v664
    %v924 = vunpack.c.l.b16 %v665
    %v925 = vunpack.c.h.b16 %v665
    %v926 = vunpack.c.l.b16 %v666
    %v927 = vunpack.c.h.b16 %v666
    %v928 = vunpack.c.l.b16 %v667
    %v929 = vunpack.c.h.b16 %v667
    %v930 = vunpack.c.l.b16 %v668
    %v931 = vunpack.c.h.b16 %v668
    %v932 = vunpack.c.l.b16 %v669
    %v933 = vunpack.c.h.b16 %v669
    %v934 = vunpack.c.l.b16 %v670
    %v935 = vunpack.c.h.b16 %v670
    %v936 = vunpack.c.l.b16 %v671
    %v937 = vunpack.c.h.b16 %v671
    %v938 = vunpack.c.l.b16 %v672
    %v939 = vunpack.c.h.b16 %v672
    %v940 = vunpack.c.l.b16 %v673
    %v941 = vunpack.c.h.b16 %v673
    %v942 = vunpack.c.l.b16 %v674
    %v943 = vunpack.c.h.b16 %v674
    %v944 = vunpack.c.l.b16 %v675
    %v945 = vunpack.c.h.b16 %v675
    %v946 = vunpack.c.l.b16 %v676
    %v947 = vunpack.c.h.b16 %v676
    %v948 = vunpack.c.l.b16 %v677
    %v949 = vunpack.c.h.b16 %v677
    %v950 = vunpack.c.l.b16 %v678
    %v951 = vunpack.c.h.b16 %v678
    %v952 = vunpack.c.l.b16 %v679
    %v953 = vunpack.c.h.b16 %v679
    %v954 = vunpack.c.l.b16 %v680
    %v955 = vunpack.c.h.b16 %v680
    %v956 = vunpack.c.l.b16 %v681
    %v957 = vunpack.c.h.b16 %v681
    %v958 = vunpack.c.l.b16 %v682
    %v959 = vunpack.c.h.b16 %v682
    %v960 = vunpack.c.l.b16 %v683
    %v961 = vunpack.c.h.b16 %v683
    %v962 = vunpack.c.l.b16 %v684
    %v963 = vunpack.c.h.b16 %v684
    %v964 = vunpack.c.l.b16 %v685
    %v965 = vunpack.c.h.b16 %v685
    %v966 = vunpack.c.l.b16 %v686
    %v967 = vunpack.c.h.b16 %v686
    %v968 = vunpack.c.l.b16 %v687
    %v969 = vunpack.c.h.b16 %v687
    %v970 = vunpack.c.l.b16 %v688
    %v971 = vunpack.c.h.b16 %v688
    %v972 = vunpack.c.l.b16 %v689
    %v973 = vunpack.c.h.b16 %v689
    %v974 = vunpack.c.l.b16 %v690
    %v975 = vunpack.c.h.b16 %v690
    %v976 = vunpack.c.l.b16 %v691
    %v977 = vunpack.c.h.b16 %v691
    %v978 = vunpack.c.l.b16 %v692
    %v979 = vunpack.c.h.b16 %v692
    %v980 = vunpack.c.l.b16 %v693
    %v981 = vunpack.c.h.b16 %v693
    %v982 = vunpack.c.l.b16 %v694
    %v983 = vunpack.c.h.b16 %v694
    %v984 = vunpack.c.l.b16 %v695
    %v985 = vunpack.c.h.b16 %v695
    %v986 = vunpack.c.l.b16 %v696
    %v987 = vunpack.c.h.b16 %v696
    %v988 = vunpack.c.l.b16 %v697
    %v989 = vunpack.c.h.b16 %v697
    %v990 = vunpack.c.l.b16 %v698
    %v991 = vunpack.c.h.b16 %v698
    %v992 = vunpack.c.l.b16 %v699
    %v993 = vunpack.c.h.b16 %v699
    %v994 = vunpack.c.l.b16 %v700
    %v995 = vunpack.c.h.b16 %v700
    %v996 = vunpack.c.l.b16 %v701
    %v997 = vunpack.c.h.b16 %v701
    %v998 = vunpack.c.l.b16 %v702
    %v999 = vunpack.c.h.b16 %v702
    %v1000 = vunpack.c.l.b16 %v703
    %v1001 = vunpack.c.h.b16 %v703
    %v1002 = vunpack.c.l.b16 %v704
    %v1003 = vunpack.c.h.b16 %v704
    %v1004 = vunpack.c.l.b16 %v705
    %v1005 = vunpack.c.h.b16 %v705
    %v1006 = vunpack.c.l.b16 %v706
    %v1007 = vunpack.c.h.b16 %v706
    %v1008 = vunpack.c.l.b16 %v707
    %v1009 = vunpack.c.h.b16 %v707
    %v1010 = vunpack.c.l.b16 %v708
    %v1011 = vunpack.c.h.b16 %v708
    %v1012 = vunpack.c.l.b16 %v709
    %v1013 = vunpack.c.h.b16 %v709
    %v1014 = vunpack.c.l.b16 %v710
    %v1015 = vunpack.c.h.b16 %v710
    %v1016 = vunpack.c.l.b16 %v711
    %v1017 = vunpack.c.h.b16 %v711
    %v1018 = vunpack.c.l.b16 %v712
    %v1019 = vunpack.c.h.b16 %v712
    %v1020 = vunpack.c.l.b16 %v713
    %v1021 = vunpack.c.h.b16 %v713
    %v1022 = vunpack.c.l.b16 %v714
    %v1023 = vunpack.c.h.b16 %v714
    %v1024 = vunpack.c.l.b16 %v715
    %v1025 = vunpack.c.h.b16 %v715
    %v1026 = vunpack.c.l.b16 %v716
    %v1027 = vunpack.c.h.b16 %v716
    %v1028 = vunpack.c.l.b16 %v717
    %v1029 = vunpack.c.h.b16 %v717
    %v1030 = vunpack.c.l.b16 %v718
    %v1031 = vunpack.c.h.b16 %v718
    %v1032 = vunpack.c.l.b16 %v719
    %v1033 = vunpack.c.h.b16 %v719
    %v1034 = vunpack.c.l.b16 %v720
    %v1035 = vunpack.c.h.b16 %v720
    %v1036 = vunpack.c.l.b16 %v721
    %v1037 = vunpack.c.h.b16 %v721
    %v1038 = vunpack.c.l.b16 %v722
    %v1039 = vunpack.c.h.b16 %v722
    %v1040 = vunpack.c.l.b16 %v723
    %v1041 = vunpack.c.h.b16 %v723
    %v1042 = vunpack.c.l.b16 %v724
    %v1043 = vunpack.c.h.b16 %v724
    %v1044 = vunpack.c.l.b16 %v725
    %v1045 = vunpack.c.h.b16 %v725
    %v1046 = vunpack.c.l.b16 %v726
    %v1047 = vunpack.c.h.b16 %v726
    %v1048 = vunpack.c.l.b16 %v727
    %v1049 = vunpack.c.h.b16 %v727
    %v1050 = vunpack.c.l.b16 %v728
    %v1051 = vunpack.c.h.b16 %v728
    %v1052 = vunpack.c.l.b16 %v729
    %v1053 = vunpack.c.h.b16 %v729
    %v1054 = vunpack.c.l.b16 %v730
    %v1055 = vunpack.c.h.b16 %v730
    %v1056 = vunpack.c.l.b16 %v731
    %v1057 = vunpack.c.h.b16 %v731
    %v1058 = vunpack.c.l.b16 %v732
    %v1059 = vunpack.c.h.b16 %v732
    %v1060 = vunpack.c.l.b16 %v733
    %v1061 = vunpack.c.h.b16 %v733
    %v1062 = vunpack.c.l.b16 %v734
    %v1063 = vunpack.c.h.b16 %v734
    %v1064 = vunpack.c.l.b16 %v735
    %v1065 = vunpack.c.h.b16 %v735
    %v1066 = vunpack.c.l.b16 %v736
    %v1067 = vunpack.c.h.b16 %v736
    %v1068 = vunpack.c.l.b16 %v737
    %v1069 = vunpack.c.h.b16 %v737
    %v1070 = vunpack.c.l.b16 %v738
    %v1071 = vunpack.c.h.b16 %v738
    %v1072 = vunpack.c.l.b16 %v739
    %v1073 = vunpack.c.h.b16 %v739
    %v1074 = vunpack.c.l.b16 %v740
    %v1075 = vunpack.c.h.b16 %v740
    %v1076 = vunpack.c.l.b16 %v741
    %v1077 = vunpack.c.h.b16 %v741
    %v1078 = vunpack.c.l.b16 %v742
    %v1079 = vunpack.c.h.b16 %v742
    %v1080 = vunpack.c.l.b16 %v743
    %v1081 = vunpack.c.h.b16 %v743
    %v1082 = vunpack.c.l.b16 %v744
    %v1083 = vunpack.c.h.b16 %v744
    %v1084 = vunpack.c.l.b16 %v745
    %v1085 = vunpack.c.h.b16 %v745
    %v1086 = vunpack.c.l.b16 %v746
    %v1087 = vunpack.c.h.b16 %v746
    %v1088 = vunpack.c.l.b16 %v747
    %v1089 = vunpack.c.h.b16 %v747
    %v1090 = vunpack.c.l.b16 %v748
    %v1091 = vunpack.c.h.b16 %v748
    %v1092 = vunpack.c.l.b16 %v749
    %v1093 = vunpack.c.h.b16 %v749
    %v1094 = vunpack.c.l.b16 %v750
    %v1095 = vunpack.c.h.b16 %v750
    %v1096 = vunpack.c.l.b16 %v751
    %v1097 = vunpack.c.h.b16 %v751
    %v1098 = vunpack.c.l.b16 %v752
    %v1099 = vunpack.c.h.b16 %v752
    %v1100 = vunpack.c.l.b16 %v753
    %v1101 = vunpack.c.h.b16 %v753
    %v1102 = vunpack.c.l.b16 %v754
    %v1103 = vunpack.c.h.b16 %v754
    %v1104 = vunpack.c.l.b16 %v755
    %v1105 = vunpack.c.h.b16 %v755
    %v1106 = vunpack.c.l.b16 %v756
    %v1107 = vunpack.c.h.b16 %v756
    %v1108 = vunpack.c.l.b16 %v757
    %v1109 = vunpack.c.h.b16 %v757
    %v1110 = vunpack.c.l.b16 %v758
    %v1111 = vunpack.c.h.b16 %v758
    %v1112 = vunpack.c.l.b16 %v759
    %v1113 = vunpack.c.h.b16 %v759
    %v1114 = vunpack.c.l.b16 %v760
    %v1115 = vunpack.c.h.b16 %v760
    %v1116 = vunpack.c.l.b16 %v761
    %v1117 = vunpack.c.h.b16 %v761
    %v1118 = vunpack.c.l.b16 %v762
    %v1119 = vunpack.c.h.b16 %v762
    %v1120 = vunpack.c.l.b16 %v763
    %v1121 = vunpack.c.h.b16 %v763
    %v1122 = vunpack.c.l.b16 %v764
    %v1123 = vunpack.c.h.b16 %v764
    %v1124 = vunpack.c.l.b16 %v765
    %v1125 = vunpack.c.h.b16 %v765
    %v1126 = vunpack.c.l.b16 %v766
    %v1127 = vunpack.c.h.b16 %v766
    %v1128 = vunpack.c.l.b16 %v767
    %v1129 = vunpack.c.h.b16 %v767
    %v1130 = vunpack.c.l.b16 %v768
    %v1131 = vunpack.c.h.b16 %v768
    %v1132 = vunpack.c.l.b16 %v769
    %v1133 = vunpack.c.h.b16 %v769
    %v1134 = vunpack.c.l.b16 %v770
    %v1135 = vunpack.c.h.b16 %v770
    %v1136 = vunpack.c.l.b16 %v771
    %v1137 = vunpack.c.h.b16 %v771
    %v1138 = vunpack.c.l.b16 %v772
    %v1139 = vunpack.c.h.b16 %v772
    %v1140 = vunpack.c.l.b16 %v773
    %v1141 = vunpack.c.h.b16 %v773
    %v1142 = vunpack.c.l.b16 %v774
    %v1143 = vunpack.c.h.b16 %v774
    %v1144 = vunpack.c.l.b16 %v775
    %v1145 = vunpack.c.h.b16 %v775
    %v1146 = vunpack.c.l.b16 %v776
    %v1147 = vunpack.c.h.b16 %v776
    %v1148 = vunpack.c.l.b16 %v777
    %v1149 = vunpack.c.h.b16 %v777
    %v1150 = vunpack.c.l.b16 %v778
    %v1151 = vunpack.c.h.b16 %v778
    %v1152 = vunpack.c.l.b16 %v779
    %v1153 = vunpack.c.h.b16 %v779
    %v1154 = vunpack.c.l.b16 %v780
    %v1155 = vunpack.c.h.b16 %v780
    %v1156 = vunpack.c.l.b16 %v781
    %v1157 = vunpack.c.h.b16 %v781
    %v1158 = vunpack.c.l.b16 %v782
    %v1159 = vunpack.c.h.b16 %v782
    %v1160 = vunpack.c.l.b16 %v783
    %v1161 = vunpack.c.h.b16 %v783
    %v1162 = vunpack.c.l.b16 %v784
    %v1163 = vunpack.c.h.b16 %v784
    %v1164 = vunpack.c.l.b16 %v785
    %v1165 = vunpack.c.h.b16 %v785
    %v1166 = vunpack.c.l.b16 %v786
    %v1167 = vunpack.c.h.b16 %v786
    %v1168 = vunpack.c.l.b16 %v787
    %v1169 = vunpack.c.h.b16 %v787
    %v1170 = vunpack.c.l.b16 %v788
    %v1171 = vunpack.c.h.b16 %v788
    %v1172 = vunpack.c.l.b16 %v789
    %v1173 = vunpack.c.h.b16 %v789
    %v1174 = vunpack.c.l.b16 %v790
    %v1175 = vunpack.c.h.b16 %v790
    %v1176 = vpack.c.b16 %v936, %v920
    %v1177 = vpack.c.b16 %v937, %v921
    %v1178 = vpack.c.b16 %v938, %v922
    %v1179 = vpack.c.b16 %v939, %v923
    %v1180 = vpack.c.b16 %v940, %v924
    %v1181 = vpack.c.b16 %v941, %v925
    %v1182 = vpack.c.b16 %v942, %v926
    %v1183 = vpack.c.b16 %v943, %v927
    %v1184 = vpack.c.b16 %v944, %v928
    %v1185 = vpack.c.b16 %v945, %v929
    %v1186 = vpack.c.b16 %v946, %v930
    %v1187 = vpack.c.b16 %v947, %v931
    %v1188 = vpack.c.b16 %v948, %v932
    %v1189 = vpack.c.b16 %v949, %v933
    %v1190 = vpack.c.b16 %v950, %v934
    %v1191 = vpack.c.b16 %v951, %v935
    %v1192 = vpack.c.b16 %v968, %v952
    %v1193 = vpack.c.b16 %v969, %v953
    %v1194 = vpack.c.b16 %v970, %v954
    %v1195 = vpack.c.b16 %v971, %v955
    %v1196 = vpack.c.b16 %v972, %v956
    %v1197 = vpack.c.b16 %v973, %v957
    %v1198 = vpack.c.b16 %v974, %v958
    %v1199 = vpack.c.b16 %v975, %v959
    %v1200 = vpack.c.b16 %v976, %v960
    %v1201 = vpack.c.b16 %v977, %v961
    %v1202 = vpack.c.b16 %v978, %v962
    %v1203 = vpack.c.b16 %v979, %v963
    %v1204 = vpack.c.b16 %v980, %v964
    %v1205 = vpack.c.b16 %v981, %v965
    %v1206 = vpack.c.b16 %v982, %v966
    %v1207 = vpack.c.b16 %v983, %v967
    %v1208 = vpack.c.b16 %v1000, %v984
    %v1209 = vpack.c.b16 %v1001, %v985
    %v1210 = vpack.c.b16 %v1002, %v986
    %v1211 = vpack.c.b16 %v1003, %v987
    %v1212 = vpack.c.b16 %v1004, %v988
    %v1213 = vpack.c.b16 %v1005, %v989
    %v1214 = vpack.c.b16 %v1006, %v990
    %v1215 = vpack.c.b16 %v1007, %v991
    %v1216 = vpack.c.b16 %v1008, %v992
    %v1217 = vpack.c.b16 %v1009, %v993
    %v1218 = vpack.c.b16 %v1010, %v994
    %v1219 = vpack.c.b16 %v1011, %v995
    %v1220 = vpack.c.b16 %v1012, %v996
    %v1221 = vpack.c.b16 %v1013, %v997
    %v1222 = vpack.c.b16 %v1014, %v998
    %v1223 = vpack.c.b16 %v1015, %v999
    %v1224 = vpack.c.b16 %v1032, %v1016
    %v1225 = vpack.c.b16 %v1033, %v1017
    %v1226 = vpack.c.b16 %v1034, %v1018
    %v1227 = vpack.c.b16 %v1035, %v1019
    %v1228 = vpack.c.b16 %v1036, %v1020
    %v1229 = vpack.c.b16 %v1037, %v1021
    %v1230 = vpack.c.b16 %v1038, %v1022
    %v1231 = vpack.c.b16 %v1039, %v1023
    %v1232 = vpack.c.b16 %v1040, %v1024
    %v1233 = vpack.c.b16 %v1041, %v1025
    %v1234 = vpack.c.b16 %v1042, %v1026
    %v1235 = vpack.c.b16 %v1043, %v1027
    %v1236 = vpack.c.b16 %v1044, %v1028
    %v1237 = vpack.c.b16 %v1045, %v1029
    %v1238 = vpack.c.b16 %v1046, %v1030
    %v1239 = vpack.c.b16 %v1047, %v1031
    %v1240 = vpack.c.b16 %v1064, %v1048
    %v1241 = vpack.c.b16 %v1065, %v1049
    %v1242 = vpack.c.b16 %v1066, %v1050
    %v1243 = vpack.c.b16 %v1067, %v1051
    %v1244 = vpack.c.b16 %v1068, %v1052
    %v1245 = vpack.c.b16 %v1069, %v1053
    %v1246 = vpack.c.b16 %v1070, %v1054
    %v1247 = vpack.c.b16 %v1071, %v1055
    %v1248 = vpack.c.b16 %v1072, %v1056
    %v1249 = vpack.c.b16 %v1073, %v1057
    %v1250 = vpack.c.b16 %v1074, %v1058
    %v1251 = vpack.c.b16 %v1075, %v1059
    %v1252 = vpack.c.b16 %v1076, %v1060
    %v1253 = vpack.c.b16 %v1077, %v1061
    %v1254 = vpack.c.b16 %v1078, %v1062
    %v1255 = vpack.c.b16 %v1079, %v1063
    %v1256 = vpack.c.b16 %v1096, %v1080
    %v1257 = vpack.c.b16 %v1097, %v1081
    %v1258 = vpack.c.b16 %v1098, %v1082
    %v1259 = vpack.c.b16 %v1099, %v1083
    %v1260 = vpack.c.b16 %v1100, %v1084
    %v1261 = vpack.c.b16 %v1101, %v1085
    %v1262 = vpack.c.b16 %v1102, %v1086
    %v1263 = vpack.c.b16 %v1103, %v1087
    %v1264 = vpack.c.b16 %v1104, %v1088
    %v1265 = vpack.c.b16 %v1105, %v1089
    %v1266 = vpack.c.b16 %v1106, %v1090
    %v1267 = vpack.c.b16 %v1107, %v1091
    %v1268 = vpack.c.b16 %v1108, %v1092
    %v1269 = vpack.c.b16 %v1109, %v1093
    %v1270 = vpack.c.b16 %v1110, %v1094
    %v1271 = vpack.c.b16 %v1111, %v1095
    %v1272 = vpack.c.b16 %v1128, %v1112
    %v1273 = vpack.c.b16 %v1129, %v1113
    %v1274 = vpack.c.b16 %v1130, %v1114
    %v1275 = vpack.c.b16 %v1131, %v1115
    %v1276 = vpack.c.b16 %v1132, %v1116
    %v1277 = vpack.c.b16 %v1133, %v1117
    %v1278 = vpack.c.b16 %v1134, %v1118
    %v1279 = vpack.c.b16 %v1135, %v1119
    %v1280 = vpack.c.b16 %v1136, %v1120
    %v1281 = vpack.c.b16 %v1137, %v1121
    %v1282 = vpack.c.b16 %v1138, %v1122
    %v1283 = vpack.c.b16 %v1139, %v1123
    %v1284 = vpack.c.b16 %v1140, %v1124
    %v1285 = vpack.c.b16 %v1141, %v1125
    %v1286 = vpack.c.b16 %v1142, %v1126
    %v1287 = vpack.c.b16 %v1143, %v1127
    %v1288 = vpack.c.b16 %v1160, %v1144
    %v1289 = vpack.c.b16 %v1161, %v1145
    %v1290 = vpack.c.b16 %v1162, %v1146
    %v1291 = vpack.c.b16 %v1163, %v1147
    %v1292 = vpack.c.b16 %v1164, %v1148
    %v1293 = vpack.c.b16 %v1165, %v1149
    %v1294 = vpack.c.b16 %v1166, %v1150
    %v1295 = vpack.c.b16 %v1167, %v1151
    %v1296 = vpack.c.b16 %v1168, %v1152
    %v1297 = vpack.c.b16 %v1169, %v1153
    %v1298 = vpack.c.b16 %v1170, %v1154
    %v1299 = vpack.c.b16 %v1171, %v1155
    %v1300 = vpack.c.b16 %v1172, %v1156
    %v1301 = vpack.c.b16 %v1173, %v1157
    %v1302 = vpack.c.b16 %v1174, %v1158
    %v1303 = vpack.c.b16 %v1175, %v1159
    %1432 = vmatpush.bf16.msra.mxu0 %v1288
    %1433 = vmatpush.bf16.msra.mxu0 %v1272
    %1434 = vmatpush.bf16.msra.mxu0 %v1256
    %1435 = vmatpush.bf16.msra.mxu0 %v1240
    %1436 = vmatpush.bf16.msra.mxu0 %v1224
    %1437 = vmatpush.bf16.msra.mxu0 %v1208
    %1438 = vmatpush.bf16.msra.mxu0 %v1192
    %1439 = vmatpush.bf16.msra.mxu0 %v1176
    %1440 = vmatmul.bf16.gmra.mxu0 %v791
    %v1441 = vpop.f32.mrf.mxu0
    %v1442 = vadd.f32 0.0, %v1441
    %v1443 = vpop.f32.mrf.mxu0
    %1444 = vdwg.mxu0
    %1445 = vmatpush.bf16.msra.mxu0 %v1289
    %1446 = vmatpush.bf16.msra.mxu0 %v1273
    %1447 = vmatpush.bf16.msra.mxu0 %v1257
    %1448 = vmatpush.bf16.msra.mxu0 %v1241
    %1449 = vmatpush.bf16.msra.mxu0 %v1225
    %1450 = vmatpush.bf16.msra.mxu0 %v1209
    %1451 = vmatpush.bf16.msra.mxu0 %v1193
    %1452 = vmatpush.bf16.msra.mxu0 %v1177
    %1453 = vmatmul.bf16.gmra.mxu0 %v791
    %v1454 = vpop.f32.mrf.mxu0
    %v1455 = vadd.f32 0.0, %v1454
    %v1456 = vpop.f32.mrf.mxu0
    %1457 = vdwg.mxu0
    %1458 = vmatpush.bf16.msra.mxu0 %v1290
    %1459 = vmatpush.bf16.msra.mxu0 %v1274
    %1460 = vmatpush.bf16.msra.mxu0 %v1258
    %1461 = vmatpush.bf16.msra.mxu0 %v1242
    %1462 = vmatpush.bf16.msra.mxu0 %v1226
    %1463 = vmatpush.bf16.msra.mxu0 %v1210
    %1464 = vmatpush.bf16.msra.mxu0 %v1194
    %1465 = vmatpush.bf16.msra.mxu0 %v1178
    %1466 = vmatmul.bf16.gmra.mxu0 %v791
    %v1467 = vpop.f32.mrf.mxu0
    %v1468 = vadd.f32 0.0, %v1467
    %v1469 = vpop.f32.mrf.mxu0
    %1470 = vdwg.mxu0
    %1471 = vmatpush.bf16.msra.mxu0 %v1291
    %1472 = vmatpush.bf16.msra.mxu0 %v1275
    %1473 = vmatpush.bf16.msra.mxu0 %v1259
    %1474 = vmatpush.bf16.msra.mxu0 %v1243
    %1475 = vmatpush.bf16.msra.mxu0 %v1227
    %1476 = vmatpush.bf16.msra.mxu0 %v1211
    %1477 = vmatpush.bf16.msra.mxu0 %v1195
    %1478 = vmatpush.bf16.msra.mxu0 %v1179
    %1479 = vmatmul.bf16.gmra.mxu0 %v791
    %v1480 = vpop.f32.mrf.mxu0
    %v1481 = vadd.f32 0.0, %v1480
    %v1482 = vpop.f32.mrf.mxu0
    %1483 = vdwg.mxu0
    %1484 = vmatpush.bf16.msra.mxu0 %v1292
    %1485 = vmatpush.bf16.msra.mxu0 %v1276
    %1486 = vmatpush.bf16.msra.mxu0 %v1260
    %1487 = vmatpush.bf16.msra.mxu0 %v1244
    %1488 = vmatpush.bf16.msra.mxu0 %v1228
    %1489 = vmatpush.bf16.msra.mxu0 %v1212
    %1490 = vmatpush.bf16.msra.mxu0 %v1196
    %1491 = vmatpush.bf16.msra.mxu0 %v1180
    %1492 = vmatmul.bf16.gmra.mxu0 %v791
    %v1493 = vpop.f32.mrf.mxu0
    %v1494 = vadd.f32 0.0, %v1493
    %v1495 = vpop.f32.mrf.mxu0
    %1496 = vdwg.mxu0
    %1497 = vmatpush.bf16.msra.mxu0 %v1293
    %1498 = vmatpush.bf16.msra.mxu0 %v1277
    %1499 = vmatpush.bf16.msra.mxu0 %v1261
    %1500 = vmatpush.bf16.msra.mxu0 %v1245
    %1501 = vmatpush.bf16.msra.mxu0 %v1229
    %1502 = vmatpush.bf16.msra.mxu0 %v1213
    %1503 = vmatpush.bf16.msra.mxu0 %v1197
    %1504 = vmatpush.bf16.msra.mxu0 %v1181
    %1505 = vmatmul.bf16.gmra.mxu0 %v791
    %v1506 = vpop.f32.mrf.mxu0
    %v1507 = vadd.f32 0.0, %v1506
    %v1508 = vpop.f32.mrf.mxu0
    %1509 = vdwg.mxu0
    %1510 = vmatpush.bf16.msra.mxu0 %v1294
    %1511 = vmatpush.bf16.msra.mxu0 %v1278
    %1512 = vmatpush.bf16.msra.mxu0 %v1262
    %1513 = vmatpush.bf16.msra.mxu0 %v1246
    %1514 = vmatpush.bf16.msra.mxu0 %v1230
    %1515 = vmatpush.bf16.msra.mxu0 %v1214
    %1516 = vmatpush.bf16.msra.mxu0 %v1198
    %1517 = vmatpush.bf16.msra.mxu0 %v1182
    %1518 = vmatmul.bf16.gmra.mxu0 %v791
    %v1519 = vpop.f32.mrf.mxu0
    %v1520 = vadd.f32 0.0, %v1519
    %v1521 = vpop.f32.mrf.mxu0
    %1522 = vdwg.mxu0
    %1523 = vmatpush.bf16.msra.mxu0 %v1295
    %1524 = vmatpush.bf16.msra.mxu0 %v1279
    %1525 = vmatpush.bf16.msra.mxu0 %v1263
    %1526 = vmatpush.bf16.msra.mxu0 %v1247
    %1527 = vmatpush.bf16.msra.mxu0 %v1231
    %1528 = vmatpush.bf16.msra.mxu0 %v1215
    %1529 = vmatpush.bf16.msra.mxu0 %v1199
    %1530 = vmatpush.bf16.msra.mxu0 %v1183
    %1531 = vmatmul.bf16.gmra.mxu0 %v791
    %v1532 = vpop.f32.mrf.mxu0
    %v1533 = vadd.f32 0.0, %v1532
    %v1534 = vpop.f32.mrf.mxu0
    %1535 = vdwg.mxu0
    %1536 = vmatpush.bf16.msra.mxu0 %v1296
    %1537 = vmatpush.bf16.msra.mxu0 %v1280
    %1538 = vmatpush.bf16.msra.mxu0 %v1264
    %1539 = vmatpush.bf16.msra.mxu0 %v1248
    %1540 = vmatpush.bf16.msra.mxu0 %v1232
    %1541 = vmatpush.bf16.msra.mxu0 %v1216
    %1542 = vmatpush.bf16.msra.mxu0 %v1200
    %1543 = vmatpush.bf16.msra.mxu0 %v1184
    %1544 = vmatmul.bf16.gmra.mxu0 %v791
    %v1545 = vpop.f32.mrf.mxu0
    %v1546 = vadd.f32 0.0, %v1545
    %v1547 = vpop.f32.mrf.mxu0
    %1548 = vdwg.mxu0
    %1549 = vmatpush.bf16.msra.mxu0 %v1297
    %1550 = vmatpush.bf16.msra.mxu0 %v1281
    %1551 = vmatpush.bf16.msra.mxu0 %v1265
    %1552 = vmatpush.bf16.msra.mxu0 %v1249
    %1553 = vmatpush.bf16.msra.mxu0 %v1233
    %1554 = vmatpush.bf16.msra.mxu0 %v1217
    %1555 = vmatpush.bf16.msra.mxu0 %v1201
    %1556 = vmatpush.bf16.msra.mxu0 %v1185
    %1557 = vmatmul.bf16.gmra.mxu0 %v791
    %v1558 = vpop.f32.mrf.mxu0
    %v1559 = vadd.f32 0.0, %v1558
    %v1560 = vpop.f32.mrf.mxu0
    %1561 = vdwg.mxu0
    %1562 = vmatpush.bf16.msra.mxu0 %v1298
    %1563 = vmatpush.bf16.msra.mxu0 %v1282
    %1564 = vmatpush.bf16.msra.mxu0 %v1266
    %1565 = vmatpush.bf16.msra.mxu0 %v1250
    %1566 = vmatpush.bf16.msra.mxu0 %v1234
    %1567 = vmatpush.bf16.msra.mxu0 %v1218
    %1568 = vmatpush.bf16.msra.mxu0 %v1202
    %1569 = vmatpush.bf16.msra.mxu0 %v1186
    %1570 = vmatmul.bf16.gmra.mxu0 %v791
    %v1571 = vpop.f32.mrf.mxu0
    %v1572 = vadd.f32 0.0, %v1571
    %v1573 = vpop.f32.mrf.mxu0
    %1574 = vdwg.mxu0
    %1575 = vmatpush.bf16.msra.mxu0 %v1299
    %1576 = vmatpush.bf16.msra.mxu0 %v1283
    %1577 = vmatpush.bf16.msra.mxu0 %v1267
    %1578 = vmatpush.bf16.msra.mxu0 %v1251
    %1579 = vmatpush.bf16.msra.mxu0 %v1235
    %1580 = vmatpush.bf16.msra.mxu0 %v1219
    %1581 = vmatpush.bf16.msra.mxu0 %v1203
    %1582 = vmatpush.bf16.msra.mxu0 %v1187
    %1583 = vmatmul.bf16.gmra.mxu0 %v791
    %v1584 = vpop.f32.mrf.mxu0
    %v1585 = vadd.f32 0.0, %v1584
    %v1586 = vpop.f32.mrf.mxu0
    %1587 = vdwg.mxu0
    %1588 = vmatpush.bf16.msra.mxu0 %v1300
    %1589 = vmatpush.bf16.msra.mxu0 %v1284
    %1590 = vmatpush.bf16.msra.mxu0 %v1268
    %1591 = vmatpush.bf16.msra.mxu0 %v1252
    %1592 = vmatpush.bf16.msra.mxu0 %v1236
    %1593 = vmatpush.bf16.msra.mxu0 %v1220
    %1594 = vmatpush.bf16.msra.mxu0 %v1204
    %1595 = vmatpush.bf16.msra.mxu0 %v1188
    %1596 = vmatmul.bf16.gmra.mxu0 %v791
    %v1597 = vpop.f32.mrf.mxu0
    %v1598 = vadd.f32 0.0, %v1597
    %v1599 = vpop.f32.mrf.mxu0
    %1600 = vdwg.mxu0
    %1601 = vmatpush.bf16.msra.mxu0 %v1301
    %1602 = vmatpush.bf16.msra.mxu0 %v1285
    %1603 = vmatpush.bf16.msra.mxu0 %v1269
    %1604 = vmatpush.bf16.msra.mxu0 %v1253
    %1605 = vmatpush.bf16.msra.mxu0 %v1237
    %1606 = vmatpush.bf16.msra.mxu0 %v1221
    %1607 = vmatpush.bf16.msra.mxu0 %v1205
    %1608 = vmatpush.bf16.msra.mxu0 %v1189
    %1609 = vmatmul.bf16.gmra.mxu0 %v791
    %v1610 = vpop.f32.mrf.mxu0
    %v1611 = vadd.f32 0.0, %v1610
    %v1612 = vpop.f32.mrf.mxu0
    %1613 = vdwg.mxu0
    %1614 = vmatpush.bf16.msra.mxu0 %v1302
    %1615 = vmatpush.bf16.msra.mxu0 %v1286
    %1616 = vmatpush.bf16.msra.mxu0 %v1270
    %1617 = vmatpush.bf16.msra.mxu0 %v1254
    %1618 = vmatpush.bf16.msra.mxu0 %v1238
    %1619 = vmatpush.bf16.msra.mxu0 %v1222
    %1620 = vmatpush.bf16.msra.mxu0 %v1206
    %1621 = vmatpush.bf16.msra.mxu0 %v1190
    %1622 = vmatmul.bf16.gmra.mxu0 %v791
    %v1623 = vpop.f32.mrf.mxu0
    %v1624 = vadd.f32 0.0, %v1623
    %v1625 = vpop.f32.mrf.mxu0
    %1626 = vdwg.mxu0
    %1627 = vmatpush.bf16.msra.mxu0 %v1303
    %1628 = vmatpush.bf16.msra.mxu0 %v1287
    %1629 = vmatpush.bf16.msra.mxu0 %v1271
    %1630 = vmatpush.bf16.msra.mxu0 %v1255
    %1631 = vmatpush.bf16.msra.mxu0 %v1239
    %1632 = vmatpush.bf16.msra.mxu0 %v1223
    %1633 = vmatpush.bf16.msra.mxu0 %v1207
    %1634 = vmatpush.bf16.msra.mxu0 %v1191
    %1635 = vmatmul.bf16.gmra.mxu0 %v791
    %v1636 = vpop.f32.mrf.mxu0
    %v1637 = vadd.f32 0.0, %v1636
    %v1638 = vpop.f32.mrf.mxu0
    %1639 = vdwg.mxu0
    %v1641 = vrot.slane %v1533, 6
    %v1644 = vrot.slane %v1611, 4
    %v1647 = vrot.slane %v1637, 2
    %vm1649 = vcmask 1041408
    %v1650 = vsel %vm1649, %v1507, %v1641
    %v1651 = vsel %vm277, %v1650, %v1644
    %vm1652 = vcmask 1045504
    %v1653 = vsel %vm1652, %v1651, %v1647
    %v1654 = vld [vmem:[%s7] sm:$0x1]
    %v1655 = vpack.c.bf16 %v1653, %v1653
    %v1657 = vsel %vm273, %v1654, 0
    %v1660 = vsel %vm277, %v1655, 0
    %1662 = vmatpush.bf16.msra.mxu0 0
    %1663 = vmatpush.bf16.msra.mxu0 0
    %1664 = vmatpush.bf16.msra.mxu0 0
    %1665 = vmatpush.bf16.msra.mxu0 0
    %1666 = vmatpush.bf16.msra.mxu0 0
    %1667 = vmatpush.bf16.msra.mxu0 0
    %1668 = vmatpush.bf16.msra.mxu0 0
    %1669 = vmatpush.bf16.msra.mxu0 %v1660
    %1670 = vmatmul.bf16.gmra.mxu0 %v1657
    %v1671 = vpop.f32.mrf.mxu0
    %v1672 = vadd.f32 0.0, %v1671
    %v1673 = vpop.f32.mrf.mxu0
    %1674 = vdwg.mxu0
    %v1676 = vrot.slane %v1520, 6
    %v1679 = vrot.slane %v1598, 4
    %v1682 = vrot.slane %v1624, 2
    %v1684 = vsel %vm1649, %v1494, %v1676
    %v1685 = vsel %vm277, %v1684, %v1679
    %v1686 = vsel %vm1652, %v1685, %v1682
    %s1687 = scalar_lea.vmem %s7, 1
    %v1688 = vld [vmem:[%s1687] sm:$0x1]
    %v1689 = vpack.c.bf16 %v1686, %v1686
    %v1691 = vsel %vm273, %v1688, 0
    %v1694 = vsel %vm277, %v1689, 0
    %1696 = vmatpush.bf16.msra.mxu0 0
    %1697 = vmatpush.bf16.msra.mxu0 0
    %1698 = vmatpush.bf16.msra.mxu0 0
    %1699 = vmatpush.bf16.msra.mxu0 0
    %1700 = vmatpush.bf16.msra.mxu0 0
    %1701 = vmatpush.bf16.msra.mxu0 0
    %1702 = vmatpush.bf16.msra.mxu0 0
    %1703 = vmatpush.bf16.msra.mxu0 %v1694
    %1704 = vmatmul.bf16.gmra.mxu0 %v1691
    %v1705 = vpop.f32.mrf.mxu0
    %v1706 = vadd.f32 0.0, %v1705
    %v1707 = vpop.f32.mrf.mxu0
    %1708 = vdwg.mxu0
    %v1710 = vrot.slane %v1481, 6
    %v1713 = vrot.slane %v1559, 4
    %v1716 = vrot.slane %v1585, 2
    %v1718 = vsel %vm1649, %v1455, %v1710
    %v1719 = vsel %vm277, %v1718, %v1713
    %v1720 = vsel %vm1652, %v1719, %v1716
    %s1721 = scalar_lea.vmem %s7, 2
    %v1722 = vld [vmem:[%s1721] sm:$0x1]
    %v1723 = vpack.c.bf16 %v1720, %v1720
    %v1725 = vsel %vm273, %v1722, 0
    %v1728 = vsel %vm277, %v1723, 0
    %1730 = vmatpush.bf16.msra.mxu0 0
    %1731 = vmatpush.bf16.msra.mxu0 0
    %1732 = vmatpush.bf16.msra.mxu0 0
    %1733 = vmatpush.bf16.msra.mxu0 0
    %1734 = vmatpush.bf16.msra.mxu0 0
    %1735 = vmatpush.bf16.msra.mxu0 0
    %1736 = vmatpush.bf16.msra.mxu0 0
    %1737 = vmatpush.bf16.msra.mxu0 %v1728
    %1738 = vmatmul.bf16.gmra.mxu0 %v1725
    %v1739 = vpop.f32.mrf.mxu0
    %v1740 = vadd.f32 0.0, %v1739
    %v1741 = vpop.f32.mrf.mxu0
    %1742 = vdwg.mxu0
    %v1744 = vrot.slane %v1468, 6
    %v1747 = vrot.slane %v1546, 4
    %v1750 = vrot.slane %v1572, 2
    %v1752 = vsel %vm1649, %v1442, %v1744
    %v1753 = vsel %vm277, %v1752, %v1747
    %v1754 = vsel %vm1652, %v1753, %v1750
    %s1755 = scalar_lea.vmem %s7, 3
    %v1756 = vld [vmem:[%s1755] sm:$0x1]
    %v1757 = vpack.c.bf16 %v1754, %v1754
    %v1759 = vsel %vm273, %v1756, 0
    %v1762 = vsel %vm277, %v1757, 0
    %1764 = vmatpush.bf16.msra.mxu0 0
    %1765 = vmatpush.bf16.msra.mxu0 0
    %1766 = vmatpush.bf16.msra.mxu0 0
    %1767 = vmatpush.bf16.msra.mxu0 0
    %1768 = vmatpush.bf16.msra.mxu0 0
    %1769 = vmatpush.bf16.msra.mxu0 0
    %1770 = vmatpush.bf16.msra.mxu0 0
    %1771 = vmatpush.bf16.msra.mxu0 %v1762
    %1772 = vmatmul.bf16.gmra.mxu0 %v1759
    %v1773 = vpop.f32.mrf.mxu0
    %v1774 = vadd.f32 0.0, %v1773
    %v1775 = vpop.f32.mrf.mxu0
    %1776 = vdwg.mxu0
    %v1778 = vrot.slane %v1706, 6
    %v1781 = vrot.slane %v1740, 4
    %v1784 = vrot.slane %v1774, 2
    %v1786 = vsel %vm1649, %v1672, %v1778
    %v1787 = vsel %vm277, %v1786, %v1781
    %v1788 = vsel %vm1652, %v1787, %v1784
    %v1789 = vld [vmem:[%s6] sm:$0x1]
    %v1791 = vperm.slane %v1789, 0
    %v1793 = vadd.f32 %v1788, %v1791
    %v1794 = vmax.f32 %v1793, 0.0
    %v1795 = vld [vmem:[#allocation10] sm:$0xff]
    %v1796 = vld [vmem:[#allocation10 + $0x8] sm:$0xff]
    %v1797 = vld [vmem:[#allocation10 + $0x10] sm:$0xff]
    %v1798 = vld [vmem:[#allocation10 + $0x18] sm:$0xff]
    %v1799 = vld [vmem:[#allocation10 + $0x20] sm:$0xff]
    %v1800 = vld [vmem:[#allocation10 + $0x28] sm:$0xff]
    %v1801 = vld [vmem:[#allocation10 + $0x30] sm:$0xff]
    %v1802 = vld [vmem:[#allocation10 + $0x38] sm:$0xff]
    %v1803 = vld [vmem:[#allocation10 + $0x40] sm:$0xff]
    %v1804 = vld [vmem:[#allocation10 + $0x48] sm:$0xff]
    %v1805 = vld [vmem:[#allocation10 + $0x50] sm:$0xff]
    %v1806 = vld [vmem:[#allocation10 + $0x58] sm:$0xff]
    %v1807 = vld [vmem:[#allocation10 + $0x60] sm:$0xff]
    %v1808 = vld [vmem:[#allocation10 + $0x68] sm:$0xff]
    %v1809 = vld [vmem:[#allocation10 + $0x70] sm:$0xff]
    %v1810 = vld [vmem:[#allocation10 + $0x78] sm:$0xff]
    %v1811 = vld [vmem:[#allocation10 + $0x80] sm:$0xff]
    %v1812 = vld [vmem:[#allocation10 + $0x88] sm:$0xff]
    %v1813 = vld [vmem:[#allocation10 + $0x90] sm:$0xff]
    %v1814 = vld [vmem:[#allocation10 + $0x98] sm:$0xff]
    %v1815 = vld [vmem:[#allocation10 + $0xa0] sm:$0xff]
    %v1816 = vld [vmem:[#allocation10 + $0xa8] sm:$0xff]
    %v1817 = vld [vmem:[#allocation10 + $0xb0] sm:$0xff]
    %v1818 = vld [vmem:[#allocation10 + $0xb8] sm:$0xff]
    %v1819 = vld [vmem:[#allocation10 + $0xc0] sm:$0xff]
    %v1820 = vld [vmem:[#allocation10 + $0xc8] sm:$0xff]
    %v1821 = vld [vmem:[#allocation10 + $0xd0] sm:$0xff]
    %v1822 = vld [vmem:[#allocation10 + $0xd8] sm:$0xff]
    %v1823 = vld [vmem:[#allocation10 + $0xe0] sm:$0xff]
    %v1824 = vld [vmem:[#allocation10 + $0xe8] sm:$0xff]
    %v1825 = vld [vmem:[#allocation10 + $0xf0] sm:$0xff]
    %v1826 = vld [vmem:[#allocation10 + $0xf8] sm:$0xff]
    %v1827 = vld [vmem:[#allocation10 + $0x100] sm:$0xff]
    %v1828 = vld [vmem:[#allocation10 + $0x108] sm:$0xff]
    %v1829 = vld [vmem:[#allocation10 + $0x110] sm:$0xff]
    %v1830 = vld [vmem:[#allocation10 + $0x118] sm:$0xff]
    %v1831 = vld [vmem:[#allocation10 + $0x120] sm:$0xff]
    %v1832 = vld [vmem:[#allocation10 + $0x128] sm:$0xff]
    %v1833 = vld [vmem:[#allocation10 + $0x130] sm:$0xff]
    %v1834 = vld [vmem:[#allocation10 + $0x138] sm:$0xff]
    %v1835 = vld [vmem:[#allocation10 + $0x140] sm:$0xff]
    %v1836 = vld [vmem:[#allocation10 + $0x148] sm:$0xff]
    %v1837 = vld [vmem:[#allocation10 + $0x150] sm:$0xff]
    %v1838 = vld [vmem:[#allocation10 + $0x158] sm:$0xff]
    %v1839 = vld [vmem:[#allocation10 + $0x160] sm:$0xff]
    %v1840 = vld [vmem:[#allocation10 + $0x168] sm:$0xff]
    %v1841 = vld [vmem:[#allocation10 + $0x170] sm:$0xff]
    %v1842 = vld [vmem:[#allocation10 + $0x178] sm:$0xff]
    %v1843 = vld [vmem:[#allocation10 + $0x180] sm:$0xff]
    %v1844 = vld [vmem:[#allocation10 + $0x188] sm:$0xff]
    %v1845 = vld [vmem:[#allocation10 + $0x190] sm:$0xff]
    %v1846 = vld [vmem:[#allocation10 + $0x198] sm:$0xff]
    %v1847 = vld [vmem:[#allocation10 + $0x1a0] sm:$0xff]
    %v1848 = vld [vmem:[#allocation10 + $0x1a8] sm:$0xff]
    %v1849 = vld [vmem:[#allocation10 + $0x1b0] sm:$0xff]
    %v1850 = vld [vmem:[#allocation10 + $0x1b8] sm:$0xff]
    %v1851 = vld [vmem:[#allocation10 + $0x1c0] sm:$0xff]
    %v1852 = vld [vmem:[#allocation10 + $0x1c8] sm:$0xff]
    %v1853 = vld [vmem:[#allocation10 + $0x1d0] sm:$0xff]
    %v1854 = vld [vmem:[#allocation10 + $0x1d8] sm:$0xff]
    %v1855 = vld [vmem:[#allocation10 + $0x1e0] sm:$0xff]
    %v1856 = vld [vmem:[#allocation10 + $0x1e8] sm:$0xff]
    %v1857 = vld [vmem:[#allocation10 + $0x1f0] sm:$0xff]
    %v1858 = vld [vmem:[#allocation10 + $0x1f8] sm:$0xff]
    %v1859 = vld [vmem:[#allocation10 + $0x200] sm:$0xff]
    %v1860 = vld [vmem:[#allocation10 + $0x208] sm:$0xff]
    %v1861 = vld [vmem:[#allocation10 + $0x210] sm:$0xff]
    %v1862 = vld [vmem:[#allocation10 + $0x218] sm:$0xff]
    %v1863 = vld [vmem:[#allocation10 + $0x220] sm:$0xff]
    %v1864 = vld [vmem:[#allocation10 + $0x228] sm:$0xff]
    %v1865 = vld [vmem:[#allocation10 + $0x230] sm:$0xff]
    %v1866 = vld [vmem:[#allocation10 + $0x238] sm:$0xff]
    %v1867 = vld [vmem:[#allocation10 + $0x240] sm:$0xff]
    %v1868 = vld [vmem:[#allocation10 + $0x248] sm:$0xff]
    %v1869 = vld [vmem:[#allocation10 + $0x250] sm:$0xff]
    %v1870 = vld [vmem:[#allocation10 + $0x258] sm:$0xff]
    %v1871 = vld [vmem:[#allocation10 + $0x260] sm:$0xff]
    %v1872 = vld [vmem:[#allocation10 + $0x268] sm:$0xff]
    %v1873 = vld [vmem:[#allocation10 + $0x270] sm:$0xff]
    %v1874 = vld [vmem:[#allocation10 + $0x278] sm:$0xff]
    %v1875 = vld [vmem:[#allocation10 + $0x280] sm:$0xff]
    %v1876 = vld [vmem:[#allocation10 + $0x288] sm:$0xff]
    %v1877 = vld [vmem:[#allocation10 + $0x290] sm:$0xff]
    %v1878 = vld [vmem:[#allocation10 + $0x298] sm:$0xff]
    %v1879 = vld [vmem:[#allocation10 + $0x2a0] sm:$0xff]
    %v1880 = vld [vmem:[#allocation10 + $0x2a8] sm:$0xff]
    %v1881 = vld [vmem:[#allocation10 + $0x2b0] sm:$0xff]
    %v1882 = vld [vmem:[#allocation10 + $0x2b8] sm:$0xff]
    %v1883 = vld [vmem:[#allocation10 + $0x2c0] sm:$0xff]
    %v1884 = vld [vmem:[#allocation10 + $0x2c8] sm:$0xff]
    %v1885 = vld [vmem:[#allocation10 + $0x2d0] sm:$0xff]
    %v1886 = vld [vmem:[#allocation10 + $0x2d8] sm:$0xff]
    %v1887 = vld [vmem:[#allocation10 + $0x2e0] sm:$0xff]
    %v1888 = vld [vmem:[#allocation10 + $0x2e8] sm:$0xff]
    %v1889 = vld [vmem:[#allocation10 + $0x2f0] sm:$0xff]
    %v1890 = vld [vmem:[#allocation10 + $0x2f8] sm:$0xff]
    %v1891 = vld [vmem:[#allocation10 + $0x300] sm:$0xff]
    %v1892 = vld [vmem:[#allocation10 + $0x308] sm:$0xff]
    %v1893 = vld [vmem:[#allocation10 + $0x310] sm:$0xff]
    %v1894 = vld [vmem:[#allocation10 + $0x318] sm:$0xff]
    %v1895 = vld [vmem:[#allocation10 + $0x320] sm:$0xff]
    %v1896 = vld [vmem:[#allocation10 + $0x328] sm:$0xff]
    %v1897 = vld [vmem:[#allocation10 + $0x330] sm:$0xff]
    %v1898 = vld [vmem:[#allocation10 + $0x338] sm:$0xff]
    %v1899 = vld [vmem:[#allocation10 + $0x340] sm:$0xff]
    %v1900 = vld [vmem:[#allocation10 + $0x348] sm:$0xff]
    %v1901 = vld [vmem:[#allocation10 + $0x350] sm:$0xff]
    %v1902 = vld [vmem:[#allocation10 + $0x358] sm:$0xff]
    %v1903 = vld [vmem:[#allocation10 + $0x360] sm:$0xff]
    %v1904 = vld [vmem:[#allocation10 + $0x368] sm:$0xff]
    %v1905 = vld [vmem:[#allocation10 + $0x370] sm:$0xff]
    %v1906 = vld [vmem:[#allocation10 + $0x378] sm:$0xff]
    %v1907 = vld [vmem:[#allocation10 + $0x380] sm:$0xff]
    %v1908 = vld [vmem:[#allocation10 + $0x388] sm:$0xff]
    %v1909 = vld [vmem:[#allocation10 + $0x390] sm:$0xff]
    %v1910 = vld [vmem:[#allocation10 + $0x398] sm:$0xff]
    %v1911 = vld [vmem:[#allocation10 + $0x3a0] sm:$0xff]
    %v1912 = vld [vmem:[#allocation10 + $0x3a8] sm:$0xff]
    %v1913 = vld [vmem:[#allocation10 + $0x3b0] sm:$0xff]
    %v1914 = vld [vmem:[#allocation10 + $0x3b8] sm:$0xff]
    %v1915 = vld [vmem:[#allocation10 + $0x3c0] sm:$0xff]
    %v1916 = vld [vmem:[#allocation10 + $0x3c8] sm:$0xff]
    %v1917 = vld [vmem:[#allocation10 + $0x3d0] sm:$0xff]
    %v1918 = vld [vmem:[#allocation10 + $0x3d8] sm:$0xff]
    %v1919 = vld [vmem:[#allocation10 + $0x3e0] sm:$0xff]
    %v1920 = vld [vmem:[#allocation10 + $0x3e8] sm:$0xff]
    %v1921 = vld [vmem:[#allocation10 + $0x3f0] sm:$0xff]
    %v1922 = vld [vmem:[#allocation10 + $0x3f8] sm:$0xff]
    %v1923 = vpack.c.bf16 %v1794, %v1794
    %v2052 = vunpack.c.l.b16 %v1795
    %v2053 = vunpack.c.h.b16 %v1795
    %v2054 = vunpack.c.l.b16 %v1796
    %v2055 = vunpack.c.h.b16 %v1796
    %v2056 = vunpack.c.l.b16 %v1797
    %v2057 = vunpack.c.h.b16 %v1797
    %v2058 = vunpack.c.l.b16 %v1798
    %v2059 = vunpack.c.h.b16 %v1798
    %v2060 = vunpack.c.l.b16 %v1799
    %v2061 = vunpack.c.h.b16 %v1799
    %v2062 = vunpack.c.l.b16 %v1800
    %v2063 = vunpack.c.h.b16 %v1800
    %v2064 = vunpack.c.l.b16 %v1801
    %v2065 = vunpack.c.h.b16 %v1801
    %v2066 = vunpack.c.l.b16 %v1802
    %v2067 = vunpack.c.h.b16 %v1802
    %v2068 = vunpack.c.l.b16 %v1803
    %v2069 = vunpack.c.h.b16 %v1803
    %v2070 = vunpack.c.l.b16 %v1804
    %v2071 = vunpack.c.h.b16 %v1804
    %v2072 = vunpack.c.l.b16 %v1805
    %v2073 = vunpack.c.h.b16 %v1805
    %v2074 = vunpack.c.l.b16 %v1806
    %v2075 = vunpack.c.h.b16 %v1806
    %v2076 = vunpack.c.l.b16 %v1807
    %v2077 = vunpack.c.h.b16 %v1807
    %v2078 = vunpack.c.l.b16 %v1808
    %v2079 = vunpack.c.h.b16 %v1808
    %v2080 = vunpack.c.l.b16 %v1809
    %v2081 = vunpack.c.h.b16 %v1809
    %v2082 = vunpack.c.l.b16 %v1810
    %v2083 = vunpack.c.h.b16 %v1810
    %v2084 = vunpack.c.l.b16 %v1811
    %v2085 = vunpack.c.h.b16 %v1811
    %v2086 = vunpack.c.l.b16 %v1812
    %v2087 = vunpack.c.h.b16 %v1812
    %v2088 = vunpack.c.l.b16 %v1813
    %v2089 = vunpack.c.h.b16 %v1813
    %v2090 = vunpack.c.l.b16 %v1814
    %v2091 = vunpack.c.h.b16 %v1814
    %v2092 = vunpack.c.l.b16 %v1815
    %v2093 = vunpack.c.h.b16 %v1815
    %v2094 = vunpack.c.l.b16 %v1816
    %v2095 = vunpack.c.h.b16 %v1816
    %v2096 = vunpack.c.l.b16 %v1817
    %v2097 = vunpack.c.h.b16 %v1817
    %v2098 = vunpack.c.l.b16 %v1818
    %v2099 = vunpack.c.h.b16 %v1818
    %v2100 = vunpack.c.l.b16 %v1819
    %v2101 = vunpack.c.h.b16 %v1819
    %v2102 = vunpack.c.l.b16 %v1820
    %v2103 = vunpack.c.h.b16 %v1820
    %v2104 = vunpack.c.l.b16 %v1821
    %v2105 = vunpack.c.h.b16 %v1821
    %v2106 = vunpack.c.l.b16 %v1822
    %v2107 = vunpack.c.h.b16 %v1822
    %v2108 = vunpack.c.l.b16 %v1823
    %v2109 = vunpack.c.h.b16 %v1823
    %v2110 = vunpack.c.l.b16 %v1824
    %v2111 = vunpack.c.h.b16 %v1824
    %v2112 = vunpack.c.l.b16 %v1825
    %v2113 = vunpack.c.h.b16 %v1825
    %v2114 = vunpack.c.l.b16 %v1826
    %v2115 = vunpack.c.h.b16 %v1826
    %v2116 = vunpack.c.l.b16 %v1827
    %v2117 = vunpack.c.h.b16 %v1827
    %v2118 = vunpack.c.l.b16 %v1828
    %v2119 = vunpack.c.h.b16 %v1828
    %v2120 = vunpack.c.l.b16 %v1829
    %v2121 = vunpack.c.h.b16 %v1829
    %v2122 = vunpack.c.l.b16 %v1830
    %v2123 = vunpack.c.h.b16 %v1830
    %v2124 = vunpack.c.l.b16 %v1831
    %v2125 = vunpack.c.h.b16 %v1831
    %v2126 = vunpack.c.l.b16 %v1832
    %v2127 = vunpack.c.h.b16 %v1832
    %v2128 = vunpack.c.l.b16 %v1833
    %v2129 = vunpack.c.h.b16 %v1833
    %v2130 = vunpack.c.l.b16 %v1834
    %v2131 = vunpack.c.h.b16 %v1834
    %v2132 = vunpack.c.l.b16 %v1835
    %v2133 = vunpack.c.h.b16 %v1835
    %v2134 = vunpack.c.l.b16 %v1836
    %v2135 = vunpack.c.h.b16 %v1836
    %v2136 = vunpack.c.l.b16 %v1837
    %v2137 = vunpack.c.h.b16 %v1837
    %v2138 = vunpack.c.l.b16 %v1838
    %v2139 = vunpack.c.h.b16 %v1838
    %v2140 = vunpack.c.l.b16 %v1839
    %v2141 = vunpack.c.h.b16 %v1839
    %v2142 = vunpack.c.l.b16 %v1840
    %v2143 = vunpack.c.h.b16 %v1840
    %v2144 = vunpack.c.l.b16 %v1841
    %v2145 = vunpack.c.h.b16 %v1841
    %v2146 = vunpack.c.l.b16 %v1842
    %v2147 = vunpack.c.h.b16 %v1842
    %v2148 = vunpack.c.l.b16 %v1843
    %v2149 = vunpack.c.h.b16 %v1843
    %v2150 = vunpack.c.l.b16 %v1844
    %v2151 = vunpack.c.h.b16 %v1844
    %v2152 = vunpack.c.l.b16 %v1845
    %v2153 = vunpack.c.h.b16 %v1845
    %v2154 = vunpack.c.l.b16 %v1846
    %v2155 = vunpack.c.h.b16 %v1846
    %v2156 = vunpack.c.l.b16 %v1847
    %v2157 = vunpack.c.h.b16 %v1847
    %v2158 = vunpack.c.l.b16 %v1848
    %v2159 = vunpack.c.h.b16 %v1848
    %v2160 = vunpack.c.l.b16 %v1849
    %v2161 = vunpack.c.h.b16 %v1849
    %v2162 = vunpack.c.l.b16 %v1850
    %v2163 = vunpack.c.h.b16 %v1850
    %v2164 = vunpack.c.l.b16 %v1851
    %v2165 = vunpack.c.h.b16 %v1851
    %v2166 = vunpack.c.l.b16 %v1852
    %v2167 = vunpack.c.h.b16 %v1852
    %v2168 = vunpack.c.l.b16 %v1853
    %v2169 = vunpack.c.h.b16 %v1853
    %v2170 = vunpack.c.l.b16 %v1854
    %v2171 = vunpack.c.h.b16 %v1854
    %v2172 = vunpack.c.l.b16 %v1855
    %v2173 = vunpack.c.h.b16 %v1855
    %v2174 = vunpack.c.l.b16 %v1856
    %v2175 = vunpack.c.h.b16 %v1856
    %v2176 = vunpack.c.l.b16 %v1857
    %v2177 = vunpack.c.h.b16 %v1857
    %v2178 = vunpack.c.l.b16 %v1858
    %v2179 = vunpack.c.h.b16 %v1858
    %v2180 = vunpack.c.l.b16 %v1859
    %v2181 = vunpack.c.h.b16 %v1859
    %v2182 = vunpack.c.l.b16 %v1860
    %v2183 = vunpack.c.h.b16 %v1860
    %v2184 = vunpack.c.l.b16 %v1861
    %v2185 = vunpack.c.h.b16 %v1861
    %v2186 = vunpack.c.l.b16 %v1862
    %v2187 = vunpack.c.h.b16 %v1862
    %v2188 = vunpack.c.l.b16 %v1863
    %v2189 = vunpack.c.h.b16 %v1863
    %v2190 = vunpack.c.l.b16 %v1864
    %v2191 = vunpack.c.h.b16 %v1864
    %v2192 = vunpack.c.l.b16 %v1865
    %v2193 = vunpack.c.h.b16 %v1865
    %v2194 = vunpack.c.l.b16 %v1866
    %v2195 = vunpack.c.h.b16 %v1866
    %v2196 = vunpack.c.l.b16 %v1867
    %v2197 = vunpack.c.h.b16 %v1867
    %v2198 = vunpack.c.l.b16 %v1868
    %v2199 = vunpack.c.h.b16 %v1868
    %v2200 = vunpack.c.l.b16 %v1869
    %v2201 = vunpack.c.h.b16 %v1869
    %v2202 = vunpack.c.l.b16 %v1870
    %v2203 = vunpack.c.h.b16 %v1870
    %v2204 = vunpack.c.l.b16 %v1871
    %v2205 = vunpack.c.h.b16 %v1871
    %v2206 = vunpack.c.l.b16 %v1872
    %v2207 = vunpack.c.h.b16 %v1872
    %v2208 = vunpack.c.l.b16 %v1873
    %v2209 = vunpack.c.h.b16 %v1873
    %v2210 = vunpack.c.l.b16 %v1874
    %v2211 = vunpack.c.h.b16 %v1874
    %v2212 = vunpack.c.l.b16 %v1875
    %v2213 = vunpack.c.h.b16 %v1875
    %v2214 = vunpack.c.l.b16 %v1876
    %v2215 = vunpack.c.h.b16 %v1876
    %v2216 = vunpack.c.l.b16 %v1877
    %v2217 = vunpack.c.h.b16 %v1877
    %v2218 = vunpack.c.l.b16 %v1878
    %v2219 = vunpack.c.h.b16 %v1878
    %v2220 = vunpack.c.l.b16 %v1879
    %v2221 = vunpack.c.h.b16 %v1879
    %v2222 = vunpack.c.l.b16 %v1880
    %v2223 = vunpack.c.h.b16 %v1880
    %v2224 = vunpack.c.l.b16 %v1881
    %v2225 = vunpack.c.h.b16 %v1881
    %v2226 = vunpack.c.l.b16 %v1882
    %v2227 = vunpack.c.h.b16 %v1882
    %v2228 = vunpack.c.l.b16 %v1883
    %v2229 = vunpack.c.h.b16 %v1883
    %v2230 = vunpack.c.l.b16 %v1884
    %v2231 = vunpack.c.h.b16 %v1884
    %v2232 = vunpack.c.l.b16 %v1885
    %v2233 = vunpack.c.h.b16 %v1885
    %v2234 = vunpack.c.l.b16 %v1886
    %v2235 = vunpack.c.h.b16 %v1886
    %v2236 = vunpack.c.l.b16 %v1887
    %v2237 = vunpack.c.h.b16 %v1887
    %v2238 = vunpack.c.l.b16 %v1888
    %v2239 = vunpack.c.h.b16 %v1888
    %v2240 = vunpack.c.l.b16 %v1889
    %v2241 = vunpack.c.h.b16 %v1889
    %v2242 = vunpack.c.l.b16 %v1890
    %v2243 = vunpack.c.h.b16 %v1890
    %v2244 = vunpack.c.l.b16 %v1891
    %v2245 = vunpack.c.h.b16 %v1891
    %v2246 = vunpack.c.l.b16 %v1892
    %v2247 = vunpack.c.h.b16 %v1892
    %v2248 = vunpack.c.l.b16 %v1893
    %v2249 = vunpack.c.h.b16 %v1893
    %v2250 = vunpack.c.l.b16 %v1894
    %v2251 = vunpack.c.h.b16 %v1894
    %v2252 = vunpack.c.l.b16 %v1895
    %v2253 = vunpack.c.h.b16 %v1895
    %v2254 = vunpack.c.l.b16 %v1896
    %v2255 = vunpack.c.h.b16 %v1896
    %v2256 = vunpack.c.l.b16 %v1897
    %v2257 = vunpack.c.h.b16 %v1897
    %v2258 = vunpack.c.l.b16 %v1898
    %v2259 = vunpack.c.h.b16 %v1898
    %v2260 = vunpack.c.l.b16 %v1899
    %v2261 = vunpack.c.h.b16 %v1899
    %v2262 = vunpack.c.l.b16 %v1900
    %v2263 = vunpack.c.h.b16 %v1900
    %v2264 = vunpack.c.l.b16 %v1901
    %v2265 = vunpack.c.h.b16 %v1901
    %v2266 = vunpack.c.l.b16 %v1902
    %v2267 = vunpack.c.h.b16 %v1902
    %v2268 = vunpack.c.l.b16 %v1903
    %v2269 = vunpack.c.h.b16 %v1903
    %v2270 = vunpack.c.l.b16 %v1904
    %v2271 = vunpack.c.h.b16 %v1904
    %v2272 = vunpack.c.l.b16 %v1905
    %v2273 = vunpack.c.h.b16 %v1905
    %v2274 = vunpack.c.l.b16 %v1906
    %v2275 = vunpack.c.h.b16 %v1906
    %v2276 = vunpack.c.l.b16 %v1907
    %v2277 = vunpack.c.h.b16 %v1907
    %v2278 = vunpack.c.l.b16 %v1908
    %v2279 = vunpack.c.h.b16 %v1908
    %v2280 = vunpack.c.l.b16 %v1909
    %v2281 = vunpack.c.h.b16 %v1909
    %v2282 = vunpack.c.l.b16 %v1910
    %v2283 = vunpack.c.h.b16 %v1910
    %v2284 = vunpack.c.l.b16 %v1911
    %v2285 = vunpack.c.h.b16 %v1911
    %v2286 = vunpack.c.l.b16 %v1912
    %v2287 = vunpack.c.h.b16 %v1912
    %v2288 = vunpack.c.l.b16 %v1913
    %v2289 = vunpack.c.h.b16 %v1913
    %v2290 = vunpack.c.l.b16 %v1914
    %v2291 = vunpack.c.h.b16 %v1914
    %v2292 = vunpack.c.l.b16 %v1915
    %v2293 = vunpack.c.h.b16 %v1915
    %v2294 = vunpack.c.l.b16 %v1916
    %v2295 = vunpack.c.h.b16 %v1916
    %v2296 = vunpack.c.l.b16 %v1917
    %v2297 = vunpack.c.h.b16 %v1917
    %v2298 = vunpack.c.l.b16 %v1918
    %v2299 = vunpack.c.h.b16 %v1918
    %v2300 = vunpack.c.l.b16 %v1919
    %v2301 = vunpack.c.h.b16 %v1919
    %v2302 = vunpack.c.l.b16 %v1920
    %v2303 = vunpack.c.h.b16 %v1920
    %v2304 = vunpack.c.l.b16 %v1921
    %v2305 = vunpack.c.h.b16 %v1921
    %v2306 = vunpack.c.l.b16 %v1922
    %v2307 = vunpack.c.h.b16 %v1922
    %v2308 = vpack.c.b16 %v2068, %v2052
    %v2309 = vpack.c.b16 %v2069, %v2053
    %v2310 = vpack.c.b16 %v2070, %v2054
    %v2311 = vpack.c.b16 %v2071, %v2055
    %v2312 = vpack.c.b16 %v2072, %v2056
    %v2313 = vpack.c.b16 %v2073, %v2057
    %v2314 = vpack.c.b16 %v2074, %v2058
    %v2315 = vpack.c.b16 %v2075, %v2059
    %v2316 = vpack.c.b16 %v2076, %v2060
    %v2317 = vpack.c.b16 %v2077, %v2061
    %v2318 = vpack.c.b16 %v2078, %v2062
    %v2319 = vpack.c.b16 %v2079, %v2063
    %v2320 = vpack.c.b16 %v2080, %v2064
    %v2321 = vpack.c.b16 %v2081, %v2065
    %v2322 = vpack.c.b16 %v2082, %v2066
    %v2323 = vpack.c.b16 %v2083, %v2067
    %v2324 = vpack.c.b16 %v2100, %v2084
    %v2325 = vpack.c.b16 %v2101, %v2085
    %v2326 = vpack.c.b16 %v2102, %v2086
    %v2327 = vpack.c.b16 %v2103, %v2087
    %v2328 = vpack.c.b16 %v2104, %v2088
    %v2329 = vpack.c.b16 %v2105, %v2089
    %v2330 = vpack.c.b16 %v2106, %v2090
    %v2331 = vpack.c.b16 %v2107, %v2091
    %v2332 = vpack.c.b16 %v2108, %v2092
    %v2333 = vpack.c.b16 %v2109, %v2093
    %v2334 = vpack.c.b16 %v2110, %v2094
    %v2335 = vpack.c.b16 %v2111, %v2095
    %v2336 = vpack.c.b16 %v2112, %v2096
    %v2337 = vpack.c.b16 %v2113, %v2097
    %v2338 = vpack.c.b16 %v2114, %v2098
    %v2339 = vpack.c.b16 %v2115, %v2099
    %v2340 = vpack.c.b16 %v2132, %v2116
    %v2341 = vpack.c.b16 %v2133, %v2117
    %v2342 = vpack.c.b16 %v2134, %v2118
    %v2343 = vpack.c.b16 %v2135, %v2119
    %v2344 = vpack.c.b16 %v2136, %v2120
    %v2345 = vpack.c.b16 %v2137, %v2121
    %v2346 = vpack.c.b16 %v2138, %v2122
    %v2347 = vpack.c.b16 %v2139, %v2123
    %v2348 = vpack.c.b16 %v2140, %v2124
    %v2349 = vpack.c.b16 %v2141, %v2125
    %v2350 = vpack.c.b16 %v2142, %v2126
    %v2351 = vpack.c.b16 %v2143, %v2127
    %v2352 = vpack.c.b16 %v2144, %v2128
    %v2353 = vpack.c.b16 %v2145, %v2129
    %v2354 = vpack.c.b16 %v2146, %v2130
    %v2355 = vpack.c.b16 %v2147, %v2131
    %v2356 = vpack.c.b16 %v2164, %v2148
    %v2357 = vpack.c.b16 %v2165, %v2149
    %v2358 = vpack.c.b16 %v2166, %v2150
    %v2359 = vpack.c.b16 %v2167, %v2151
    %v2360 = vpack.c.b16 %v2168, %v2152
    %v2361 = vpack.c.b16 %v2169, %v2153
    %v2362 = vpack.c.b16 %v2170, %v2154
    %v2363 = vpack.c.b16 %v2171, %v2155
    %v2364 = vpack.c.b16 %v2172, %v2156
    %v2365 = vpack.c.b16 %v2173, %v2157
    %v2366 = vpack.c.b16 %v2174, %v2158
    %v2367 = vpack.c.b16 %v2175, %v2159
    %v2368 = vpack.c.b16 %v2176, %v2160
    %v2369 = vpack.c.b16 %v2177, %v2161
    %v2370 = vpack.c.b16 %v2178, %v2162
    %v2371 = vpack.c.b16 %v2179, %v2163
    %v2372 = vpack.c.b16 %v2196, %v2180
    %v2373 = vpack.c.b16 %v2197, %v2181
    %v2374 = vpack.c.b16 %v2198, %v2182
    %v2375 = vpack.c.b16 %v2199, %v2183
    %v2376 = vpack.c.b16 %v2200, %v2184
    %v2377 = vpack.c.b16 %v2201, %v2185
    %v2378 = vpack.c.b16 %v2202, %v2186
    %v2379 = vpack.c.b16 %v2203, %v2187
    %v2380 = vpack.c.b16 %v2204, %v2188
    %v2381 = vpack.c.b16 %v2205, %v2189
    %v2382 = vpack.c.b16 %v2206, %v2190
    %v2383 = vpack.c.b16 %v2207, %v2191
    %v2384 = vpack.c.b16 %v2208, %v2192
    %v2385 = vpack.c.b16 %v2209, %v2193
    %v2386 = vpack.c.b16 %v2210, %v2194
    %v2387 = vpack.c.b16 %v2211, %v2195
    %v2388 = vpack.c.b16 %v2228, %v2212
    %v2389 = vpack.c.b16 %v2229, %v2213
    %v2390 = vpack.c.b16 %v2230, %v2214
    %v2391 = vpack.c.b16 %v2231, %v2215
    %v2392 = vpack.c.b16 %v2232, %v2216
    %v2393 = vpack.c.b16 %v2233, %v2217
    %v2394 = vpack.c.b16 %v2234, %v2218
    %v2395 = vpack.c.b16 %v2235, %v2219
    %v2396 = vpack.c.b16 %v2236, %v2220
    %v2397 = vpack.c.b16 %v2237, %v2221
    %v2398 = vpack.c.b16 %v2238, %v2222
    %v2399 = vpack.c.b16 %v2239, %v2223
    %v2400 = vpack.c.b16 %v2240, %v2224
    %v2401 = vpack.c.b16 %v2241, %v2225
    %v2402 = vpack.c.b16 %v2242, %v2226
    %v2403 = vpack.c.b16 %v2243, %v2227
    %v2404 = vpack.c.b16 %v2260, %v2244
    %v2405 = vpack.c.b16 %v2261, %v2245
    %v2406 = vpack.c.b16 %v2262, %v2246
    %v2407 = vpack.c.b16 %v2263, %v2247
    %v2408 = vpack.c.b16 %v2264, %v2248
    %v2409 = vpack.c.b16 %v2265, %v2249
    %v2410 = vpack.c.b16 %v2266, %v2250
    %v2411 = vpack.c.b16 %v2267, %v2251
    %v2412 = vpack.c.b16 %v2268, %v2252
    %v2413 = vpack.c.b16 %v2269, %v2253
    %v2414 = vpack.c.b16 %v2270, %v2254
    %v2415 = vpack.c.b16 %v2271, %v2255
    %v2416 = vpack.c.b16 %v2272, %v2256
    %v2417 = vpack.c.b16 %v2273, %v2257
    %v2418 = vpack.c.b16 %v2274, %v2258
    %v2419 = vpack.c.b16 %v2275, %v2259
    %v2420 = vpack.c.b16 %v2292, %v2276
    %v2421 = vpack.c.b16 %v2293, %v2277
    %v2422 = vpack.c.b16 %v2294, %v2278
    %v2423 = vpack.c.b16 %v2295, %v2279
    %v2424 = vpack.c.b16 %v2296, %v2280
    %v2425 = vpack.c.b16 %v2297, %v2281
    %v2426 = vpack.c.b16 %v2298, %v2282
    %v2427 = vpack.c.b16 %v2299, %v2283
    %v2428 = vpack.c.b16 %v2300, %v2284
    %v2429 = vpack.c.b16 %v2301, %v2285
    %v2430 = vpack.c.b16 %v2302, %v2286
    %v2431 = vpack.c.b16 %v2303, %v2287
    %v2432 = vpack.c.b16 %v2304, %v2288
    %v2433 = vpack.c.b16 %v2305, %v2289
    %v2434 = vpack.c.b16 %v2306, %v2290
    %v2435 = vpack.c.b16 %v2307, %v2291
    %2564 = vmatpush.bf16.msra.mxu0 %v2420
    %2565 = vmatpush.bf16.msra.mxu0 %v2404
    %2566 = vmatpush.bf16.msra.mxu0 %v2388
    %2567 = vmatpush.bf16.msra.mxu0 %v2372
    %2568 = vmatpush.bf16.msra.mxu0 %v2356
    %2569 = vmatpush.bf16.msra.mxu0 %v2340
    %2570 = vmatpush.bf16.msra.mxu0 %v2324
    %2571 = vmatpush.bf16.msra.mxu0 %v2308
    %2572 = vmatmul.bf16.gmra.mxu0 %v1923
    %v2573 = vpop.f32.mrf.mxu0
    %v2574 = vadd.f32 0.0, %v2573
    %v2575 = vpop.f32.mrf.mxu0
    %2576 = vdwg.mxu0
    %2577 = vmatpush.bf16.msra.mxu0 %v2421
    %2578 = vmatpush.bf16.msra.mxu0 %v2405
    %2579 = vmatpush.bf16.msra.mxu0 %v2389
    %2580 = vmatpush.bf16.msra.mxu0 %v2373
    %2581 = vmatpush.bf16.msra.mxu0 %v2357
    %2582 = vmatpush.bf16.msra.mxu0 %v2341
    %2583 = vmatpush.bf16.msra.mxu0 %v2325
    %2584 = vmatpush.bf16.msra.mxu0 %v2309
    %2585 = vmatmul.bf16.gmra.mxu0 %v1923
    %v2586 = vpop.f32.mrf.mxu0
    %v2587 = vadd.f32 0.0, %v2586
    %v2588 = vpop.f32.mrf.mxu0
    %2589 = vdwg.mxu0
    %2590 = vmatpush.bf16.msra.mxu0 %v2422
    %2591 = vmatpush.bf16.msra.mxu0 %v2406
    %2592 = vmatpush.bf16.msra.mxu0 %v2390
    %2593 = vmatpush.bf16.msra.mxu0 %v2374
    %2594 = vmatpush.bf16.msra.mxu0 %v2358
    %2595 = vmatpush.bf16.msra.mxu0 %v2342
    %2596 = vmatpush.bf16.msra.mxu0 %v2326
    %2597 = vmatpush.bf16.msra.mxu0 %v2310
    %2598 = vmatmul.bf16.gmra.mxu0 %v1923
    %v2599 = vpop.f32.mrf.mxu0
    %v2600 = vadd.f32 0.0, %v2599
    %v2601 = vpop.f32.mrf.mxu0
    %2602 = vdwg.mxu0
    %2603 = vmatpush.bf16.msra.mxu0 %v2423
    %2604 = vmatpush.bf16.msra.mxu0 %v2407
    %2605 = vmatpush.bf16.msra.mxu0 %v2391
    %2606 = vmatpush.bf16.msra.mxu0 %v2375
    %2607 = vmatpush.bf16.msra.mxu0 %v2359
    %2608 = vmatpush.bf16.msra.mxu0 %v2343
    %2609 = vmatpush.bf16.msra.mxu0 %v2327
    %2610 = vmatpush.bf16.msra.mxu0 %v2311
    %2611 = vmatmul.bf16.gmra.mxu0 %v1923
    %v2612 = vpop.f32.mrf.mxu0
    %v2613 = vadd.f32 0.0, %v2612
    %v2614 = vpop.f32.mrf.mxu0
    %2615 = vdwg.mxu0
    %2616 = vmatpush.bf16.msra.mxu0 %v2424
    %2617 = vmatpush.bf16.msra.mxu0 %v2408
    %2618 = vmatpush.bf16.msra.mxu0 %v2392
    %2619 = vmatpush.bf16.msra.mxu0 %v2376
    %2620 = vmatpush.bf16.msra.mxu0 %v2360
    %2621 = vmatpush.bf16.msra.mxu0 %v2344
    %2622 = vmatpush.bf16.msra.mxu0 %v2328
    %2623 = vmatpush.bf16.msra.mxu0 %v2312
    %2624 = vmatmul.bf16.gmra.mxu0 %v1923
    %v2625 = vpop.f32.mrf.mxu0
    %v2626 = vadd.f32 0.0, %v2625
    %v2627 = vpop.f32.mrf.mxu0
    %2628 = vdwg.mxu0
    %2629 = vmatpush.bf16.msra.mxu0 %v2425
    %2630 = vmatpush.bf16.msra.mxu0 %v2409
    %2631 = vmatpush.bf16.msra.mxu0 %v2393
    %2632 = vmatpush.bf16.msra.mxu0 %v2377
    %2633 = vmatpush.bf16.msra.mxu0 %v2361
    %2634 = vmatpush.bf16.msra.mxu0 %v2345
    %2635 = vmatpush.bf16.msra.mxu0 %v2329
    %2636 = vmatpush.bf16.msra.mxu0 %v2313
    %2637 = vmatmul.bf16.gmra.mxu0 %v1923
    %v2638 = vpop.f32.mrf.mxu0
    %v2639 = vadd.f32 0.0, %v2638
    %v2640 = vpop.f32.mrf.mxu0
    %2641 = vdwg.mxu0
    %2642 = vmatpush.bf16.msra.mxu0 %v2426
    %2643 = vmatpush.bf16.msra.mxu0 %v2410
    %2644 = vmatpush.bf16.msra.mxu0 %v2394
    %2645 = vmatpush.bf16.msra.mxu0 %v2378
    %2646 = vmatpush.bf16.msra.mxu0 %v2362
    %2647 = vmatpush.bf16.msra.mxu0 %v2346
    %2648 = vmatpush.bf16.msra.mxu0 %v2330
    %2649 = vmatpush.bf16.msra.mxu0 %v2314
    %2650 = vmatmul.bf16.gmra.mxu0 %v1923
    %v2651 = vpop.f32.mrf.mxu0
    %v2652 = vadd.f32 0.0, %v2651
    %v2653 = vpop.f32.mrf.mxu0
    %2654 = vdwg.mxu0
    %2655 = vmatpush.bf16.msra.mxu0 %v2427
    %2656 = vmatpush.bf16.msra.mxu0 %v2411
    %2657 = vmatpush.bf16.msra.mxu0 %v2395
    %2658 = vmatpush.bf16.msra.mxu0 %v2379
    %2659 = vmatpush.bf16.msra.mxu0 %v2363
    %2660 = vmatpush.bf16.msra.mxu0 %v2347
    %2661 = vmatpush.bf16.msra.mxu0 %v2331
    %2662 = vmatpush.bf16.msra.mxu0 %v2315
    %2663 = vmatmul.bf16.gmra.mxu0 %v1923
    %v2664 = vpop.f32.mrf.mxu0
    %v2665 = vadd.f32 0.0, %v2664
    %v2666 = vpop.f32.mrf.mxu0
    %2667 = vdwg.mxu0
    %2668 = vmatpush.bf16.msra.mxu0 %v2428
    %2669 = vmatpush.bf16.msra.mxu0 %v2412
    %2670 = vmatpush.bf16.msra.mxu0 %v2396
    %2671 = vmatpush.bf16.msra.mxu0 %v2380
    %2672 = vmatpush.bf16.msra.mxu0 %v2364
    %2673 = vmatpush.bf16.msra.mxu0 %v2348
    %2674 = vmatpush.bf16.msra.mxu0 %v2332
    %2675 = vmatpush.bf16.msra.mxu0 %v2316
    %2676 = vmatmul.bf16.gmra.mxu0 %v1923
    %v2677 = vpop.f32.mrf.mxu0
    %v2678 = vadd.f32 0.0, %v2677
    %v2679 = vpop.f32.mrf.mxu0
    %2680 = vdwg.mxu0
    %2681 = vmatpush.bf16.msra.mxu0 %v2429
    %2682 = vmatpush.bf16.msra.mxu0 %v2413
    %2683 = vmatpush.bf16.msra.mxu0 %v2397
    %2684 = vmatpush.bf16.msra.mxu0 %v2381
    %2685 = vmatpush.bf16.msra.mxu0 %v2365
    %2686 = vmatpush.bf16.msra.mxu0 %v2349
    %2687 = vmatpush.bf16.msra.mxu0 %v2333
    %2688 = vmatpush.bf16.msra.mxu0 %v2317
    %2689 = vmatmul.bf16.gmra.mxu0 %v1923
    %v2690 = vpop.f32.mrf.mxu0
    %v2691 = vadd.f32 0.0, %v2690
    %v2692 = vpop.f32.mrf.mxu0
    %2693 = vdwg.mxu0
    %2694 = vmatpush.bf16.msra.mxu0 %v2430
    %2695 = vmatpush.bf16.msra.mxu0 %v2414
    %2696 = vmatpush.bf16.msra.mxu0 %v2398
    %2697 = vmatpush.bf16.msra.mxu0 %v2382
    %2698 = vmatpush.bf16.msra.mxu0 %v2366
    %2699 = vmatpush.bf16.msra.mxu0 %v2350
    %2700 = vmatpush.bf16.msra.mxu0 %v2334
    %2701 = vmatpush.bf16.msra.mxu0 %v2318
    %2702 = vmatmul.bf16.gmra.mxu0 %v1923
    %v2703 = vpop.f32.mrf.mxu0
    %v2704 = vadd.f32 0.0, %v2703
    %v2705 = vpop.f32.mrf.mxu0
    %2706 = vdwg.mxu0
    %2707 = vmatpush.bf16.msra.mxu0 %v2431
    %2708 = vmatpush.bf16.msra.mxu0 %v2415
    %2709 = vmatpush.bf16.msra.mxu0 %v2399
    %2710 = vmatpush.bf16.msra.mxu0 %v2383
    %2711 = vmatpush.bf16.msra.mxu0 %v2367
    %2712 = vmatpush.bf16.msra.mxu0 %v2351
    %2713 = vmatpush.bf16.msra.mxu0 %v2335
    %2714 = vmatpush.bf16.msra.mxu0 %v2319
    %2715 = vmatmul.bf16.gmra.mxu0 %v1923
    %v2716 = vpop.f32.mrf.mxu0
    %v2717 = vadd.f32 0.0, %v2716
    %v2718 = vpop.f32.mrf.mxu0
    %2719 = vdwg.mxu0
    %2720 = vmatpush.bf16.msra.mxu0 %v2432
    %2721 = vmatpush.bf16.msra.mxu0 %v2416
    %2722 = vmatpush.bf16.msra.mxu0 %v2400
    %2723 = vmatpush.bf16.msra.mxu0 %v2384
    %2724 = vmatpush.bf16.msra.mxu0 %v2368
    %2725 = vmatpush.bf16.msra.mxu0 %v2352
    %2726 = vmatpush.bf16.msra.mxu0 %v2336
    %2727 = vmatpush.bf16.msra.mxu0 %v2320
    %2728 = vmatmul.bf16.gmra.mxu0 %v1923
    %v2729 = vpop.f32.mrf.mxu0
    %v2730 = vadd.f32 0.0, %v2729
    %v2731 = vpop.f32.mrf.mxu0
    %2732 = vdwg.mxu0
    %2733 = vmatpush.bf16.msra.mxu0 %v2433
    %2734 = vmatpush.bf16.msra.mxu0 %v2417
    %2735 = vmatpush.bf16.msra.mxu0 %v2401
    %2736 = vmatpush.bf16.msra.mxu0 %v2385
    %2737 = vmatpush.bf16.msra.mxu0 %v2369
    %2738 = vmatpush.bf16.msra.mxu0 %v2353
    %2739 = vmatpush.bf16.msra.mxu0 %v2337
    %2740 = vmatpush.bf16.msra.mxu0 %v2321
    %2741 = vmatmul.bf16.gmra.mxu0 %v1923
    %v2742 = vpop.f32.mrf.mxu0
    %v2743 = vadd.f32 0.0, %v2742
    %v2744 = vpop.f32.mrf.mxu0
    %2745 = vdwg.mxu0
    %2746 = vmatpush.bf16.msra.mxu0 %v2434
    %2747 = vmatpush.bf16.msra.mxu0 %v2418
    %2748 = vmatpush.bf16.msra.mxu0 %v2402
    %2749 = vmatpush.bf16.msra.mxu0 %v2386
    %2750 = vmatpush.bf16.msra.mxu0 %v2370
    %2751 = vmatpush.bf16.msra.mxu0 %v2354
    %2752 = vmatpush.bf16.msra.mxu0 %v2338
    %2753 = vmatpush.bf16.msra.mxu0 %v2322
    %2754 = vmatmul.bf16.gmra.mxu0 %v1923
    %v2755 = vpop.f32.mrf.mxu0
    %v2756 = vadd.f32 0.0, %v2755
    %v2757 = vpop.f32.mrf.mxu0
    %2758 = vdwg.mxu0
    %2759 = vmatpush.bf16.msra.mxu0 %v2435
    %2760 = vmatpush.bf16.msra.mxu0 %v2419
    %2761 = vmatpush.bf16.msra.mxu0 %v2403
    %2762 = vmatpush.bf16.msra.mxu0 %v2387
    %2763 = vmatpush.bf16.msra.mxu0 %v2371
    %2764 = vmatpush.bf16.msra.mxu0 %v2355
    %2765 = vmatpush.bf16.msra.mxu0 %v2339
    %2766 = vmatpush.bf16.msra.mxu0 %v2323
    %2767 = vmatmul.bf16.gmra.mxu0 %v1923
    %v2768 = vpop.f32.mrf.mxu0
    %v2769 = vadd.f32 0.0, %v2768
    %v2770 = vpop.f32.mrf.mxu0
    %2771 = vdwg.mxu0
    %v2772 = vld [vmem:[#allocation12] sm:$0xf]
    %v2773 = vpack.c.bf16 %v2665, %v2639
    %v2774 = vpack.c.bf16 %v2769, %v2743
    %vm2775 = vcmask 261120
    %v2777 = vsel %vm2775, %v2772, 0
    %2779 = vmatpush.bf16.msra.mxu0 0
    %2780 = vmatpush.bf16.msra.mxu0 0
    %2781 = vmatpush.bf16.msra.mxu0 0
    %2782 = vmatpush.bf16.msra.mxu0 0
    %2783 = vmatpush.bf16.msra.mxu0 0
    %2784 = vmatpush.bf16.msra.mxu0 0
    %2785 = vmatpush.bf16.msra.mxu0 %v2774
    %2786 = vmatpush.bf16.msra.mxu0 %v2773
    %2787 = vmatmul.bf16.gmra.mxu0 %v2777
    %v2788 = vpop.f32.mrf.mxu0
    %v2789 = vadd.f32 0.0, %v2788
    %v2790 = vpop.f32.mrf.mxu0
    %2791 = vdwg.mxu0
    %s2792 = scalar_lea.vmem [#allocation12], 4
    %v2793 = vld [vmem:[%s2792] sm:$0xf]
    %v2794 = vpack.c.bf16 %v2652, %v2626
    %v2795 = vpack.c.bf16 %v2756, %v2730
    %v2797 = vsel %vm2775, %v2793, 0
    %2799 = vmatpush.bf16.msra.mxu0 0
    %2800 = vmatpush.bf16.msra.mxu0 0
    %2801 = vmatpush.bf16.msra.mxu0 0
    %2802 = vmatpush.bf16.msra.mxu0 0
    %2803 = vmatpush.bf16.msra.mxu0 0
    %2804 = vmatpush.bf16.msra.mxu0 0
    %2805 = vmatpush.bf16.msra.mxu0 %v2795
    %2806 = vmatpush.bf16.msra.mxu0 %v2794
    %2807 = vmatmul.bf16.gmra.mxu0 %v2797
    %v2808 = vpop.f32.mrf.mxu0
    %v2809 = vadd.f32 0.0, %v2808
    %v2810 = vpop.f32.mrf.mxu0
    %2811 = vdwg.mxu0
    %s2812 = scalar_lea.vmem [#allocation12], 8
    %v2813 = vld [vmem:[%s2812] sm:$0xf]
    %v2814 = vpack.c.bf16 %v2613, %v2587
    %v2815 = vpack.c.bf16 %v2717, %v2691
    %v2817 = vsel %vm2775, %v2813, 0
    %2819 = vmatpush.bf16.msra.mxu0 0
    %2820 = vmatpush.bf16.msra.mxu0 0
    %2821 = vmatpush.bf16.msra.mxu0 0
    %2822 = vmatpush.bf16.msra.mxu0 0
    %2823 = vmatpush.bf16.msra.mxu0 0
    %2824 = vmatpush.bf16.msra.mxu0 0
    %2825 = vmatpush.bf16.msra.mxu0 %v2815
    %2826 = vmatpush.bf16.msra.mxu0 %v2814
    %2827 = vmatmul.bf16.gmra.mxu0 %v2817
    %v2828 = vpop.f32.mrf.mxu0
    %v2829 = vadd.f32 0.0, %v2828
    %v2830 = vpop.f32.mrf.mxu0
    %2831 = vdwg.mxu0
    %s2832 = scalar_lea.vmem [#allocation12], 12
    %v2833 = vld [vmem:[%s2832] sm:$0xf]
    %v2834 = vpack.c.bf16 %v2600, %v2574
    %v2835 = vpack.c.bf16 %v2704, %v2678
    %v2837 = vsel %vm2775, %v2833, 0
    %2839 = vmatpush.bf16.msra.mxu0 0
    %2840 = vmatpush.bf16.msra.mxu0 0
    %2841 = vmatpush.bf16.msra.mxu0 0
    %2842 = vmatpush.bf16.msra.mxu0 0
    %2843 = vmatpush.bf16.msra.mxu0 0
    %2844 = vmatpush.bf16.msra.mxu0 0
    %2845 = vmatpush.bf16.msra.mxu0 %v2835
    %2846 = vmatpush.bf16.msra.mxu0 %v2834
    %2847 = vmatmul.bf16.gmra.mxu0 %v2837
    %v2848 = vpop.f32.mrf.mxu0
    %v2849 = vadd.f32 0.0, %v2848
    %v2850 = vpop.f32.mrf.mxu0
    %2851 = vdwg.mxu0
    %v2852 = vld [vmem:[%s9] sm:$0x1]
    %v2854 = vperm.slane %v2852, 0
    %v2856 = vadd.f32 %v2789, %v2854
    %v2857 = vadd.f32 %v2809, %v2854
    %v2858 = vadd.f32 %v2829, %v2854
    %v2859 = vadd.f32 %v2849, %v2854
    %v2860 = vmax.f32 %v2856, 0.0
    %v2861 = vmax.f32 %v2857, 0.0
    %v2862 = vmax.f32 %v2858, 0.0
    %v2863 = vmax.f32 %v2859, 0.0
    %v2864 = vld [vmem:[#allocation13] sm:$0xff]
    %v2865 = vld [vmem:[#allocation13 + $0x8] sm:$0xff]
    %v2866 = vld [vmem:[#allocation13 + $0x10] sm:$0xff]
    %v2867 = vld [vmem:[#allocation13 + $0x18] sm:$0xff]
    %v2868 = vld [vmem:[#allocation13 + $0x20] sm:$0xff]
    %v2869 = vld [vmem:[#allocation13 + $0x28] sm:$0xff]
    %v2870 = vld [vmem:[#allocation13 + $0x30] sm:$0xff]
    %v2871 = vld [vmem:[#allocation13 + $0x38] sm:$0xff]
    %v2872 = vld [vmem:[#allocation13 + $0x40] sm:$0xff]
    %v2873 = vld [vmem:[#allocation13 + $0x48] sm:$0xff]
    %v2874 = vld [vmem:[#allocation13 + $0x50] sm:$0xff]
    %v2875 = vld [vmem:[#allocation13 + $0x58] sm:$0xff]
    %v2876 = vld [vmem:[#allocation13 + $0x60] sm:$0xff]
    %v2877 = vld [vmem:[#allocation13 + $0x68] sm:$0xff]
    %v2878 = vld [vmem:[#allocation13 + $0x70] sm:$0xff]
    %v2879 = vld [vmem:[#allocation13 + $0x78] sm:$0xff]
    %v2880 = vld [vmem:[#allocation13 + $0x80] sm:$0xff]
    %v2881 = vld [vmem:[#allocation13 + $0x88] sm:$0xff]
    %v2882 = vld [vmem:[#allocation13 + $0x90] sm:$0xff]
    %v2883 = vld [vmem:[#allocation13 + $0x98] sm:$0xff]
    %v2884 = vld [vmem:[#allocation13 + $0xa0] sm:$0xff]
    %v2885 = vld [vmem:[#allocation13 + $0xa8] sm:$0xff]
    %v2886 = vld [vmem:[#allocation13 + $0xb0] sm:$0xff]
    %v2887 = vld [vmem:[#allocation13 + $0xb8] sm:$0xff]
    %v2888 = vld [vmem:[#allocation13 + $0xc0] sm:$0xff]
    %v2889 = vld [vmem:[#allocation13 + $0xc8] sm:$0xff]
    %v2890 = vld [vmem:[#allocation13 + $0xd0] sm:$0xff]
    %v2891 = vld [vmem:[#allocation13 + $0xd8] sm:$0xff]
    %v2892 = vld [vmem:[#allocation13 + $0xe0] sm:$0xff]
    %v2893 = vld [vmem:[#allocation13 + $0xe8] sm:$0xff]
    %v2894 = vld [vmem:[#allocation13 + $0xf0] sm:$0xff]
    %v2895 = vld [vmem:[#allocation13 + $0xf8] sm:$0xff]
    %v2896 = vld [vmem:[#allocation13 + $0x100] sm:$0xff]
    %v2897 = vld [vmem:[#allocation13 + $0x108] sm:$0xff]
    %v2898 = vld [vmem:[#allocation13 + $0x110] sm:$0xff]
    %v2899 = vld [vmem:[#allocation13 + $0x118] sm:$0xff]
    %v2900 = vld [vmem:[#allocation13 + $0x120] sm:$0xff]
    %v2901 = vld [vmem:[#allocation13 + $0x128] sm:$0xff]
    %v2902 = vld [vmem:[#allocation13 + $0x130] sm:$0xff]
    %v2903 = vld [vmem:[#allocation13 + $0x138] sm:$0xff]
    %v2904 = vld [vmem:[#allocation13 + $0x140] sm:$0xff]
    %v2905 = vld [vmem:[#allocation13 + $0x148] sm:$0xff]
    %v2906 = vld [vmem:[#allocation13 + $0x150] sm:$0xff]
    %v2907 = vld [vmem:[#allocation13 + $0x158] sm:$0xff]
    %v2908 = vld [vmem:[#allocation13 + $0x160] sm:$0xff]
    %v2909 = vld [vmem:[#allocation13 + $0x168] sm:$0xff]
    %v2910 = vld [vmem:[#allocation13 + $0x170] sm:$0xff]
    %v2911 = vld [vmem:[#allocation13 + $0x178] sm:$0xff]
    %v2912 = vld [vmem:[#allocation13 + $0x180] sm:$0xff]
    %v2913 = vld [vmem:[#allocation13 + $0x188] sm:$0xff]
    %v2914 = vld [vmem:[#allocation13 + $0x190] sm:$0xff]
    %v2915 = vld [vmem:[#allocation13 + $0x198] sm:$0xff]
    %v2916 = vld [vmem:[#allocation13 + $0x1a0] sm:$0xff]
    %v2917 = vld [vmem:[#allocation13 + $0x1a8] sm:$0xff]
    %v2918 = vld [vmem:[#allocation13 + $0x1b0] sm:$0xff]
    %v2919 = vld [vmem:[#allocation13 + $0x1b8] sm:$0xff]
    %v2920 = vld [vmem:[#allocation13 + $0x1c0] sm:$0xff]
    %v2921 = vld [vmem:[#allocation13 + $0x1c8] sm:$0xff]
    %v2922 = vld [vmem:[#allocation13 + $0x1d0] sm:$0xff]
    %v2923 = vld [vmem:[#allocation13 + $0x1d8] sm:$0xff]
    %v2924 = vld [vmem:[#allocation13 + $0x1e0] sm:$0xff]
    %v2925 = vld [vmem:[#allocation13 + $0x1e8] sm:$0xff]
    %v2926 = vld [vmem:[#allocation13 + $0x1f0] sm:$0xff]
    %v2927 = vld [vmem:[#allocation13 + $0x1f8] sm:$0xff]
    %v2928 = vld [vmem:[#allocation13 + $0x200] sm:$0xff]
    %v2929 = vld [vmem:[#allocation13 + $0x208] sm:$0xff]
    %v2930 = vld [vmem:[#allocation13 + $0x210] sm:$0xff]
    %v2931 = vld [vmem:[#allocation13 + $0x218] sm:$0xff]
    %v2932 = vld [vmem:[#allocation13 + $0x220] sm:$0xff]
    %v2933 = vld [vmem:[#allocation13 + $0x228] sm:$0xff]
    %v2934 = vld [vmem:[#allocation13 + $0x230] sm:$0xff]
    %v2935 = vld [vmem:[#allocation13 + $0x238] sm:$0xff]
    %v2936 = vld [vmem:[#allocation13 + $0x240] sm:$0xff]
    %v2937 = vld [vmem:[#allocation13 + $0x248] sm:$0xff]
    %v2938 = vld [vmem:[#allocation13 + $0x250] sm:$0xff]
    %v2939 = vld [vmem:[#allocation13 + $0x258] sm:$0xff]
    %v2940 = vld [vmem:[#allocation13 + $0x260] sm:$0xff]
    %v2941 = vld [vmem:[#allocation13 + $0x268] sm:$0xff]
    %v2942 = vld [vmem:[#allocation13 + $0x270] sm:$0xff]
    %v2943 = vld [vmem:[#allocation13 + $0x278] sm:$0xff]
    %v2944 = vld [vmem:[#allocation13 + $0x280] sm:$0xff]
    %v2945 = vld [vmem:[#allocation13 + $0x288] sm:$0xff]
    %v2946 = vld [vmem:[#allocation13 + $0x290] sm:$0xff]
    %v2947 = vld [vmem:[#allocation13 + $0x298] sm:$0xff]
    %v2948 = vld [vmem:[#allocation13 + $0x2a0] sm:$0xff]
    %v2949 = vld [vmem:[#allocation13 + $0x2a8] sm:$0xff]
    %v2950 = vld [vmem:[#allocation13 + $0x2b0] sm:$0xff]
    %v2951 = vld [vmem:[#allocation13 + $0x2b8] sm:$0xff]
    %v2952 = vld [vmem:[#allocation13 + $0x2c0] sm:$0xff]
    %v2953 = vld [vmem:[#allocation13 + $0x2c8] sm:$0xff]
    %v2954 = vld [vmem:[#allocation13 + $0x2d0] sm:$0xff]
    %v2955 = vld [vmem:[#allocation13 + $0x2d8] sm:$0xff]
    %v2956 = vld [vmem:[#allocation13 + $0x2e0] sm:$0xff]
    %v2957 = vld [vmem:[#allocation13 + $0x2e8] sm:$0xff]
    %v2958 = vld [vmem:[#allocation13 + $0x2f0] sm:$0xff]
    %v2959 = vld [vmem:[#allocation13 + $0x2f8] sm:$0xff]
    %v2960 = vld [vmem:[#allocation13 + $0x300] sm:$0xff]
    %v2961 = vld [vmem:[#allocation13 + $0x308] sm:$0xff]
    %v2962 = vld [vmem:[#allocation13 + $0x310] sm:$0xff]
    %v2963 = vld [vmem:[#allocation13 + $0x318] sm:$0xff]
    %v2964 = vld [vmem:[#allocation13 + $0x320] sm:$0xff]
    %v2965 = vld [vmem:[#allocation13 + $0x328] sm:$0xff]
    %v2966 = vld [vmem:[#allocation13 + $0x330] sm:$0xff]
    %v2967 = vld [vmem:[#allocation13 + $0x338] sm:$0xff]
    %v2968 = vld [vmem:[#allocation13 + $0x340] sm:$0xff]
    %v2969 = vld [vmem:[#allocation13 + $0x348] sm:$0xff]
    %v2970 = vld [vmem:[#allocation13 + $0x350] sm:$0xff]
    %v2971 = vld [vmem:[#allocation13 + $0x358] sm:$0xff]
    %v2972 = vld [vmem:[#allocation13 + $0x360] sm:$0xff]
    %v2973 = vld [vmem:[#allocation13 + $0x368] sm:$0xff]
    %v2974 = vld [vmem:[#allocation13 + $0x370] sm:$0xff]
    %v2975 = vld [vmem:[#allocation13 + $0x378] sm:$0xff]
    %v2976 = vld [vmem:[#allocation13 + $0x380] sm:$0xff]
    %v2977 = vld [vmem:[#allocation13 + $0x388] sm:$0xff]
    %v2978 = vld [vmem:[#allocation13 + $0x390] sm:$0xff]
    %v2979 = vld [vmem:[#allocation13 + $0x398] sm:$0xff]
    %v2980 = vld [vmem:[#allocation13 + $0x3a0] sm:$0xff]
    %v2981 = vld [vmem:[#allocation13 + $0x3a8] sm:$0xff]
    %v2982 = vld [vmem:[#allocation13 + $0x3b0] sm:$0xff]
    %v2983 = vld [vmem:[#allocation13 + $0x3b8] sm:$0xff]
    %v2984 = vld [vmem:[#allocation13 + $0x3c0] sm:$0xff]
    %v2985 = vld [vmem:[#allocation13 + $0x3c8] sm:$0xff]
    %v2986 = vld [vmem:[#allocation13 + $0x3d0] sm:$0xff]
    %v2987 = vld [vmem:[#allocation13 + $0x3d8] sm:$0xff]
    %v2988 = vld [vmem:[#allocation13 + $0x3e0] sm:$0xff]
    %v2989 = vld [vmem:[#allocation13 + $0x3e8] sm:$0xff]
    %v2990 = vld [vmem:[#allocation13 + $0x3f0] sm:$0xff]
    %v2991 = vld [vmem:[#allocation13 + $0x3f8] sm:$0xff]
    %v2992 = vpack.c.bf16 %v2861, %v2860
    %v2993 = vpack.c.bf16 %v2863, %v2862
    %v3122 = vunpack.c.l.b16 %v2864
    %v3123 = vunpack.c.h.b16 %v2864
    %v3124 = vunpack.c.l.b16 %v2865
    %v3125 = vunpack.c.h.b16 %v2865
    %v3126 = vunpack.c.l.b16 %v2866
    %v3127 = vunpack.c.h.b16 %v2866
    %v3128 = vunpack.c.l.b16 %v2867
    %v3129 = vunpack.c.h.b16 %v2867
    %v3130 = vunpack.c.l.b16 %v2868
    %v3131 = vunpack.c.h.b16 %v2868
    %v3132 = vunpack.c.l.b16 %v2869
    %v3133 = vunpack.c.h.b16 %v2869
    %v3134 = vunpack.c.l.b16 %v2870
    %v3135 = vunpack.c.h.b16 %v2870
    %v3136 = vunpack.c.l.b16 %v2871
    %v3137 = vunpack.c.h.b16 %v2871
    %v3138 = vunpack.c.l.b16 %v2872
    %v3139 = vunpack.c.h.b16 %v2872
    %v3140 = vunpack.c.l.b16 %v2873
    %v3141 = vunpack.c.h.b16 %v2873
    %v3142 = vunpack.c.l.b16 %v2874
    %v3143 = vunpack.c.h.b16 %v2874
    %v3144 = vunpack.c.l.b16 %v2875
    %v3145 = vunpack.c.h.b16 %v2875
    %v3146 = vunpack.c.l.b16 %v2876
    %v3147 = vunpack.c.h.b16 %v2876
    %v3148 = vunpack.c.l.b16 %v2877
    %v3149 = vunpack.c.h.b16 %v2877
    %v3150 = vunpack.c.l.b16 %v2878
    %v3151 = vunpack.c.h.b16 %v2878
    %v3152 = vunpack.c.l.b16 %v2879
    %v3153 = vunpack.c.h.b16 %v2879
    %v3154 = vunpack.c.l.b16 %v2880
    %v3155 = vunpack.c.h.b16 %v2880
    %v3156 = vunpack.c.l.b16 %v2881
    %v3157 = vunpack.c.h.b16 %v2881
    %v3158 = vunpack.c.l.b16 %v2882
    %v3159 = vunpack.c.h.b16 %v2882
    %v3160 = vunpack.c.l.b16 %v2883
    %v3161 = vunpack.c.h.b16 %v2883
    %v3162 = vunpack.c.l.b16 %v2884
    %v3163 = vunpack.c.h.b16 %v2884
    %v3164 = vunpack.c.l.b16 %v2885
    %v3165 = vunpack.c.h.b16 %v2885
    %v3166 = vunpack.c.l.b16 %v2886
    %v3167 = vunpack.c.h.b16 %v2886
    %v3168 = vunpack.c.l.b16 %v2887
    %v3169 = vunpack.c.h.b16 %v2887
    %v3170 = vunpack.c.l.b16 %v2888
    %v3171 = vunpack.c.h.b16 %v2888
    %v3172 = vunpack.c.l.b16 %v2889
    %v3173 = vunpack.c.h.b16 %v2889
    %v3174 = vunpack.c.l.b16 %v2890
    %v3175 = vunpack.c.h.b16 %v2890
    %v3176 = vunpack.c.l.b16 %v2891
    %v3177 = vunpack.c.h.b16 %v2891
    %v3178 = vunpack.c.l.b16 %v2892
    %v3179 = vunpack.c.h.b16 %v2892
    %v3180 = vunpack.c.l.b16 %v2893
    %v3181 = vunpack.c.h.b16 %v2893
    %v3182 = vunpack.c.l.b16 %v2894
    %v3183 = vunpack.c.h.b16 %v2894
    %v3184 = vunpack.c.l.b16 %v2895
    %v3185 = vunpack.c.h.b16 %v2895
    %v3186 = vunpack.c.l.b16 %v2896
    %v3187 = vunpack.c.h.b16 %v2896
    %v3188 = vunpack.c.l.b16 %v2897
    %v3189 = vunpack.c.h.b16 %v2897
    %v3190 = vunpack.c.l.b16 %v2898
    %v3191 = vunpack.c.h.b16 %v2898
    %v3192 = vunpack.c.l.b16 %v2899
    %v3193 = vunpack.c.h.b16 %v2899
    %v3194 = vunpack.c.l.b16 %v2900
    %v3195 = vunpack.c.h.b16 %v2900
    %v3196 = vunpack.c.l.b16 %v2901
    %v3197 = vunpack.c.h.b16 %v2901
    %v3198 = vunpack.c.l.b16 %v2902
    %v3199 = vunpack.c.h.b16 %v2902
    %v3200 = vunpack.c.l.b16 %v2903
    %v3201 = vunpack.c.h.b16 %v2903
    %v3202 = vunpack.c.l.b16 %v2904
    %v3203 = vunpack.c.h.b16 %v2904
    %v3204 = vunpack.c.l.b16 %v2905
    %v3205 = vunpack.c.h.b16 %v2905
    %v3206 = vunpack.c.l.b16 %v2906
    %v3207 = vunpack.c.h.b16 %v2906
    %v3208 = vunpack.c.l.b16 %v2907
    %v3209 = vunpack.c.h.b16 %v2907
    %v3210 = vunpack.c.l.b16 %v2908
    %v3211 = vunpack.c.h.b16 %v2908
    %v3212 = vunpack.c.l.b16 %v2909
    %v3213 = vunpack.c.h.b16 %v2909
    %v3214 = vunpack.c.l.b16 %v2910
    %v3215 = vunpack.c.h.b16 %v2910
    %v3216 = vunpack.c.l.b16 %v2911
    %v3217 = vunpack.c.h.b16 %v2911
    %v3218 = vunpack.c.l.b16 %v2912
    %v3219 = vunpack.c.h.b16 %v2912
    %v3220 = vunpack.c.l.b16 %v2913
    %v3221 = vunpack.c.h.b16 %v2913
    %v3222 = vunpack.c.l.b16 %v2914
    %v3223 = vunpack.c.h.b16 %v2914
    %v3224 = vunpack.c.l.b16 %v2915
    %v3225 = vunpack.c.h.b16 %v2915
    %v3226 = vunpack.c.l.b16 %v2916
    %v3227 = vunpack.c.h.b16 %v2916
    %v3228 = vunpack.c.l.b16 %v2917
    %v3229 = vunpack.c.h.b16 %v2917
    %v3230 = vunpack.c.l.b16 %v2918
    %v3231 = vunpack.c.h.b16 %v2918
    %v3232 = vunpack.c.l.b16 %v2919
    %v3233 = vunpack.c.h.b16 %v2919
    %v3234 = vunpack.c.l.b16 %v2920
    %v3235 = vunpack.c.h.b16 %v2920
    %v3236 = vunpack.c.l.b16 %v2921
    %v3237 = vunpack.c.h.b16 %v2921
    %v3238 = vunpack.c.l.b16 %v2922
    %v3239 = vunpack.c.h.b16 %v2922
    %v3240 = vunpack.c.l.b16 %v2923
    %v3241 = vunpack.c.h.b16 %v2923
    %v3242 = vunpack.c.l.b16 %v2924
    %v3243 = vunpack.c.h.b16 %v2924
    %v3244 = vunpack.c.l.b16 %v2925
    %v3245 = vunpack.c.h.b16 %v2925
    %v3246 = vunpack.c.l.b16 %v2926
    %v3247 = vunpack.c.h.b16 %v2926
    %v3248 = vunpack.c.l.b16 %v2927
    %v3249 = vunpack.c.h.b16 %v2927
    %v3250 = vunpack.c.l.b16 %v2928
    %v3251 = vunpack.c.h.b16 %v2928
    %v3252 = vunpack.c.l.b16 %v2929
    %v3253 = vunpack.c.h.b16 %v2929
    %v3254 = vunpack.c.l.b16 %v2930
    %v3255 = vunpack.c.h.b16 %v2930
    %v3256 = vunpack.c.l.b16 %v2931
    %v3257 = vunpack.c.h.b16 %v2931
    %v3258 = vunpack.c.l.b16 %v2932
    %v3259 = vunpack.c.h.b16 %v2932
    %v3260 = vunpack.c.l.b16 %v2933
    %v3261 = vunpack.c.h.b16 %v2933
    %v3262 = vunpack.c.l.b16 %v2934
    %v3263 = vunpack.c.h.b16 %v2934
    %v3264 = vunpack.c.l.b16 %v2935
    %v3265 = vunpack.c.h.b16 %v2935
    %v3266 = vunpack.c.l.b16 %v2936
    %v3267 = vunpack.c.h.b16 %v2936
    %v3268 = vunpack.c.l.b16 %v2937
    %v3269 = vunpack.c.h.b16 %v2937
    %v3270 = vunpack.c.l.b16 %v2938
    %v3271 = vunpack.c.h.b16 %v2938
    %v3272 = vunpack.c.l.b16 %v2939
    %v3273 = vunpack.c.h.b16 %v2939
    %v3274 = vunpack.c.l.b16 %v2940
    %v3275 = vunpack.c.h.b16 %v2940
    %v3276 = vunpack.c.l.b16 %v2941
    %v3277 = vunpack.c.h.b16 %v2941
    %v3278 = vunpack.c.l.b16 %v2942
    %v3279 = vunpack.c.h.b16 %v2942
    %v3280 = vunpack.c.l.b16 %v2943
    %v3281 = vunpack.c.h.b16 %v2943
    %v3282 = vunpack.c.l.b16 %v2944
    %v3283 = vunpack.c.h.b16 %v2944
    %v3284 = vunpack.c.l.b16 %v2945
    %v3285 = vunpack.c.h.b16 %v2945
    %v3286 = vunpack.c.l.b16 %v2946
    %v3287 = vunpack.c.h.b16 %v2946
    %v3288 = vunpack.c.l.b16 %v2947
    %v3289 = vunpack.c.h.b16 %v2947
    %v3290 = vunpack.c.l.b16 %v2948
    %v3291 = vunpack.c.h.b16 %v2948
    %v3292 = vunpack.c.l.b16 %v2949
    %v3293 = vunpack.c.h.b16 %v2949
    %v3294 = vunpack.c.l.b16 %v2950
    %v3295 = vunpack.c.h.b16 %v2950
    %v3296 = vunpack.c.l.b16 %v2951
    %v3297 = vunpack.c.h.b16 %v2951
    %v3298 = vunpack.c.l.b16 %v2952
    %v3299 = vunpack.c.h.b16 %v2952
    %v3300 = vunpack.c.l.b16 %v2953
    %v3301 = vunpack.c.h.b16 %v2953
    %v3302 = vunpack.c.l.b16 %v2954
    %v3303 = vunpack.c.h.b16 %v2954
    %v3304 = vunpack.c.l.b16 %v2955
    %v3305 = vunpack.c.h.b16 %v2955
    %v3306 = vunpack.c.l.b16 %v2956
    %v3307 = vunpack.c.h.b16 %v2956
    %v3308 = vunpack.c.l.b16 %v2957
    %v3309 = vunpack.c.h.b16 %v2957
    %v3310 = vunpack.c.l.b16 %v2958
    %v3311 = vunpack.c.h.b16 %v2958
    %v3312 = vunpack.c.l.b16 %v2959
    %v3313 = vunpack.c.h.b16 %v2959
    %v3314 = vunpack.c.l.b16 %v2960
    %v3315 = vunpack.c.h.b16 %v2960
    %v3316 = vunpack.c.l.b16 %v2961
    %v3317 = vunpack.c.h.b16 %v2961
    %v3318 = vunpack.c.l.b16 %v2962
    %v3319 = vunpack.c.h.b16 %v2962
    %v3320 = vunpack.c.l.b16 %v2963
    %v3321 = vunpack.c.h.b16 %v2963
    %v3322 = vunpack.c.l.b16 %v2964
    %v3323 = vunpack.c.h.b16 %v2964
    %v3324 = vunpack.c.l.b16 %v2965
    %v3325 = vunpack.c.h.b16 %v2965
    %v3326 = vunpack.c.l.b16 %v2966
    %v3327 = vunpack.c.h.b16 %v2966
    %v3328 = vunpack.c.l.b16 %v2967
    %v3329 = vunpack.c.h.b16 %v2967
    %v3330 = vunpack.c.l.b16 %v2968
    %v3331 = vunpack.c.h.b16 %v2968
    %v3332 = vunpack.c.l.b16 %v2969
    %v3333 = vunpack.c.h.b16 %v2969
    %v3334 = vunpack.c.l.b16 %v2970
    %v3335 = vunpack.c.h.b16 %v2970
    %v3336 = vunpack.c.l.b16 %v2971
    %v3337 = vunpack.c.h.b16 %v2971
    %v3338 = vunpack.c.l.b16 %v2972
    %v3339 = vunpack.c.h.b16 %v2972
    %v3340 = vunpack.c.l.b16 %v2973
    %v3341 = vunpack.c.h.b16 %v2973
    %v3342 = vunpack.c.l.b16 %v2974
    %v3343 = vunpack.c.h.b16 %v2974
    %v3344 = vunpack.c.l.b16 %v2975
    %v3345 = vunpack.c.h.b16 %v2975
    %v3346 = vunpack.c.l.b16 %v2976
    %v3347 = vunpack.c.h.b16 %v2976
    %v3348 = vunpack.c.l.b16 %v2977
    %v3349 = vunpack.c.h.b16 %v2977
    %v3350 = vunpack.c.l.b16 %v2978
    %v3351 = vunpack.c.h.b16 %v2978
    %v3352 = vunpack.c.l.b16 %v2979
    %v3353 = vunpack.c.h.b16 %v2979
    %v3354 = vunpack.c.l.b16 %v2980
    %v3355 = vunpack.c.h.b16 %v2980
    %v3356 = vunpack.c.l.b16 %v2981
    %v3357 = vunpack.c.h.b16 %v2981
    %v3358 = vunpack.c.l.b16 %v2982
    %v3359 = vunpack.c.h.b16 %v2982
    %v3360 = vunpack.c.l.b16 %v2983
    %v3361 = vunpack.c.h.b16 %v2983
    %v3362 = vunpack.c.l.b16 %v2984
    %v3363 = vunpack.c.h.b16 %v2984
    %v3364 = vunpack.c.l.b16 %v2985
    %v3365 = vunpack.c.h.b16 %v2985
    %v3366 = vunpack.c.l.b16 %v2986
    %v3367 = vunpack.c.h.b16 %v2986
    %v3368 = vunpack.c.l.b16 %v2987
    %v3369 = vunpack.c.h.b16 %v2987
    %v3370 = vunpack.c.l.b16 %v2988
    %v3371 = vunpack.c.h.b16 %v2988
    %v3372 = vunpack.c.l.b16 %v2989
    %v3373 = vunpack.c.h.b16 %v2989
    %v3374 = vunpack.c.l.b16 %v2990
    %v3375 = vunpack.c.h.b16 %v2990
    %v3376 = vunpack.c.l.b16 %v2991
    %v3377 = vunpack.c.h.b16 %v2991
    %v3378 = vpack.c.b16 %v3138, %v3122
    %v3379 = vpack.c.b16 %v3139, %v3123
    %v3380 = vpack.c.b16 %v3140, %v3124
    %v3381 = vpack.c.b16 %v3141, %v3125
    %v3382 = vpack.c.b16 %v3142, %v3126
    %v3383 = vpack.c.b16 %v3143, %v3127
    %v3384 = vpack.c.b16 %v3144, %v3128
    %v3385 = vpack.c.b16 %v3145, %v3129
    %v3386 = vpack.c.b16 %v3146, %v3130
    %v3387 = vpack.c.b16 %v3147, %v3131
    %v3388 = vpack.c.b16 %v3148, %v3132
    %v3389 = vpack.c.b16 %v3149, %v3133
    %v3390 = vpack.c.b16 %v3150, %v3134
    %v3391 = vpack.c.b16 %v3151, %v3135
    %v3392 = vpack.c.b16 %v3152, %v3136
    %v3393 = vpack.c.b16 %v3153, %v3137
    %v3394 = vpack.c.b16 %v3170, %v3154
    %v3395 = vpack.c.b16 %v3171, %v3155
    %v3396 = vpack.c.b16 %v3172, %v3156
    %v3397 = vpack.c.b16 %v3173, %v3157
    %v3398 = vpack.c.b16 %v3174, %v3158
    %v3399 = vpack.c.b16 %v3175, %v3159
    %v3400 = vpack.c.b16 %v3176, %v3160
    %v3401 = vpack.c.b16 %v3177, %v3161
    %v3402 = vpack.c.b16 %v3178, %v3162
    %v3403 = vpack.c.b16 %v3179, %v3163
    %v3404 = vpack.c.b16 %v3180, %v3164
    %v3405 = vpack.c.b16 %v3181, %v3165
    %v3406 = vpack.c.b16 %v3182, %v3166
    %v3407 = vpack.c.b16 %v3183, %v3167
    %v3408 = vpack.c.b16 %v3184, %v3168
    %v3409 = vpack.c.b16 %v3185, %v3169
    %v3410 = vpack.c.b16 %v3202, %v3186
    %v3411 = vpack.c.b16 %v3203, %v3187
    %v3412 = vpack.c.b16 %v3204, %v3188
    %v3413 = vpack.c.b16 %v3205, %v3189
    %v3414 = vpack.c.b16 %v3206, %v3190
    %v3415 = vpack.c.b16 %v3207, %v3191
    %v3416 = vpack.c.b16 %v3208, %v3192
    %v3417 = vpack.c.b16 %v3209, %v3193
    %v3418 = vpack.c.b16 %v3210, %v3194
    %v3419 = vpack.c.b16 %v3211, %v3195
    %v3420 = vpack.c.b16 %v3212, %v3196
    %v3421 = vpack.c.b16 %v3213, %v3197
    %v3422 = vpack.c.b16 %v3214, %v3198
    %v3423 = vpack.c.b16 %v3215, %v3199
    %v3424 = vpack.c.b16 %v3216, %v3200
    %v3425 = vpack.c.b16 %v3217, %v3201
    %v3426 = vpack.c.b16 %v3234, %v3218
    %v3427 = vpack.c.b16 %v3235, %v3219
    %v3428 = vpack.c.b16 %v3236, %v3220
    %v3429 = vpack.c.b16 %v3237, %v3221
    %v3430 = vpack.c.b16 %v3238, %v3222
    %v3431 = vpack.c.b16 %v3239, %v3223
    %v3432 = vpack.c.b16 %v3240, %v3224
    %v3433 = vpack.c.b16 %v3241, %v3225
    %v3434 = vpack.c.b16 %v3242, %v3226
    %v3435 = vpack.c.b16 %v3243, %v3227
    %v3436 = vpack.c.b16 %v3244, %v3228
    %v3437 = vpack.c.b16 %v3245, %v3229
    %v3438 = vpack.c.b16 %v3246, %v3230
    %v3439 = vpack.c.b16 %v3247, %v3231
    %v3440 = vpack.c.b16 %v3248, %v3232
    %v3441 = vpack.c.b16 %v3249, %v3233
    %v3442 = vpack.c.b16 %v3266, %v3250
    %v3443 = vpack.c.b16 %v3267, %v3251
    %v3444 = vpack.c.b16 %v3268, %v3252
    %v3445 = vpack.c.b16 %v3269, %v3253
    %v3446 = vpack.c.b16 %v3270, %v3254
    %v3447 = vpack.c.b16 %v3271, %v3255
    %v3448 = vpack.c.b16 %v3272, %v3256
    %v3449 = vpack.c.b16 %v3273, %v3257
    %v3450 = vpack.c.b16 %v3274, %v3258
    %v3451 = vpack.c.b16 %v3275, %v3259
    %v3452 = vpack.c.b16 %v3276, %v3260
    %v3453 = vpack.c.b16 %v3277, %v3261
    %v3454 = vpack.c.b16 %v3278, %v3262
    %v3455 = vpack.c.b16 %v3279, %v3263
    %v3456 = vpack.c.b16 %v3280, %v3264
    %v3457 = vpack.c.b16 %v3281, %v3265
    %v3458 = vpack.c.b16 %v3298, %v3282
    %v3459 = vpack.c.b16 %v3299, %v3283
    %v3460 = vpack.c.b16 %v3300, %v3284
    %v3461 = vpack.c.b16 %v3301, %v3285
    %v3462 = vpack.c.b16 %v3302, %v3286
    %v3463 = vpack.c.b16 %v3303, %v3287
    %v3464 = vpack.c.b16 %v3304, %v3288
    %v3465 = vpack.c.b16 %v3305, %v3289
    %v3466 = vpack.c.b16 %v3306, %v3290
    %v3467 = vpack.c.b16 %v3307, %v3291
    %v3468 = vpack.c.b16 %v3308, %v3292
    %v3469 = vpack.c.b16 %v3309, %v3293
    %v3470 = vpack.c.b16 %v3310, %v3294
    %v3471 = vpack.c.b16 %v3311, %v3295
    %v3472 = vpack.c.b16 %v3312, %v3296
    %v3473 = vpack.c.b16 %v3313, %v3297
    %v3474 = vpack.c.b16 %v3330, %v3314
    %v3475 = vpack.c.b16 %v3331, %v3315
    %v3476 = vpack.c.b16 %v3332, %v3316
    %v3477 = vpack.c.b16 %v3333, %v3317
    %v3478 = vpack.c.b16 %v3334, %v3318
    %v3479 = vpack.c.b16 %v3335, %v3319
    %v3480 = vpack.c.b16 %v3336, %v3320
    %v3481 = vpack.c.b16 %v3337, %v3321
    %v3482 = vpack.c.b16 %v3338, %v3322
    %v3483 = vpack.c.b16 %v3339, %v3323
    %v3484 = vpack.c.b16 %v3340, %v3324
    %v3485 = vpack.c.b16 %v3341, %v3325
    %v3486 = vpack.c.b16 %v3342, %v3326
    %v3487 = vpack.c.b16 %v3343, %v3327
    %v3488 = vpack.c.b16 %v3344, %v3328
    %v3489 = vpack.c.b16 %v3345, %v3329
    %v3490 = vpack.c.b16 %v3362, %v3346
    %v3491 = vpack.c.b16 %v3363, %v3347
    %v3492 = vpack.c.b16 %v3364, %v3348
    %v3493 = vpack.c.b16 %v3365, %v3349
    %v3494 = vpack.c.b16 %v3366, %v3350
    %v3495 = vpack.c.b16 %v3367, %v3351
    %v3496 = vpack.c.b16 %v3368, %v3352
    %v3497 = vpack.c.b16 %v3369, %v3353
    %v3498 = vpack.c.b16 %v3370, %v3354
    %v3499 = vpack.c.b16 %v3371, %v3355
    %v3500 = vpack.c.b16 %v3372, %v3356
    %v3501 = vpack.c.b16 %v3373, %v3357
    %v3502 = vpack.c.b16 %v3374, %v3358
    %v3503 = vpack.c.b16 %v3375, %v3359
    %v3504 = vpack.c.b16 %v3376, %v3360
    %v3505 = vpack.c.b16 %v3377, %v3361
    %3634 = vmatpush.bf16.msra.mxu0 %v3490
    %3635 = vmatpush.bf16.msra.mxu0 %v3474
    %3636 = vmatpush.bf16.msra.mxu0 %v3458
    %3637 = vmatpush.bf16.msra.mxu0 %v3442
    %3638 = vmatpush.bf16.msra.mxu0 %v3426
    %3639 = vmatpush.bf16.msra.mxu0 %v3410
    %3640 = vmatpush.bf16.msra.mxu0 %v3394
    %3641 = vmatpush.bf16.msra.mxu0 %v3378
    %3642 = vmatmul.bf16.gmra.mxu0 %v2992
    %v3643 = vpop.f32.mrf.mxu0
    %v3644 = vadd.f32 0.0, %v3643
    %v3645 = vpop.f32.mrf.mxu0
    %v3646 = vadd.f32 0.0, %v3645
    %3647 = vmatmul.bf16.gmra.mxu0 %v2993
    %v3648 = vpop.f32.mrf.mxu0
    %v3649 = vadd.f32 0.0, %v3648
    %v3650 = vpop.f32.mrf.mxu0
    %v3651 = vadd.f32 0.0, %v3650
    %3652 = vdwg.mxu0
    %3653 = vmatpush.bf16.msra.mxu0 %v3491
    %3654 = vmatpush.bf16.msra.mxu0 %v3475
    %3655 = vmatpush.bf16.msra.mxu0 %v3459
    %3656 = vmatpush.bf16.msra.mxu0 %v3443
    %3657 = vmatpush.bf16.msra.mxu0 %v3427
    %3658 = vmatpush.bf16.msra.mxu0 %v3411
    %3659 = vmatpush.bf16.msra.mxu0 %v3395
    %3660 = vmatpush.bf16.msra.mxu0 %v3379
    %3661 = vmatmul.bf16.gmra.mxu0 %v2992
    %v3662 = vpop.f32.mrf.mxu0
    %v3663 = vadd.f32 0.0, %v3662
    %v3664 = vpop.f32.mrf.mxu0
    %v3665 = vadd.f32 0.0, %v3664
    %3666 = vmatmul.bf16.gmra.mxu0 %v2993
    %v3667 = vpop.f32.mrf.mxu0
    %v3668 = vadd.f32 0.0, %v3667
    %v3669 = vpop.f32.mrf.mxu0
    %v3670 = vadd.f32 0.0, %v3669
    %3671 = vdwg.mxu0
    %3672 = vmatpush.bf16.msra.mxu0 %v3492
    %3673 = vmatpush.bf16.msra.mxu0 %v3476
    %3674 = vmatpush.bf16.msra.mxu0 %v3460
    %3675 = vmatpush.bf16.msra.mxu0 %v3444
    %3676 = vmatpush.bf16.msra.mxu0 %v3428
    %3677 = vmatpush.bf16.msra.mxu0 %v3412
    %3678 = vmatpush.bf16.msra.mxu0 %v3396
    %3679 = vmatpush.bf16.msra.mxu0 %v3380
    %3680 = vmatmul.bf16.gmra.mxu0 %v2992
    %v3681 = vpop.f32.mrf.mxu0
    %v3682 = vadd.f32 0.0, %v3681
    %v3683 = vpop.f32.mrf.mxu0
    %v3684 = vadd.f32 0.0, %v3683
    %3685 = vmatmul.bf16.gmra.mxu0 %v2993
    %v3686 = vpop.f32.mrf.mxu0
    %v3687 = vadd.f32 0.0, %v3686
    %v3688 = vpop.f32.mrf.mxu0
    %v3689 = vadd.f32 0.0, %v3688
    %3690 = vdwg.mxu0
    %3691 = vmatpush.bf16.msra.mxu0 %v3493
    %3692 = vmatpush.bf16.msra.mxu0 %v3477
    %3693 = vmatpush.bf16.msra.mxu0 %v3461
    %3694 = vmatpush.bf16.msra.mxu0 %v3445
    %3695 = vmatpush.bf16.msra.mxu0 %v3429
    %3696 = vmatpush.bf16.msra.mxu0 %v3413
    %3697 = vmatpush.bf16.msra.mxu0 %v3397
    %3698 = vmatpush.bf16.msra.mxu0 %v3381
    %3699 = vmatmul.bf16.gmra.mxu0 %v2992
    %v3700 = vpop.f32.mrf.mxu0
    %v3701 = vadd.f32 0.0, %v3700
    %v3702 = vpop.f32.mrf.mxu0
    %v3703 = vadd.f32 0.0, %v3702
    %3704 = vmatmul.bf16.gmra.mxu0 %v2993
    %v3705 = vpop.f32.mrf.mxu0
    %v3706 = vadd.f32 0.0, %v3705
    %v3707 = vpop.f32.mrf.mxu0
    %v3708 = vadd.f32 0.0, %v3707
    %3709 = vdwg.mxu0
    %3710 = vmatpush.bf16.msra.mxu0 %v3494
    %3711 = vmatpush.bf16.msra.mxu0 %v3478
    %3712 = vmatpush.bf16.msra.mxu0 %v3462
    %3713 = vmatpush.bf16.msra.mxu0 %v3446
    %3714 = vmatpush.bf16.msra.mxu0 %v3430
    %3715 = vmatpush.bf16.msra.mxu0 %v3414
    %3716 = vmatpush.bf16.msra.mxu0 %v3398
    %3717 = vmatpush.bf16.msra.mxu0 %v3382
    %3718 = vmatmul.bf16.gmra.mxu0 %v2992
    %v3719 = vpop.f32.mrf.mxu0
    %v3720 = vadd.f32 0.0, %v3719
    %v3721 = vpop.f32.mrf.mxu0
    %v3722 = vadd.f32 0.0, %v3721
    %3723 = vmatmul.bf16.gmra.mxu0 %v2993
    %v3724 = vpop.f32.mrf.mxu0
    %v3725 = vadd.f32 0.0, %v3724
    %v3726 = vpop.f32.mrf.mxu0
    %v3727 = vadd.f32 0.0, %v3726
    %3728 = vdwg.mxu0
    %3729 = vmatpush.bf16.msra.mxu0 %v3495
    %3730 = vmatpush.bf16.msra.mxu0 %v3479
    %3731 = vmatpush.bf16.msra.mxu0 %v3463
    %3732 = vmatpush.bf16.msra.mxu0 %v3447
    %3733 = vmatpush.bf16.msra.mxu0 %v3431
    %3734 = vmatpush.bf16.msra.mxu0 %v3415
    %3735 = vmatpush.bf16.msra.mxu0 %v3399
    %3736 = vmatpush.bf16.msra.mxu0 %v3383
    %3737 = vmatmul.bf16.gmra.mxu0 %v2992
    %v3738 = vpop.f32.mrf.mxu0
    %v3739 = vadd.f32 0.0, %v3738
    %v3740 = vpop.f32.mrf.mxu0
    %v3741 = vadd.f32 0.0, %v3740
    %3742 = vmatmul.bf16.gmra.mxu0 %v2993
    %v3743 = vpop.f32.mrf.mxu0
    %v3744 = vadd.f32 0.0, %v3743
    %v3745 = vpop.f32.mrf.mxu0
    %v3746 = vadd.f32 0.0, %v3745
    %3747 = vdwg.mxu0
    %3748 = vmatpush.bf16.msra.mxu0 %v3496
    %3749 = vmatpush.bf16.msra.mxu0 %v3480
    %3750 = vmatpush.bf16.msra.mxu0 %v3464
    %3751 = vmatpush.bf16.msra.mxu0 %v3448
    %3752 = vmatpush.bf16.msra.mxu0 %v3432
    %3753 = vmatpush.bf16.msra.mxu0 %v3416
    %3754 = vmatpush.bf16.msra.mxu0 %v3400
    %3755 = vmatpush.bf16.msra.mxu0 %v3384
    %3756 = vmatmul.bf16.gmra.mxu0 %v2992
    %v3757 = vpop.f32.mrf.mxu0
    %v3758 = vadd.f32 0.0, %v3757
    %v3759 = vpop.f32.mrf.mxu0
    %v3760 = vadd.f32 0.0, %v3759
    %3761 = vmatmul.bf16.gmra.mxu0 %v2993
    %v3762 = vpop.f32.mrf.mxu0
    %v3763 = vadd.f32 0.0, %v3762
    %v3764 = vpop.f32.mrf.mxu0
    %v3765 = vadd.f32 0.0, %v3764
    %3766 = vdwg.mxu0
    %3767 = vmatpush.bf16.msra.mxu0 %v3497
    %3768 = vmatpush.bf16.msra.mxu0 %v3481
    %3769 = vmatpush.bf16.msra.mxu0 %v3465
    %3770 = vmatpush.bf16.msra.mxu0 %v3449
    %3771 = vmatpush.bf16.msra.mxu0 %v3433
    %3772 = vmatpush.bf16.msra.mxu0 %v3417
    %3773 = vmatpush.bf16.msra.mxu0 %v3401
    %3774 = vmatpush.bf16.msra.mxu0 %v3385
    %3775 = vmatmul.bf16.gmra.mxu0 %v2992
    %v3776 = vpop.f32.mrf.mxu0
    %v3777 = vadd.f32 0.0, %v3776
    %v3778 = vpop.f32.mrf.mxu0
    %v3779 = vadd.f32 0.0, %v3778
    %3780 = vmatmul.bf16.gmra.mxu0 %v2993
    %v3781 = vpop.f32.mrf.mxu0
    %v3782 = vadd.f32 0.0, %v3781
    %v3783 = vpop.f32.mrf.mxu0
    %v3784 = vadd.f32 0.0, %v3783
    %3785 = vdwg.mxu0
    %3786 = vmatpush.bf16.msra.mxu0 %v3498
    %3787 = vmatpush.bf16.msra.mxu0 %v3482
    %3788 = vmatpush.bf16.msra.mxu0 %v3466
    %3789 = vmatpush.bf16.msra.mxu0 %v3450
    %3790 = vmatpush.bf16.msra.mxu0 %v3434
    %3791 = vmatpush.bf16.msra.mxu0 %v3418
    %3792 = vmatpush.bf16.msra.mxu0 %v3402
    %3793 = vmatpush.bf16.msra.mxu0 %v3386
    %3794 = vmatmul.bf16.gmra.mxu0 %v2992
    %v3795 = vpop.f32.mrf.mxu0
    %v3796 = vadd.f32 0.0, %v3795
    %v3797 = vpop.f32.mrf.mxu0
    %v3798 = vadd.f32 0.0, %v3797
    %3799 = vmatmul.bf16.gmra.mxu0 %v2993
    %v3800 = vpop.f32.mrf.mxu0
    %v3801 = vadd.f32 0.0, %v3800
    %v3802 = vpop.f32.mrf.mxu0
    %v3803 = vadd.f32 0.0, %v3802
    %3804 = vdwg.mxu0
    %3805 = vmatpush.bf16.msra.mxu0 %v3499
    %3806 = vmatpush.bf16.msra.mxu0 %v3483
    %3807 = vmatpush.bf16.msra.mxu0 %v3467
    %3808 = vmatpush.bf16.msra.mxu0 %v3451
    %3809 = vmatpush.bf16.msra.mxu0 %v3435
    %3810 = vmatpush.bf16.msra.mxu0 %v3419
    %3811 = vmatpush.bf16.msra.mxu0 %v3403
    %3812 = vmatpush.bf16.msra.mxu0 %v3387
    %3813 = vmatmul.bf16.gmra.mxu0 %v2992
    %v3814 = vpop.f32.mrf.mxu0
    %v3815 = vadd.f32 0.0, %v3814
    %v3816 = vpop.f32.mrf.mxu0
    %v3817 = vadd.f32 0.0, %v3816
    %3818 = vmatmul.bf16.gmra.mxu0 %v2993
    %v3819 = vpop.f32.mrf.mxu0
    %v3820 = vadd.f32 0.0, %v3819
    %v3821 = vpop.f32.mrf.mxu0
    %v3822 = vadd.f32 0.0, %v3821
    %3823 = vdwg.mxu0
    %3824 = vmatpush.bf16.msra.mxu0 %v3500
    %3825 = vmatpush.bf16.msra.mxu0 %v3484
    %3826 = vmatpush.bf16.msra.mxu0 %v3468
    %3827 = vmatpush.bf16.msra.mxu0 %v3452
    %3828 = vmatpush.bf16.msra.mxu0 %v3436
    %3829 = vmatpush.bf16.msra.mxu0 %v3420
    %3830 = vmatpush.bf16.msra.mxu0 %v3404
    %3831 = vmatpush.bf16.msra.mxu0 %v3388
    %3832 = vmatmul.bf16.gmra.mxu0 %v2992
    %v3833 = vpop.f32.mrf.mxu0
    %v3834 = vadd.f32 0.0, %v3833
    %v3835 = vpop.f32.mrf.mxu0
    %v3836 = vadd.f32 0.0, %v3835
    %3837 = vmatmul.bf16.gmra.mxu0 %v2993
    %v3838 = vpop.f32.mrf.mxu0
    %v3839 = vadd.f32 0.0, %v3838
    %v3840 = vpop.f32.mrf.mxu0
    %v3841 = vadd.f32 0.0, %v3840
    %3842 = vdwg.mxu0
    %3843 = vmatpush.bf16.msra.mxu0 %v3501
    %3844 = vmatpush.bf16.msra.mxu0 %v3485
    %3845 = vmatpush.bf16.msra.mxu0 %v3469
    %3846 = vmatpush.bf16.msra.mxu0 %v3453
    %3847 = vmatpush.bf16.msra.mxu0 %v3437
    %3848 = vmatpush.bf16.msra.mxu0 %v3421
    %3849 = vmatpush.bf16.msra.mxu0 %v3405
    %3850 = vmatpush.bf16.msra.mxu0 %v3389
    %3851 = vmatmul.bf16.gmra.mxu0 %v2992
    %v3852 = vpop.f32.mrf.mxu0
    %v3853 = vadd.f32 0.0, %v3852
    %v3854 = vpop.f32.mrf.mxu0
    %v3855 = vadd.f32 0.0, %v3854
    %3856 = vmatmul.bf16.gmra.mxu0 %v2993
    %v3857 = vpop.f32.mrf.mxu0
    %v3858 = vadd.f32 0.0, %v3857
    %v3859 = vpop.f32.mrf.mxu0
    %v3860 = vadd.f32 0.0, %v3859
    %3861 = vdwg.mxu0
    %3862 = vmatpush.bf16.msra.mxu0 %v3502
    %3863 = vmatpush.bf16.msra.mxu0 %v3486
    %3864 = vmatpush.bf16.msra.mxu0 %v3470
    %3865 = vmatpush.bf16.msra.mxu0 %v3454
    %3866 = vmatpush.bf16.msra.mxu0 %v3438
    %3867 = vmatpush.bf16.msra.mxu0 %v3422
    %3868 = vmatpush.bf16.msra.mxu0 %v3406
    %3869 = vmatpush.bf16.msra.mxu0 %v3390
    %3870 = vmatmul.bf16.gmra.mxu0 %v2992
    %v3871 = vpop.f32.mrf.mxu0
    %v3872 = vadd.f32 0.0, %v3871
    %v3873 = vpop.f32.mrf.mxu0
    %v3874 = vadd.f32 0.0, %v3873
    %3875 = vmatmul.bf16.gmra.mxu0 %v2993
    %v3876 = vpop.f32.mrf.mxu0
    %v3877 = vadd.f32 0.0, %v3876
    %v3878 = vpop.f32.mrf.mxu0
    %v3879 = vadd.f32 0.0, %v3878
    %3880 = vdwg.mxu0
    %3881 = vmatpush.bf16.msra.mxu0 %v3503
    %3882 = vmatpush.bf16.msra.mxu0 %v3487
    %3883 = vmatpush.bf16.msra.mxu0 %v3471
    %3884 = vmatpush.bf16.msra.mxu0 %v3455
    %3885 = vmatpush.bf16.msra.mxu0 %v3439
    %3886 = vmatpush.bf16.msra.mxu0 %v3423
    %3887 = vmatpush.bf16.msra.mxu0 %v3407
    %3888 = vmatpush.bf16.msra.mxu0 %v3391
    %3889 = vmatmul.bf16.gmra.mxu0 %v2992
    %v3890 = vpop.f32.mrf.mxu0
    %v3891 = vadd.f32 0.0, %v3890
    %v3892 = vpop.f32.mrf.mxu0
    %v3893 = vadd.f32 0.0, %v3892
    %3894 = vmatmul.bf16.gmra.mxu0 %v2993
    %v3895 = vpop.f32.mrf.mxu0
    %v3896 = vadd.f32 0.0, %v3895
    %v3897 = vpop.f32.mrf.mxu0
    %v3898 = vadd.f32 0.0, %v3897
    %3899 = vdwg.mxu0
    %3900 = vmatpush.bf16.msra.mxu0 %v3504
    %3901 = vmatpush.bf16.msra.mxu0 %v3488
    %3902 = vmatpush.bf16.msra.mxu0 %v3472
    %3903 = vmatpush.bf16.msra.mxu0 %v3456
    %3904 = vmatpush.bf16.msra.mxu0 %v3440
    %3905 = vmatpush.bf16.msra.mxu0 %v3424
    %3906 = vmatpush.bf16.msra.mxu0 %v3408
    %3907 = vmatpush.bf16.msra.mxu0 %v3392
    %3908 = vmatmul.bf16.gmra.mxu0 %v2992
    %v3909 = vpop.f32.mrf.mxu0
    %v3910 = vadd.f32 0.0, %v3909
    %v3911 = vpop.f32.mrf.mxu0
    %v3912 = vadd.f32 0.0, %v3911
    %3913 = vmatmul.bf16.gmra.mxu0 %v2993
    %v3914 = vpop.f32.mrf.mxu0
    %v3915 = vadd.f32 0.0, %v3914
    %v3916 = vpop.f32.mrf.mxu0
    %v3917 = vadd.f32 0.0, %v3916
    %3918 = vdwg.mxu0
    %3919 = vmatpush.bf16.msra.mxu0 %v3505
    %3920 = vmatpush.bf16.msra.mxu0 %v3489
    %3921 = vmatpush.bf16.msra.mxu0 %v3473
    %3922 = vmatpush.bf16.msra.mxu0 %v3457
    %3923 = vmatpush.bf16.msra.mxu0 %v3441
    %3924 = vmatpush.bf16.msra.mxu0 %v3425
    %3925 = vmatpush.bf16.msra.mxu0 %v3409
    %3926 = vmatpush.bf16.msra.mxu0 %v3393
    %3927 = vmatmul.bf16.gmra.mxu0 %v2992
    %v3928 = vpop.f32.mrf.mxu0
    %v3929 = vadd.f32 0.0, %v3928
    %v3930 = vpop.f32.mrf.mxu0
    %v3931 = vadd.f32 0.0, %v3930
    %3932 = vmatmul.bf16.gmra.mxu0 %v2993
    %v3933 = vpop.f32.mrf.mxu0
    %v3934 = vadd.f32 0.0, %v3933
    %v3935 = vpop.f32.mrf.mxu0
    %v3936 = vadd.f32 0.0, %v3935
    %3937 = vdwg.mxu0
    %v3938 = vld [vmem:[#allocation16] sm:$0xf]
    %v3939 = vld [vmem:[#allocation16 + $0x4] sm:$0xf]
    %v3940 = vld [vmem:[#allocation16 + $0x8] sm:$0xf]
    %v3941 = vld [vmem:[#allocation16 + $0xc] sm:$0xf]
    %v3942 = vpack.c.bf16 %v3741, %v3739
    %v3943 = vpack.c.bf16 %v3746, %v3744
    %v3944 = vpack.c.bf16 %v3779, %v3777
    %v3945 = vpack.c.bf16 %v3784, %v3782
    %v3946 = vpack.c.bf16 %v3893, %v3891
    %v3947 = vpack.c.bf16 %v3898, %v3896
    %v3948 = vpack.c.bf16 %v3931, %v3929
    %v3949 = vpack.c.bf16 %v3936, %v3934
    %v3954 = vunpack.c.l.b16 %v3938
    %v3955 = vunpack.c.l.b16 %v3939
    %v3956 = vunpack.c.l.b16 %v3940
    %v3957 = vunpack.c.l.b16 %v3941
    %v3958 = vpack.c.b16 %v3955, %v3954
    %v3959 = vpack.c.b16 %v3957, %v3956
    %3962 = vmatpush.bf16.msra.mxu0 %v3949
    %3963 = vmatpush.bf16.msra.mxu0 %v3948
    %3964 = vmatpush.bf16.msra.mxu0 %v3947
    %3965 = vmatpush.bf16.msra.mxu0 %v3946
    %3966 = vmatpush.bf16.msra.mxu0 %v3945
    %3967 = vmatpush.bf16.msra.mxu0 %v3944
    %3968 = vmatpush.bf16.msra.mxu0 %v3943
    %3969 = vmatpush.bf16.msra.mxu0 %v3942
    %3970 = vmatmul.bf16.gmra.mxu0 %v3958
    %v3971 = vpop.f32.mrf.mxu0
    %v3972 = vadd.f32 0.0, %v3971
    %v3973 = vpop.f32.mrf.mxu0
    %v3974 = vadd.f32 0.0, %v3973
    %3975 = vmatmul.bf16.gmra.mxu0 %v3959
    %v3976 = vpop.f32.mrf.mxu0
    %v3977 = vadd.f32 0.0, %v3976
    %v3978 = vpop.f32.mrf.mxu0
    %v3979 = vadd.f32 0.0, %v3978
    %3980 = vdwg.mxu0
    %s3981 = scalar_lea.vmem [#allocation16], 16
    %v3982 = vld [vmem:[%s3981] sm:$0xf]
    %v3983 = vld [vmem:[%s3981 + $0x4] sm:$0xf]
    %v3984 = vld [vmem:[%s3981 + $0x8] sm:$0xf]
    %v3985 = vld [vmem:[%s3981 + $0xc] sm:$0xf]
    %v3986 = vpack.c.bf16 %v3722, %v3720
    %v3987 = vpack.c.bf16 %v3727, %v3725
    %v3988 = vpack.c.bf16 %v3760, %v3758
    %v3989 = vpack.c.bf16 %v3765, %v3763
    %v3990 = vpack.c.bf16 %v3874, %v3872
    %v3991 = vpack.c.bf16 %v3879, %v3877
    %v3992 = vpack.c.bf16 %v3912, %v3910
    %v3993 = vpack.c.bf16 %v3917, %v3915
    %v3998 = vunpack.c.l.b16 %v3982
    %v3999 = vunpack.c.l.b16 %v3983
    %v4000 = vunpack.c.l.b16 %v3984
    %v4001 = vunpack.c.l.b16 %v3985
    %v4002 = vpack.c.b16 %v3999, %v3998
    %v4003 = vpack.c.b16 %v4001, %v4000
    %4006 = vmatpush.bf16.msra.mxu0 %v3993
    %4007 = vmatpush.bf16.msra.mxu0 %v3992
    %4008 = vmatpush.bf16.msra.mxu0 %v3991
    %4009 = vmatpush.bf16.msra.mxu0 %v3990
    %4010 = vmatpush.bf16.msra.mxu0 %v3989
    %4011 = vmatpush.bf16.msra.mxu0 %v3988
    %4012 = vmatpush.bf16.msra.mxu0 %v3987
    %4013 = vmatpush.bf16.msra.mxu0 %v3986
    %4014 = vmatmul.bf16.gmra.mxu0 %v4002
    %v4015 = vpop.f32.mrf.mxu0
    %v4016 = vadd.f32 0.0, %v4015
    %v4017 = vpop.f32.mrf.mxu0
    %v4018 = vadd.f32 0.0, %v4017
    %4019 = vmatmul.bf16.gmra.mxu0 %v4003
    %v4020 = vpop.f32.mrf.mxu0
    %v4021 = vadd.f32 0.0, %v4020
    %v4022 = vpop.f32.mrf.mxu0
    %v4023 = vadd.f32 0.0, %v4022
    %4024 = vdwg.mxu0
    %s4025 = scalar_lea.vmem [#allocation16], 32
    %v4026 = vld [vmem:[%s4025] sm:$0xf]
    %v4027 = vld [vmem:[%s4025 + $0x4] sm:$0xf]
    %v4028 = vld [vmem:[%s4025 + $0x8] sm:$0xf]
    %v4029 = vld [vmem:[%s4025 + $0xc] sm:$0xf]
    %v4030 = vpack.c.bf16 %v3665, %v3663
    %v4031 = vpack.c.bf16 %v3670, %v3668
    %v4032 = vpack.c.bf16 %v3703, %v3701
    %v4033 = vpack.c.bf16 %v3708, %v3706
    %v4034 = vpack.c.bf16 %v3817, %v3815
    %v4035 = vpack.c.bf16 %v3822, %v3820
    %v4036 = vpack.c.bf16 %v3855, %v3853
    %v4037 = vpack.c.bf16 %v3860, %v3858
    %v4042 = vunpack.c.l.b16 %v4026
    %v4043 = vunpack.c.l.b16 %v4027
    %v4044 = vunpack.c.l.b16 %v4028
    %v4045 = vunpack.c.l.b16 %v4029
    %v4046 = vpack.c.b16 %v4043, %v4042
    %v4047 = vpack.c.b16 %v4045, %v4044
    %4050 = vmatpush.bf16.msra.mxu0 %v4037
    %4051 = vmatpush.bf16.msra.mxu0 %v4036
    %4052 = vmatpush.bf16.msra.mxu0 %v4035
    %4053 = vmatpush.bf16.msra.mxu0 %v4034
    %4054 = vmatpush.bf16.msra.mxu0 %v4033
    %4055 = vmatpush.bf16.msra.mxu0 %v4032
    %4056 = vmatpush.bf16.msra.mxu0 %v4031
    %4057 = vmatpush.bf16.msra.mxu0 %v4030
    %4058 = vmatmul.bf16.gmra.mxu0 %v4046
    %v4059 = vpop.f32.mrf.mxu0
    %v4060 = vadd.f32 0.0, %v4059
    %v4061 = vpop.f32.mrf.mxu0
    %v4062 = vadd.f32 0.0, %v4061
    %4063 = vmatmul.bf16.gmra.mxu0 %v4047
    %v4064 = vpop.f32.mrf.mxu0
    %v4065 = vadd.f32 0.0, %v4064
    %v4066 = vpop.f32.mrf.mxu0
    %v4067 = vadd.f32 0.0, %v4066
    %4068 = vdwg.mxu0
    %s4069 = scalar_lea.vmem [#allocation16], 48
    %v4070 = vld [vmem:[%s4069] sm:$0xf]
    %v4071 = vld [vmem:[%s4069 + $0x4] sm:$0xf]
    %v4072 = vld [vmem:[%s4069 + $0x8] sm:$0xf]
    %v4073 = vld [vmem:[%s4069 + $0xc] sm:$0xf]
    %v4074 = vpack.c.bf16 %v3646, %v3644
    %v4075 = vpack.c.bf16 %v3651, %v3649
    %v4076 = vpack.c.bf16 %v3684, %v3682
    %v4077 = vpack.c.bf16 %v3689, %v3687
    %v4078 = vpack.c.bf16 %v3798, %v3796
    %v4079 = vpack.c.bf16 %v3803, %v3801
    %v4080 = vpack.c.bf16 %v3836, %v3834
    %v4081 = vpack.c.bf16 %v3841, %v3839
    %v4086 = vunpack.c.l.b16 %v4070
    %v4087 = vunpack.c.l.b16 %v4071
    %v4088 = vunpack.c.l.b16 %v4072
    %v4089 = vunpack.c.l.b16 %v4073
    %v4090 = vpack.c.b16 %v4087, %v4086
    %v4091 = vpack.c.b16 %v4089, %v4088
    %4094 = vmatpush.bf16.msra.mxu0 %v4081
    %4095 = vmatpush.bf16.msra.mxu0 %v4080
    %4096 = vmatpush.bf16.msra.mxu0 %v4079
    %4097 = vmatpush.bf16.msra.mxu0 %v4078
    %4098 = vmatpush.bf16.msra.mxu0 %v4077
    %4099 = vmatpush.bf16.msra.mxu0 %v4076
    %4100 = vmatpush.bf16.msra.mxu0 %v4075
    %4101 = vmatpush.bf16.msra.mxu0 %v4074
    %4102 = vmatmul.bf16.gmra.mxu0 %v4090
    %v4103 = vpop.f32.mrf.mxu0
    %v4104 = vadd.f32 0.0, %v4103
    %v4105 = vpop.f32.mrf.mxu0
    %v4106 = vadd.f32 0.0, %v4105
    %4107 = vmatmul.bf16.gmra.mxu0 %v4091
    %v4108 = vpop.f32.mrf.mxu0
    %v4109 = vadd.f32 0.0, %v4108
    %v4110 = vpop.f32.mrf.mxu0
    %v4111 = vadd.f32 0.0, %v4110
    %4112 = vdwg.mxu0
    %v4113 = vld [vmem:[#allocation15] sm:$0x1]
    %v4115 = vperm.slane %v4113, 0
    %v4117 = vadd.f32 %v3972, %v4115
    %v4118 = vadd.f32 %v3974, %v4115
    %v4119 = vadd.f32 %v3977, %v4115
    %v4120 = vadd.f32 %v3979, %v4115
    %v4121 = vadd.f32 %v4016, %v4115
    %v4122 = vadd.f32 %v4018, %v4115
    %v4123 = vadd.f32 %v4021, %v4115
    %v4124 = vadd.f32 %v4023, %v4115
    %v4125 = vadd.f32 %v4060, %v4115
    %v4126 = vadd.f32 %v4062, %v4115
    %v4127 = vadd.f32 %v4065, %v4115
    %v4128 = vadd.f32 %v4067, %v4115
    %v4129 = vadd.f32 %v4104, %v4115
    %v4130 = vadd.f32 %v4106, %v4115
    %v4131 = vadd.f32 %v4109, %v4115
    %v4132 = vadd.f32 %v4111, %v4115
    %v4133 = vmax.f32 %v4117, 0.0
    %v4134 = vmax.f32 %v4118, 0.0
    %v4135 = vmax.f32 %v4119, 0.0
    %v4136 = vmax.f32 %v4120, 0.0
    %v4137 = vmax.f32 %v4121, 0.0
    %v4138 = vmax.f32 %v4122, 0.0
    %v4139 = vmax.f32 %v4123, 0.0
    %v4140 = vmax.f32 %v4124, 0.0
    %v4141 = vmax.f32 %v4125, 0.0
    %v4142 = vmax.f32 %v4126, 0.0
    %v4143 = vmax.f32 %v4127, 0.0
    %v4144 = vmax.f32 %v4128, 0.0
    %v4145 = vmax.f32 %v4129, 0.0
    %v4146 = vmax.f32 %v4130, 0.0
    %v4147 = vmax.f32 %v4131, 0.0
    %v4148 = vmax.f32 %v4132, 0.0
    %v4149 = vld [vmem:[#allocation18] sm:$0xff]
    %v4150 = vld [vmem:[#allocation18 + $0x8] sm:$0xff]
    %v4151 = vld [vmem:[#allocation18 + $0x10] sm:$0xff]
    %v4152 = vld [vmem:[#allocation18 + $0x18] sm:$0xff]
    %v4153 = vld [vmem:[#allocation18 + $0x20] sm:$0xff]
    %v4154 = vld [vmem:[#allocation18 + $0x28] sm:$0xff]
    %v4155 = vld [vmem:[#allocation18 + $0x30] sm:$0xff]
    %v4156 = vld [vmem:[#allocation18 + $0x38] sm:$0xff]
    %v4157 = vld [vmem:[#allocation18 + $0x40] sm:$0xff]
    %v4158 = vld [vmem:[#allocation18 + $0x48] sm:$0xff]
    %v4159 = vld [vmem:[#allocation18 + $0x50] sm:$0xff]
    %v4160 = vld [vmem:[#allocation18 + $0x58] sm:$0xff]
    %v4161 = vld [vmem:[#allocation18 + $0x60] sm:$0xff]
    %v4162 = vld [vmem:[#allocation18 + $0x68] sm:$0xff]
    %v4163 = vld [vmem:[#allocation18 + $0x70] sm:$0xff]
    %v4164 = vld [vmem:[#allocation18 + $0x78] sm:$0xff]
    %v4165 = vld [vmem:[#allocation18 + $0x80] sm:$0xff]
    %v4166 = vld [vmem:[#allocation18 + $0x88] sm:$0xff]
    %v4167 = vld [vmem:[#allocation18 + $0x90] sm:$0xff]
    %v4168 = vld [vmem:[#allocation18 + $0x98] sm:$0xff]
    %v4169 = vld [vmem:[#allocation18 + $0xa0] sm:$0xff]
    %v4170 = vld [vmem:[#allocation18 + $0xa8] sm:$0xff]
    %v4171 = vld [vmem:[#allocation18 + $0xb0] sm:$0xff]
    %v4172 = vld [vmem:[#allocation18 + $0xb8] sm:$0xff]
    %v4173 = vld [vmem:[#allocation18 + $0xc0] sm:$0xff]
    %v4174 = vld [vmem:[#allocation18 + $0xc8] sm:$0xff]
    %v4175 = vld [vmem:[#allocation18 + $0xd0] sm:$0xff]
    %v4176 = vld [vmem:[#allocation18 + $0xd8] sm:$0xff]
    %v4177 = vld [vmem:[#allocation18 + $0xe0] sm:$0xff]
    %v4178 = vld [vmem:[#allocation18 + $0xe8] sm:$0xff]
    %v4179 = vld [vmem:[#allocation18 + $0xf0] sm:$0xff]
    %v4180 = vld [vmem:[#allocation18 + $0xf8] sm:$0xff]
    %v4181 = vld [vmem:[#allocation18 + $0x100] sm:$0xff]
    %v4182 = vld [vmem:[#allocation18 + $0x108] sm:$0xff]
    %v4183 = vld [vmem:[#allocation18 + $0x110] sm:$0xff]
    %v4184 = vld [vmem:[#allocation18 + $0x118] sm:$0xff]
    %v4185 = vld [vmem:[#allocation18 + $0x120] sm:$0xff]
    %v4186 = vld [vmem:[#allocation18 + $0x128] sm:$0xff]
    %v4187 = vld [vmem:[#allocation18 + $0x130] sm:$0xff]
    %v4188 = vld [vmem:[#allocation18 + $0x138] sm:$0xff]
    %v4189 = vld [vmem:[#allocation18 + $0x140] sm:$0xff]
    %v4190 = vld [vmem:[#allocation18 + $0x148] sm:$0xff]
    %v4191 = vld [vmem:[#allocation18 + $0x150] sm:$0xff]
    %v4192 = vld [vmem:[#allocation18 + $0x158] sm:$0xff]
    %v4193 = vld [vmem:[#allocation18 + $0x160] sm:$0xff]
    %v4194 = vld [vmem:[#allocation18 + $0x168] sm:$0xff]
    %v4195 = vld [vmem:[#allocation18 + $0x170] sm:$0xff]
    %v4196 = vld [vmem:[#allocation18 + $0x178] sm:$0xff]
    %v4197 = vld [vmem:[#allocation18 + $0x180] sm:$0xff]
    %v4198 = vld [vmem:[#allocation18 + $0x188] sm:$0xff]
    %v4199 = vld [vmem:[#allocation18 + $0x190] sm:$0xff]
    %v4200 = vld [vmem:[#allocation18 + $0x198] sm:$0xff]
    %v4201 = vld [vmem:[#allocation18 + $0x1a0] sm:$0xff]
    %v4202 = vld [vmem:[#allocation18 + $0x1a8] sm:$0xff]
    %v4203 = vld [vmem:[#allocation18 + $0x1b0] sm:$0xff]
    %v4204 = vld [vmem:[#allocation18 + $0x1b8] sm:$0xff]
    %v4205 = vld [vmem:[#allocation18 + $0x1c0] sm:$0xff]
    %v4206 = vld [vmem:[#allocation18 + $0x1c8] sm:$0xff]
    %v4207 = vld [vmem:[#allocation18 + $0x1d0] sm:$0xff]
    %v4208 = vld [vmem:[#allocation18 + $0x1d8] sm:$0xff]
    %v4209 = vld [vmem:[#allocation18 + $0x1e0] sm:$0xff]
    %v4210 = vld [vmem:[#allocation18 + $0x1e8] sm:$0xff]
    %v4211 = vld [vmem:[#allocation18 + $0x1f0] sm:$0xff]
    %v4212 = vld [vmem:[#allocation18 + $0x1f8] sm:$0xff]
    %v4213 = vld [vmem:[#allocation18 + $0x200] sm:$0xff]
    %v4214 = vld [vmem:[#allocation18 + $0x208] sm:$0xff]
    %v4215 = vld [vmem:[#allocation18 + $0x210] sm:$0xff]
    %v4216 = vld [vmem:[#allocation18 + $0x218] sm:$0xff]
    %v4217 = vld [vmem:[#allocation18 + $0x220] sm:$0xff]
    %v4218 = vld [vmem:[#allocation18 + $0x228] sm:$0xff]
    %v4219 = vld [vmem:[#allocation18 + $0x230] sm:$0xff]
    %v4220 = vld [vmem:[#allocation18 + $0x238] sm:$0xff]
    %v4221 = vld [vmem:[#allocation18 + $0x240] sm:$0xff]
    %v4222 = vld [vmem:[#allocation18 + $0x248] sm:$0xff]
    %v4223 = vld [vmem:[#allocation18 + $0x250] sm:$0xff]
    %v4224 = vld [vmem:[#allocation18 + $0x258] sm:$0xff]
    %v4225 = vld [vmem:[#allocation18 + $0x260] sm:$0xff]
    %v4226 = vld [vmem:[#allocation18 + $0x268] sm:$0xff]
    %v4227 = vld [vmem:[#allocation18 + $0x270] sm:$0xff]
    %v4228 = vld [vmem:[#allocation18 + $0x278] sm:$0xff]
    %v4229 = vld [vmem:[#allocation18 + $0x280] sm:$0xff]
    %v4230 = vld [vmem:[#allocation18 + $0x288] sm:$0xff]
    %v4231 = vld [vmem:[#allocation18 + $0x290] sm:$0xff]
    %v4232 = vld [vmem:[#allocation18 + $0x298] sm:$0xff]
    %v4233 = vld [vmem:[#allocation18 + $0x2a0] sm:$0xff]
    %v4234 = vld [vmem:[#allocation18 + $0x2a8] sm:$0xff]
    %v4235 = vld [vmem:[#allocation18 + $0x2b0] sm:$0xff]
    %v4236 = vld [vmem:[#allocation18 + $0x2b8] sm:$0xff]
    %v4237 = vld [vmem:[#allocation18 + $0x2c0] sm:$0xff]
    %v4238 = vld [vmem:[#allocation18 + $0x2c8] sm:$0xff]
    %v4239 = vld [vmem:[#allocation18 + $0x2d0] sm:$0xff]
    %v4240 = vld [vmem:[#allocation18 + $0x2d8] sm:$0xff]
    %v4241 = vld [vmem:[#allocation18 + $0x2e0] sm:$0xff]
    %v4242 = vld [vmem:[#allocation18 + $0x2e8] sm:$0xff]
    %v4243 = vld [vmem:[#allocation18 + $0x2f0] sm:$0xff]
    %v4244 = vld [vmem:[#allocation18 + $0x2f8] sm:$0xff]
    %v4245 = vld [vmem:[#allocation18 + $0x300] sm:$0xff]
    %v4246 = vld [vmem:[#allocation18 + $0x308] sm:$0xff]
    %v4247 = vld [vmem:[#allocation18 + $0x310] sm:$0xff]
    %v4248 = vld [vmem:[#allocation18 + $0x318] sm:$0xff]
    %v4249 = vld [vmem:[#allocation18 + $0x320] sm:$0xff]
    %v4250 = vld [vmem:[#allocation18 + $0x328] sm:$0xff]
    %v4251 = vld [vmem:[#allocation18 + $0x330] sm:$0xff]
    %v4252 = vld [vmem:[#allocation18 + $0x338] sm:$0xff]
    %v4253 = vld [vmem:[#allocation18 + $0x340] sm:$0xff]
    %v4254 = vld [vmem:[#allocation18 + $0x348] sm:$0xff]
    %v4255 = vld [vmem:[#allocation18 + $0x350] sm:$0xff]
    %v4256 = vld [vmem:[#allocation18 + $0x358] sm:$0xff]
    %v4257 = vld [vmem:[#allocation18 + $0x360] sm:$0xff]
    %v4258 = vld [vmem:[#allocation18 + $0x368] sm:$0xff]
    %v4259 = vld [vmem:[#allocation18 + $0x370] sm:$0xff]
    %v4260 = vld [vmem:[#allocation18 + $0x378] sm:$0xff]
    %v4261 = vld [vmem:[#allocation18 + $0x380] sm:$0xff]
    %v4262 = vld [vmem:[#allocation18 + $0x388] sm:$0xff]
    %v4263 = vld [vmem:[#allocation18 + $0x390] sm:$0xff]
    %v4264 = vld [vmem:[#allocation18 + $0x398] sm:$0xff]
    %v4265 = vld [vmem:[#allocation18 + $0x3a0] sm:$0xff]
    %v4266 = vld [vmem:[#allocation18 + $0x3a8] sm:$0xff]
    %v4267 = vld [vmem:[#allocation18 + $0x3b0] sm:$0xff]
    %v4268 = vld [vmem:[#allocation18 + $0x3b8] sm:$0xff]
    %v4269 = vld [vmem:[#allocation18 + $0x3c0] sm:$0xff]
    %v4270 = vld [vmem:[#allocation18 + $0x3c8] sm:$0xff]
    %v4271 = vld [vmem:[#allocation18 + $0x3d0] sm:$0xff]
    %v4272 = vld [vmem:[#allocation18 + $0x3d8] sm:$0xff]
    %v4273 = vld [vmem:[#allocation18 + $0x3e0] sm:$0xff]
    %v4274 = vld [vmem:[#allocation18 + $0x3e8] sm:$0xff]
    %v4275 = vld [vmem:[#allocation18 + $0x3f0] sm:$0xff]
    %v4276 = vld [vmem:[#allocation18 + $0x3f8] sm:$0xff]
    %v4277 = vpack.c.bf16 %v4134, %v4133
    %v4278 = vpack.c.bf16 %v4136, %v4135
    %v4279 = vpack.c.bf16 %v4138, %v4137
    %v4280 = vpack.c.bf16 %v4140, %v4139
    %v4281 = vpack.c.bf16 %v4142, %v4141
    %v4282 = vpack.c.bf16 %v4144, %v4143
    %v4283 = vpack.c.bf16 %v4146, %v4145
    %v4284 = vpack.c.bf16 %v4148, %v4147
    %v4413 = vunpack.c.l.b16 %v4149
    %v4414 = vunpack.c.h.b16 %v4149
    %v4415 = vunpack.c.l.b16 %v4150
    %v4416 = vunpack.c.h.b16 %v4150
    %v4417 = vunpack.c.l.b16 %v4151
    %v4418 = vunpack.c.h.b16 %v4151
    %v4419 = vunpack.c.l.b16 %v4152
    %v4420 = vunpack.c.h.b16 %v4152
    %v4421 = vunpack.c.l.b16 %v4153
    %v4422 = vunpack.c.h.b16 %v4153
    %v4423 = vunpack.c.l.b16 %v4154
    %v4424 = vunpack.c.h.b16 %v4154
    %v4425 = vunpack.c.l.b16 %v4155
    %v4426 = vunpack.c.h.b16 %v4155
    %v4427 = vunpack.c.l.b16 %v4156
    %v4428 = vunpack.c.h.b16 %v4156
    %v4429 = vunpack.c.l.b16 %v4157
    %v4430 = vunpack.c.h.b16 %v4157
    %v4431 = vunpack.c.l.b16 %v4158
    %v4432 = vunpack.c.h.b16 %v4158
    %v4433 = vunpack.c.l.b16 %v4159
    %v4434 = vunpack.c.h.b16 %v4159
    %v4435 = vunpack.c.l.b16 %v4160
    %v4436 = vunpack.c.h.b16 %v4160
    %v4437 = vunpack.c.l.b16 %v4161
    %v4438 = vunpack.c.h.b16 %v4161
    %v4439 = vunpack.c.l.b16 %v4162
    %v4440 = vunpack.c.h.b16 %v4162
    %v4441 = vunpack.c.l.b16 %v4163
    %v4442 = vunpack.c.h.b16 %v4163
    %v4443 = vunpack.c.l.b16 %v4164
    %v4444 = vunpack.c.h.b16 %v4164
    %v4445 = vunpack.c.l.b16 %v4165
    %v4446 = vunpack.c.h.b16 %v4165
    %v4447 = vunpack.c.l.b16 %v4166
    %v4448 = vunpack.c.h.b16 %v4166
    %v4449 = vunpack.c.l.b16 %v4167
    %v4450 = vunpack.c.h.b16 %v4167
    %v4451 = vunpack.c.l.b16 %v4168
    %v4452 = vunpack.c.h.b16 %v4168
    %v4453 = vunpack.c.l.b16 %v4169
    %v4454 = vunpack.c.h.b16 %v4169
    %v4455 = vunpack.c.l.b16 %v4170
    %v4456 = vunpack.c.h.b16 %v4170
    %v4457 = vunpack.c.l.b16 %v4171
    %v4458 = vunpack.c.h.b16 %v4171
    %v4459 = vunpack.c.l.b16 %v4172
    %v4460 = vunpack.c.h.b16 %v4172
    %v4461 = vunpack.c.l.b16 %v4173
    %v4462 = vunpack.c.h.b16 %v4173
    %v4463 = vunpack.c.l.b16 %v4174
    %v4464 = vunpack.c.h.b16 %v4174
    %v4465 = vunpack.c.l.b16 %v4175
    %v4466 = vunpack.c.h.b16 %v4175
    %v4467 = vunpack.c.l.b16 %v4176
    %v4468 = vunpack.c.h.b16 %v4176
    %v4469 = vunpack.c.l.b16 %v4177
    %v4470 = vunpack.c.h.b16 %v4177
    %v4471 = vunpack.c.l.b16 %v4178
    %v4472 = vunpack.c.h.b16 %v4178
    %v4473 = vunpack.c.l.b16 %v4179
    %v4474 = vunpack.c.h.b16 %v4179
    %v4475 = vunpack.c.l.b16 %v4180
    %v4476 = vunpack.c.h.b16 %v4180
    %v4477 = vunpack.c.l.b16 %v4181
    %v4478 = vunpack.c.h.b16 %v4181
    %v4479 = vunpack.c.l.b16 %v4182
    %v4480 = vunpack.c.h.b16 %v4182
    %v4481 = vunpack.c.l.b16 %v4183
    %v4482 = vunpack.c.h.b16 %v4183
    %v4483 = vunpack.c.l.b16 %v4184
    %v4484 = vunpack.c.h.b16 %v4184
    %v4485 = vunpack.c.l.b16 %v4185
    %v4486 = vunpack.c.h.b16 %v4185
    %v4487 = vunpack.c.l.b16 %v4186
    %v4488 = vunpack.c.h.b16 %v4186
    %v4489 = vunpack.c.l.b16 %v4187
    %v4490 = vunpack.c.h.b16 %v4187
    %v4491 = vunpack.c.l.b16 %v4188
    %v4492 = vunpack.c.h.b16 %v4188
    %v4493 = vunpack.c.l.b16 %v4189
    %v4494 = vunpack.c.h.b16 %v4189
    %v4495 = vunpack.c.l.b16 %v4190
    %v4496 = vunpack.c.h.b16 %v4190
    %v4497 = vunpack.c.l.b16 %v4191
    %v4498 = vunpack.c.h.b16 %v4191
    %v4499 = vunpack.c.l.b16 %v4192
    %v4500 = vunpack.c.h.b16 %v4192
    %v4501 = vunpack.c.l.b16 %v4193
    %v4502 = vunpack.c.h.b16 %v4193
    %v4503 = vunpack.c.l.b16 %v4194
    %v4504 = vunpack.c.h.b16 %v4194
    %v4505 = vunpack.c.l.b16 %v4195
    %v4506 = vunpack.c.h.b16 %v4195
    %v4507 = vunpack.c.l.b16 %v4196
    %v4508 = vunpack.c.h.b16 %v4196
    %v4509 = vunpack.c.l.b16 %v4197
    %v4510 = vunpack.c.h.b16 %v4197
    %v4511 = vunpack.c.l.b16 %v4198
    %v4512 = vunpack.c.h.b16 %v4198
    %v4513 = vunpack.c.l.b16 %v4199
    %v4514 = vunpack.c.h.b16 %v4199
    %v4515 = vunpack.c.l.b16 %v4200
    %v4516 = vunpack.c.h.b16 %v4200
    %v4517 = vunpack.c.l.b16 %v4201
    %v4518 = vunpack.c.h.b16 %v4201
    %v4519 = vunpack.c.l.b16 %v4202
    %v4520 = vunpack.c.h.b16 %v4202
    %v4521 = vunpack.c.l.b16 %v4203
    %v4522 = vunpack.c.h.b16 %v4203
    %v4523 = vunpack.c.l.b16 %v4204
    %v4524 = vunpack.c.h.b16 %v4204
    %v4525 = vunpack.c.l.b16 %v4205
    %v4526 = vunpack.c.h.b16 %v4205
    %v4527 = vunpack.c.l.b16 %v4206
    %v4528 = vunpack.c.h.b16 %v4206
    %v4529 = vunpack.c.l.b16 %v4207
    %v4530 = vunpack.c.h.b16 %v4207
    %v4531 = vunpack.c.l.b16 %v4208
    %v4532 = vunpack.c.h.b16 %v4208
    %v4533 = vunpack.c.l.b16 %v4209
    %v4534 = vunpack.c.h.b16 %v4209
    %v4535 = vunpack.c.l.b16 %v4210
    %v4536 = vunpack.c.h.b16 %v4210
    %v4537 = vunpack.c.l.b16 %v4211
    %v4538 = vunpack.c.h.b16 %v4211
    %v4539 = vunpack.c.l.b16 %v4212
    %v4540 = vunpack.c.h.b16 %v4212
    %v4541 = vunpack.c.l.b16 %v4213
    %v4542 = vunpack.c.h.b16 %v4213
    %v4543 = vunpack.c.l.b16 %v4214
    %v4544 = vunpack.c.h.b16 %v4214
    %v4545 = vunpack.c.l.b16 %v4215
    %v4546 = vunpack.c.h.b16 %v4215
    %v4547 = vunpack.c.l.b16 %v4216
    %v4548 = vunpack.c.h.b16 %v4216
    %v4549 = vunpack.c.l.b16 %v4217
    %v4550 = vunpack.c.h.b16 %v4217
    %v4551 = vunpack.c.l.b16 %v4218
    %v4552 = vunpack.c.h.b16 %v4218
    %v4553 = vunpack.c.l.b16 %v4219
    %v4554 = vunpack.c.h.b16 %v4219
    %v4555 = vunpack.c.l.b16 %v4220
    %v4556 = vunpack.c.h.b16 %v4220
    %v4557 = vunpack.c.l.b16 %v4221
    %v4558 = vunpack.c.h.b16 %v4221
    %v4559 = vunpack.c.l.b16 %v4222
    %v4560 = vunpack.c.h.b16 %v4222
    %v4561 = vunpack.c.l.b16 %v4223
    %v4562 = vunpack.c.h.b16 %v4223
    %v4563 = vunpack.c.l.b16 %v4224
    %v4564 = vunpack.c.h.b16 %v4224
    %v4565 = vunpack.c.l.b16 %v4225
    %v4566 = vunpack.c.h.b16 %v4225
    %v4567 = vunpack.c.l.b16 %v4226
    %v4568 = vunpack.c.h.b16 %v4226
    %v4569 = vunpack.c.l.b16 %v4227
    %v4570 = vunpack.c.h.b16 %v4227
    %v4571 = vunpack.c.l.b16 %v4228
    %v4572 = vunpack.c.h.b16 %v4228
    %v4573 = vunpack.c.l.b16 %v4229
    %v4574 = vunpack.c.h.b16 %v4229
    %v4575 = vunpack.c.l.b16 %v4230
    %v4576 = vunpack.c.h.b16 %v4230
    %v4577 = vunpack.c.l.b16 %v4231
    %v4578 = vunpack.c.h.b16 %v4231
    %v4579 = vunpack.c.l.b16 %v4232
    %v4580 = vunpack.c.h.b16 %v4232
    %v4581 = vunpack.c.l.b16 %v4233
    %v4582 = vunpack.c.h.b16 %v4233
    %v4583 = vunpack.c.l.b16 %v4234
    %v4584 = vunpack.c.h.b16 %v4234
    %v4585 = vunpack.c.l.b16 %v4235
    %v4586 = vunpack.c.h.b16 %v4235
    %v4587 = vunpack.c.l.b16 %v4236
    %v4588 = vunpack.c.h.b16 %v4236
    %v4589 = vunpack.c.l.b16 %v4237
    %v4590 = vunpack.c.h.b16 %v4237
    %v4591 = vunpack.c.l.b16 %v4238
    %v4592 = vunpack.c.h.b16 %v4238
    %v4593 = vunpack.c.l.b16 %v4239
    %v4594 = vunpack.c.h.b16 %v4239
    %v4595 = vunpack.c.l.b16 %v4240
    %v4596 = vunpack.c.h.b16 %v4240
    %v4597 = vunpack.c.l.b16 %v4241
    %v4598 = vunpack.c.h.b16 %v4241
    %v4599 = vunpack.c.l.b16 %v4242
    %v4600 = vunpack.c.h.b16 %v4242
    %v4601 = vunpack.c.l.b16 %v4243
    %v4602 = vunpack.c.h.b16 %v4243
    %v4603 = vunpack.c.l.b16 %v4244
    %v4604 = vunpack.c.h.b16 %v4244
    %v4605 = vunpack.c.l.b16 %v4245
    %v4606 = vunpack.c.h.b16 %v4245
    %v4607 = vunpack.c.l.b16 %v4246
    %v4608 = vunpack.c.h.b16 %v4246
    %v4609 = vunpack.c.l.b16 %v4247
    %v4610 = vunpack.c.h.b16 %v4247
    %v4611 = vunpack.c.l.b16 %v4248
    %v4612 = vunpack.c.h.b16 %v4248
    %v4613 = vunpack.c.l.b16 %v4249
    %v4614 = vunpack.c.h.b16 %v4249
    %v4615 = vunpack.c.l.b16 %v4250
    %v4616 = vunpack.c.h.b16 %v4250
    %v4617 = vunpack.c.l.b16 %v4251
    %v4618 = vunpack.c.h.b16 %v4251
    %v4619 = vunpack.c.l.b16 %v4252
    %v4620 = vunpack.c.h.b16 %v4252
    %v4621 = vunpack.c.l.b16 %v4253
    %v4622 = vunpack.c.h.b16 %v4253
    %v4623 = vunpack.c.l.b16 %v4254
    %v4624 = vunpack.c.h.b16 %v4254
    %v4625 = vunpack.c.l.b16 %v4255
    %v4626 = vunpack.c.h.b16 %v4255
    %v4627 = vunpack.c.l.b16 %v4256
    %v4628 = vunpack.c.h.b16 %v4256
    %v4629 = vunpack.c.l.b16 %v4257
    %v4630 = vunpack.c.h.b16 %v4257
    %v4631 = vunpack.c.l.b16 %v4258
    %v4632 = vunpack.c.h.b16 %v4258
    %v4633 = vunpack.c.l.b16 %v4259
    %v4634 = vunpack.c.h.b16 %v4259
    %v4635 = vunpack.c.l.b16 %v4260
    %v4636 = vunpack.c.h.b16 %v4260
    %v4637 = vunpack.c.l.b16 %v4261
    %v4638 = vunpack.c.h.b16 %v4261
    %v4639 = vunpack.c.l.b16 %v4262
    %v4640 = vunpack.c.h.b16 %v4262
    %v4641 = vunpack.c.l.b16 %v4263
    %v4642 = vunpack.c.h.b16 %v4263
    %v4643 = vunpack.c.l.b16 %v4264
    %v4644 = vunpack.c.h.b16 %v4264
    %v4645 = vunpack.c.l.b16 %v4265
    %v4646 = vunpack.c.h.b16 %v4265
    %v4647 = vunpack.c.l.b16 %v4266
    %v4648 = vunpack.c.h.b16 %v4266
    %v4649 = vunpack.c.l.b16 %v4267
    %v4650 = vunpack.c.h.b16 %v4267
    %v4651 = vunpack.c.l.b16 %v4268
    %v4652 = vunpack.c.h.b16 %v4268
    %v4653 = vunpack.c.l.b16 %v4269
    %v4654 = vunpack.c.h.b16 %v4269
    %v4655 = vunpack.c.l.b16 %v4270
    %v4656 = vunpack.c.h.b16 %v4270
    %v4657 = vunpack.c.l.b16 %v4271
    %v4658 = vunpack.c.h.b16 %v4271
    %v4659 = vunpack.c.l.b16 %v4272
    %v4660 = vunpack.c.h.b16 %v4272
    %v4661 = vunpack.c.l.b16 %v4273
    %v4662 = vunpack.c.h.b16 %v4273
    %v4663 = vunpack.c.l.b16 %v4274
    %v4664 = vunpack.c.h.b16 %v4274
    %v4665 = vunpack.c.l.b16 %v4275
    %v4666 = vunpack.c.h.b16 %v4275
    %v4667 = vunpack.c.l.b16 %v4276
    %v4668 = vunpack.c.h.b16 %v4276
    %v4669 = vpack.c.b16 %v4429, %v4413
    %v4670 = vpack.c.b16 %v4430, %v4414
    %v4671 = vpack.c.b16 %v4431, %v4415
    %v4672 = vpack.c.b16 %v4432, %v4416
    %v4673 = vpack.c.b16 %v4433, %v4417
    %v4674 = vpack.c.b16 %v4434, %v4418
    %v4675 = vpack.c.b16 %v4435, %v4419
    %v4676 = vpack.c.b16 %v4436, %v4420
    %v4677 = vpack.c.b16 %v4437, %v4421
    %v4678 = vpack.c.b16 %v4438, %v4422
    %v4679 = vpack.c.b16 %v4439, %v4423
    %v4680 = vpack.c.b16 %v4440, %v4424
    %v4681 = vpack.c.b16 %v4441, %v4425
    %v4682 = vpack.c.b16 %v4442, %v4426
    %v4683 = vpack.c.b16 %v4443, %v4427
    %v4684 = vpack.c.b16 %v4444, %v4428
    %v4685 = vpack.c.b16 %v4461, %v4445
    %v4686 = vpack.c.b16 %v4462, %v4446
    %v4687 = vpack.c.b16 %v4463, %v4447
    %v4688 = vpack.c.b16 %v4464, %v4448
    %v4689 = vpack.c.b16 %v4465, %v4449
    %v4690 = vpack.c.b16 %v4466, %v4450
    %v4691 = vpack.c.b16 %v4467, %v4451
    %v4692 = vpack.c.b16 %v4468, %v4452
    %v4693 = vpack.c.b16 %v4469, %v4453
    %v4694 = vpack.c.b16 %v4470, %v4454
    %v4695 = vpack.c.b16 %v4471, %v4455
    %v4696 = vpack.c.b16 %v4472, %v4456
    %v4697 = vpack.c.b16 %v4473, %v4457
    %v4698 = vpack.c.b16 %v4474, %v4458
    %v4699 = vpack.c.b16 %v4475, %v4459
    %v4700 = vpack.c.b16 %v4476, %v4460
    %v4701 = vpack.c.b16 %v4493, %v4477
    %v4702 = vpack.c.b16 %v4494, %v4478
    %v4703 = vpack.c.b16 %v4495, %v4479
    %v4704 = vpack.c.b16 %v4496, %v4480
    %v4705 = vpack.c.b16 %v4497, %v4481
    %v4706 = vpack.c.b16 %v4498, %v4482
    %v4707 = vpack.c.b16 %v4499, %v4483
    %v4708 = vpack.c.b16 %v4500, %v4484
    %v4709 = vpack.c.b16 %v4501, %v4485
    %v4710 = vpack.c.b16 %v4502, %v4486
    %v4711 = vpack.c.b16 %v4503, %v4487
    %v4712 = vpack.c.b16 %v4504, %v4488
    %v4713 = vpack.c.b16 %v4505, %v4489
    %v4714 = vpack.c.b16 %v4506, %v4490
    %v4715 = vpack.c.b16 %v4507, %v4491
    %v4716 = vpack.c.b16 %v4508, %v4492
    %v4717 = vpack.c.b16 %v4525, %v4509
    %v4718 = vpack.c.b16 %v4526, %v4510
    %v4719 = vpack.c.b16 %v4527, %v4511
    %v4720 = vpack.c.b16 %v4528, %v4512
    %v4721 = vpack.c.b16 %v4529, %v4513
    %v4722 = vpack.c.b16 %v4530, %v4514
    %v4723 = vpack.c.b16 %v4531, %v4515
    %v4724 = vpack.c.b16 %v4532, %v4516
    %v4725 = vpack.c.b16 %v4533, %v4517
    %v4726 = vpack.c.b16 %v4534, %v4518
    %v4727 = vpack.c.b16 %v4535, %v4519
    %v4728 = vpack.c.b16 %v4536, %v4520
    %v4729 = vpack.c.b16 %v4537, %v4521
    %v4730 = vpack.c.b16 %v4538, %v4522
    %v4731 = vpack.c.b16 %v4539, %v4523
    %v4732 = vpack.c.b16 %v4540, %v4524
    %v4733 = vpack.c.b16 %v4557, %v4541
    %v4734 = vpack.c.b16 %v4558, %v4542
    %v4735 = vpack.c.b16 %v4559, %v4543
    %v4736 = vpack.c.b16 %v4560, %v4544
    %v4737 = vpack.c.b16 %v4561, %v4545
    %v4738 = vpack.c.b16 %v4562, %v4546
    %v4739 = vpack.c.b16 %v4563, %v4547
    %v4740 = vpack.c.b16 %v4564, %v4548
    %v4741 = vpack.c.b16 %v4565, %v4549
    %v4742 = vpack.c.b16 %v4566, %v4550
    %v4743 = vpack.c.b16 %v4567, %v4551
    %v4744 = vpack.c.b16 %v4568, %v4552
    %v4745 = vpack.c.b16 %v4569, %v4553
    %v4746 = vpack.c.b16 %v4570, %v4554
    %v4747 = vpack.c.b16 %v4571, %v4555
    %v4748 = vpack.c.b16 %v4572, %v4556
    %v4749 = vpack.c.b16 %v4589, %v4573
    %v4750 = vpack.c.b16 %v4590, %v4574
    %v4751 = vpack.c.b16 %v4591, %v4575
    %v4752 = vpack.c.b16 %v4592, %v4576
    %v4753 = vpack.c.b16 %v4593, %v4577
    %v4754 = vpack.c.b16 %v4594, %v4578
    %v4755 = vpack.c.b16 %v4595, %v4579
    %v4756 = vpack.c.b16 %v4596, %v4580
    %v4757 = vpack.c.b16 %v4597, %v4581
    %v4758 = vpack.c.b16 %v4598, %v4582
    %v4759 = vpack.c.b16 %v4599, %v4583
    %v4760 = vpack.c.b16 %v4600, %v4584
    %v4761 = vpack.c.b16 %v4601, %v4585
    %v4762 = vpack.c.b16 %v4602, %v4586
    %v4763 = vpack.c.b16 %v4603, %v4587
    %v4764 = vpack.c.b16 %v4604, %v4588
    %v4765 = vpack.c.b16 %v4621, %v4605
    %v4766 = vpack.c.b16 %v4622, %v4606
    %v4767 = vpack.c.b16 %v4623, %v4607
    %v4768 = vpack.c.b16 %v4624, %v4608
    %v4769 = vpack.c.b16 %v4625, %v4609
    %v4770 = vpack.c.b16 %v4626, %v4610
    %v4771 = vpack.c.b16 %v4627, %v4611
    %v4772 = vpack.c.b16 %v4628, %v4612
    %v4773 = vpack.c.b16 %v4629, %v4613
    %v4774 = vpack.c.b16 %v4630, %v4614
    %v4775 = vpack.c.b16 %v4631, %v4615
    %v4776 = vpack.c.b16 %v4632, %v4616
    %v4777 = vpack.c.b16 %v4633, %v4617
    %v4778 = vpack.c.b16 %v4634, %v4618
    %v4779 = vpack.c.b16 %v4635, %v4619
    %v4780 = vpack.c.b16 %v4636, %v4620
    %v4781 = vpack.c.b16 %v4653, %v4637
    %v4782 = vpack.c.b16 %v4654, %v4638
    %v4783 = vpack.c.b16 %v4655, %v4639
    %v4784 = vpack.c.b16 %v4656, %v4640
    %v4785 = vpack.c.b16 %v4657, %v4641
    %v4786 = vpack.c.b16 %v4658, %v4642
    %v4787 = vpack.c.b16 %v4659, %v4643
    %v4788 = vpack.c.b16 %v4660, %v4644
    %v4789 = vpack.c.b16 %v4661, %v4645
    %v4790 = vpack.c.b16 %v4662, %v4646
    %v4791 = vpack.c.b16 %v4663, %v4647
    %v4792 = vpack.c.b16 %v4664, %v4648
    %v4793 = vpack.c.b16 %v4665, %v4649
    %v4794 = vpack.c.b16 %v4666, %v4650
    %v4795 = vpack.c.b16 %v4667, %v4651
    %v4796 = vpack.c.b16 %v4668, %v4652
    %4925 = vmatpush.bf16.msra.mxu0 %v4781
    %4926 = vmatpush.bf16.msra.mxu0 %v4765
    %4927 = vmatpush.bf16.msra.mxu0 %v4749
    %4928 = vmatpush.bf16.msra.mxu0 %v4733
    %4929 = vmatpush.bf16.msra.mxu0 %v4717
    %4930 = vmatpush.bf16.msra.mxu0 %v4701
    %4931 = vmatpush.bf16.msra.mxu0 %v4685
    %4932 = vmatpush.bf16.msra.mxu0 %v4669
    %4933 = vmatmul.bf16.gmra.mxu0 %v4277
    %v4934 = vpop.f32.mrf.mxu0
    %v4935 = vadd.f32 0.0, %v4934
    %v4936 = vpop.f32.mrf.mxu0
    %v4937 = vadd.f32 0.0, %v4936
    %4938 = vmatmul.bf16.gmra.mxu0 %v4278
    %v4939 = vpop.f32.mrf.mxu0
    %v4940 = vadd.f32 0.0, %v4939
    %v4941 = vpop.f32.mrf.mxu0
    %v4942 = vadd.f32 0.0, %v4941
    %4943 = vmatmul.bf16.gmra.mxu0 %v4279
    %v4944 = vpop.f32.mrf.mxu0
    %v4945 = vadd.f32 0.0, %v4944
    %v4946 = vpop.f32.mrf.mxu0
    %v4947 = vadd.f32 0.0, %v4946
    %4948 = vmatmul.bf16.gmra.mxu0 %v4280
    %v4949 = vpop.f32.mrf.mxu0
    %v4950 = vadd.f32 0.0, %v4949
    %v4951 = vpop.f32.mrf.mxu0
    %v4952 = vadd.f32 0.0, %v4951
    %4953 = vmatmul.bf16.gmra.mxu0 %v4281
    %v4954 = vpop.f32.mrf.mxu0
    %v4955 = vadd.f32 0.0, %v4954
    %v4956 = vpop.f32.mrf.mxu0
    %v4957 = vadd.f32 0.0, %v4956
    %4958 = vmatmul.bf16.gmra.mxu0 %v4282
    %v4959 = vpop.f32.mrf.mxu0
    %v4960 = vadd.f32 0.0, %v4959
    %v4961 = vpop.f32.mrf.mxu0
    %v4962 = vadd.f32 0.0, %v4961
    %4963 = vmatmul.bf16.gmra.mxu0 %v4283
    %v4964 = vpop.f32.mrf.mxu0
    %v4965 = vadd.f32 0.0, %v4964
    %v4966 = vpop.f32.mrf.mxu0
    %v4967 = vadd.f32 0.0, %v4966
    %4968 = vmatmul.bf16.gmra.mxu0 %v4284
    %v4969 = vpop.f32.mrf.mxu0
    %v4970 = vadd.f32 0.0, %v4969
    %v4971 = vpop.f32.mrf.mxu0
    %v4972 = vadd.f32 0.0, %v4971
    %4973 = vdwg.mxu0
    %4974 = vmatpush.bf16.msra.mxu0 %v4782
    %4975 = vmatpush.bf16.msra.mxu0 %v4766
    %4976 = vmatpush.bf16.msra.mxu0 %v4750
    %4977 = vmatpush.bf16.msra.mxu0 %v4734
    %4978 = vmatpush.bf16.msra.mxu0 %v4718
    %4979 = vmatpush.bf16.msra.mxu0 %v4702
    %4980 = vmatpush.bf16.msra.mxu0 %v4686
    %4981 = vmatpush.bf16.msra.mxu0 %v4670
    %4982 = vmatmul.bf16.gmra.mxu0 %v4277
    %v4983 = vpop.f32.mrf.mxu0
    %v4984 = vadd.f32 0.0, %v4983
    %v4985 = vpop.f32.mrf.mxu0
    %v4986 = vadd.f32 0.0, %v4985
    %4987 = vmatmul.bf16.gmra.mxu0 %v4278
    %v4988 = vpop.f32.mrf.mxu0
    %v4989 = vadd.f32 0.0, %v4988
    %v4990 = vpop.f32.mrf.mxu0
    %v4991 = vadd.f32 0.0, %v4990
    %4992 = vmatmul.bf16.gmra.mxu0 %v4279
    %v4993 = vpop.f32.mrf.mxu0
    %v4994 = vadd.f32 0.0, %v4993
    %v4995 = vpop.f32.mrf.mxu0
    %v4996 = vadd.f32 0.0, %v4995
    %4997 = vmatmul.bf16.gmra.mxu0 %v4280
    %v4998 = vpop.f32.mrf.mxu0
    %v4999 = vadd.f32 0.0, %v4998
    %v5000 = vpop.f32.mrf.mxu0
    %v5001 = vadd.f32 0.0, %v5000
    %5002 = vmatmul.bf16.gmra.mxu0 %v4281
    %v5003 = vpop.f32.mrf.mxu0
    %v5004 = vadd.f32 0.0, %v5003
    %v5005 = vpop.f32.mrf.mxu0
    %v5006 = vadd.f32 0.0, %v5005
    %5007 = vmatmul.bf16.gmra.mxu0 %v4282
    %v5008 = vpop.f32.mrf.mxu0
    %v5009 = vadd.f32 0.0, %v5008
    %v5010 = vpop.f32.mrf.mxu0
    %v5011 = vadd.f32 0.0, %v5010
    %5012 = vmatmul.bf16.gmra.mxu0 %v4283
    %v5013 = vpop.f32.mrf.mxu0
    %v5014 = vadd.f32 0.0, %v5013
    %v5015 = vpop.f32.mrf.mxu0
    %v5016 = vadd.f32 0.0, %v5015
    %5017 = vmatmul.bf16.gmra.mxu0 %v4284
    %v5018 = vpop.f32.mrf.mxu0
    %v5019 = vadd.f32 0.0, %v5018
    %v5020 = vpop.f32.mrf.mxu0
    %v5021 = vadd.f32 0.0, %v5020
    %5022 = vdwg.mxu0
    %5023 = vmatpush.bf16.msra.mxu0 %v4783
    %5024 = vmatpush.bf16.msra.mxu0 %v4767
    %5025 = vmatpush.bf16.msra.mxu0 %v4751
    %5026 = vmatpush.bf16.msra.mxu0 %v4735
    %5027 = vmatpush.bf16.msra.mxu0 %v4719
    %5028 = vmatpush.bf16.msra.mxu0 %v4703
    %5029 = vmatpush.bf16.msra.mxu0 %v4687
    %5030 = vmatpush.bf16.msra.mxu0 %v4671
    %5031 = vmatmul.bf16.gmra.mxu0 %v4277
    %v5032 = vpop.f32.mrf.mxu0
    %v5033 = vadd.f32 0.0, %v5032
    %v5034 = vpop.f32.mrf.mxu0
    %v5035 = vadd.f32 0.0, %v5034
    %5036 = vmatmul.bf16.gmra.mxu0 %v4278
    %v5037 = vpop.f32.mrf.mxu0
    %v5038 = vadd.f32 0.0, %v5037
    %v5039 = vpop.f32.mrf.mxu0
    %v5040 = vadd.f32 0.0, %v5039
    %5041 = vmatmul.bf16.gmra.mxu0 %v4279
    %v5042 = vpop.f32.mrf.mxu0
    %v5043 = vadd.f32 0.0, %v5042
    %v5044 = vpop.f32.mrf.mxu0
    %v5045 = vadd.f32 0.0, %v5044
    %5046 = vmatmul.bf16.gmra.mxu0 %v4280
    %v5047 = vpop.f32.mrf.mxu0
    %v5048 = vadd.f32 0.0, %v5047
    %v5049 = vpop.f32.mrf.mxu0
    %v5050 = vadd.f32 0.0, %v5049
    %5051 = vmatmul.bf16.gmra.mxu0 %v4281
    %v5052 = vpop.f32.mrf.mxu0
    %v5053 = vadd.f32 0.0, %v5052
    %v5054 = vpop.f32.mrf.mxu0
    %v5055 = vadd.f32 0.0, %v5054
    %5056 = vmatmul.bf16.gmra.mxu0 %v4282
    %v5057 = vpop.f32.mrf.mxu0
    %v5058 = vadd.f32 0.0, %v5057
    %v5059 = vpop.f32.mrf.mxu0
    %v5060 = vadd.f32 0.0, %v5059
    %5061 = vmatmul.bf16.gmra.mxu0 %v4283
    %v5062 = vpop.f32.mrf.mxu0
    %v5063 = vadd.f32 0.0, %v5062
    %v5064 = vpop.f32.mrf.mxu0
    %v5065 = vadd.f32 0.0, %v5064
    %5066 = vmatmul.bf16.gmra.mxu0 %v4284
    %v5067 = vpop.f32.mrf.mxu0
    %v5068 = vadd.f32 0.0, %v5067
    %v5069 = vpop.f32.mrf.mxu0
    %v5070 = vadd.f32 0.0, %v5069
    %5071 = vdwg.mxu0
    %5072 = vmatpush.bf16.msra.mxu0 %v4784
    %5073 = vmatpush.bf16.msra.mxu0 %v4768
    %5074 = vmatpush.bf16.msra.mxu0 %v4752
    %5075 = vmatpush.bf16.msra.mxu0 %v4736
    %5076 = vmatpush.bf16.msra.mxu0 %v4720
    %5077 = vmatpush.bf16.msra.mxu0 %v4704
    %5078 = vmatpush.bf16.msra.mxu0 %v4688
    %5079 = vmatpush.bf16.msra.mxu0 %v4672
    %5080 = vmatmul.bf16.gmra.mxu0 %v4277
    %v5081 = vpop.f32.mrf.mxu0
    %v5082 = vadd.f32 0.0, %v5081
    %v5083 = vpop.f32.mrf.mxu0
    %v5084 = vadd.f32 0.0, %v5083
    %5085 = vmatmul.bf16.gmra.mxu0 %v4278
    %v5086 = vpop.f32.mrf.mxu0
    %v5087 = vadd.f32 0.0, %v5086
    %v5088 = vpop.f32.mrf.mxu0
    %v5089 = vadd.f32 0.0, %v5088
    %5090 = vmatmul.bf16.gmra.mxu0 %v4279
    %v5091 = vpop.f32.mrf.mxu0
    %v5092 = vadd.f32 0.0, %v5091
    %v5093 = vpop.f32.mrf.mxu0
    %v5094 = vadd.f32 0.0, %v5093
    %5095 = vmatmul.bf16.gmra.mxu0 %v4280
    %v5096 = vpop.f32.mrf.mxu0
    %v5097 = vadd.f32 0.0, %v5096
    %v5098 = vpop.f32.mrf.mxu0
    %v5099 = vadd.f32 0.0, %v5098
    %5100 = vmatmul.bf16.gmra.mxu0 %v4281
    %v5101 = vpop.f32.mrf.mxu0
    %v5102 = vadd.f32 0.0, %v5101
    %v5103 = vpop.f32.mrf.mxu0
    %v5104 = vadd.f32 0.0, %v5103
    %5105 = vmatmul.bf16.gmra.mxu0 %v4282
    %v5106 = vpop.f32.mrf.mxu0
    %v5107 = vadd.f32 0.0, %v5106
    %v5108 = vpop.f32.mrf.mxu0
    %v5109 = vadd.f32 0.0, %v5108
    %5110 = vmatmul.bf16.gmra.mxu0 %v4283
    %v5111 = vpop.f32.mrf.mxu0
    %v5112 = vadd.f32 0.0, %v5111
    %v5113 = vpop.f32.mrf.mxu0
    %v5114 = vadd.f32 0.0, %v5113
    %5115 = vmatmul.bf16.gmra.mxu0 %v4284
    %v5116 = vpop.f32.mrf.mxu0
    %v5117 = vadd.f32 0.0, %v5116
    %v5118 = vpop.f32.mrf.mxu0
    %v5119 = vadd.f32 0.0, %v5118
    %5120 = vdwg.mxu0
    %5121 = vmatpush.bf16.msra.mxu0 %v4785
    %5122 = vmatpush.bf16.msra.mxu0 %v4769
    %5123 = vmatpush.bf16.msra.mxu0 %v4753
    %5124 = vmatpush.bf16.msra.mxu0 %v4737
    %5125 = vmatpush.bf16.msra.mxu0 %v4721
    %5126 = vmatpush.bf16.msra.mxu0 %v4705
    %5127 = vmatpush.bf16.msra.mxu0 %v4689
    %5128 = vmatpush.bf16.msra.mxu0 %v4673
    %5129 = vmatmul.bf16.gmra.mxu0 %v4277
    %v5130 = vpop.f32.mrf.mxu0
    %v5131 = vadd.f32 0.0, %v5130
    %v5132 = vpop.f32.mrf.mxu0
    %v5133 = vadd.f32 0.0, %v5132
    %5134 = vmatmul.bf16.gmra.mxu0 %v4278
    %v5135 = vpop.f32.mrf.mxu0
    %v5136 = vadd.f32 0.0, %v5135
    %v5137 = vpop.f32.mrf.mxu0
    %v5138 = vadd.f32 0.0, %v5137
    %5139 = vmatmul.bf16.gmra.mxu0 %v4279
    %v5140 = vpop.f32.mrf.mxu0
    %v5141 = vadd.f32 0.0, %v5140
    %v5142 = vpop.f32.mrf.mxu0
    %v5143 = vadd.f32 0.0, %v5142
    %5144 = vmatmul.bf16.gmra.mxu0 %v4280
    %v5145 = vpop.f32.mrf.mxu0
    %v5146 = vadd.f32 0.0, %v5145
    %v5147 = vpop.f32.mrf.mxu0
    %v5148 = vadd.f32 0.0, %v5147
    %5149 = vmatmul.bf16.gmra.mxu0 %v4281
    %v5150 = vpop.f32.mrf.mxu0
    %v5151 = vadd.f32 0.0, %v5150
    %v5152 = vpop.f32.mrf.mxu0
    %v5153 = vadd.f32 0.0, %v5152
    %5154 = vmatmul.bf16.gmra.mxu0 %v4282
    %v5155 = vpop.f32.mrf.mxu0
    %v5156 = vadd.f32 0.0, %v5155
    %v5157 = vpop.f32.mrf.mxu0
    %v5158 = vadd.f32 0.0, %v5157
    %5159 = vmatmul.bf16.gmra.mxu0 %v4283
    %v5160 = vpop.f32.mrf.mxu0
    %v5161 = vadd.f32 0.0, %v5160
    %v5162 = vpop.f32.mrf.mxu0
    %v5163 = vadd.f32 0.0, %v5162
    %5164 = vmatmul.bf16.gmra.mxu0 %v4284
    %v5165 = vpop.f32.mrf.mxu0
    %v5166 = vadd.f32 0.0, %v5165
    %v5167 = vpop.f32.mrf.mxu0
    %v5168 = vadd.f32 0.0, %v5167
    %5169 = vdwg.mxu0
    %5170 = vmatpush.bf16.msra.mxu0 %v4786
    %5171 = vmatpush.bf16.msra.mxu0 %v4770
    %5172 = vmatpush.bf16.msra.mxu0 %v4754
    %5173 = vmatpush.bf16.msra.mxu0 %v4738
    %5174 = vmatpush.bf16.msra.mxu0 %v4722
    %5175 = vmatpush.bf16.msra.mxu0 %v4706
    %5176 = vmatpush.bf16.msra.mxu0 %v4690
    %5177 = vmatpush.bf16.msra.mxu0 %v4674
    %5178 = vmatmul.bf16.gmra.mxu0 %v4277
    %v5179 = vpop.f32.mrf.mxu0
    %v5180 = vadd.f32 0.0, %v5179
    %v5181 = vpop.f32.mrf.mxu0
    %v5182 = vadd.f32 0.0, %v5181
    %5183 = vmatmul.bf16.gmra.mxu0 %v4278
    %v5184 = vpop.f32.mrf.mxu0
    %v5185 = vadd.f32 0.0, %v5184
    %v5186 = vpop.f32.mrf.mxu0
    %v5187 = vadd.f32 0.0, %v5186
    %5188 = vmatmul.bf16.gmra.mxu0 %v4279
    %v5189 = vpop.f32.mrf.mxu0
    %v5190 = vadd.f32 0.0, %v5189
    %v5191 = vpop.f32.mrf.mxu0
    %v5192 = vadd.f32 0.0, %v5191
    %5193 = vmatmul.bf16.gmra.mxu0 %v4280
    %v5194 = vpop.f32.mrf.mxu0
    %v5195 = vadd.f32 0.0, %v5194
    %v5196 = vpop.f32.mrf.mxu0
    %v5197 = vadd.f32 0.0, %v5196
    %5198 = vmatmul.bf16.gmra.mxu0 %v4281
    %v5199 = vpop.f32.mrf.mxu0
    %v5200 = vadd.f32 0.0, %v5199
    %v5201 = vpop.f32.mrf.mxu0
    %v5202 = vadd.f32 0.0, %v5201
    %5203 = vmatmul.bf16.gmra.mxu0 %v4282
    %v5204 = vpop.f32.mrf.mxu0
    %v5205 = vadd.f32 0.0, %v5204
    %v5206 = vpop.f32.mrf.mxu0
    %v5207 = vadd.f32 0.0, %v5206
    %5208 = vmatmul.bf16.gmra.mxu0 %v4283
    %v5209 = vpop.f32.mrf.mxu0
    %v5210 = vadd.f32 0.0, %v5209
    %v5211 = vpop.f32.mrf.mxu0
    %v5212 = vadd.f32 0.0, %v5211
    %5213 = vmatmul.bf16.gmra.mxu0 %v4284
    %v5214 = vpop.f32.mrf.mxu0
    %v5215 = vadd.f32 0.0, %v5214
    %v5216 = vpop.f32.mrf.mxu0
    %v5217 = vadd.f32 0.0, %v5216
    %5218 = vdwg.mxu0
    %5219 = vmatpush.bf16.msra.mxu0 %v4787
    %5220 = vmatpush.bf16.msra.mxu0 %v4771
    %5221 = vmatpush.bf16.msra.mxu0 %v4755
    %5222 = vmatpush.bf16.msra.mxu0 %v4739
    %5223 = vmatpush.bf16.msra.mxu0 %v4723
    %5224 = vmatpush.bf16.msra.mxu0 %v4707
    %5225 = vmatpush.bf16.msra.mxu0 %v4691
    %5226 = vmatpush.bf16.msra.mxu0 %v4675
    %5227 = vmatmul.bf16.gmra.mxu0 %v4277
    %v5228 = vpop.f32.mrf.mxu0
    %v5229 = vadd.f32 0.0, %v5228
    %v5230 = vpop.f32.mrf.mxu0
    %v5231 = vadd.f32 0.0, %v5230
    %5232 = vmatmul.bf16.gmra.mxu0 %v4278
    %v5233 = vpop.f32.mrf.mxu0
    %v5234 = vadd.f32 0.0, %v5233
    %v5235 = vpop.f32.mrf.mxu0
    %v5236 = vadd.f32 0.0, %v5235
    %5237 = vmatmul.bf16.gmra.mxu0 %v4279
    %v5238 = vpop.f32.mrf.mxu0
    %v5239 = vadd.f32 0.0, %v5238
    %v5240 = vpop.f32.mrf.mxu0
    %v5241 = vadd.f32 0.0, %v5240
    %5242 = vmatmul.bf16.gmra.mxu0 %v4280
    %v5243 = vpop.f32.mrf.mxu0
    %v5244 = vadd.f32 0.0, %v5243
    %v5245 = vpop.f32.mrf.mxu0
    %v5246 = vadd.f32 0.0, %v5245
    %5247 = vmatmul.bf16.gmra.mxu0 %v4281
    %v5248 = vpop.f32.mrf.mxu0
    %v5249 = vadd.f32 0.0, %v5248
    %v5250 = vpop.f32.mrf.mxu0
    %v5251 = vadd.f32 0.0, %v5250
    %5252 = vmatmul.bf16.gmra.mxu0 %v4282
    %v5253 = vpop.f32.mrf.mxu0
    %v5254 = vadd.f32 0.0, %v5253
    %v5255 = vpop.f32.mrf.mxu0
    %v5256 = vadd.f32 0.0, %v5255
    %5257 = vmatmul.bf16.gmra.mxu0 %v4283
    %v5258 = vpop.f32.mrf.mxu0
    %v5259 = vadd.f32 0.0, %v5258
    %v5260 = vpop.f32.mrf.mxu0
    %v5261 = vadd.f32 0.0, %v5260
    %5262 = vmatmul.bf16.gmra.mxu0 %v4284
    %v5263 = vpop.f32.mrf.mxu0
    %v5264 = vadd.f32 0.0, %v5263
    %v5265 = vpop.f32.mrf.mxu0
    %v5266 = vadd.f32 0.0, %v5265
    %5267 = vdwg.mxu0
    %5268 = vmatpush.bf16.msra.mxu0 %v4788
    %5269 = vmatpush.bf16.msra.mxu0 %v4772
    %5270 = vmatpush.bf16.msra.mxu0 %v4756
    %5271 = vmatpush.bf16.msra.mxu0 %v4740
    %5272 = vmatpush.bf16.msra.mxu0 %v4724
    %5273 = vmatpush.bf16.msra.mxu0 %v4708
    %5274 = vmatpush.bf16.msra.mxu0 %v4692
    %5275 = vmatpush.bf16.msra.mxu0 %v4676
    %5276 = vmatmul.bf16.gmra.mxu0 %v4277
    %v5277 = vpop.f32.mrf.mxu0
    %v5278 = vadd.f32 0.0, %v5277
    %v5279 = vpop.f32.mrf.mxu0
    %v5280 = vadd.f32 0.0, %v5279
    %5281 = vmatmul.bf16.gmra.mxu0 %v4278
    %v5282 = vpop.f32.mrf.mxu0
    %v5283 = vadd.f32 0.0, %v5282
    %v5284 = vpop.f32.mrf.mxu0
    %v5285 = vadd.f32 0.0, %v5284
    %5286 = vmatmul.bf16.gmra.mxu0 %v4279
    %v5287 = vpop.f32.mrf.mxu0
    %v5288 = vadd.f32 0.0, %v5287
    %v5289 = vpop.f32.mrf.mxu0
    %v5290 = vadd.f32 0.0, %v5289
    %5291 = vmatmul.bf16.gmra.mxu0 %v4280
    %v5292 = vpop.f32.mrf.mxu0
    %v5293 = vadd.f32 0.0, %v5292
    %v5294 = vpop.f32.mrf.mxu0
    %v5295 = vadd.f32 0.0, %v5294
    %5296 = vmatmul.bf16.gmra.mxu0 %v4281
    %v5297 = vpop.f32.mrf.mxu0
    %v5298 = vadd.f32 0.0, %v5297
    %v5299 = vpop.f32.mrf.mxu0
    %v5300 = vadd.f32 0.0, %v5299
    %5301 = vmatmul.bf16.gmra.mxu0 %v4282
    %v5302 = vpop.f32.mrf.mxu0
    %v5303 = vadd.f32 0.0, %v5302
    %v5304 = vpop.f32.mrf.mxu0
    %v5305 = vadd.f32 0.0, %v5304
    %5306 = vmatmul.bf16.gmra.mxu0 %v4283
    %v5307 = vpop.f32.mrf.mxu0
    %v5308 = vadd.f32 0.0, %v5307
    %v5309 = vpop.f32.mrf.mxu0
    %v5310 = vadd.f32 0.0, %v5309
    %5311 = vmatmul.bf16.gmra.mxu0 %v4284
    %v5312 = vpop.f32.mrf.mxu0
    %v5313 = vadd.f32 0.0, %v5312
    %v5314 = vpop.f32.mrf.mxu0
    %v5315 = vadd.f32 0.0, %v5314
    %5316 = vdwg.mxu0
    %5317 = vmatpush.bf16.msra.mxu0 %v4789
    %5318 = vmatpush.bf16.msra.mxu0 %v4773
    %5319 = vmatpush.bf16.msra.mxu0 %v4757
    %5320 = vmatpush.bf16.msra.mxu0 %v4741
    %5321 = vmatpush.bf16.msra.mxu0 %v4725
    %5322 = vmatpush.bf16.msra.mxu0 %v4709
    %5323 = vmatpush.bf16.msra.mxu0 %v4693
    %5324 = vmatpush.bf16.msra.mxu0 %v4677
    %5325 = vmatmul.bf16.gmra.mxu0 %v4277
    %v5326 = vpop.f32.mrf.mxu0
    %v5327 = vadd.f32 0.0, %v5326
    %v5328 = vpop.f32.mrf.mxu0
    %v5329 = vadd.f32 0.0, %v5328
    %5330 = vmatmul.bf16.gmra.mxu0 %v4278
    %v5331 = vpop.f32.mrf.mxu0
    %v5332 = vadd.f32 0.0, %v5331
    %v5333 = vpop.f32.mrf.mxu0
    %v5334 = vadd.f32 0.0, %v5333
    %5335 = vmatmul.bf16.gmra.mxu0 %v4279
    %v5336 = vpop.f32.mrf.mxu0
    %v5337 = vadd.f32 0.0, %v5336
    %v5338 = vpop.f32.mrf.mxu0
    %v5339 = vadd.f32 0.0, %v5338
    %5340 = vmatmul.bf16.gmra.mxu0 %v4280
    %v5341 = vpop.f32.mrf.mxu0
    %v5342 = vadd.f32 0.0, %v5341
    %v5343 = vpop.f32.mrf.mxu0
    %v5344 = vadd.f32 0.0, %v5343
    %5345 = vmatmul.bf16.gmra.mxu0 %v4281
    %v5346 = vpop.f32.mrf.mxu0
    %v5347 = vadd.f32 0.0, %v5346
    %v5348 = vpop.f32.mrf.mxu0
    %v5349 = vadd.f32 0.0, %v5348
    %5350 = vmatmul.bf16.gmra.mxu0 %v4282
    %v5351 = vpop.f32.mrf.mxu0
    %v5352 = vadd.f32 0.0, %v5351
    %v5353 = vpop.f32.mrf.mxu0
    %v5354 = vadd.f32 0.0, %v5353
    %5355 = vmatmul.bf16.gmra.mxu0 %v4283
    %v5356 = vpop.f32.mrf.mxu0
    %v5357 = vadd.f32 0.0, %v5356
    %v5358 = vpop.f32.mrf.mxu0
    %v5359 = vadd.f32 0.0, %v5358
    %5360 = vmatmul.bf16.gmra.mxu0 %v4284
    %v5361 = vpop.f32.mrf.mxu0
    %v5362 = vadd.f32 0.0, %v5361
    %v5363 = vpop.f32.mrf.mxu0
    %v5364 = vadd.f32 0.0, %v5363
    %5365 = vdwg.mxu0
    %5366 = vmatpush.bf16.msra.mxu0 %v4790
    %5367 = vmatpush.bf16.msra.mxu0 %v4774
    %5368 = vmatpush.bf16.msra.mxu0 %v4758
    %5369 = vmatpush.bf16.msra.mxu0 %v4742
    %5370 = vmatpush.bf16.msra.mxu0 %v4726
    %5371 = vmatpush.bf16.msra.mxu0 %v4710
    %5372 = vmatpush.bf16.msra.mxu0 %v4694
    %5373 = vmatpush.bf16.msra.mxu0 %v4678
    %5374 = vmatmul.bf16.gmra.mxu0 %v4277
    %v5375 = vpop.f32.mrf.mxu0
    %v5376 = vadd.f32 0.0, %v5375
    %v5377 = vpop.f32.mrf.mxu0
    %v5378 = vadd.f32 0.0, %v5377
    %5379 = vmatmul.bf16.gmra.mxu0 %v4278
    %v5380 = vpop.f32.mrf.mxu0
    %v5381 = vadd.f32 0.0, %v5380
    %v5382 = vpop.f32.mrf.mxu0
    %v5383 = vadd.f32 0.0, %v5382
    %5384 = vmatmul.bf16.gmra.mxu0 %v4279
    %v5385 = vpop.f32.mrf.mxu0
    %v5386 = vadd.f32 0.0, %v5385
    %v5387 = vpop.f32.mrf.mxu0
    %v5388 = vadd.f32 0.0, %v5387
    %5389 = vmatmul.bf16.gmra.mxu0 %v4280
    %v5390 = vpop.f32.mrf.mxu0
    %v5391 = vadd.f32 0.0, %v5390
    %v5392 = vpop.f32.mrf.mxu0
    %v5393 = vadd.f32 0.0, %v5392
    %5394 = vmatmul.bf16.gmra.mxu0 %v4281
    %v5395 = vpop.f32.mrf.mxu0
    %v5396 = vadd.f32 0.0, %v5395
    %v5397 = vpop.f32.mrf.mxu0
    %v5398 = vadd.f32 0.0, %v5397
    %5399 = vmatmul.bf16.gmra.mxu0 %v4282
    %v5400 = vpop.f32.mrf.mxu0
    %v5401 = vadd.f32 0.0, %v5400
    %v5402 = vpop.f32.mrf.mxu0
    %v5403 = vadd.f32 0.0, %v5402
    %5404 = vmatmul.bf16.gmra.mxu0 %v4283
    %v5405 = vpop.f32.mrf.mxu0
    %v5406 = vadd.f32 0.0, %v5405
    %v5407 = vpop.f32.mrf.mxu0
    %v5408 = vadd.f32 0.0, %v5407
    %5409 = vmatmul.bf16.gmra.mxu0 %v4284
    %v5410 = vpop.f32.mrf.mxu0
    %v5411 = vadd.f32 0.0, %v5410
    %v5412 = vpop.f32.mrf.mxu0
    %v5413 = vadd.f32 0.0, %v5412
    %5414 = vdwg.mxu0
    %5415 = vmatpush.bf16.msra.mxu0 %v4791
    %5416 = vmatpush.bf16.msra.mxu0 %v4775
    %5417 = vmatpush.bf16.msra.mxu0 %v4759
    %5418 = vmatpush.bf16.msra.mxu0 %v4743
    %5419 = vmatpush.bf16.msra.mxu0 %v4727
    %5420 = vmatpush.bf16.msra.mxu0 %v4711
    %5421 = vmatpush.bf16.msra.mxu0 %v4695
    %5422 = vmatpush.bf16.msra.mxu0 %v4679
    %5423 = vmatmul.bf16.gmra.mxu0 %v4277
    %v5424 = vpop.f32.mrf.mxu0
    %v5425 = vadd.f32 0.0, %v5424
    %v5426 = vpop.f32.mrf.mxu0
    %v5427 = vadd.f32 0.0, %v5426
    %5428 = vmatmul.bf16.gmra.mxu0 %v4278
    %v5429 = vpop.f32.mrf.mxu0
    %v5430 = vadd.f32 0.0, %v5429
    %v5431 = vpop.f32.mrf.mxu0
    %v5432 = vadd.f32 0.0, %v5431
    %5433 = vmatmul.bf16.gmra.mxu0 %v4279
    %v5434 = vpop.f32.mrf.mxu0
    %v5435 = vadd.f32 0.0, %v5434
    %v5436 = vpop.f32.mrf.mxu0
    %v5437 = vadd.f32 0.0, %v5436
    %5438 = vmatmul.bf16.gmra.mxu0 %v4280
    %v5439 = vpop.f32.mrf.mxu0
    %v5440 = vadd.f32 0.0, %v5439
    %v5441 = vpop.f32.mrf.mxu0
    %v5442 = vadd.f32 0.0, %v5441
    %5443 = vmatmul.bf16.gmra.mxu0 %v4281
    %v5444 = vpop.f32.mrf.mxu0
    %v5445 = vadd.f32 0.0, %v5444
    %v5446 = vpop.f32.mrf.mxu0
    %v5447 = vadd.f32 0.0, %v5446
    %5448 = vmatmul.bf16.gmra.mxu0 %v4282
    %v5449 = vpop.f32.mrf.mxu0
    %v5450 = vadd.f32 0.0, %v5449
    %v5451 = vpop.f32.mrf.mxu0
    %v5452 = vadd.f32 0.0, %v5451
    %5453 = vmatmul.bf16.gmra.mxu0 %v4283
    %v5454 = vpop.f32.mrf.mxu0
    %v5455 = vadd.f32 0.0, %v5454
    %v5456 = vpop.f32.mrf.mxu0
    %v5457 = vadd.f32 0.0, %v5456
    %5458 = vmatmul.bf16.gmra.mxu0 %v4284
    %v5459 = vpop.f32.mrf.mxu0
    %v5460 = vadd.f32 0.0, %v5459
    %v5461 = vpop.f32.mrf.mxu0
    %v5462 = vadd.f32 0.0, %v5461
    %5463 = vdwg.mxu0
    %5464 = vmatpush.bf16.msra.mxu0 %v4792
    %5465 = vmatpush.bf16.msra.mxu0 %v4776
    %5466 = vmatpush.bf16.msra.mxu0 %v4760
    %5467 = vmatpush.bf16.msra.mxu0 %v4744
    %5468 = vmatpush.bf16.msra.mxu0 %v4728
    %5469 = vmatpush.bf16.msra.mxu0 %v4712
    %5470 = vmatpush.bf16.msra.mxu0 %v4696
    %5471 = vmatpush.bf16.msra.mxu0 %v4680
    %5472 = vmatmul.bf16.gmra.mxu0 %v4277
    %v5473 = vpop.f32.mrf.mxu0
    %v5474 = vadd.f32 0.0, %v5473
    %v5475 = vpop.f32.mrf.mxu0
    %v5476 = vadd.f32 0.0, %v5475
    %5477 = vmatmul.bf16.gmra.mxu0 %v4278
    %v5478 = vpop.f32.mrf.mxu0
    %v5479 = vadd.f32 0.0, %v5478
    %v5480 = vpop.f32.mrf.mxu0
    %v5481 = vadd.f32 0.0, %v5480
    %5482 = vmatmul.bf16.gmra.mxu0 %v4279
    %v5483 = vpop.f32.mrf.mxu0
    %v5484 = vadd.f32 0.0, %v5483
    %v5485 = vpop.f32.mrf.mxu0
    %v5486 = vadd.f32 0.0, %v5485
    %5487 = vmatmul.bf16.gmra.mxu0 %v4280
    %v5488 = vpop.f32.mrf.mxu0
    %v5489 = vadd.f32 0.0, %v5488
    %v5490 = vpop.f32.mrf.mxu0
    %v5491 = vadd.f32 0.0, %v5490
    %5492 = vmatmul.bf16.gmra.mxu0 %v4281
    %v5493 = vpop.f32.mrf.mxu0
    %v5494 = vadd.f32 0.0, %v5493
    %v5495 = vpop.f32.mrf.mxu0
    %v5496 = vadd.f32 0.0, %v5495
    %5497 = vmatmul.bf16.gmra.mxu0 %v4282
    %v5498 = vpop.f32.mrf.mxu0
    %v5499 = vadd.f32 0.0, %v5498
    %v5500 = vpop.f32.mrf.mxu0
    %v5501 = vadd.f32 0.0, %v5500
    %5502 = vmatmul.bf16.gmra.mxu0 %v4283
    %v5503 = vpop.f32.mrf.mxu0
    %v5504 = vadd.f32 0.0, %v5503
    %v5505 = vpop.f32.mrf.mxu0
    %v5506 = vadd.f32 0.0, %v5505
    %5507 = vmatmul.bf16.gmra.mxu0 %v4284
    %v5508 = vpop.f32.mrf.mxu0
    %v5509 = vadd.f32 0.0, %v5508
    %v5510 = vpop.f32.mrf.mxu0
    %v5511 = vadd.f32 0.0, %v5510
    %5512 = vdwg.mxu0
    %5513 = vmatpush.bf16.msra.mxu0 %v4793
    %5514 = vmatpush.bf16.msra.mxu0 %v4777
    %5515 = vmatpush.bf16.msra.mxu0 %v4761
    %5516 = vmatpush.bf16.msra.mxu0 %v4745
    %5517 = vmatpush.bf16.msra.mxu0 %v4729
    %5518 = vmatpush.bf16.msra.mxu0 %v4713
    %5519 = vmatpush.bf16.msra.mxu0 %v4697
    %5520 = vmatpush.bf16.msra.mxu0 %v4681
    %5521 = vmatmul.bf16.gmra.mxu0 %v4277
    %v5522 = vpop.f32.mrf.mxu0
    %v5523 = vadd.f32 0.0, %v5522
    %v5524 = vpop.f32.mrf.mxu0
    %v5525 = vadd.f32 0.0, %v5524
    %5526 = vmatmul.bf16.gmra.mxu0 %v4278
    %v5527 = vpop.f32.mrf.mxu0
    %v5528 = vadd.f32 0.0, %v5527
    %v5529 = vpop.f32.mrf.mxu0
    %v5530 = vadd.f32 0.0, %v5529
    %5531 = vmatmul.bf16.gmra.mxu0 %v4279
    %v5532 = vpop.f32.mrf.mxu0
    %v5533 = vadd.f32 0.0, %v5532
    %v5534 = vpop.f32.mrf.mxu0
    %v5535 = vadd.f32 0.0, %v5534
    %5536 = vmatmul.bf16.gmra.mxu0 %v4280
    %v5537 = vpop.f32.mrf.mxu0
    %v5538 = vadd.f32 0.0, %v5537
    %v5539 = vpop.f32.mrf.mxu0
    %v5540 = vadd.f32 0.0, %v5539
    %5541 = vmatmul.bf16.gmra.mxu0 %v4281
    %v5542 = vpop.f32.mrf.mxu0
    %v5543 = vadd.f32 0.0, %v5542
    %v5544 = vpop.f32.mrf.mxu0
    %v5545 = vadd.f32 0.0, %v5544
    %5546 = vmatmul.bf16.gmra.mxu0 %v4282
    %v5547 = vpop.f32.mrf.mxu0
    %v5548 = vadd.f32 0.0, %v5547
    %v5549 = vpop.f32.mrf.mxu0
    %v5550 = vadd.f32 0.0, %v5549
    %5551 = vmatmul.bf16.gmra.mxu0 %v4283
    %v5552 = vpop.f32.mrf.mxu0
    %v5553 = vadd.f32 0.0, %v5552
    %v5554 = vpop.f32.mrf.mxu0
    %v5555 = vadd.f32 0.0, %v5554
    %5556 = vmatmul.bf16.gmra.mxu0 %v4284
    %v5557 = vpop.f32.mrf.mxu0
    %v5558 = vadd.f32 0.0, %v5557
    %v5559 = vpop.f32.mrf.mxu0
    %v5560 = vadd.f32 0.0, %v5559
    %5561 = vdwg.mxu0
    %5562 = vmatpush.bf16.msra.mxu0 %v4794
    %5563 = vmatpush.bf16.msra.mxu0 %v4778
    %5564 = vmatpush.bf16.msra.mxu0 %v4762
    %5565 = vmatpush.bf16.msra.mxu0 %v4746
    %5566 = vmatpush.bf16.msra.mxu0 %v4730
    %5567 = vmatpush.bf16.msra.mxu0 %v4714
    %5568 = vmatpush.bf16.msra.mxu0 %v4698
    %5569 = vmatpush.bf16.msra.mxu0 %v4682
    %5570 = vmatmul.bf16.gmra.mxu0 %v4277
    %v5571 = vpop.f32.mrf.mxu0
    %v5572 = vadd.f32 0.0, %v5571
    %v5573 = vpop.f32.mrf.mxu0
    %v5574 = vadd.f32 0.0, %v5573
    %5575 = vmatmul.bf16.gmra.mxu0 %v4278
    %v5576 = vpop.f32.mrf.mxu0
    %v5577 = vadd.f32 0.0, %v5576
    %v5578 = vpop.f32.mrf.mxu0
    %v5579 = vadd.f32 0.0, %v5578
    %5580 = vmatmul.bf16.gmra.mxu0 %v4279
    %v5581 = vpop.f32.mrf.mxu0
    %v5582 = vadd.f32 0.0, %v5581
    %v5583 = vpop.f32.mrf.mxu0
    %v5584 = vadd.f32 0.0, %v5583
    %5585 = vmatmul.bf16.gmra.mxu0 %v4280
    %v5586 = vpop.f32.mrf.mxu0
    %v5587 = vadd.f32 0.0, %v5586
    %v5588 = vpop.f32.mrf.mxu0
    %v5589 = vadd.f32 0.0, %v5588
    %5590 = vmatmul.bf16.gmra.mxu0 %v4281
    %v5591 = vpop.f32.mrf.mxu0
    %v5592 = vadd.f32 0.0, %v5591
    %v5593 = vpop.f32.mrf.mxu0
    %v5594 = vadd.f32 0.0, %v5593
    %5595 = vmatmul.bf16.gmra.mxu0 %v4282
    %v5596 = vpop.f32.mrf.mxu0
    %v5597 = vadd.f32 0.0, %v5596
    %v5598 = vpop.f32.mrf.mxu0
    %v5599 = vadd.f32 0.0, %v5598
    %5600 = vmatmul.bf16.gmra.mxu0 %v4283
    %v5601 = vpop.f32.mrf.mxu0
    %v5602 = vadd.f32 0.0, %v5601
    %v5603 = vpop.f32.mrf.mxu0
    %v5604 = vadd.f32 0.0, %v5603
    %5605 = vmatmul.bf16.gmra.mxu0 %v4284
    %v5606 = vpop.f32.mrf.mxu0
    %v5607 = vadd.f32 0.0, %v5606
    %v5608 = vpop.f32.mrf.mxu0
    %v5609 = vadd.f32 0.0, %v5608
    %5610 = vdwg.mxu0
    %5611 = vmatpush.bf16.msra.mxu0 %v4795
    %5612 = vmatpush.bf16.msra.mxu0 %v4779
    %5613 = vmatpush.bf16.msra.mxu0 %v4763
    %5614 = vmatpush.bf16.msra.mxu0 %v4747
    %5615 = vmatpush.bf16.msra.mxu0 %v4731
    %5616 = vmatpush.bf16.msra.mxu0 %v4715
    %5617 = vmatpush.bf16.msra.mxu0 %v4699
    %5618 = vmatpush.bf16.msra.mxu0 %v4683
    %5619 = vmatmul.bf16.gmra.mxu0 %v4277
    %v5620 = vpop.f32.mrf.mxu0
    %v5621 = vadd.f32 0.0, %v5620
    %v5622 = vpop.f32.mrf.mxu0
    %v5623 = vadd.f32 0.0, %v5622
    %5624 = vmatmul.bf16.gmra.mxu0 %v4278
    %v5625 = vpop.f32.mrf.mxu0
    %v5626 = vadd.f32 0.0, %v5625
    %v5627 = vpop.f32.mrf.mxu0
    %v5628 = vadd.f32 0.0, %v5627
    %5629 = vmatmul.bf16.gmra.mxu0 %v4279
    %v5630 = vpop.f32.mrf.mxu0
    %v5631 = vadd.f32 0.0, %v5630
    %v5632 = vpop.f32.mrf.mxu0
    %v5633 = vadd.f32 0.0, %v5632
    %5634 = vmatmul.bf16.gmra.mxu0 %v4280
    %v5635 = vpop.f32.mrf.mxu0
    %v5636 = vadd.f32 0.0, %v5635
    %v5637 = vpop.f32.mrf.mxu0
    %v5638 = vadd.f32 0.0, %v5637
    %5639 = vmatmul.bf16.gmra.mxu0 %v4281
    %v5640 = vpop.f32.mrf.mxu0
    %v5641 = vadd.f32 0.0, %v5640
    %v5642 = vpop.f32.mrf.mxu0
    %v5643 = vadd.f32 0.0, %v5642
    %5644 = vmatmul.bf16.gmra.mxu0 %v4282
    %v5645 = vpop.f32.mrf.mxu0
    %v5646 = vadd.f32 0.0, %v5645
    %v5647 = vpop.f32.mrf.mxu0
    %v5648 = vadd.f32 0.0, %v5647
    %5649 = vmatmul.bf16.gmra.mxu0 %v4283
    %v5650 = vpop.f32.mrf.mxu0
    %v5651 = vadd.f32 0.0, %v5650
    %v5652 = vpop.f32.mrf.mxu0
    %v5653 = vadd.f32 0.0, %v5652
    %5654 = vmatmul.bf16.gmra.mxu0 %v4284
    %v5655 = vpop.f32.mrf.mxu0
    %v5656 = vadd.f32 0.0, %v5655
    %v5657 = vpop.f32.mrf.mxu0
    %v5658 = vadd.f32 0.0, %v5657
    %5659 = vdwg.mxu0
    %5660 = vmatpush.bf16.msra.mxu0 %v4796
    %5661 = vmatpush.bf16.msra.mxu0 %v4780
    %5662 = vmatpush.bf16.msra.mxu0 %v4764
    %5663 = vmatpush.bf16.msra.mxu0 %v4748
    %5664 = vmatpush.bf16.msra.mxu0 %v4732
    %5665 = vmatpush.bf16.msra.mxu0 %v4716
    %5666 = vmatpush.bf16.msra.mxu0 %v4700
    %5667 = vmatpush.bf16.msra.mxu0 %v4684
    %5668 = vmatmul.bf16.gmra.mxu0 %v4277
    %v5669 = vpop.f32.mrf.mxu0
    %v5670 = vadd.f32 0.0, %v5669
    %v5671 = vpop.f32.mrf.mxu0
    %v5672 = vadd.f32 0.0, %v5671
    %5673 = vmatmul.bf16.gmra.mxu0 %v4278
    %v5674 = vpop.f32.mrf.mxu0
    %v5675 = vadd.f32 0.0, %v5674
    %v5676 = vpop.f32.mrf.mxu0
    %v5677 = vadd.f32 0.0, %v5676
    %5678 = vmatmul.bf16.gmra.mxu0 %v4279
    %v5679 = vpop.f32.mrf.mxu0
    %v5680 = vadd.f32 0.0, %v5679
    %v5681 = vpop.f32.mrf.mxu0
    %v5682 = vadd.f32 0.0, %v5681
    %5683 = vmatmul.bf16.gmra.mxu0 %v4280
    %v5684 = vpop.f32.mrf.mxu0
    %v5685 = vadd.f32 0.0, %v5684
    %v5686 = vpop.f32.mrf.mxu0
    %v5687 = vadd.f32 0.0, %v5686
    %5688 = vmatmul.bf16.gmra.mxu0 %v4281
    %v5689 = vpop.f32.mrf.mxu0
    %v5690 = vadd.f32 0.0, %v5689
    %v5691 = vpop.f32.mrf.mxu0
    %v5692 = vadd.f32 0.0, %v5691
    %5693 = vmatmul.bf16.gmra.mxu0 %v4282
    %v5694 = vpop.f32.mrf.mxu0
    %v5695 = vadd.f32 0.0, %v5694
    %v5696 = vpop.f32.mrf.mxu0
    %v5697 = vadd.f32 0.0, %v5696
    %5698 = vmatmul.bf16.gmra.mxu0 %v4283
    %v5699 = vpop.f32.mrf.mxu0
    %v5700 = vadd.f32 0.0, %v5699
    %v5701 = vpop.f32.mrf.mxu0
    %v5702 = vadd.f32 0.0, %v5701
    %5703 = vmatmul.bf16.gmra.mxu0 %v4284
    %v5704 = vpop.f32.mrf.mxu0
    %v5705 = vadd.f32 0.0, %v5704
    %v5706 = vpop.f32.mrf.mxu0
    %v5707 = vadd.f32 0.0, %v5706
    %5708 = vdwg.mxu0
    %v5709 = vld [vmem:[#allocation21] sm:$0xff]
    %v5710 = vld [vmem:[#allocation21 + $0x8] sm:$0xff]
    %v5711 = vld [vmem:[#allocation21 + $0x10] sm:$0xff]
    %v5712 = vld [vmem:[#allocation21 + $0x18] sm:$0xff]
    %v5713 = vld [vmem:[#allocation21 + $0x20] sm:$0xff]
    %v5714 = vld [vmem:[#allocation21 + $0x28] sm:$0xff]
    %v5715 = vld [vmem:[#allocation21 + $0x30] sm:$0xff]
    %v5716 = vld [vmem:[#allocation21 + $0x38] sm:$0xff]
    %v5717 = vld [vmem:[#allocation21 + $0x40] sm:$0xff]
    %v5718 = vld [vmem:[#allocation21 + $0x48] sm:$0xff]
    %v5719 = vld [vmem:[#allocation21 + $0x50] sm:$0xff]
    %v5720 = vld [vmem:[#allocation21 + $0x58] sm:$0xff]
    %v5721 = vld [vmem:[#allocation21 + $0x60] sm:$0xff]
    %v5722 = vld [vmem:[#allocation21 + $0x68] sm:$0xff]
    %v5723 = vld [vmem:[#allocation21 + $0x70] sm:$0xff]
    %v5724 = vld [vmem:[#allocation21 + $0x78] sm:$0xff]
    %v5725 = vld [vmem:[#allocation21 + $0x80] sm:$0xff]
    %v5726 = vld [vmem:[#allocation21 + $0x88] sm:$0xff]
    %v5727 = vld [vmem:[#allocation21 + $0x90] sm:$0xff]
    %v5728 = vld [vmem:[#allocation21 + $0x98] sm:$0xff]
    %v5729 = vld [vmem:[#allocation21 + $0xa0] sm:$0xff]
    %v5730 = vld [vmem:[#allocation21 + $0xa8] sm:$0xff]
    %v5731 = vld [vmem:[#allocation21 + $0xb0] sm:$0xff]
    %v5732 = vld [vmem:[#allocation21 + $0xb8] sm:$0xff]
    %v5733 = vld [vmem:[#allocation21 + $0xc0] sm:$0xff]
    %v5734 = vld [vmem:[#allocation21 + $0xc8] sm:$0xff]
    %v5735 = vld [vmem:[#allocation21 + $0xd0] sm:$0xff]
    %v5736 = vld [vmem:[#allocation21 + $0xd8] sm:$0xff]
    %v5737 = vld [vmem:[#allocation21 + $0xe0] sm:$0xff]
    %v5738 = vld [vmem:[#allocation21 + $0xe8] sm:$0xff]
    %v5739 = vld [vmem:[#allocation21 + $0xf0] sm:$0xff]
    %v5740 = vld [vmem:[#allocation21 + $0xf8] sm:$0xff]
    %v5741 = vpack.c.bf16 %v5182, %v5180
    %v5742 = vpack.c.bf16 %v5187, %v5185
    %v5743 = vpack.c.bf16 %v5192, %v5190
    %v5744 = vpack.c.bf16 %v5197, %v5195
    %v5745 = vpack.c.bf16 %v5202, %v5200
    %v5746 = vpack.c.bf16 %v5207, %v5205
    %v5747 = vpack.c.bf16 %v5212, %v5210
    %v5748 = vpack.c.bf16 %v5217, %v5215
    %v5749 = vpack.c.bf16 %v5280, %v5278
    %v5750 = vpack.c.bf16 %v5285, %v5283
    %v5751 = vpack.c.bf16 %v5290, %v5288
    %v5752 = vpack.c.bf16 %v5295, %v5293
    %v5753 = vpack.c.bf16 %v5300, %v5298
    %v5754 = vpack.c.bf16 %v5305, %v5303
    %v5755 = vpack.c.bf16 %v5310, %v5308
    %v5756 = vpack.c.bf16 %v5315, %v5313
    %v5757 = vpack.c.bf16 %v5574, %v5572
    %v5758 = vpack.c.bf16 %v5579, %v5577
    %v5759 = vpack.c.bf16 %v5584, %v5582
    %v5760 = vpack.c.bf16 %v5589, %v5587
    %v5761 = vpack.c.bf16 %v5594, %v5592
    %v5762 = vpack.c.bf16 %v5599, %v5597
    %v5763 = vpack.c.bf16 %v5604, %v5602
    %v5764 = vpack.c.bf16 %v5609, %v5607
    %v5765 = vpack.c.bf16 %v5672, %v5670
    %v5766 = vpack.c.bf16 %v5677, %v5675
    %v5767 = vpack.c.bf16 %v5682, %v5680
    %v5768 = vpack.c.bf16 %v5687, %v5685
    %v5769 = vpack.c.bf16 %v5692, %v5690
    %v5770 = vpack.c.bf16 %v5697, %v5695
    %v5771 = vpack.c.bf16 %v5702, %v5700
    %v5772 = vpack.c.bf16 %v5707, %v5705
    %v5805 = vunpack.c.l.b16 %v5709
    %v5806 = vunpack.c.h.b16 %v5709
    %v5807 = vunpack.c.l.b16 %v5710
    %v5808 = vunpack.c.h.b16 %v5710
    %v5809 = vunpack.c.l.b16 %v5711
    %v5810 = vunpack.c.h.b16 %v5711
    %v5811 = vunpack.c.l.b16 %v5712
    %v5812 = vunpack.c.h.b16 %v5712
    %v5813 = vunpack.c.l.b16 %v5713
    %v5814 = vunpack.c.h.b16 %v5713
    %v5815 = vunpack.c.l.b16 %v5714
    %v5816 = vunpack.c.h.b16 %v5714
    %v5817 = vunpack.c.l.b16 %v5715
    %v5818 = vunpack.c.h.b16 %v5715
    %v5819 = vunpack.c.l.b16 %v5716
    %v5820 = vunpack.c.h.b16 %v5716
    %v5821 = vunpack.c.l.b16 %v5717
    %v5822 = vunpack.c.h.b16 %v5717
    %v5823 = vunpack.c.l.b16 %v5718
    %v5824 = vunpack.c.h.b16 %v5718
    %v5825 = vunpack.c.l.b16 %v5719
    %v5826 = vunpack.c.h.b16 %v5719
    %v5827 = vunpack.c.l.b16 %v5720
    %v5828 = vunpack.c.h.b16 %v5720
    %v5829 = vunpack.c.l.b16 %v5721
    %v5830 = vunpack.c.h.b16 %v5721
    %v5831 = vunpack.c.l.b16 %v5722
    %v5832 = vunpack.c.h.b16 %v5722
    %v5833 = vunpack.c.l.b16 %v5723
    %v5834 = vunpack.c.h.b16 %v5723
    %v5835 = vunpack.c.l.b16 %v5724
    %v5836 = vunpack.c.h.b16 %v5724
    %v5837 = vunpack.c.l.b16 %v5725
    %v5838 = vunpack.c.h.b16 %v5725
    %v5839 = vunpack.c.l.b16 %v5726
    %v5840 = vunpack.c.h.b16 %v5726
    %v5841 = vunpack.c.l.b16 %v5727
    %v5842 = vunpack.c.h.b16 %v5727
    %v5843 = vunpack.c.l.b16 %v5728
    %v5844 = vunpack.c.h.b16 %v5728
    %v5845 = vunpack.c.l.b16 %v5729
    %v5846 = vunpack.c.h.b16 %v5729
    %v5847 = vunpack.c.l.b16 %v5730
    %v5848 = vunpack.c.h.b16 %v5730
    %v5849 = vunpack.c.l.b16 %v5731
    %v5850 = vunpack.c.h.b16 %v5731
    %v5851 = vunpack.c.l.b16 %v5732
    %v5852 = vunpack.c.h.b16 %v5732
    %v5853 = vunpack.c.l.b16 %v5733
    %v5854 = vunpack.c.h.b16 %v5733
    %v5855 = vunpack.c.l.b16 %v5734
    %v5856 = vunpack.c.h.b16 %v5734
    %v5857 = vunpack.c.l.b16 %v5735
    %v5858 = vunpack.c.h.b16 %v5735
    %v5859 = vunpack.c.l.b16 %v5736
    %v5860 = vunpack.c.h.b16 %v5736
    %v5861 = vunpack.c.l.b16 %v5737
    %v5862 = vunpack.c.h.b16 %v5737
    %v5863 = vunpack.c.l.b16 %v5738
    %v5864 = vunpack.c.h.b16 %v5738
    %v5865 = vunpack.c.l.b16 %v5739
    %v5866 = vunpack.c.h.b16 %v5739
    %v5867 = vunpack.c.l.b16 %v5740
    %v5868 = vunpack.c.h.b16 %v5740
    %v5869 = vpack.c.b16 %v5809, %v5805
    %v5870 = vpack.c.b16 %v5810, %v5806
    %v5871 = vpack.c.b16 %v5811, %v5807
    %v5872 = vpack.c.b16 %v5812, %v5808
    %v5873 = vpack.c.b16 %v5817, %v5813
    %v5874 = vpack.c.b16 %v5818, %v5814
    %v5875 = vpack.c.b16 %v5819, %v5815
    %v5876 = vpack.c.b16 %v5820, %v5816
    %v5877 = vpack.c.b16 %v5825, %v5821
    %v5878 = vpack.c.b16 %v5826, %v5822
    %v5879 = vpack.c.b16 %v5827, %v5823
    %v5880 = vpack.c.b16 %v5828, %v5824
    %v5881 = vpack.c.b16 %v5833, %v5829
    %v5882 = vpack.c.b16 %v5834, %v5830
    %v5883 = vpack.c.b16 %v5835, %v5831
    %v5884 = vpack.c.b16 %v5836, %v5832
    %v5885 = vpack.c.b16 %v5841, %v5837
    %v5886 = vpack.c.b16 %v5842, %v5838
    %v5887 = vpack.c.b16 %v5843, %v5839
    %v5888 = vpack.c.b16 %v5844, %v5840
    %v5889 = vpack.c.b16 %v5849, %v5845
    %v5890 = vpack.c.b16 %v5850, %v5846
    %v5891 = vpack.c.b16 %v5851, %v5847
    %v5892 = vpack.c.b16 %v5852, %v5848
    %v5893 = vpack.c.b16 %v5857, %v5853
    %v5894 = vpack.c.b16 %v5858, %v5854
    %v5895 = vpack.c.b16 %v5859, %v5855
    %v5896 = vpack.c.b16 %v5860, %v5856
    %v5897 = vpack.c.b16 %v5865, %v5861
    %v5898 = vpack.c.b16 %v5866, %v5862
    %v5899 = vpack.c.b16 %v5867, %v5863
    %v5900 = vpack.c.b16 %v5868, %v5864
    %5933 = vmatpush.bf16.msra.mxu0 %v5748
    %5934 = vmatpush.bf16.msra.mxu0 %v5747
    %5935 = vmatpush.bf16.msra.mxu0 %v5746
    %5936 = vmatpush.bf16.msra.mxu0 %v5745
    %5937 = vmatpush.bf16.msra.mxu0 %v5744
    %5938 = vmatpush.bf16.msra.mxu0 %v5743
    %5939 = vmatpush.bf16.msra.mxu0 %v5742
    %5940 = vmatpush.bf16.msra.mxu0 %v5741
    %5941 = vmatmul.bf16.gmra.mxu0 %v5869
    %v5942 = vpop.f32.mrf.mxu0
    %v5943 = vadd.f32 0.0, %v5942
    %v5944 = vpop.f32.mrf.mxu0
    %v5945 = vadd.f32 0.0, %v5944
    %5946 = vmatmul.bf16.gmra.mxu0 %v5873
    %v5947 = vpop.f32.mrf.mxu0
    %v5948 = vadd.f32 0.0, %v5947
    %v5949 = vpop.f32.mrf.mxu0
    %v5950 = vadd.f32 0.0, %v5949
    %5951 = vmatmul.bf16.gmra.mxu0 %v5877
    %v5952 = vpop.f32.mrf.mxu0
    %v5953 = vadd.f32 0.0, %v5952
    %v5954 = vpop.f32.mrf.mxu0
    %v5955 = vadd.f32 0.0, %v5954
    %5956 = vmatmul.bf16.gmra.mxu0 %v5881
    %v5957 = vpop.f32.mrf.mxu0
    %v5958 = vadd.f32 0.0, %v5957
    %v5959 = vpop.f32.mrf.mxu0
    %v5960 = vadd.f32 0.0, %v5959
    %5961 = vmatmul.bf16.gmra.mxu0 %v5885
    %v5962 = vpop.f32.mrf.mxu0
    %v5963 = vadd.f32 0.0, %v5962
    %v5964 = vpop.f32.mrf.mxu0
    %v5965 = vadd.f32 0.0, %v5964
    %5966 = vmatmul.bf16.gmra.mxu0 %v5889
    %v5967 = vpop.f32.mrf.mxu0
    %v5968 = vadd.f32 0.0, %v5967
    %v5969 = vpop.f32.mrf.mxu0
    %v5970 = vadd.f32 0.0, %v5969
    %5971 = vmatmul.bf16.gmra.mxu0 %v5893
    %v5972 = vpop.f32.mrf.mxu0
    %v5973 = vadd.f32 0.0, %v5972
    %v5974 = vpop.f32.mrf.mxu0
    %v5975 = vadd.f32 0.0, %v5974
    %5976 = vmatmul.bf16.gmra.mxu0 %v5897
    %v5977 = vpop.f32.mrf.mxu0
    %v5978 = vadd.f32 0.0, %v5977
    %v5979 = vpop.f32.mrf.mxu0
    %v5980 = vadd.f32 0.0, %v5979
    %5981 = vdwg.mxu0
    %5982 = vmatpush.bf16.msra.mxu0 %v5756
    %5983 = vmatpush.bf16.msra.mxu0 %v5755
    %5984 = vmatpush.bf16.msra.mxu0 %v5754
    %5985 = vmatpush.bf16.msra.mxu0 %v5753
    %5986 = vmatpush.bf16.msra.mxu0 %v5752
    %5987 = vmatpush.bf16.msra.mxu0 %v5751
    %5988 = vmatpush.bf16.msra.mxu0 %v5750
    %5989 = vmatpush.bf16.msra.mxu0 %v5749
    %5990 = vmatmul.bf16.gmra.mxu0 %v5870
    %v5991 = vpop.f32.mrf.mxu0
    %v5992 = vadd.f32 %v5943, %v5991
    %v5993 = vpop.f32.mrf.mxu0
    %v5994 = vadd.f32 %v5945, %v5993
    %5995 = vmatmul.bf16.gmra.mxu0 %v5874
    %v5996 = vpop.f32.mrf.mxu0
    %v5997 = vadd.f32 %v5948, %v5996
    %v5998 = vpop.f32.mrf.mxu0
    %v5999 = vadd.f32 %v5950, %v5998
    %6000 = vmatmul.bf16.gmra.mxu0 %v5878
    %v6001 = vpop.f32.mrf.mxu0
    %v6002 = vadd.f32 %v5953, %v6001
    %v6003 = vpop.f32.mrf.mxu0
    %v6004 = vadd.f32 %v5955, %v6003
    %6005 = vmatmul.bf16.gmra.mxu0 %v5882
    %v6006 = vpop.f32.mrf.mxu0
    %v6007 = vadd.f32 %v5958, %v6006
    %v6008 = vpop.f32.mrf.mxu0
    %v6009 = vadd.f32 %v5960, %v6008
    %6010 = vmatmul.bf16.gmra.mxu0 %v5886
    %v6011 = vpop.f32.mrf.mxu0
    %v6012 = vadd.f32 %v5963, %v6011
    %v6013 = vpop.f32.mrf.mxu0
    %v6014 = vadd.f32 %v5965, %v6013
    %6015 = vmatmul.bf16.gmra.mxu0 %v5890
    %v6016 = vpop.f32.mrf.mxu0
    %v6017 = vadd.f32 %v5968, %v6016
    %v6018 = vpop.f32.mrf.mxu0
    %v6019 = vadd.f32 %v5970, %v6018
    %6020 = vmatmul.bf16.gmra.mxu0 %v5894
    %v6021 = vpop.f32.mrf.mxu0
    %v6022 = vadd.f32 %v5973, %v6021
    %v6023 = vpop.f32.mrf.mxu0
    %v6024 = vadd.f32 %v5975, %v6023
    %6025 = vmatmul.bf16.gmra.mxu0 %v5898
    %v6026 = vpop.f32.mrf.mxu0
    %v6027 = vadd.f32 %v5978, %v6026
    %v6028 = vpop.f32.mrf.mxu0
    %v6029 = vadd.f32 %v5980, %v6028
    %6030 = vdwg.mxu0
    %6031 = vmatpush.bf16.msra.mxu0 %v5764
    %6032 = vmatpush.bf16.msra.mxu0 %v5763
    %6033 = vmatpush.bf16.msra.mxu0 %v5762
    %6034 = vmatpush.bf16.msra.mxu0 %v5761
    %6035 = vmatpush.bf16.msra.mxu0 %v5760
    %6036 = vmatpush.bf16.msra.mxu0 %v5759
    %6037 = vmatpush.bf16.msra.mxu0 %v5758
    %6038 = vmatpush.bf16.msra.mxu0 %v5757
    %6039 = vmatmul.bf16.gmra.mxu0 %v5871
    %v6040 = vpop.f32.mrf.mxu0
    %v6041 = vadd.f32 %v5992, %v6040
    %v6042 = vpop.f32.mrf.mxu0
    %v6043 = vadd.f32 %v5994, %v6042
    %6044 = vmatmul.bf16.gmra.mxu0 %v5875
    %v6045 = vpop.f32.mrf.mxu0
    %v6046 = vadd.f32 %v5997, %v6045
    %v6047 = vpop.f32.mrf.mxu0
    %v6048 = vadd.f32 %v5999, %v6047
    %6049 = vmatmul.bf16.gmra.mxu0 %v5879
    %v6050 = vpop.f32.mrf.mxu0
    %v6051 = vadd.f32 %v6002, %v6050
    %v6052 = vpop.f32.mrf.mxu0
    %v6053 = vadd.f32 %v6004, %v6052
    %6054 = vmatmul.bf16.gmra.mxu0 %v5883
    %v6055 = vpop.f32.mrf.mxu0
    %v6056 = vadd.f32 %v6007, %v6055
    %v6057 = vpop.f32.mrf.mxu0
    %v6058 = vadd.f32 %v6009, %v6057
    %6059 = vmatmul.bf16.gmra.mxu0 %v5887
    %v6060 = vpop.f32.mrf.mxu0
    %v6061 = vadd.f32 %v6012, %v6060
    %v6062 = vpop.f32.mrf.mxu0
    %v6063 = vadd.f32 %v6014, %v6062
    %6064 = vmatmul.bf16.gmra.mxu0 %v5891
    %v6065 = vpop.f32.mrf.mxu0
    %v6066 = vadd.f32 %v6017, %v6065
    %v6067 = vpop.f32.mrf.mxu0
    %v6068 = vadd.f32 %v6019, %v6067
    %6069 = vmatmul.bf16.gmra.mxu0 %v5895
    %v6070 = vpop.f32.mrf.mxu0
    %v6071 = vadd.f32 %v6022, %v6070
    %v6072 = vpop.f32.mrf.mxu0
    %v6073 = vadd.f32 %v6024, %v6072
    %6074 = vmatmul.bf16.gmra.mxu0 %v5899
    %v6075 = vpop.f32.mrf.mxu0
    %v6076 = vadd.f32 %v6027, %v6075
    %v6077 = vpop.f32.mrf.mxu0
    %v6078 = vadd.f32 %v6029, %v6077
    %6079 = vdwg.mxu0
    %6080 = vmatpush.bf16.msra.mxu0 %v5772
    %6081 = vmatpush.bf16.msra.mxu0 %v5771
    %6082 = vmatpush.bf16.msra.mxu0 %v5770
    %6083 = vmatpush.bf16.msra.mxu0 %v5769
    %6084 = vmatpush.bf16.msra.mxu0 %v5768
    %6085 = vmatpush.bf16.msra.mxu0 %v5767
    %6086 = vmatpush.bf16.msra.mxu0 %v5766
    %6087 = vmatpush.bf16.msra.mxu0 %v5765
    %6088 = vmatmul.bf16.gmra.mxu0 %v5872
    %v6089 = vpop.f32.mrf.mxu0
    %v6090 = vadd.f32 %v6041, %v6089
    %v6091 = vpop.f32.mrf.mxu0
    %v6092 = vadd.f32 %v6043, %v6091
    %6093 = vmatmul.bf16.gmra.mxu0 %v5876
    %v6094 = vpop.f32.mrf.mxu0
    %v6095 = vadd.f32 %v6046, %v6094
    %v6096 = vpop.f32.mrf.mxu0
    %v6097 = vadd.f32 %v6048, %v6096
    %6098 = vmatmul.bf16.gmra.mxu0 %v5880
    %v6099 = vpop.f32.mrf.mxu0
    %v6100 = vadd.f32 %v6051, %v6099
    %v6101 = vpop.f32.mrf.mxu0
    %v6102 = vadd.f32 %v6053, %v6101
    %6103 = vmatmul.bf16.gmra.mxu0 %v5884
    %v6104 = vpop.f32.mrf.mxu0
    %v6105 = vadd.f32 %v6056, %v6104
    %v6106 = vpop.f32.mrf.mxu0
    %v6107 = vadd.f32 %v6058, %v6106
    %6108 = vmatmul.bf16.gmra.mxu0 %v5888
    %v6109 = vpop.f32.mrf.mxu0
    %v6110 = vadd.f32 %v6061, %v6109
    %v6111 = vpop.f32.mrf.mxu0
    %v6112 = vadd.f32 %v6063, %v6111
    %6113 = vmatmul.bf16.gmra.mxu0 %v5892
    %v6114 = vpop.f32.mrf.mxu0
    %v6115 = vadd.f32 %v6066, %v6114
    %v6116 = vpop.f32.mrf.mxu0
    %v6117 = vadd.f32 %v6068, %v6116
    %6118 = vmatmul.bf16.gmra.mxu0 %v5896
    %v6119 = vpop.f32.mrf.mxu0
    %v6120 = vadd.f32 %v6071, %v6119
    %v6121 = vpop.f32.mrf.mxu0
    %v6122 = vadd.f32 %v6073, %v6121
    %6123 = vmatmul.bf16.gmra.mxu0 %v5900
    %v6124 = vpop.f32.mrf.mxu0
    %v6125 = vadd.f32 %v6076, %v6124
    %v6126 = vpop.f32.mrf.mxu0
    %v6127 = vadd.f32 %v6078, %v6126
    %6128 = vdwg.mxu0
    %s6129 = scalar_lea.vmem [#allocation21], 256
    %v6130 = vld [vmem:[%s6129] sm:$0xff]
    %v6131 = vld [vmem:[%s6129 + $0x8] sm:$0xff]
    %v6132 = vld [vmem:[%s6129 + $0x10] sm:$0xff]
    %v6133 = vld [vmem:[%s6129 + $0x18] sm:$0xff]
    %v6134 = vld [vmem:[%s6129 + $0x20] sm:$0xff]
    %v6135 = vld [vmem:[%s6129 + $0x28] sm:$0xff]
    %v6136 = vld [vmem:[%s6129 + $0x30] sm:$0xff]
    %v6137 = vld [vmem:[%s6129 + $0x38] sm:$0xff]
    %v6138 = vld [vmem:[%s6129 + $0x40] sm:$0xff]
    %v6139 = vld [vmem:[%s6129 + $0x48] sm:$0xff]
    %v6140 = vld [vmem:[%s6129 + $0x50] sm:$0xff]
    %v6141 = vld [vmem:[%s6129 + $0x58] sm:$0xff]
    %v6142 = vld [vmem:[%s6129 + $0x60] sm:$0xff]
    %v6143 = vld [vmem:[%s6129 + $0x68] sm:$0xff]
    %v6144 = vld [vmem:[%s6129 + $0x70] sm:$0xff]
    %v6145 = vld [vmem:[%s6129 + $0x78] sm:$0xff]
    %v6146 = vld [vmem:[%s6129 + $0x80] sm:$0xff]
    %v6147 = vld [vmem:[%s6129 + $0x88] sm:$0xff]
    %v6148 = vld [vmem:[%s6129 + $0x90] sm:$0xff]
    %v6149 = vld [vmem:[%s6129 + $0x98] sm:$0xff]
    %v6150 = vld [vmem:[%s6129 + $0xa0] sm:$0xff]
    %v6151 = vld [vmem:[%s6129 + $0xa8] sm:$0xff]
    %v6152 = vld [vmem:[%s6129 + $0xb0] sm:$0xff]
    %v6153 = vld [vmem:[%s6129 + $0xb8] sm:$0xff]
    %v6154 = vld [vmem:[%s6129 + $0xc0] sm:$0xff]
    %v6155 = vld [vmem:[%s6129 + $0xc8] sm:$0xff]
    %v6156 = vld [vmem:[%s6129 + $0xd0] sm:$0xff]
    %v6157 = vld [vmem:[%s6129 + $0xd8] sm:$0xff]
    %v6158 = vld [vmem:[%s6129 + $0xe0] sm:$0xff]
    %v6159 = vld [vmem:[%s6129 + $0xe8] sm:$0xff]
    %v6160 = vld [vmem:[%s6129 + $0xf0] sm:$0xff]
    %v6161 = vld [vmem:[%s6129 + $0xf8] sm:$0xff]
    %v6162 = vpack.c.bf16 %v5133, %v5131
    %v6163 = vpack.c.bf16 %v5138, %v5136
    %v6164 = vpack.c.bf16 %v5143, %v5141
    %v6165 = vpack.c.bf16 %v5148, %v5146
    %v6166 = vpack.c.bf16 %v5153, %v5151
    %v6167 = vpack.c.bf16 %v5158, %v5156
    %v6168 = vpack.c.bf16 %v5163, %v5161
    %v6169 = vpack.c.bf16 %v5168, %v5166
    %v6170 = vpack.c.bf16 %v5231, %v5229
    %v6171 = vpack.c.bf16 %v5236, %v5234
    %v6172 = vpack.c.bf16 %v5241, %v5239
    %v6173 = vpack.c.bf16 %v5246, %v5244
    %v6174 = vpack.c.bf16 %v5251, %v5249
    %v6175 = vpack.c.bf16 %v5256, %v5254
    %v6176 = vpack.c.bf16 %v5261, %v5259
    %v6177 = vpack.c.bf16 %v5266, %v5264
    %v6178 = vpack.c.bf16 %v5525, %v5523
    %v6179 = vpack.c.bf16 %v5530, %v5528
    %v6180 = vpack.c.bf16 %v5535, %v5533
    %v6181 = vpack.c.bf16 %v5540, %v5538
    %v6182 = vpack.c.bf16 %v5545, %v5543
    %v6183 = vpack.c.bf16 %v5550, %v5548
    %v6184 = vpack.c.bf16 %v5555, %v5553
    %v6185 = vpack.c.bf16 %v5560, %v5558
    %v6186 = vpack.c.bf16 %v5623, %v5621
    %v6187 = vpack.c.bf16 %v5628, %v5626
    %v6188 = vpack.c.bf16 %v5633, %v5631
    %v6189 = vpack.c.bf16 %v5638, %v5636
    %v6190 = vpack.c.bf16 %v5643, %v5641
    %v6191 = vpack.c.bf16 %v5648, %v5646
    %v6192 = vpack.c.bf16 %v5653, %v5651
    %v6193 = vpack.c.bf16 %v5658, %v5656
    %v6226 = vunpack.c.l.b16 %v6130
    %v6227 = vunpack.c.h.b16 %v6130
    %v6228 = vunpack.c.l.b16 %v6131
    %v6229 = vunpack.c.h.b16 %v6131
    %v6230 = vunpack.c.l.b16 %v6132
    %v6231 = vunpack.c.h.b16 %v6132
    %v6232 = vunpack.c.l.b16 %v6133
    %v6233 = vunpack.c.h.b16 %v6133
    %v6234 = vunpack.c.l.b16 %v6134
    %v6235 = vunpack.c.h.b16 %v6134
    %v6236 = vunpack.c.l.b16 %v6135
    %v6237 = vunpack.c.h.b16 %v6135
    %v6238 = vunpack.c.l.b16 %v6136
    %v6239 = vunpack.c.h.b16 %v6136
    %v6240 = vunpack.c.l.b16 %v6137
    %v6241 = vunpack.c.h.b16 %v6137
    %v6242 = vunpack.c.l.b16 %v6138
    %v6243 = vunpack.c.h.b16 %v6138
    %v6244 = vunpack.c.l.b16 %v6139
    %v6245 = vunpack.c.h.b16 %v6139
    %v6246 = vunpack.c.l.b16 %v6140
    %v6247 = vunpack.c.h.b16 %v6140
    %v6248 = vunpack.c.l.b16 %v6141
    %v6249 = vunpack.c.h.b16 %v6141
    %v6250 = vunpack.c.l.b16 %v6142
    %v6251 = vunpack.c.h.b16 %v6142
    %v6252 = vunpack.c.l.b16 %v6143
    %v6253 = vunpack.c.h.b16 %v6143
    %v6254 = vunpack.c.l.b16 %v6144
    %v6255 = vunpack.c.h.b16 %v6144
    %v6256 = vunpack.c.l.b16 %v6145
    %v6257 = vunpack.c.h.b16 %v6145
    %v6258 = vunpack.c.l.b16 %v6146
    %v6259 = vunpack.c.h.b16 %v6146
    %v6260 = vunpack.c.l.b16 %v6147
    %v6261 = vunpack.c.h.b16 %v6147
    %v6262 = vunpack.c.l.b16 %v6148
    %v6263 = vunpack.c.h.b16 %v6148
    %v6264 = vunpack.c.l.b16 %v6149
    %v6265 = vunpack.c.h.b16 %v6149
    %v6266 = vunpack.c.l.b16 %v6150
    %v6267 = vunpack.c.h.b16 %v6150
    %v6268 = vunpack.c.l.b16 %v6151
    %v6269 = vunpack.c.h.b16 %v6151
    %v6270 = vunpack.c.l.b16 %v6152
    %v6271 = vunpack.c.h.b16 %v6152
    %v6272 = vunpack.c.l.b16 %v6153
    %v6273 = vunpack.c.h.b16 %v6153
    %v6274 = vunpack.c.l.b16 %v6154
    %v6275 = vunpack.c.h.b16 %v6154
    %v6276 = vunpack.c.l.b16 %v6155
    %v6277 = vunpack.c.h.b16 %v6155
    %v6278 = vunpack.c.l.b16 %v6156
    %v6279 = vunpack.c.h.b16 %v6156
    %v6280 = vunpack.c.l.b16 %v6157
    %v6281 = vunpack.c.h.b16 %v6157
    %v6282 = vunpack.c.l.b16 %v6158
    %v6283 = vunpack.c.h.b16 %v6158
    %v6284 = vunpack.c.l.b16 %v6159
    %v6285 = vunpack.c.h.b16 %v6159
    %v6286 = vunpack.c.l.b16 %v6160
    %v6287 = vunpack.c.h.b16 %v6160
    %v6288 = vunpack.c.l.b16 %v6161
    %v6289 = vunpack.c.h.b16 %v6161
    %v6290 = vpack.c.b16 %v6230, %v6226
    %v6291 = vpack.c.b16 %v6231, %v6227
    %v6292 = vpack.c.b16 %v6232, %v6228
    %v6293 = vpack.c.b16 %v6233, %v6229
    %v6294 = vpack.c.b16 %v6238, %v6234
    %v6295 = vpack.c.b16 %v6239, %v6235
    %v6296 = vpack.c.b16 %v6240, %v6236
    %v6297 = vpack.c.b16 %v6241, %v6237
    %v6298 = vpack.c.b16 %v6246, %v6242
    %v6299 = vpack.c.b16 %v6247, %v6243
    %v6300 = vpack.c.b16 %v6248, %v6244
    %v6301 = vpack.c.b16 %v6249, %v6245
    %v6302 = vpack.c.b16 %v6254, %v6250
    %v6303 = vpack.c.b16 %v6255, %v6251
    %v6304 = vpack.c.b16 %v6256, %v6252
    %v6305 = vpack.c.b16 %v6257, %v6253
    %v6306 = vpack.c.b16 %v6262, %v6258
    %v6307 = vpack.c.b16 %v6263, %v6259
    %v6308 = vpack.c.b16 %v6264, %v6260
    %v6309 = vpack.c.b16 %v6265, %v6261
    %v6310 = vpack.c.b16 %v6270, %v6266
    %v6311 = vpack.c.b16 %v6271, %v6267
    %v6312 = vpack.c.b16 %v6272, %v6268
    %v6313 = vpack.c.b16 %v6273, %v6269
    %v6314 = vpack.c.b16 %v6278, %v6274
    %v6315 = vpack.c.b16 %v6279, %v6275
    %v6316 = vpack.c.b16 %v6280, %v6276
    %v6317 = vpack.c.b16 %v6281, %v6277
    %v6318 = vpack.c.b16 %v6286, %v6282
    %v6319 = vpack.c.b16 %v6287, %v6283
    %v6320 = vpack.c.b16 %v6288, %v6284
    %v6321 = vpack.c.b16 %v6289, %v6285
    %6354 = vmatpush.bf16.msra.mxu0 %v6169
    %6355 = vmatpush.bf16.msra.mxu0 %v6168
    %6356 = vmatpush.bf16.msra.mxu0 %v6167
    %6357 = vmatpush.bf16.msra.mxu0 %v6166
    %6358 = vmatpush.bf16.msra.mxu0 %v6165
    %6359 = vmatpush.bf16.msra.mxu0 %v6164
    %6360 = vmatpush.bf16.msra.mxu0 %v6163
    %6361 = vmatpush.bf16.msra.mxu0 %v6162
    %6362 = vmatmul.bf16.gmra.mxu0 %v6290
    %v6363 = vpop.f32.mrf.mxu0
    %v6364 = vadd.f32 0.0, %v6363
    %v6365 = vpop.f32.mrf.mxu0
    %v6366 = vadd.f32 0.0, %v6365
    %6367 = vmatmul.bf16.gmra.mxu0 %v6294
    %v6368 = vpop.f32.mrf.mxu0
    %v6369 = vadd.f32 0.0, %v6368
    %v6370 = vpop.f32.mrf.mxu0
    %v6371 = vadd.f32 0.0, %v6370
    %6372 = vmatmul.bf16.gmra.mxu0 %v6298
    %v6373 = vpop.f32.mrf.mxu0
    %v6374 = vadd.f32 0.0, %v6373
    %v6375 = vpop.f32.mrf.mxu0
    %v6376 = vadd.f32 0.0, %v6375
    %6377 = vmatmul.bf16.gmra.mxu0 %v6302
    %v6378 = vpop.f32.mrf.mxu0
    %v6379 = vadd.f32 0.0, %v6378
    %v6380 = vpop.f32.mrf.mxu0
    %v6381 = vadd.f32 0.0, %v6380
    %6382 = vmatmul.bf16.gmra.mxu0 %v6306
    %v6383 = vpop.f32.mrf.mxu0
    %v6384 = vadd.f32 0.0, %v6383
    %v6385 = vpop.f32.mrf.mxu0
    %v6386 = vadd.f32 0.0, %v6385
    %6387 = vmatmul.bf16.gmra.mxu0 %v6310
    %v6388 = vpop.f32.mrf.mxu0
    %v6389 = vadd.f32 0.0, %v6388
    %v6390 = vpop.f32.mrf.mxu0
    %v6391 = vadd.f32 0.0, %v6390
    %6392 = vmatmul.bf16.gmra.mxu0 %v6314
    %v6393 = vpop.f32.mrf.mxu0
    %v6394 = vadd.f32 0.0, %v6393
    %v6395 = vpop.f32.mrf.mxu0
    %v6396 = vadd.f32 0.0, %v6395
    %6397 = vmatmul.bf16.gmra.mxu0 %v6318
    %v6398 = vpop.f32.mrf.mxu0
    %v6399 = vadd.f32 0.0, %v6398
    %v6400 = vpop.f32.mrf.mxu0
    %v6401 = vadd.f32 0.0, %v6400
    %6402 = vdwg.mxu0
    %6403 = vmatpush.bf16.msra.mxu0 %v6177
    %6404 = vmatpush.bf16.msra.mxu0 %v6176
    %6405 = vmatpush.bf16.msra.mxu0 %v6175
    %6406 = vmatpush.bf16.msra.mxu0 %v6174
    %6407 = vmatpush.bf16.msra.mxu0 %v6173
    %6408 = vmatpush.bf16.msra.mxu0 %v6172
    %6409 = vmatpush.bf16.msra.mxu0 %v6171
    %6410 = vmatpush.bf16.msra.mxu0 %v6170
    %6411 = vmatmul.bf16.gmra.mxu0 %v6291
    %v6412 = vpop.f32.mrf.mxu0
    %v6413 = vadd.f32 %v6364, %v6412
    %v6414 = vpop.f32.mrf.mxu0
    %v6415 = vadd.f32 %v6366, %v6414
    %6416 = vmatmul.bf16.gmra.mxu0 %v6295
    %v6417 = vpop.f32.mrf.mxu0
    %v6418 = vadd.f32 %v6369, %v6417
    %v6419 = vpop.f32.mrf.mxu0
    %v6420 = vadd.f32 %v6371, %v6419
    %6421 = vmatmul.bf16.gmra.mxu0 %v6299
    %v6422 = vpop.f32.mrf.mxu0
    %v6423 = vadd.f32 %v6374, %v6422
    %v6424 = vpop.f32.mrf.mxu0
    %v6425 = vadd.f32 %v6376, %v6424
    %6426 = vmatmul.bf16.gmra.mxu0 %v6303
    %v6427 = vpop.f32.mrf.mxu0
    %v6428 = vadd.f32 %v6379, %v6427
    %v6429 = vpop.f32.mrf.mxu0
    %v6430 = vadd.f32 %v6381, %v6429
    %6431 = vmatmul.bf16.gmra.mxu0 %v6307
    %v6432 = vpop.f32.mrf.mxu0
    %v6433 = vadd.f32 %v6384, %v6432
    %v6434 = vpop.f32.mrf.mxu0
    %v6435 = vadd.f32 %v6386, %v6434
    %6436 = vmatmul.bf16.gmra.mxu0 %v6311
    %v6437 = vpop.f32.mrf.mxu0
    %v6438 = vadd.f32 %v6389, %v6437
    %v6439 = vpop.f32.mrf.mxu0
    %v6440 = vadd.f32 %v6391, %v6439
    %6441 = vmatmul.bf16.gmra.mxu0 %v6315
    %v6442 = vpop.f32.mrf.mxu0
    %v6443 = vadd.f32 %v6394, %v6442
    %v6444 = vpop.f32.mrf.mxu0
    %v6445 = vadd.f32 %v6396, %v6444
    %6446 = vmatmul.bf16.gmra.mxu0 %v6319
    %v6447 = vpop.f32.mrf.mxu0
    %v6448 = vadd.f32 %v6399, %v6447
    %v6449 = vpop.f32.mrf.mxu0
    %v6450 = vadd.f32 %v6401, %v6449
    %6451 = vdwg.mxu0
    %6452 = vmatpush.bf16.msra.mxu0 %v6185
    %6453 = vmatpush.bf16.msra.mxu0 %v6184
    %6454 = vmatpush.bf16.msra.mxu0 %v6183
    %6455 = vmatpush.bf16.msra.mxu0 %v6182
    %6456 = vmatpush.bf16.msra.mxu0 %v6181
    %6457 = vmatpush.bf16.msra.mxu0 %v6180
    %6458 = vmatpush.bf16.msra.mxu0 %v6179
    %6459 = vmatpush.bf16.msra.mxu0 %v6178
    %6460 = vmatmul.bf16.gmra.mxu0 %v6292
    %v6461 = vpop.f32.mrf.mxu0
    %v6462 = vadd.f32 %v6413, %v6461
    %v6463 = vpop.f32.mrf.mxu0
    %v6464 = vadd.f32 %v6415, %v6463
    %6465 = vmatmul.bf16.gmra.mxu0 %v6296
    %v6466 = vpop.f32.mrf.mxu0
    %v6467 = vadd.f32 %v6418, %v6466
    %v6468 = vpop.f32.mrf.mxu0
    %v6469 = vadd.f32 %v6420, %v6468
    %6470 = vmatmul.bf16.gmra.mxu0 %v6300
    %v6471 = vpop.f32.mrf.mxu0
    %v6472 = vadd.f32 %v6423, %v6471
    %v6473 = vpop.f32.mrf.mxu0
    %v6474 = vadd.f32 %v6425, %v6473
    %6475 = vmatmul.bf16.gmra.mxu0 %v6304
    %v6476 = vpop.f32.mrf.mxu0
    %v6477 = vadd.f32 %v6428, %v6476
    %v6478 = vpop.f32.mrf.mxu0
    %v6479 = vadd.f32 %v6430, %v6478
    %6480 = vmatmul.bf16.gmra.mxu0 %v6308
    %v6481 = vpop.f32.mrf.mxu0
    %v6482 = vadd.f32 %v6433, %v6481
    %v6483 = vpop.f32.mrf.mxu0
    %v6484 = vadd.f32 %v6435, %v6483
    %6485 = vmatmul.bf16.gmra.mxu0 %v6312
    %v6486 = vpop.f32.mrf.mxu0
    %v6487 = vadd.f32 %v6438, %v6486
    %v6488 = vpop.f32.mrf.mxu0
    %v6489 = vadd.f32 %v6440, %v6488
    %6490 = vmatmul.bf16.gmra.mxu0 %v6316
    %v6491 = vpop.f32.mrf.mxu0
    %v6492 = vadd.f32 %v6443, %v6491
    %v6493 = vpop.f32.mrf.mxu0
    %v6494 = vadd.f32 %v6445, %v6493
    %6495 = vmatmul.bf16.gmra.mxu0 %v6320
    %v6496 = vpop.f32.mrf.mxu0
    %v6497 = vadd.f32 %v6448, %v6496
    %v6498 = vpop.f32.mrf.mxu0
    %v6499 = vadd.f32 %v6450, %v6498
    %6500 = vdwg.mxu0
    %6501 = vmatpush.bf16.msra.mxu0 %v6193
    %6502 = vmatpush.bf16.msra.mxu0 %v6192
    %6503 = vmatpush.bf16.msra.mxu0 %v6191
    %6504 = vmatpush.bf16.msra.mxu0 %v6190
    %6505 = vmatpush.bf16.msra.mxu0 %v6189
    %6506 = vmatpush.bf16.msra.mxu0 %v6188
    %6507 = vmatpush.bf16.msra.mxu0 %v6187
    %6508 = vmatpush.bf16.msra.mxu0 %v6186
    %6509 = vmatmul.bf16.gmra.mxu0 %v6293
    %v6510 = vpop.f32.mrf.mxu0
    %v6511 = vadd.f32 %v6462, %v6510
    %v6512 = vpop.f32.mrf.mxu0
    %v6513 = vadd.f32 %v6464, %v6512
    %6514 = vmatmul.bf16.gmra.mxu0 %v6297
    %v6515 = vpop.f32.mrf.mxu0
    %v6516 = vadd.f32 %v6467, %v6515
    %v6517 = vpop.f32.mrf.mxu0
    %v6518 = vadd.f32 %v6469, %v6517
    %6519 = vmatmul.bf16.gmra.mxu0 %v6301
    %v6520 = vpop.f32.mrf.mxu0
    %v6521 = vadd.f32 %v6472, %v6520
    %v6522 = vpop.f32.mrf.mxu0
    %v6523 = vadd.f32 %v6474, %v6522
    %6524 = vmatmul.bf16.gmra.mxu0 %v6305
    %v6525 = vpop.f32.mrf.mxu0
    %v6526 = vadd.f32 %v6477, %v6525
    %v6527 = vpop.f32.mrf.mxu0
    %v6528 = vadd.f32 %v6479, %v6527
    %6529 = vmatmul.bf16.gmra.mxu0 %v6309
    %v6530 = vpop.f32.mrf.mxu0
    %v6531 = vadd.f32 %v6482, %v6530
    %v6532 = vpop.f32.mrf.mxu0
    %v6533 = vadd.f32 %v6484, %v6532
    %6534 = vmatmul.bf16.gmra.mxu0 %v6313
    %v6535 = vpop.f32.mrf.mxu0
    %v6536 = vadd.f32 %v6487, %v6535
    %v6537 = vpop.f32.mrf.mxu0
    %v6538 = vadd.f32 %v6489, %v6537
    %6539 = vmatmul.bf16.gmra.mxu0 %v6317
    %v6540 = vpop.f32.mrf.mxu0
    %v6541 = vadd.f32 %v6492, %v6540
    %v6542 = vpop.f32.mrf.mxu0
    %v6543 = vadd.f32 %v6494, %v6542
    %6544 = vmatmul.bf16.gmra.mxu0 %v6321
    %v6545 = vpop.f32.mrf.mxu0
    %v6546 = vadd.f32 %v6497, %v6545
    %v6547 = vpop.f32.mrf.mxu0
    %v6548 = vadd.f32 %v6499, %v6547
    %6549 = vdwg.mxu0
    %s6550 = scalar_lea.vmem [#allocation21], 512
    %v6551 = vld [vmem:[%s6550] sm:$0xff]
    %v6552 = vld [vmem:[%s6550 + $0x8] sm:$0xff]
    %v6553 = vld [vmem:[%s6550 + $0x10] sm:$0xff]
    %v6554 = vld [vmem:[%s6550 + $0x18] sm:$0xff]
    %v6555 = vld [vmem:[%s6550 + $0x20] sm:$0xff]
    %v6556 = vld [vmem:[%s6550 + $0x28] sm:$0xff]
    %v6557 = vld [vmem:[%s6550 + $0x30] sm:$0xff]
    %v6558 = vld [vmem:[%s6550 + $0x38] sm:$0xff]
    %v6559 = vld [vmem:[%s6550 + $0x40] sm:$0xff]
    %v6560 = vld [vmem:[%s6550 + $0x48] sm:$0xff]
    %v6561 = vld [vmem:[%s6550 + $0x50] sm:$0xff]
    %v6562 = vld [vmem:[%s6550 + $0x58] sm:$0xff]
    %v6563 = vld [vmem:[%s6550 + $0x60] sm:$0xff]
    %v6564 = vld [vmem:[%s6550 + $0x68] sm:$0xff]
    %v6565 = vld [vmem:[%s6550 + $0x70] sm:$0xff]
    %v6566 = vld [vmem:[%s6550 + $0x78] sm:$0xff]
    %v6567 = vld [vmem:[%s6550 + $0x80] sm:$0xff]
    %v6568 = vld [vmem:[%s6550 + $0x88] sm:$0xff]
    %v6569 = vld [vmem:[%s6550 + $0x90] sm:$0xff]
    %v6570 = vld [vmem:[%s6550 + $0x98] sm:$0xff]
    %v6571 = vld [vmem:[%s6550 + $0xa0] sm:$0xff]
    %v6572 = vld [vmem:[%s6550 + $0xa8] sm:$0xff]
    %v6573 = vld [vmem:[%s6550 + $0xb0] sm:$0xff]
    %v6574 = vld [vmem:[%s6550 + $0xb8] sm:$0xff]
    %v6575 = vld [vmem:[%s6550 + $0xc0] sm:$0xff]
    %v6576 = vld [vmem:[%s6550 + $0xc8] sm:$0xff]
    %v6577 = vld [vmem:[%s6550 + $0xd0] sm:$0xff]
    %v6578 = vld [vmem:[%s6550 + $0xd8] sm:$0xff]
    %v6579 = vld [vmem:[%s6550 + $0xe0] sm:$0xff]
    %v6580 = vld [vmem:[%s6550 + $0xe8] sm:$0xff]
    %v6581 = vld [vmem:[%s6550 + $0xf0] sm:$0xff]
    %v6582 = vld [vmem:[%s6550 + $0xf8] sm:$0xff]
    %v6583 = vpack.c.bf16 %v4986, %v4984
    %v6584 = vpack.c.bf16 %v4991, %v4989
    %v6585 = vpack.c.bf16 %v4996, %v4994
    %v6586 = vpack.c.bf16 %v5001, %v4999
    %v6587 = vpack.c.bf16 %v5006, %v5004
    %v6588 = vpack.c.bf16 %v5011, %v5009
    %v6589 = vpack.c.bf16 %v5016, %v5014
    %v6590 = vpack.c.bf16 %v5021, %v5019
    %v6591 = vpack.c.bf16 %v5084, %v5082
    %v6592 = vpack.c.bf16 %v5089, %v5087
    %v6593 = vpack.c.bf16 %v5094, %v5092
    %v6594 = vpack.c.bf16 %v5099, %v5097
    %v6595 = vpack.c.bf16 %v5104, %v5102
    %v6596 = vpack.c.bf16 %v5109, %v5107
    %v6597 = vpack.c.bf16 %v5114, %v5112
    %v6598 = vpack.c.bf16 %v5119, %v5117
    %v6599 = vpack.c.bf16 %v5378, %v5376
    %v6600 = vpack.c.bf16 %v5383, %v5381
    %v6601 = vpack.c.bf16 %v5388, %v5386
    %v6602 = vpack.c.bf16 %v5393, %v5391
    %v6603 = vpack.c.bf16 %v5398, %v5396
    %v6604 = vpack.c.bf16 %v5403, %v5401
    %v6605 = vpack.c.bf16 %v5408, %v5406
    %v6606 = vpack.c.bf16 %v5413, %v5411
    %v6607 = vpack.c.bf16 %v5476, %v5474
    %v6608 = vpack.c.bf16 %v5481, %v5479
    %v6609 = vpack.c.bf16 %v5486, %v5484
    %v6610 = vpack.c.bf16 %v5491, %v5489
    %v6611 = vpack.c.bf16 %v5496, %v5494
    %v6612 = vpack.c.bf16 %v5501, %v5499
    %v6613 = vpack.c.bf16 %v5506, %v5504
    %v6614 = vpack.c.bf16 %v5511, %v5509
    %v6647 = vunpack.c.l.b16 %v6551
    %v6648 = vunpack.c.h.b16 %v6551
    %v6649 = vunpack.c.l.b16 %v6552
    %v6650 = vunpack.c.h.b16 %v6552
    %v6651 = vunpack.c.l.b16 %v6553
    %v6652 = vunpack.c.h.b16 %v6553
    %v6653 = vunpack.c.l.b16 %v6554
    %v6654 = vunpack.c.h.b16 %v6554
    %v6655 = vunpack.c.l.b16 %v6555
    %v6656 = vunpack.c.h.b16 %v6555
    %v6657 = vunpack.c.l.b16 %v6556
    %v6658 = vunpack.c.h.b16 %v6556
    %v6659 = vunpack.c.l.b16 %v6557
    %v6660 = vunpack.c.h.b16 %v6557
    %v6661 = vunpack.c.l.b16 %v6558
    %v6662 = vunpack.c.h.b16 %v6558
    %v6663 = vunpack.c.l.b16 %v6559
    %v6664 = vunpack.c.h.b16 %v6559
    %v6665 = vunpack.c.l.b16 %v6560
    %v6666 = vunpack.c.h.b16 %v6560
    %v6667 = vunpack.c.l.b16 %v6561
    %v6668 = vunpack.c.h.b16 %v6561
    %v6669 = vunpack.c.l.b16 %v6562
    %v6670 = vunpack.c.h.b16 %v6562
    %v6671 = vunpack.c.l.b16 %v6563
    %v6672 = vunpack.c.h.b16 %v6563
    %v6673 = vunpack.c.l.b16 %v6564
    %v6674 = vunpack.c.h.b16 %v6564
    %v6675 = vunpack.c.l.b16 %v6565
    %v6676 = vunpack.c.h.b16 %v6565
    %v6677 = vunpack.c.l.b16 %v6566
    %v6678 = vunpack.c.h.b16 %v6566
    %v6679 = vunpack.c.l.b16 %v6567
    %v6680 = vunpack.c.h.b16 %v6567
    %v6681 = vunpack.c.l.b16 %v6568
    %v6682 = vunpack.c.h.b16 %v6568
    %v6683 = vunpack.c.l.b16 %v6569
    %v6684 = vunpack.c.h.b16 %v6569
    %v6685 = vunpack.c.l.b16 %v6570
    %v6686 = vunpack.c.h.b16 %v6570
    %v6687 = vunpack.c.l.b16 %v6571
    %v6688 = vunpack.c.h.b16 %v6571
    %v6689 = vunpack.c.l.b16 %v6572
    %v6690 = vunpack.c.h.b16 %v6572
    %v6691 = vunpack.c.l.b16 %v6573
    %v6692 = vunpack.c.h.b16 %v6573
    %v6693 = vunpack.c.l.b16 %v6574
    %v6694 = vunpack.c.h.b16 %v6574
    %v6695 = vunpack.c.l.b16 %v6575
    %v6696 = vunpack.c.h.b16 %v6575
    %v6697 = vunpack.c.l.b16 %v6576
    %v6698 = vunpack.c.h.b16 %v6576
    %v6699 = vunpack.c.l.b16 %v6577
    %v6700 = vunpack.c.h.b16 %v6577
    %v6701 = vunpack.c.l.b16 %v6578
    %v6702 = vunpack.c.h.b16 %v6578
    %v6703 = vunpack.c.l.b16 %v6579
    %v6704 = vunpack.c.h.b16 %v6579
    %v6705 = vunpack.c.l.b16 %v6580
    %v6706 = vunpack.c.h.b16 %v6580
    %v6707 = vunpack.c.l.b16 %v6581
    %v6708 = vunpack.c.h.b16 %v6581
    %v6709 = vunpack.c.l.b16 %v6582
    %v6710 = vunpack.c.h.b16 %v6582
    %v6711 = vpack.c.b16 %v6651, %v6647
    %v6712 = vpack.c.b16 %v6652, %v6648
    %v6713 = vpack.c.b16 %v6653, %v6649
    %v6714 = vpack.c.b16 %v6654, %v6650
    %v6715 = vpack.c.b16 %v6659, %v6655
    %v6716 = vpack.c.b16 %v6660, %v6656
    %v6717 = vpack.c.b16 %v6661, %v6657
    %v6718 = vpack.c.b16 %v6662, %v6658
    %v6719 = vpack.c.b16 %v6667, %v6663
    %v6720 = vpack.c.b16 %v6668, %v6664
    %v6721 = vpack.c.b16 %v6669, %v6665
    %v6722 = vpack.c.b16 %v6670, %v6666
    %v6723 = vpack.c.b16 %v6675, %v6671
    %v6724 = vpack.c.b16 %v6676, %v6672
    %v6725 = vpack.c.b16 %v6677, %v6673
    %v6726 = vpack.c.b16 %v6678, %v6674
    %v6727 = vpack.c.b16 %v6683, %v6679
    %v6728 = vpack.c.b16 %v6684, %v6680
    %v6729 = vpack.c.b16 %v6685, %v6681
    %v6730 = vpack.c.b16 %v6686, %v6682
    %v6731 = vpack.c.b16 %v6691, %v6687
    %v6732 = vpack.c.b16 %v6692, %v6688
    %v6733 = vpack.c.b16 %v6693, %v6689
    %v6734 = vpack.c.b16 %v6694, %v6690
    %v6735 = vpack.c.b16 %v6699, %v6695
    %v6736 = vpack.c.b16 %v6700, %v6696
    %v6737 = vpack.c.b16 %v6701, %v6697
    %v6738 = vpack.c.b16 %v6702, %v6698
    %v6739 = vpack.c.b16 %v6707, %v6703
    %v6740 = vpack.c.b16 %v6708, %v6704
    %v6741 = vpack.c.b16 %v6709, %v6705
    %v6742 = vpack.c.b16 %v6710, %v6706
    %6775 = vmatpush.bf16.msra.mxu0 %v6590
    %6776 = vmatpush.bf16.msra.mxu0 %v6589
    %6777 = vmatpush.bf16.msra.mxu0 %v6588
    %6778 = vmatpush.bf16.msra.mxu0 %v6587
    %6779 = vmatpush.bf16.msra.mxu0 %v6586
    %6780 = vmatpush.bf16.msra.mxu0 %v6585
    %6781 = vmatpush.bf16.msra.mxu0 %v6584
    %6782 = vmatpush.bf16.msra.mxu0 %v6583
    %6783 = vmatmul.bf16.gmra.mxu0 %v6711
    %v6784 = vpop.f32.mrf.mxu0
    %v6785 = vadd.f32 0.0, %v6784
    %v6786 = vpop.f32.mrf.mxu0
    %v6787 = vadd.f32 0.0, %v6786
    %6788 = vmatmul.bf16.gmra.mxu0 %v6715
    %v6789 = vpop.f32.mrf.mxu0
    %v6790 = vadd.f32 0.0, %v6789
    %v6791 = vpop.f32.mrf.mxu0
    %v6792 = vadd.f32 0.0, %v6791
    %6793 = vmatmul.bf16.gmra.mxu0 %v6719
    %v6794 = vpop.f32.mrf.mxu0
    %v6795 = vadd.f32 0.0, %v6794
    %v6796 = vpop.f32.mrf.mxu0
    %v6797 = vadd.f32 0.0, %v6796
    %6798 = vmatmul.bf16.gmra.mxu0 %v6723
    %v6799 = vpop.f32.mrf.mxu0
    %v6800 = vadd.f32 0.0, %v6799
    %v6801 = vpop.f32.mrf.mxu0
    %v6802 = vadd.f32 0.0, %v6801
    %6803 = vmatmul.bf16.gmra.mxu0 %v6727
    %v6804 = vpop.f32.mrf.mxu0
    %v6805 = vadd.f32 0.0, %v6804
    %v6806 = vpop.f32.mrf.mxu0
    %v6807 = vadd.f32 0.0, %v6806
    %6808 = vmatmul.bf16.gmra.mxu0 %v6731
    %v6809 = vpop.f32.mrf.mxu0
    %v6810 = vadd.f32 0.0, %v6809
    %v6811 = vpop.f32.mrf.mxu0
    %v6812 = vadd.f32 0.0, %v6811
    %6813 = vmatmul.bf16.gmra.mxu0 %v6735
    %v6814 = vpop.f32.mrf.mxu0
    %v6815 = vadd.f32 0.0, %v6814
    %v6816 = vpop.f32.mrf.mxu0
    %v6817 = vadd.f32 0.0, %v6816
    %6818 = vmatmul.bf16.gmra.mxu0 %v6739
    %v6819 = vpop.f32.mrf.mxu0
    %v6820 = vadd.f32 0.0, %v6819
    %v6821 = vpop.f32.mrf.mxu0
    %v6822 = vadd.f32 0.0, %v6821
    %6823 = vdwg.mxu0
    %6824 = vmatpush.bf16.msra.mxu0 %v6598
    %6825 = vmatpush.bf16.msra.mxu0 %v6597
    %6826 = vmatpush.bf16.msra.mxu0 %v6596
    %6827 = vmatpush.bf16.msra.mxu0 %v6595
    %6828 = vmatpush.bf16.msra.mxu0 %v6594
    %6829 = vmatpush.bf16.msra.mxu0 %v6593
    %6830 = vmatpush.bf16.msra.mxu0 %v6592
    %6831 = vmatpush.bf16.msra.mxu0 %v6591
    %6832 = vmatmul.bf16.gmra.mxu0 %v6712
    %v6833 = vpop.f32.mrf.mxu0
    %v6834 = vadd.f32 %v6785, %v6833
    %v6835 = vpop.f32.mrf.mxu0
    %v6836 = vadd.f32 %v6787, %v6835
    %6837 = vmatmul.bf16.gmra.mxu0 %v6716
    %v6838 = vpop.f32.mrf.mxu0
    %v6839 = vadd.f32 %v6790, %v6838
    %v6840 = vpop.f32.mrf.mxu0
    %v6841 = vadd.f32 %v6792, %v6840
    %6842 = vmatmul.bf16.gmra.mxu0 %v6720
    %v6843 = vpop.f32.mrf.mxu0
    %v6844 = vadd.f32 %v6795, %v6843
    %v6845 = vpop.f32.mrf.mxu0
    %v6846 = vadd.f32 %v6797, %v6845
    %6847 = vmatmul.bf16.gmra.mxu0 %v6724
    %v6848 = vpop.f32.mrf.mxu0
    %v6849 = vadd.f32 %v6800, %v6848
    %v6850 = vpop.f32.mrf.mxu0
    %v6851 = vadd.f32 %v6802, %v6850
    %6852 = vmatmul.bf16.gmra.mxu0 %v6728
    %v6853 = vpop.f32.mrf.mxu0
    %v6854 = vadd.f32 %v6805, %v6853
    %v6855 = vpop.f32.mrf.mxu0
    %v6856 = vadd.f32 %v6807, %v6855
    %6857 = vmatmul.bf16.gmra.mxu0 %v6732
    %v6858 = vpop.f32.mrf.mxu0
    %v6859 = vadd.f32 %v6810, %v6858
    %v6860 = vpop.f32.mrf.mxu0
    %v6861 = vadd.f32 %v6812, %v6860
    %6862 = vmatmul.bf16.gmra.mxu0 %v6736
    %v6863 = vpop.f32.mrf.mxu0
    %v6864 = vadd.f32 %v6815, %v6863
    %v6865 = vpop.f32.mrf.mxu0
    %v6866 = vadd.f32 %v6817, %v6865
    %6867 = vmatmul.bf16.gmra.mxu0 %v6740
    %v6868 = vpop.f32.mrf.mxu0
    %v6869 = vadd.f32 %v6820, %v6868
    %v6870 = vpop.f32.mrf.mxu0
    %v6871 = vadd.f32 %v6822, %v6870
    %6872 = vdwg.mxu0
    %6873 = vmatpush.bf16.msra.mxu0 %v6606
    %6874 = vmatpush.bf16.msra.mxu0 %v6605
    %6875 = vmatpush.bf16.msra.mxu0 %v6604
    %6876 = vmatpush.bf16.msra.mxu0 %v6603
    %6877 = vmatpush.bf16.msra.mxu0 %v6602
    %6878 = vmatpush.bf16.msra.mxu0 %v6601
    %6879 = vmatpush.bf16.msra.mxu0 %v6600
    %6880 = vmatpush.bf16.msra.mxu0 %v6599
    %6881 = vmatmul.bf16.gmra.mxu0 %v6713
    %v6882 = vpop.f32.mrf.mxu0
    %v6883 = vadd.f32 %v6834, %v6882
    %v6884 = vpop.f32.mrf.mxu0
    %v6885 = vadd.f32 %v6836, %v6884
    %6886 = vmatmul.bf16.gmra.mxu0 %v6717
    %v6887 = vpop.f32.mrf.mxu0
    %v6888 = vadd.f32 %v6839, %v6887
    %v6889 = vpop.f32.mrf.mxu0
    %v6890 = vadd.f32 %v6841, %v6889
    %6891 = vmatmul.bf16.gmra.mxu0 %v6721
    %v6892 = vpop.f32.mrf.mxu0
    %v6893 = vadd.f32 %v6844, %v6892
    %v6894 = vpop.f32.mrf.mxu0
    %v6895 = vadd.f32 %v6846, %v6894
    %6896 = vmatmul.bf16.gmra.mxu0 %v6725
    %v6897 = vpop.f32.mrf.mxu0
    %v6898 = vadd.f32 %v6849, %v6897
    %v6899 = vpop.f32.mrf.mxu0
    %v6900 = vadd.f32 %v6851, %v6899
    %6901 = vmatmul.bf16.gmra.mxu0 %v6729
    %v6902 = vpop.f32.mrf.mxu0
    %v6903 = vadd.f32 %v6854, %v6902
    %v6904 = vpop.f32.mrf.mxu0
    %v6905 = vadd.f32 %v6856, %v6904
    %6906 = vmatmul.bf16.gmra.mxu0 %v6733
    %v6907 = vpop.f32.mrf.mxu0
    %v6908 = vadd.f32 %v6859, %v6907
    %v6909 = vpop.f32.mrf.mxu0
    %v6910 = vadd.f32 %v6861, %v6909
    %6911 = vmatmul.bf16.gmra.mxu0 %v6737
    %v6912 = vpop.f32.mrf.mxu0
    %v6913 = vadd.f32 %v6864, %v6912
    %v6914 = vpop.f32.mrf.mxu0
    %v6915 = vadd.f32 %v6866, %v6914
    %6916 = vmatmul.bf16.gmra.mxu0 %v6741
    %v6917 = vpop.f32.mrf.mxu0
    %v6918 = vadd.f32 %v6869, %v6917
    %v6919 = vpop.f32.mrf.mxu0
    %v6920 = vadd.f32 %v6871, %v6919
    %6921 = vdwg.mxu0
    %6922 = vmatpush.bf16.msra.mxu0 %v6614
    %6923 = vmatpush.bf16.msra.mxu0 %v6613
    %6924 = vmatpush.bf16.msra.mxu0 %v6612
    %6925 = vmatpush.bf16.msra.mxu0 %v6611
    %6926 = vmatpush.bf16.msra.mxu0 %v6610
    %6927 = vmatpush.bf16.msra.mxu0 %v6609
    %6928 = vmatpush.bf16.msra.mxu0 %v6608
    %6929 = vmatpush.bf16.msra.mxu0 %v6607
    %6930 = vmatmul.bf16.gmra.mxu0 %v6714
    %v6931 = vpop.f32.mrf.mxu0
    %v6932 = vadd.f32 %v6883, %v6931
    %v6933 = vpop.f32.mrf.mxu0
    %v6934 = vadd.f32 %v6885, %v6933
    %6935 = vmatmul.bf16.gmra.mxu0 %v6718
    %v6936 = vpop.f32.mrf.mxu0
    %v6937 = vadd.f32 %v6888, %v6936
    %v6938 = vpop.f32.mrf.mxu0
    %v6939 = vadd.f32 %v6890, %v6938
    %6940 = vmatmul.bf16.gmra.mxu0 %v6722
    %v6941 = vpop.f32.mrf.mxu0
    %v6942 = vadd.f32 %v6893, %v6941
    %v6943 = vpop.f32.mrf.mxu0
    %v6944 = vadd.f32 %v6895, %v6943
    %6945 = vmatmul.bf16.gmra.mxu0 %v6726
    %v6946 = vpop.f32.mrf.mxu0
    %v6947 = vadd.f32 %v6898, %v6946
    %v6948 = vpop.f32.mrf.mxu0
    %v6949 = vadd.f32 %v6900, %v6948
    %6950 = vmatmul.bf16.gmra.mxu0 %v6730
    %v6951 = vpop.f32.mrf.mxu0
    %v6952 = vadd.f32 %v6903, %v6951
    %v6953 = vpop.f32.mrf.mxu0
    %v6954 = vadd.f32 %v6905, %v6953
    %6955 = vmatmul.bf16.gmra.mxu0 %v6734
    %v6956 = vpop.f32.mrf.mxu0
    %v6957 = vadd.f32 %v6908, %v6956
    %v6958 = vpop.f32.mrf.mxu0
    %v6959 = vadd.f32 %v6910, %v6958
    %6960 = vmatmul.bf16.gmra.mxu0 %v6738
    %v6961 = vpop.f32.mrf.mxu0
    %v6962 = vadd.f32 %v6913, %v6961
    %v6963 = vpop.f32.mrf.mxu0
    %v6964 = vadd.f32 %v6915, %v6963
    %6965 = vmatmul.bf16.gmra.mxu0 %v6742
    %v6966 = vpop.f32.mrf.mxu0
    %v6967 = vadd.f32 %v6918, %v6966
    %v6968 = vpop.f32.mrf.mxu0
    %v6969 = vadd.f32 %v6920, %v6968
    %6970 = vdwg.mxu0
    %s6971 = scalar_lea.vmem [#allocation21], 768
    %v6972 = vld [vmem:[%s6971] sm:$0xff]
    %v6973 = vld [vmem:[%s6971 + $0x8] sm:$0xff]
    %v6974 = vld [vmem:[%s6971 + $0x10] sm:$0xff]
    %v6975 = vld [vmem:[%s6971 + $0x18] sm:$0xff]
    %v6976 = vld [vmem:[%s6971 + $0x20] sm:$0xff]
    %v6977 = vld [vmem:[%s6971 + $0x28] sm:$0xff]
    %v6978 = vld [vmem:[%s6971 + $0x30] sm:$0xff]
    %v6979 = vld [vmem:[%s6971 + $0x38] sm:$0xff]
    %v6980 = vld [vmem:[%s6971 + $0x40] sm:$0xff]
    %v6981 = vld [vmem:[%s6971 + $0x48] sm:$0xff]
    %v6982 = vld [vmem:[%s6971 + $0x50] sm:$0xff]
    %v6983 = vld [vmem:[%s6971 + $0x58] sm:$0xff]
    %v6984 = vld [vmem:[%s6971 + $0x60] sm:$0xff]
    %v6985 = vld [vmem:[%s6971 + $0x68] sm:$0xff]
    %v6986 = vld [vmem:[%s6971 + $0x70] sm:$0xff]
    %v6987 = vld [vmem:[%s6971 + $0x78] sm:$0xff]
    %v6988 = vld [vmem:[%s6971 + $0x80] sm:$0xff]
    %v6989 = vld [vmem:[%s6971 + $0x88] sm:$0xff]
    %v6990 = vld [vmem:[%s6971 + $0x90] sm:$0xff]
    %v6991 = vld [vmem:[%s6971 + $0x98] sm:$0xff]
    %v6992 = vld [vmem:[%s6971 + $0xa0] sm:$0xff]
    %v6993 = vld [vmem:[%s6971 + $0xa8] sm:$0xff]
    %v6994 = vld [vmem:[%s6971 + $0xb0] sm:$0xff]
    %v6995 = vld [vmem:[%s6971 + $0xb8] sm:$0xff]
    %v6996 = vld [vmem:[%s6971 + $0xc0] sm:$0xff]
    %v6997 = vld [vmem:[%s6971 + $0xc8] sm:$0xff]
    %v6998 = vld [vmem:[%s6971 + $0xd0] sm:$0xff]
    %v6999 = vld [vmem:[%s6971 + $0xd8] sm:$0xff]
    %v7000 = vld [vmem:[%s6971 + $0xe0] sm:$0xff]
    %v7001 = vld [vmem:[%s6971 + $0xe8] sm:$0xff]
    %v7002 = vld [vmem:[%s6971 + $0xf0] sm:$0xff]
    %v7003 = vld [vmem:[%s6971 + $0xf8] sm:$0xff]
    %v7004 = vpack.c.bf16 %v4937, %v4935
    %v7005 = vpack.c.bf16 %v4942, %v4940
    %v7006 = vpack.c.bf16 %v4947, %v4945
    %v7007 = vpack.c.bf16 %v4952, %v4950
    %v7008 = vpack.c.bf16 %v4957, %v4955
    %v7009 = vpack.c.bf16 %v4962, %v4960
    %v7010 = vpack.c.bf16 %v4967, %v4965
    %v7011 = vpack.c.bf16 %v4972, %v4970
    %v7012 = vpack.c.bf16 %v5035, %v5033
    %v7013 = vpack.c.bf16 %v5040, %v5038
    %v7014 = vpack.c.bf16 %v5045, %v5043
    %v7015 = vpack.c.bf16 %v5050, %v5048
    %v7016 = vpack.c.bf16 %v5055, %v5053
    %v7017 = vpack.c.bf16 %v5060, %v5058
    %v7018 = vpack.c.bf16 %v5065, %v5063
    %v7019 = vpack.c.bf16 %v5070, %v5068
    %v7020 = vpack.c.bf16 %v5329, %v5327
    %v7021 = vpack.c.bf16 %v5334, %v5332
    %v7022 = vpack.c.bf16 %v5339, %v5337
    %v7023 = vpack.c.bf16 %v5344, %v5342
    %v7024 = vpack.c.bf16 %v5349, %v5347
    %v7025 = vpack.c.bf16 %v5354, %v5352
    %v7026 = vpack.c.bf16 %v5359, %v5357
    %v7027 = vpack.c.bf16 %v5364, %v5362
    %v7028 = vpack.c.bf16 %v5427, %v5425
    %v7029 = vpack.c.bf16 %v5432, %v5430
    %v7030 = vpack.c.bf16 %v5437, %v5435
    %v7031 = vpack.c.bf16 %v5442, %v5440
    %v7032 = vpack.c.bf16 %v5447, %v5445
    %v7033 = vpack.c.bf16 %v5452, %v5450
    %v7034 = vpack.c.bf16 %v5457, %v5455
    %v7035 = vpack.c.bf16 %v5462, %v5460
    %v7068 = vunpack.c.l.b16 %v6972
    %v7069 = vunpack.c.h.b16 %v6972
    %v7070 = vunpack.c.l.b16 %v6973
    %v7071 = vunpack.c.h.b16 %v6973
    %v7072 = vunpack.c.l.b16 %v6974
    %v7073 = vunpack.c.h.b16 %v6974
    %v7074 = vunpack.c.l.b16 %v6975
    %v7075 = vunpack.c.h.b16 %v6975
    %v7076 = vunpack.c.l.b16 %v6976
    %v7077 = vunpack.c.h.b16 %v6976
    %v7078 = vunpack.c.l.b16 %v6977
    %v7079 = vunpack.c.h.b16 %v6977
    %v7080 = vunpack.c.l.b16 %v6978
    %v7081 = vunpack.c.h.b16 %v6978
    %v7082 = vunpack.c.l.b16 %v6979
    %v7083 = vunpack.c.h.b16 %v6979
    %v7084 = vunpack.c.l.b16 %v6980
    %v7085 = vunpack.c.h.b16 %v6980
    %v7086 = vunpack.c.l.b16 %v6981
    %v7087 = vunpack.c.h.b16 %v6981
    %v7088 = vunpack.c.l.b16 %v6982
    %v7089 = vunpack.c.h.b16 %v6982
    %v7090 = vunpack.c.l.b16 %v6983
    %v7091 = vunpack.c.h.b16 %v6983
    %v7092 = vunpack.c.l.b16 %v6984
    %v7093 = vunpack.c.h.b16 %v6984
    %v7094 = vunpack.c.l.b16 %v6985
    %v7095 = vunpack.c.h.b16 %v6985
    %v7096 = vunpack.c.l.b16 %v6986
    %v7097 = vunpack.c.h.b16 %v6986
    %v7098 = vunpack.c.l.b16 %v6987
    %v7099 = vunpack.c.h.b16 %v6987
    %v7100 = vunpack.c.l.b16 %v6988
    %v7101 = vunpack.c.h.b16 %v6988
    %v7102 = vunpack.c.l.b16 %v6989
    %v7103 = vunpack.c.h.b16 %v6989
    %v7104 = vunpack.c.l.b16 %v6990
    %v7105 = vunpack.c.h.b16 %v6990
    %v7106 = vunpack.c.l.b16 %v6991
    %v7107 = vunpack.c.h.b16 %v6991
    %v7108 = vunpack.c.l.b16 %v6992
    %v7109 = vunpack.c.h.b16 %v6992
    %v7110 = vunpack.c.l.b16 %v6993
    %v7111 = vunpack.c.h.b16 %v6993
    %v7112 = vunpack.c.l.b16 %v6994
    %v7113 = vunpack.c.h.b16 %v6994
    %v7114 = vunpack.c.l.b16 %v6995
    %v7115 = vunpack.c.h.b16 %v6995
    %v7116 = vunpack.c.l.b16 %v6996
    %v7117 = vunpack.c.h.b16 %v6996
    %v7118 = vunpack.c.l.b16 %v6997
    %v7119 = vunpack.c.h.b16 %v6997
    %v7120 = vunpack.c.l.b16 %v6998
    %v7121 = vunpack.c.h.b16 %v6998
    %v7122 = vunpack.c.l.b16 %v6999
    %v7123 = vunpack.c.h.b16 %v6999
    %v7124 = vunpack.c.l.b16 %v7000
    %v7125 = vunpack.c.h.b16 %v7000
    %v7126 = vunpack.c.l.b16 %v7001
    %v7127 = vunpack.c.h.b16 %v7001
    %v7128 = vunpack.c.l.b16 %v7002
    %v7129 = vunpack.c.h.b16 %v7002
    %v7130 = vunpack.c.l.b16 %v7003
    %v7131 = vunpack.c.h.b16 %v7003
    %v7132 = vpack.c.b16 %v7072, %v7068
    %v7133 = vpack.c.b16 %v7073, %v7069
    %v7134 = vpack.c.b16 %v7074, %v7070
    %v7135 = vpack.c.b16 %v7075, %v7071
    %v7136 = vpack.c.b16 %v7080, %v7076
    %v7137 = vpack.c.b16 %v7081, %v7077
    %v7138 = vpack.c.b16 %v7082, %v7078
    %v7139 = vpack.c.b16 %v7083, %v7079
    %v7140 = vpack.c.b16 %v7088, %v7084
    %v7141 = vpack.c.b16 %v7089, %v7085
    %v7142 = vpack.c.b16 %v7090, %v7086
    %v7143 = vpack.c.b16 %v7091, %v7087
    %v7144 = vpack.c.b16 %v7096, %v7092
    %v7145 = vpack.c.b16 %v7097, %v7093
    %v7146 = vpack.c.b16 %v7098, %v7094
    %v7147 = vpack.c.b16 %v7099, %v7095
    %v7148 = vpack.c.b16 %v7104, %v7100
    %v7149 = vpack.c.b16 %v7105, %v7101
    %v7150 = vpack.c.b16 %v7106, %v7102
    %v7151 = vpack.c.b16 %v7107, %v7103
    %v7152 = vpack.c.b16 %v7112, %v7108
    %v7153 = vpack.c.b16 %v7113, %v7109
    %v7154 = vpack.c.b16 %v7114, %v7110
    %v7155 = vpack.c.b16 %v7115, %v7111
    %v7156 = vpack.c.b16 %v7120, %v7116
    %v7157 = vpack.c.b16 %v7121, %v7117
    %v7158 = vpack.c.b16 %v7122, %v7118
    %v7159 = vpack.c.b16 %v7123, %v7119
    %v7160 = vpack.c.b16 %v7128, %v7124
    %v7161 = vpack.c.b16 %v7129, %v7125
    %v7162 = vpack.c.b16 %v7130, %v7126
    %v7163 = vpack.c.b16 %v7131, %v7127
    %7196 = vmatpush.bf16.msra.mxu0 %v7011
    %7197 = vmatpush.bf16.msra.mxu0 %v7010
    %7198 = vmatpush.bf16.msra.mxu0 %v7009
    %7199 = vmatpush.bf16.msra.mxu0 %v7008
    %7200 = vmatpush.bf16.msra.mxu0 %v7007
    %7201 = vmatpush.bf16.msra.mxu0 %v7006
    %7202 = vmatpush.bf16.msra.mxu0 %v7005
    %7203 = vmatpush.bf16.msra.mxu0 %v7004
    %7204 = vmatmul.bf16.gmra.mxu0 %v7132
    %v7205 = vpop.f32.mrf.mxu0
    %v7206 = vadd.f32 0.0, %v7205
    %v7207 = vpop.f32.mrf.mxu0
    %v7208 = vadd.f32 0.0, %v7207
    %7209 = vmatmul.bf16.gmra.mxu0 %v7136
    %v7210 = vpop.f32.mrf.mxu0
    %v7211 = vadd.f32 0.0, %v7210
    %v7212 = vpop.f32.mrf.mxu0
    %v7213 = vadd.f32 0.0, %v7212
    %7214 = vmatmul.bf16.gmra.mxu0 %v7140
    %v7215 = vpop.f32.mrf.mxu0
    %v7216 = vadd.f32 0.0, %v7215
    %v7217 = vpop.f32.mrf.mxu0
    %v7218 = vadd.f32 0.0, %v7217
    %7219 = vmatmul.bf16.gmra.mxu0 %v7144
    %v7220 = vpop.f32.mrf.mxu0
    %v7221 = vadd.f32 0.0, %v7220
    %v7222 = vpop.f32.mrf.mxu0
    %v7223 = vadd.f32 0.0, %v7222
    %7224 = vmatmul.bf16.gmra.mxu0 %v7148
    %v7225 = vpop.f32.mrf.mxu0
    %v7226 = vadd.f32 0.0, %v7225
    %v7227 = vpop.f32.mrf.mxu0
    %v7228 = vadd.f32 0.0, %v7227
    %7229 = vmatmul.bf16.gmra.mxu0 %v7152
    %v7230 = vpop.f32.mrf.mxu0
    %v7231 = vadd.f32 0.0, %v7230
    %v7232 = vpop.f32.mrf.mxu0
    %v7233 = vadd.f32 0.0, %v7232
    %7234 = vmatmul.bf16.gmra.mxu0 %v7156
    %v7235 = vpop.f32.mrf.mxu0
    %v7236 = vadd.f32 0.0, %v7235
    %v7237 = vpop.f32.mrf.mxu0
    %v7238 = vadd.f32 0.0, %v7237
    %7239 = vmatmul.bf16.gmra.mxu0 %v7160
    %v7240 = vpop.f32.mrf.mxu0
    %v7241 = vadd.f32 0.0, %v7240
    %v7242 = vpop.f32.mrf.mxu0
    %v7243 = vadd.f32 0.0, %v7242
    %7244 = vdwg.mxu0
    %7245 = vmatpush.bf16.msra.mxu0 %v7019
    %7246 = vmatpush.bf16.msra.mxu0 %v7018
    %7247 = vmatpush.bf16.msra.mxu0 %v7017
    %7248 = vmatpush.bf16.msra.mxu0 %v7016
    %7249 = vmatpush.bf16.msra.mxu0 %v7015
    %7250 = vmatpush.bf16.msra.mxu0 %v7014
    %7251 = vmatpush.bf16.msra.mxu0 %v7013
    %7252 = vmatpush.bf16.msra.mxu0 %v7012
    %7253 = vmatmul.bf16.gmra.mxu0 %v7133
    %v7254 = vpop.f32.mrf.mxu0
    %v7255 = vadd.f32 %v7206, %v7254
    %v7256 = vpop.f32.mrf.mxu0
    %v7257 = vadd.f32 %v7208, %v7256
    %7258 = vmatmul.bf16.gmra.mxu0 %v7137
    %v7259 = vpop.f32.mrf.mxu0
    %v7260 = vadd.f32 %v7211, %v7259
    %v7261 = vpop.f32.mrf.mxu0
    %v7262 = vadd.f32 %v7213, %v7261
    %7263 = vmatmul.bf16.gmra.mxu0 %v7141
    %v7264 = vpop.f32.mrf.mxu0
    %v7265 = vadd.f32 %v7216, %v7264
    %v7266 = vpop.f32.mrf.mxu0
    %v7267 = vadd.f32 %v7218, %v7266
    %7268 = vmatmul.bf16.gmra.mxu0 %v7145
    %v7269 = vpop.f32.mrf.mxu0
    %v7270 = vadd.f32 %v7221, %v7269
    %v7271 = vpop.f32.mrf.mxu0
    %v7272 = vadd.f32 %v7223, %v7271
    %7273 = vmatmul.bf16.gmra.mxu0 %v7149
    %v7274 = vpop.f32.mrf.mxu0
    %v7275 = vadd.f32 %v7226, %v7274
    %v7276 = vpop.f32.mrf.mxu0
    %v7277 = vadd.f32 %v7228, %v7276
    %7278 = vmatmul.bf16.gmra.mxu0 %v7153
    %v7279 = vpop.f32.mrf.mxu0
    %v7280 = vadd.f32 %v7231, %v7279
    %v7281 = vpop.f32.mrf.mxu0
    %v7282 = vadd.f32 %v7233, %v7281
    %7283 = vmatmul.bf16.gmra.mxu0 %v7157
    %v7284 = vpop.f32.mrf.mxu0
    %v7285 = vadd.f32 %v7236, %v7284
    %v7286 = vpop.f32.mrf.mxu0
    %v7287 = vadd.f32 %v7238, %v7286
    %7288 = vmatmul.bf16.gmra.mxu0 %v7161
    %v7289 = vpop.f32.mrf.mxu0
    %v7290 = vadd.f32 %v7241, %v7289
    %v7291 = vpop.f32.mrf.mxu0
    %v7292 = vadd.f32 %v7243, %v7291
    %7293 = vdwg.mxu0
    %7294 = vmatpush.bf16.msra.mxu0 %v7027
    %7295 = vmatpush.bf16.msra.mxu0 %v7026
    %7296 = vmatpush.bf16.msra.mxu0 %v7025
    %7297 = vmatpush.bf16.msra.mxu0 %v7024
    %7298 = vmatpush.bf16.msra.mxu0 %v7023
    %7299 = vmatpush.bf16.msra.mxu0 %v7022
    %7300 = vmatpush.bf16.msra.mxu0 %v7021
    %7301 = vmatpush.bf16.msra.mxu0 %v7020
    %7302 = vmatmul.bf16.gmra.mxu0 %v7134
    %v7303 = vpop.f32.mrf.mxu0
    %v7304 = vadd.f32 %v7255, %v7303
    %v7305 = vpop.f32.mrf.mxu0
    %v7306 = vadd.f32 %v7257, %v7305
    %7307 = vmatmul.bf16.gmra.mxu0 %v7138
    %v7308 = vpop.f32.mrf.mxu0
    %v7309 = vadd.f32 %v7260, %v7308
    %v7310 = vpop.f32.mrf.mxu0
    %v7311 = vadd.f32 %v7262, %v7310
    %7312 = vmatmul.bf16.gmra.mxu0 %v7142
    %v7313 = vpop.f32.mrf.mxu0
    %v7314 = vadd.f32 %v7265, %v7313
    %v7315 = vpop.f32.mrf.mxu0
    %v7316 = vadd.f32 %v7267, %v7315
    %7317 = vmatmul.bf16.gmra.mxu0 %v7146
    %v7318 = vpop.f32.mrf.mxu0
    %v7319 = vadd.f32 %v7270, %v7318
    %v7320 = vpop.f32.mrf.mxu0
    %v7321 = vadd.f32 %v7272, %v7320
    %7322 = vmatmul.bf16.gmra.mxu0 %v7150
    %v7323 = vpop.f32.mrf.mxu0
    %v7324 = vadd.f32 %v7275, %v7323
    %v7325 = vpop.f32.mrf.mxu0
    %v7326 = vadd.f32 %v7277, %v7325
    %7327 = vmatmul.bf16.gmra.mxu0 %v7154
    %v7328 = vpop.f32.mrf.mxu0
    %v7329 = vadd.f32 %v7280, %v7328
    %v7330 = vpop.f32.mrf.mxu0
    %v7331 = vadd.f32 %v7282, %v7330
    %7332 = vmatmul.bf16.gmra.mxu0 %v7158
    %v7333 = vpop.f32.mrf.mxu0
    %v7334 = vadd.f32 %v7285, %v7333
    %v7335 = vpop.f32.mrf.mxu0
    %v7336 = vadd.f32 %v7287, %v7335
    %7337 = vmatmul.bf16.gmra.mxu0 %v7162
    %v7338 = vpop.f32.mrf.mxu0
    %v7339 = vadd.f32 %v7290, %v7338
    %v7340 = vpop.f32.mrf.mxu0
    %v7341 = vadd.f32 %v7292, %v7340
    %7342 = vdwg.mxu0
    %7343 = vmatpush.bf16.msra.mxu0 %v7035
    %7344 = vmatpush.bf16.msra.mxu0 %v7034
    %7345 = vmatpush.bf16.msra.mxu0 %v7033
    %7346 = vmatpush.bf16.msra.mxu0 %v7032
    %7347 = vmatpush.bf16.msra.mxu0 %v7031
    %7348 = vmatpush.bf16.msra.mxu0 %v7030
    %7349 = vmatpush.bf16.msra.mxu0 %v7029
    %7350 = vmatpush.bf16.msra.mxu0 %v7028
    %7351 = vmatmul.bf16.gmra.mxu0 %v7135
    %v7352 = vpop.f32.mrf.mxu0
    %v7353 = vadd.f32 %v7304, %v7352
    %v7354 = vpop.f32.mrf.mxu0
    %v7355 = vadd.f32 %v7306, %v7354
    %7356 = vmatmul.bf16.gmra.mxu0 %v7139
    %v7357 = vpop.f32.mrf.mxu0
    %v7358 = vadd.f32 %v7309, %v7357
    %v7359 = vpop.f32.mrf.mxu0
    %v7360 = vadd.f32 %v7311, %v7359
    %7361 = vmatmul.bf16.gmra.mxu0 %v7143
    %v7362 = vpop.f32.mrf.mxu0
    %v7363 = vadd.f32 %v7314, %v7362
    %v7364 = vpop.f32.mrf.mxu0
    %v7365 = vadd.f32 %v7316, %v7364
    %7366 = vmatmul.bf16.gmra.mxu0 %v7147
    %v7367 = vpop.f32.mrf.mxu0
    %v7368 = vadd.f32 %v7319, %v7367
    %v7369 = vpop.f32.mrf.mxu0
    %v7370 = vadd.f32 %v7321, %v7369
    %7371 = vmatmul.bf16.gmra.mxu0 %v7151
    %v7372 = vpop.f32.mrf.mxu0
    %v7373 = vadd.f32 %v7324, %v7372
    %v7374 = vpop.f32.mrf.mxu0
    %v7375 = vadd.f32 %v7326, %v7374
    %7376 = vmatmul.bf16.gmra.mxu0 %v7155
    %v7377 = vpop.f32.mrf.mxu0
    %v7378 = vadd.f32 %v7329, %v7377
    %v7379 = vpop.f32.mrf.mxu0
    %v7380 = vadd.f32 %v7331, %v7379
    %7381 = vmatmul.bf16.gmra.mxu0 %v7159
    %v7382 = vpop.f32.mrf.mxu0
    %v7383 = vadd.f32 %v7334, %v7382
    %v7384 = vpop.f32.mrf.mxu0
    %v7385 = vadd.f32 %v7336, %v7384
    %7386 = vmatmul.bf16.gmra.mxu0 %v7163
    %v7387 = vpop.f32.mrf.mxu0
    %v7388 = vadd.f32 %v7339, %v7387
    %v7389 = vpop.f32.mrf.mxu0
    %v7390 = vadd.f32 %v7341, %v7389
    %7391 = vdwg.mxu0
    %v7392 = vld [vmem:[#allocation19] sm:$0x1]
    %v7394 = vperm.slane %v7392, 0
    %v7396 = vadd.f32 %v6090, %v7394
    %v7397 = vadd.f32 %v6092, %v7394
    %v7398 = vadd.f32 %v6095, %v7394
    %v7399 = vadd.f32 %v6097, %v7394
    %v7400 = vadd.f32 %v6100, %v7394
    %v7401 = vadd.f32 %v6102, %v7394
    %v7402 = vadd.f32 %v6105, %v7394
    %v7403 = vadd.f32 %v6107, %v7394
    %v7404 = vadd.f32 %v6110, %v7394
    %v7405 = vadd.f32 %v6112, %v7394
    %v7406 = vadd.f32 %v6115, %v7394
    %v7407 = vadd.f32 %v6117, %v7394
    %v7408 = vadd.f32 %v6120, %v7394
    %v7409 = vadd.f32 %v6122, %v7394
    %v7410 = vadd.f32 %v6125, %v7394
    %v7411 = vadd.f32 %v6127, %v7394
    %v7412 = vadd.f32 %v6511, %v7394
    %v7413 = vadd.f32 %v6513, %v7394
    %v7414 = vadd.f32 %v6516, %v7394
    %v7415 = vadd.f32 %v6518, %v7394
    %v7416 = vadd.f32 %v6521, %v7394
    %v7417 = vadd.f32 %v6523, %v7394
    %v7418 = vadd.f32 %v6526, %v7394
    %v7419 = vadd.f32 %v6528, %v7394
    %v7420 = vadd.f32 %v6531, %v7394
    %v7421 = vadd.f32 %v6533, %v7394
    %v7422 = vadd.f32 %v6536, %v7394
    %v7423 = vadd.f32 %v6538, %v7394
    %v7424 = vadd.f32 %v6541, %v7394
    %v7425 = vadd.f32 %v6543, %v7394
    %v7426 = vadd.f32 %v6546, %v7394
    %v7427 = vadd.f32 %v6548, %v7394
    %v7428 = vadd.f32 %v6932, %v7394
    %v7429 = vadd.f32 %v6934, %v7394
    %v7430 = vadd.f32 %v6937, %v7394
    %v7431 = vadd.f32 %v6939, %v7394
    %v7432 = vadd.f32 %v6942, %v7394
    %v7433 = vadd.f32 %v6944, %v7394
    %v7434 = vadd.f32 %v6947, %v7394
    %v7435 = vadd.f32 %v6949, %v7394
    %v7436 = vadd.f32 %v6952, %v7394
    %v7437 = vadd.f32 %v6954, %v7394
    %v7438 = vadd.f32 %v6957, %v7394
    %v7439 = vadd.f32 %v6959, %v7394
    %v7440 = vadd.f32 %v6962, %v7394
    %v7441 = vadd.f32 %v6964, %v7394
    %v7442 = vadd.f32 %v6967, %v7394
    %v7443 = vadd.f32 %v6969, %v7394
    %v7444 = vadd.f32 %v7353, %v7394
    %v7445 = vadd.f32 %v7355, %v7394
    %v7446 = vadd.f32 %v7358, %v7394
    %v7447 = vadd.f32 %v7360, %v7394
    %v7448 = vadd.f32 %v7363, %v7394
    %v7449 = vadd.f32 %v7365, %v7394
    %v7450 = vadd.f32 %v7368, %v7394
    %v7451 = vadd.f32 %v7370, %v7394
    %v7452 = vadd.f32 %v7373, %v7394
    %v7453 = vadd.f32 %v7375, %v7394
    %v7454 = vadd.f32 %v7378, %v7394
    %v7455 = vadd.f32 %v7380, %v7394
    %v7456 = vadd.f32 %v7383, %v7394
    %v7457 = vadd.f32 %v7385, %v7394
    %v7458 = vadd.f32 %v7388, %v7394
    %v7459 = vadd.f32 %v7390, %v7394
    %7460 = vst [vmem:[%s17] sm:$0xff] %v7396
    %7461 = vst [vmem:[%s17 + $0x8] sm:$0xff] %v7397
    %7462 = vst [vmem:[%s17 + $0x10] sm:$0xff] %v7398
    %7463 = vst [vmem:[%s17 + $0x18] sm:$0xff] %v7399
    %7464 = vst [vmem:[%s17 + $0x20] sm:$0xff] %v7400
    %7465 = vst [vmem:[%s17 + $0x28] sm:$0xff] %v7401
    %7466 = vst [vmem:[%s17 + $0x30] sm:$0xff] %v7402
    %7467 = vst [vmem:[%s17 + $0x38] sm:$0xff] %v7403
    %7468 = vst [vmem:[%s17 + $0x40] sm:$0xff] %v7404
    %7469 = vst [vmem:[%s17 + $0x48] sm:$0xff] %v7405
    %7470 = vst [vmem:[%s17 + $0x50] sm:$0xff] %v7406
    %7471 = vst [vmem:[%s17 + $0x58] sm:$0xff] %v7407
    %7472 = vst [vmem:[%s17 + $0x60] sm:$0xff] %v7408
    %7473 = vst [vmem:[%s17 + $0x68] sm:$0xff] %v7409
    %7474 = vst [vmem:[%s17 + $0x70] sm:$0xff] %v7410
    %7475 = vst [vmem:[%s17 + $0x78] sm:$0xff] %v7411
    %7476 = vst [vmem:[%s17 + $0x80] sm:$0xff] %v7412
    %7477 = vst [vmem:[%s17 + $0x88] sm:$0xff] %v7413
    %7478 = vst [vmem:[%s17 + $0x90] sm:$0xff] %v7414
    %7479 = vst [vmem:[%s17 + $0x98] sm:$0xff] %v7415
    %7480 = vst [vmem:[%s17 + $0xa0] sm:$0xff] %v7416
    %7481 = vst [vmem:[%s17 + $0xa8] sm:$0xff] %v7417
    %7482 = vst [vmem:[%s17 + $0xb0] sm:$0xff] %v7418
    %7483 = vst [vmem:[%s17 + $0xb8] sm:$0xff] %v7419
    %7484 = vst [vmem:[%s17 + $0xc0] sm:$0xff] %v7420
    %7485 = vst [vmem:[%s17 + $0xc8] sm:$0xff] %v7421
    %7486 = vst [vmem:[%s17 + $0xd0] sm:$0xff] %v7422
    %7487 = vst [vmem:[%s17 + $0xd8] sm:$0xff] %v7423
    %7488 = vst [vmem:[%s17 + $0xe0] sm:$0xff] %v7424
    %7489 = vst [vmem:[%s17 + $0xe8] sm:$0xff] %v7425
    %7490 = vst [vmem:[%s17 + $0xf0] sm:$0xff] %v7426
    %7491 = vst [vmem:[%s17 + $0xf8] sm:$0xff] %v7427
    %7492 = vst [vmem:[%s17 + $0x100] sm:$0xff] %v7428
    %7493 = vst [vmem:[%s17 + $0x108] sm:$0xff] %v7429
    %7494 = vst [vmem:[%s17 + $0x110] sm:$0xff] %v7430
    %7495 = vst [vmem:[%s17 + $0x118] sm:$0xff] %v7431
    %7496 = vst [vmem:[%s17 + $0x120] sm:$0xff] %v7432
    %7497 = vst [vmem:[%s17 + $0x128] sm:$0xff] %v7433
    %7498 = vst [vmem:[%s17 + $0x130] sm:$0xff] %v7434
    %7499 = vst [vmem:[%s17 + $0x138] sm:$0xff] %v7435
    %7500 = vst [vmem:[%s17 + $0x140] sm:$0xff] %v7436
    %7501 = vst [vmem:[%s17 + $0x148] sm:$0xff] %v7437
    %7502 = vst [vmem:[%s17 + $0x150] sm:$0xff] %v7438
    %7503 = vst [vmem:[%s17 + $0x158] sm:$0xff] %v7439
    %7504 = vst [vmem:[%s17 + $0x160] sm:$0xff] %v7440
    %7505 = vst [vmem:[%s17 + $0x168] sm:$0xff] %v7441
    %7506 = vst [vmem:[%s17 + $0x170] sm:$0xff] %v7442
    %7507 = vst [vmem:[%s17 + $0x178] sm:$0xff] %v7443
    %7508 = vst [vmem:[%s17 + $0x180] sm:$0xff] %v7444
    %7509 = vst [vmem:[%s17 + $0x188] sm:$0xff] %v7445
    %7510 = vst [vmem:[%s17 + $0x190] sm:$0xff] %v7446
    %7511 = vst [vmem:[%s17 + $0x198] sm:$0xff] %v7447
    %7512 = vst [vmem:[%s17 + $0x1a0] sm:$0xff] %v7448
    %7513 = vst [vmem:[%s17 + $0x1a8] sm:$0xff] %v7449
    %7514 = vst [vmem:[%s17 + $0x1b0] sm:$0xff] %v7450
    %7515 = vst [vmem:[%s17 + $0x1b8] sm:$0xff] %v7451
    %7516 = vst [vmem:[%s17 + $0x1c0] sm:$0xff] %v7452
    %7517 = vst [vmem:[%s17 + $0x1c8] sm:$0xff] %v7453
    %7518 = vst [vmem:[%s17 + $0x1d0] sm:$0xff] %v7454
    %7519 = vst [vmem:[%s17 + $0x1d8] sm:$0xff] %v7455
    %7520 = vst [vmem:[%s17 + $0x1e0] sm:$0xff] %v7456
    %7521 = vst [vmem:[%s17 + $0x1e8] sm:$0xff] %v7457
    %7522 = vst [vmem:[%s17 + $0x1f0] sm:$0xff] %v7458
    %7523 = vst [vmem:[%s17 + $0x1f8] sm:$0xff] %v7459
    // Predicated region
    $region122: #{forward.1} parent=1 // pred_check
      _
    $region123: #{forward.1} parent=1 // pred_check_branch
      %7525 = sbr.rel (0) target = $region125
    $region124: #{forward.1} parent=1 // pred_region
      _
    $region125: #{forward.1} parent=1 // pred_fallthru
      _
    // Predicated region
    $region126: #{forward.1} parent=1 // pred_check
      _
    $region127: #{forward.1} parent=1 // pred_check_branch
      %7527 = sbr.rel (0) target = $region129
    $region128: #{forward.1} parent=1 // pred_region
      _
    $region129: #{forward.1} parent=1 // pred_fallthru
      _
    %7528 = vsyncpa [#allocation3], 1
    %7529 = vsyncpa [#allocation5], 1
    %7530 = vsyncpa [#allocation8], 1
    %7531 = vsyncpa [#allocation11], 1
    %7532 = vsyncpa [#allocation14], 1
    %7533 = vsyncpa [#allocation17], 1
    %7534 = vsyncpa [#allocation20], 1

</llo_original>
